<compile_context>
chip_gen: v5e
topology: v5e:2x2
jax: 0.10.0
libtpu: 0.0.40
codegen_flags: <defaults>
</compile_context>

<pallas_src>
import functools

import jax
import jax.numpy as jnp
from jax import lax
from jax.experimental import pallas as pl
from jax.experimental.pallas import tpu as pltpu


def _geadah_kernel(hidden_size, t_chunk, lane_pad,
                   # inputs
                   x_ref,       # (T_CHUNK, B, 1)  chunk of the input sequence
                   wih_ref,     # (2, 4H)  rows: [x, prev_out] of W_ih^T (g cols x2)
                   wcomb_ref,   # (H, LP + 4H)  [W_lin^T | 0-pad | W_hh^T (g x2)]
                   b_ref,       # (1, 4H)  b_ih + b_hh (g cols x2)
                   scal_ref,    # (4,) SMEM [w_gamma, b_gamma, b_lin_n, b_lin_s]
                   # output
                   out_ref,     # (T_CHUNK, B, 3)  [output | n | s] on last axis
                   # scratch persisting across chunks
                   hw_scr,      # (B, 4H)  h_t @ W_hh^T carried between chunks
                   c_scr,       # (B, H)   LSTM cell state
                   prev_scr,    # (B, 1)   previous output
                   xb_scr):     # (T_CHUNK, B, 4H)  hoisted x_t@W_ih_x^T + bias
    H = hidden_size
    LP = lane_pad
    B = out_ref.shape[1]
    chunk = pl.program_id(0)

    @pl.when(chunk == 0)
    def _():
        hw_scr[...] = jnp.zeros_like(hw_scr)
        c_scr[...] = jnp.zeros_like(c_scr)
        prev_scr[...] = jnp.zeros_like(prev_scr)

    # Chunk-invariant loads.
    wih_x = wih_ref[0:1, :]             # (1, 4H)
    wih_p = wih_ref[1:2, :]             # (1, 4H)
    bias = b_ref[...]                   # (1, 4H)
    w_comb = wcomb_ref[...]             # (H, LP + 4H), bf16 (or f32 fallback)
    g_w = scal_ref[0]
    g_b = scal_ref[1]
    b_n = scal_ref[2]
    b_s = scal_ref[3]

    # Hoist all x-only gate work out of the serialized recurrence: the main
    # loop body below only contains ops on the true dependence chain.
    for t in range(t_chunk):
        xb_scr[t] = x_ref[t] * wih_x + bias          # (B, 4H)

    # Lane index pattern for packing [output | n | s] into one (B, 3) store.
    lane_idx = lax.broadcasted_iota(jnp.int32, (B, 3), 1)

    # Recurrent state carried in registers across the unrolled time loop.
    hw = hw_scr[...]                    # (B, 4H)
    c = c_scr[...]                      # (B, H)
    prev = prev_scr[...]                # (B, 1)

    for t in range(t_chunk):            # static, fully unrolled
        # gates_t = [x_t, out_{t-1}] @ W_ih^T + h_{t-1} @ W_hh^T + b
        gates = prev * wih_p + hw + xb_scr[t]        # (B, 4H)

        # One EUP launch for all four gates; g-gate weight columns were
        # pre-scaled by 2 so tanh(a) == 2*sigmoid(2a) - 1.
        sig = jax.nn.sigmoid(gates)
        i_t = sig[:, 0:H]
        f_t = sig[:, H:2 * H]
        g_t = 2.0 * sig[:, 2 * H:3 * H] - 1.0
        o_t = sig[:, 3 * H:4 * H]

        c_new = f_t * c + i_t * g_t
        h_new = o_t * jnp.tanh(c_new)                # (B, H)

        # Single bf16 MXU pass: h_t @ [W_lin^T | 0-pad | W_hh^T].
        fused = jnp.dot(h_new.astype(w_comb.dtype), w_comb,
                        preferred_element_type=jnp.float32)
        n_raw = fused[:, 0:1] + b_n                  # (B, 1)
        s_raw = fused[:, 1:2] + b_s                  # (B, 1)
        hw_new = fused[:, LP:LP + 4 * H]             # -> gates_{t+1}

        if t == 0:
            # Global step 0: n = s = 1 and the LSTM state stays zero.
            is_first = chunk == 0
            n_t = jnp.where(is_first, jnp.ones_like(n_raw), n_raw)
            s_t = jnp.where(is_first, jnp.ones_like(s_raw), s_raw)
            c = jnp.where(is_first, jnp.zeros_like(c_new), c_new)
            hw = jnp.where(is_first, jnp.zeros_like(hw_new), hw_new)
        else:
            n_t, s_t, c, hw = n_raw, s_raw, c_new, hw_new

        # output = (1-s)*(1/n)*softplus(n*linOut) + s*sigmoid(n*linOut)
        # linearGamma(x_t) is 2 VPU ops on a 1-lane vreg; kept inline (it is
        # off the dependence chain and not worth a dedicated scratch).
        lin_out = g_w * x_ref[t] + g_b               # (B, 1)
        z = n_t * lin_out
        e = jnp.exp(-jnp.abs(z))                     # shared exp for both terms
        r = pl.reciprocal(1.0 + e, approx=True)
        sig_z = jnp.where(z >= 0.0, r, 1.0 - r)      # sigmoid(z)
        softplus = jnp.maximum(z, 0.0) + jnp.log(1.0 + e)
        gamma_one = pl.reciprocal(n_t, approx=True) * softplus
        output = (1.0 - s_t) * gamma_one + s_t * sig_z   # (B, 1)

        # Pack [output | n | s] into one (B, 3) tile -> single store per step.
        packed = jnp.where(lane_idx == 0, output,
                           jnp.where(lane_idx == 1, n_t, s_t))
        out_ref[t] = packed
        prev = output

    # Persist recurrent state for the next chunk.
    hw_scr[...] = hw
    c_scr[...] = c
    prev_scr[...] = prev


def _pick_chunk(T, max_chunk):
    c = min(T, max_chunk)
    while T % c:
        c -= 1
    return c


def network_one_neuron_geadah(x, params, hidden_size=32, max_chunk=32,
                              mxu_bf16=True):
    """x: (T, B, 1) float32.  Returns (out (T,B,1), (n (T,B), s (T,B)))."""
    T, B, D = x.shape
    assert D == 1, "module is defined for input_dim == 1"
    H = hidden_size
    t_chunk = _pick_chunk(T, max_chunk)
    lane_pad = 128                      # W_lin's 2 columns padded to a full lane group

    # Pre-scale the g-gate columns by 2 so the kernel can use a single sigmoid
    # over all four gates (tanh(a) = 2*sigmoid(2a) - 1).
    col_scale = jnp.concatenate([
        jnp.ones((2 * H,), jnp.float32),
        jnp.full((H,), 2.0, jnp.float32),
        jnp.ones((H,), jnp.float32),
    ])

    wih_t = params["w_ih"].T.astype(jnp.float32) * col_scale[None, :]       # (2, 4H)
    bias = ((params["b_ih"] + params["b_hh"]).astype(jnp.float32)
            * col_scale).reshape(1, 4 * H)                                  # (1, 4H)
    whh_t = params["w_hh"].T.astype(jnp.float32) * col_scale[None, :]       # (H, 4H)
    wlin_t = params["w_lin"].T.astype(jnp.float32)                          # (H, 2)
    # n/s columns FIRST so they pop from the MXU result FIFO before hw (v5e).
    wcomb = jnp.concatenate(
        [wlin_t, jnp.zeros((H, lane_pad - 2), jnp.float32), whh_t], axis=1)  # (H, LP+4H)
    if mxu_bf16:
        wcomb = wcomb.astype(jnp.bfloat16)   # single bf16 MXU pass per step
    scal = jnp.stack([params["w_gamma"][0, 0], params["b_gamma"][0],
                      params["b_lin"][0], params["b_lin"][1]]).astype(jnp.float32)

    grid_spec = pltpu.PrefetchScalarGridSpec(
        num_scalar_prefetch=0,
        grid=(T // t_chunk,),
        in_specs=[
            pl.BlockSpec((t_chunk, B, 1), lambda i: (i, 0, 0)),             # x chunk
            pl.BlockSpec((2, 4 * H), lambda i: (0, 0)),                     # W_ih^T
            pl.BlockSpec((H, lane_pad + 4 * H), lambda i: (0, 0)),          # fused RHS
            pl.BlockSpec((1, 4 * H), lambda i: (0, 0)),                     # b_ih+b_hh
            pl.BlockSpec(memory_space=pltpu.MemorySpace.SMEM),              # scalars
        ],
        out_specs=pl.BlockSpec((t_chunk, B, 3), lambda i: (i, 0, 0)),
        scratch_shapes=[
            pltpu.VMEM((B, 4 * H), jnp.float32),           # h @ W_hh^T carry
            pltpu.VMEM((B, H), jnp.float32),               # c
            pltpu.VMEM((B, 1), jnp.float32),               # previous output
            pltpu.VMEM((t_chunk, B, 4 * H), jnp.float32),  # hoisted x-only gate terms
        ],
    )

    packed = pl.pallas_call(
        functools.partial(_geadah_kernel, H, t_chunk, lane_pad),
        out_shape=jax.ShapeDtypeStruct((T, B, 3), jnp.float32),
        grid_spec=grid_spec,
        compiler_params=pltpu.CompilerParams(
            dimension_semantics=("arbitrary",)),   # time chunks carry state
    )(x.astype(jnp.float32), wih_t, wcomb, bias, scal)

    out = packed[:, :, 0:1]                        # (T, B, 1)
    n_out = packed[:, :, 1]                        # (T, B)
    s_out = packed[:, :, 2]                        # (T, B)
    return out, (n_out, s_out)


def reference_forward(x, params, hidden_size):
    """Pure-JAX reference mirroring the PyTorch forward exactly (f32)."""
    T, B, _ = x.shape
    H = hidden_size
    h = jnp.zeros((B, H), jnp.float32)
    c = jnp.zeros((B, H), jnp.float32)
    hp = jax.lax.Precision.HIGHEST
    outs, ns, ss = [], [], []
    prev = None
    for i in range(T):
        x_i = x[i]                                    # (B, 1)
        if i > 0:
            combined = jnp.concatenate([x_i, prev], axis=1)        # (B, 2)
            gates = (jnp.dot(combined, params["w_ih"].T, precision=hp)
                     + params["b_ih"]
                     + jnp.dot(h, params["w_hh"].T, precision=hp)
                     + params["b_hh"])
            i_t = jax.nn.sigmoid(gates[:, 0:H])
            f_t = jax.nn.sigmoid(gates[:, H:2 * H])
            g_t = jnp.tanh(gates[:, 2 * H:3 * H])
            o_t = jax.nn.sigmoid(gates[:, 3 * H:4 * H])
            c = f_t * c + i_t * g_t
            h = o_t * jnp.tanh(c)
            lin = jnp.dot(h, params["w_lin"].T, precision=hp) + params["b_lin"]
            n_t, s_t = lin[:, 0], lin[:, 1]
        else:
            n_t = jnp.ones((B,), jnp.float32)
            s_t = jnp.ones((B,), jnp.float32)
        lin_out = (jnp.dot(x_i, params["w_gamma"].T, precision=hp)
                   + params["b_gamma"]).reshape(-1)                # (B,)
        gamma_one = (1.0 / n_t) * jnp.log(1.0 + jnp.exp(n_t * lin_out))
        gamma_two = jax.nn.sigmoid(n_t * lin_out)
        output = ((1.0 - s_t) * gamma_one + s_t * gamma_two).reshape(-1, 1)
        outs.append(output)
        ns.append(n_t)
        ss.append(s_t)
        prev = output
    return jnp.stack(outs, 0), (jnp.stack(ns, 0), jnp.stack(ss, 0))


if __name__ == "__main__":
    T, B, D, H = 32, 8, 1, 32
    key = jax.random.PRNGKey(0)
    keys = jax.random.split(key, 9)
    scale = 1.0 / float(jnp.sqrt(H))

    # Deterministic synthetic parameters (PyTorch-style uniform init ranges).
    # b_lin's first entry is offset by +1 so n_t stays away from the 1/n
    # singularity that the module's own math has (keeps the comparison between
    # kernel and reference well conditioned).
    params = {
        "w_ih": jax.random.uniform(keys[0], (4 * H, 2), jnp.float32, -scale, scale),
        "w_hh": jax.random.uniform(keys[1], (4 * H, H), jnp.float32, -scale, scale),
        "b_ih": jax.random.uniform(keys[2], (4 * H,), jnp.float32, -scale, scale),
        "b_hh": jax.random.uniform(keys[3], (4 * H,), jnp.float32, -scale, scale),
        "w_lin": jax.random.uniform(keys[4], (2, H), jnp.float32, -scale, scale),
        "b_lin": (jnp.array([1.0, 0.0], jnp.float32)
                  + jax.random.uniform(keys[5], (2,), jnp.float32, -scale, scale)),
        "w_gamma": jax.random.uniform(keys[6], (1, 1), jnp.float32, -1.0, 1.0),
        "b_gamma": jax.random.uniform(keys[7], (1,), jnp.float32, -1.0, 1.0),
    }
    x = jax.random.normal(keys[8], (T, B, D), jnp.float32)

    out, (n_out, s_out) = network_one_neuron_geadah(x, params, hidden_size=H)
    jax.block_until_ready((out, n_out, s_out))

    assert out.shape == (T, B, 1)
    assert n_out.shape == (T, B)
    assert s_out.shape == (T, B)

    ref_out, (ref_n, ref_s) = reference_forward(x, params, H)
    # Tolerance is slightly looser than a pure-f32 comparison because the
    # kernel uses bf16 MXU operands (f32 accumulation, K=32) and EUP approx
    # reciprocals (~2^-12 rel error); semantics are otherwise identical.
    for got, ref in ((out, ref_out), (n_out, ref_n), (s_out, ref_s)):
        assert jnp.allclose(got, ref, rtol=2e-2, atol=1e-2), (
            "mismatch vs reference", float(jnp.max(jnp.abs(got - ref))))

    print("KERNEL_OK")
</pallas_src>

<mosaic_0001>
module attributes {stable_mosaic.version = 11 : i64} {
  func.func @_geadah_kernel(%arg0: i32, %arg1: memref<32x8x1xf32, #tpu.memory_space<vmem>>, %arg2: memref<2x128xf32, #tpu.memory_space<vmem>>, %arg3: memref<32x256xbf16, #tpu.memory_space<vmem>>, %arg4: memref<1x128xf32, #tpu.memory_space<vmem>>, %arg5: memref<4xf32, #tpu.memory_space<smem>>, %arg6: memref<32x8x3xf32, #tpu.memory_space<vmem>>, %arg7: memref<8x128xf32, #tpu.memory_space<vmem>>, %arg8: memref<8x32xf32, #tpu.memory_space<vmem>>, %arg9: memref<8x1xf32, #tpu.memory_space<vmem>>, %arg10: memref<32x8x128xf32, #tpu.memory_space<vmem>>) attributes {dimension_semantics = [#tpu.dimension_semantics<arbitrary>], iteration_bounds = array<i64: 1>, scalar_prefetch = 0 : i64, scratch_operands = 4 : i64, tpu.core_type = #tpu.core_type<tc>, window_params = [{transform_indices = @transform_0, window_bounds = array<i64: 32, 8, 1>}, {pipeline_mode = #tpu.pipeline_mode<synchronous>, transform_indices = @transform_1, window_bounds = array<i64: 2, 128>}, {pipeline_mode = #tpu.pipeline_mode<synchronous>, transform_indices = @transform_2, window_bounds = array<i64: 32, 256>}, {pipeline_mode = #tpu.pipeline_mode<synchronous>, transform_indices = @transform_3, window_bounds = array<i64: 1, 128>}, {transform_indices = @transform_4, window_bounds = array<i64: 4>}, {transform_indices = @transform_5, window_bounds = array<i64: 32, 8, 3>}]} {
    %c0_i32 = arith.constant 0 : i32
    %0 = arith.cmpi eq, %arg0, %c0_i32 : i32
    %1 = arith.extui %0 : i1 to i32
    %c0_i32_0 = arith.constant 0 : i32
    %2 = arith.cmpi ne, %1, %c0_i32_0 : i32
    scf.if %2 {
      %cst_892 = arith.constant 0.000000e+00 : f32
      %2939 = vector.broadcast %cst_892 : f32 to vector<8x128xf32>
      %c0_893 = arith.constant 0 : index
      %c0_894 = arith.constant 0 : index
      %2940 = vector.load %arg7[%c0_893, %c0_894] : memref<8x128xf32, #tpu.memory_space<vmem>>, vector<8x128xf32>
      tpu.vector_store %arg7[%c0_893, %c0_894], %2939 {strides = array<i32>} : memref<8x128xf32, #tpu.memory_space<vmem>>, vector<8x128xf32>,
      %cst_895 = arith.constant 0.000000e+00 : f32
      %2941 = vector.broadcast %cst_895 : f32 to vector<8x32xf32>
      %c0_896 = arith.constant 0 : index
      %c0_897 = arith.constant 0 : index
      %2942 = vector.load %arg8[%c0_896, %c0_897] : memref<8x32xf32, #tpu.memory_space<vmem>>, vector<8x32xf32>
      tpu.vector_store %arg8[%c0_896, %c0_897], %2941 {strides = array<i32>} : memref<8x32xf32, #tpu.memory_space<vmem>>, vector<8x32xf32>,
      %cst_898 = arith.constant 0.000000e+00 : f32
      %2943 = vector.broadcast %cst_898 : f32 to vector<8x1xf32>
      %c0_899 = arith.constant 0 : index
      %c0_900 = arith.constant 0 : index
      %2944 = vector.load %arg9[%c0_899, %c0_900] : memref<8x1xf32, #tpu.memory_space<vmem>>, vector<8x1xf32>
      tpu.vector_store %arg9[%c0_899, %c0_900], %2943 {strides = array<i32>} : memref<8x1xf32, #tpu.memory_space<vmem>>, vector<8x1xf32>,
    } else {
    }
    %c0 = arith.constant 0 : index
    %c0_1 = arith.constant 0 : index
    %3 = vector.load %arg2[%c0, %c0_1] : memref<2x128xf32, #tpu.memory_space<vmem>>, vector<1x128xf32>
    %c1 = arith.constant 1 : index
    %c0_2 = arith.constant 0 : index
    %4 = vector.load %arg2[%c1, %c0_2] : memref<2x128xf32, #tpu.memory_space<vmem>>, vector<1x128xf32>
    %c0_3 = arith.constant 0 : index
    %c0_4 = arith.constant 0 : index
    %5 = vector.load %arg4[%c0_3, %c0_4] : memref<1x128xf32, #tpu.memory_space<vmem>>, vector<1x128xf32>
    %c0_5 = arith.constant 0 : index
    %c0_6 = arith.constant 0 : index
    %6 = vector.load %arg3[%c0_5, %c0_6] : memref<32x256xbf16, #tpu.memory_space<vmem>>, vector<32x256xbf16>
    %c0_7 = arith.constant 0 : index
    %7 = memref.load %arg5[%c0_7] : memref<4xf32, #tpu.memory_space<smem>>
    %c1_8 = arith.constant 1 : index
    %8 = memref.load %arg5[%c1_8] : memref<4xf32, #tpu.memory_space<smem>>
    %c2 = arith.constant 2 : index
    %9 = memref.load %arg5[%c2] : memref<4xf32, #tpu.memory_space<smem>>
    %c3 = arith.constant 3 : index
    %10 = memref.load %arg5[%c3] : memref<4xf32, #tpu.memory_space<smem>>
    %c0_9 = arith.constant 0 : index
    %c0_10 = arith.constant 0 : index
    %c0_11 = arith.constant 0 : index
    %11 = vector.load %arg1[%c0_9, %c0_10, %c0_11] : memref<32x8x1xf32, #tpu.memory_space<vmem>>, vector<1x8x1xf32>
    %12 = vector.shape_cast %11 : vector<1x8x1xf32> to vector<8x1xf32>
    %13 = vector.broadcast %12 : vector<8x1xf32> to vector<8x128xf32>
    %14 = vector.broadcast %3 : vector<1x128xf32> to vector<8x128xf32>
    %15 = arith.mulf %13, %14 : vector<8x128xf32>
    %16 = vector.broadcast %5 : vector<1x128xf32> to vector<8x128xf32>
    %17 = arith.addf %15, %16 : vector<8x128xf32>
    %c0_12 = arith.constant 0 : index
    %c0_13 = arith.constant 0 : index
    %c0_14 = arith.constant 0 : index
    %18 = vector.load %arg10[%c0_12, %c0_13, %c0_14] : memref<32x8x128xf32, #tpu.memory_space<vmem>>, vector<1x8x128xf32>
    %19 = vector.shape_cast %18 : vector<1x8x128xf32> to vector<8x128xf32>
    %20 = vector.shape_cast %17 : vector<8x128xf32> to vector<1x8x128xf32>
    tpu.vector_store %arg10[%c0_12, %c0_13, %c0_14], %20 {strides = array<i32>} : memref<32x8x128xf32, #tpu.memory_space<vmem>>, vector<1x8x128xf32>,
    %c1_15 = arith.constant 1 : index
    %c0_16 = arith.constant 0 : index
    %c0_17 = arith.constant 0 : index
    %21 = vector.load %arg1[%c1_15, %c0_16, %c0_17] : memref<32x8x1xf32, #tpu.memory_space<vmem>>, vector<1x8x1xf32>
    %22 = vector.shape_cast %21 : vector<1x8x1xf32> to vector<8x1xf32>
    %23 = vector.broadcast %22 : vector<8x1xf32> to vector<8x128xf32>
    %24 = vector.broadcast %3 : vector<1x128xf32> to vector<8x128xf32>
    %25 = arith.mulf %23, %24 : vector<8x128xf32>
    %26 = vector.broadcast %5 : vector<1x128xf32> to vector<8x128xf32>
    %27 = arith.addf %25, %26 : vector<8x128xf32>
    %c1_18 = arith.constant 1 : index
    %c0_19 = arith.constant 0 : index
    %c0_20 = arith.constant 0 : index
    %28 = vector.load %arg10[%c1_18, %c0_19, %c0_20] : memref<32x8x128xf32, #tpu.memory_space<vmem>>, vector<1x8x128xf32>
    %29 = vector.shape_cast %28 : vector<1x8x128xf32> to vector<8x128xf32>
    %30 = vector.shape_cast %27 : vector<8x128xf32> to vector<1x8x128xf32>
    tpu.vector_store %arg10[%c1_18, %c0_19, %c0_20], %30 {strides = array<i32>} : memref<32x8x128xf32, #tpu.memory_space<vmem>>, vector<1x8x128xf32>,
    %c2_21 = arith.constant 2 : index
    %c0_22 = arith.constant 0 : index
    %c0_23 = arith.constant 0 : index
    %31 = vector.load %arg1[%c2_21, %c0_22, %c0_23] : memref<32x8x1xf32, #tpu.memory_space<vmem>>, vector<1x8x1xf32>
    %32 = vector.shape_cast %31 : vector<1x8x1xf32> to vector<8x1xf32>
    %33 = vector.broadcast %32 : vector<8x1xf32> to vector<8x128xf32>
    %34 = vector.broadcast %3 : vector<1x128xf32> to vector<8x128xf32>
    %35 = arith.mulf %33, %34 : vector<8x128xf32>
    %36 = vector.broadcast %5 : vector<1x128xf32> to vector<8x128xf32>
    %37 = arith.addf %35, %36 : vector<8x128xf32>
    %c2_24 = arith.constant 2 : index
    %c0_25 = arith.constant 0 : index
    %c0_26 = arith.constant 0 : index
    %38 = vector.load %arg10[%c2_24, %c0_25, %c0_26] : memref<32x8x128xf32, #tpu.memory_space<vmem>>, vector<1x8x128xf32>
    %39 = vector.shape_cast %38 : vector<1x8x128xf32> to vector<8x128xf32>
    %40 = vector.shape_cast %37 : vector<8x128xf32> to vector<1x8x128xf32>
    tpu.vector_store %arg10[%c2_24, %c0_25, %c0_26], %40 {strides = array<i32>} : memref<32x8x128xf32, #tpu.memory_space<vmem>>, vector<1x8x128xf32>,
    %c3_27 = arith.constant 3 : index
    %c0_28 = arith.constant 0 : index
    %c0_29 = arith.constant 0 : index
    %41 = vector.load %arg1[%c3_27, %c0_28, %c0_29] : memref<32x8x1xf32, #tpu.memory_space<vmem>>, vector<1x8x1xf32>
    %42 = vector.shape_cast %41 : vector<1x8x1xf32> to vector<8x1xf32>
    %43 = vector.broadcast %42 : vector<8x1xf32> to vector<8x128xf32>
    %44 = vector.broadcast %3 : vector<1x128xf32> to vector<8x128xf32>
    %45 = arith.mulf %43, %44 : vector<8x128xf32>
    %46 = vector.broadcast %5 : vector<1x128xf32> to vector<8x128xf32>
    %47 = arith.addf %45, %46 : vector<8x128xf32>
    %c3_30 = arith.constant 3 : index
    %c0_31 = arith.constant 0 : index
    %c0_32 = arith.constant 0 : index
    %48 = vector.load %arg10[%c3_30, %c0_31, %c0_32] : memref<32x8x128xf32, #tpu.memory_space<vmem>>, vector<1x8x128xf32>
    %49 = vector.shape_cast %48 : vector<1x8x128xf32> to vector<8x128xf32>
    %50 = vector.shape_cast %47 : vector<8x128xf32> to vector<1x8x128xf32>
    tpu.vector_store %arg10[%c3_30, %c0_31, %c0_32], %50 {strides = array<i32>} : memref<32x8x128xf32, #tpu.memory_space<vmem>>, vector<1x8x128xf32>,
    %c4 = arith.constant 4 : index
    %c0_33 = arith.constant 0 : index
    %c0_34 = arith.constant 0 : index
    %51 = vector.load %arg1[%c4, %c0_33, %c0_34] : memref<32x8x1xf32, #tpu.memory_space<vmem>>, vector<1x8x1xf32>
    %52 = vector.shape_cast %51 : vector<1x8x1xf32> to vector<8x1xf32>
    %53 = vector.broadcast %52 : vector<8x1xf32> to vector<8x128xf32>
    %54 = vector.broadcast %3 : vector<1x128xf32> to vector<8x128xf32>
    %55 = arith.mulf %53, %54 : vector<8x128xf32>
    %56 = vector.broadcast %5 : vector<1x128xf32> to vector<8x128xf32>
    %57 = arith.addf %55, %56 : vector<8x128xf32>
    %c4_35 = arith.constant 4 : index
    %c0_36 = arith.constant 0 : index
    %c0_37 = arith.constant 0 : index
    %58 = vector.load %arg10[%c4_35, %c0_36, %c0_37] : memref<32x8x128xf32, #tpu.memory_space<vmem>>, vector<1x8x128xf32>
    %59 = vector.shape_cast %58 : vector<1x8x128xf32> to vector<8x128xf32>
    %60 = vector.shape_cast %57 : vector<8x128xf32> to vector<1x8x128xf32>
    tpu.vector_store %arg10[%c4_35, %c0_36, %c0_37], %60 {strides = array<i32>} : memref<32x8x128xf32, #tpu.memory_space<vmem>>, vector<1x8x128xf32>,
    %c5 = arith.constant 5 : index
    %c0_38 = arith.constant 0 : index
    %c0_39 = arith.constant 0 : index
    %61 = vector.load %arg1[%c5, %c0_38, %c0_39] : memref<32x8x1xf32, #tpu.memory_space<vmem>>, vector<1x8x1xf32>
    %62 = vector.shape_cast %61 : vector<1x8x1xf32> to vector<8x1xf32>
    %63 = vector.broadcast %62 : vector<8x1xf32> to vector<8x128xf32>
    %64 = vector.broadcast %3 : vector<1x128xf32> to vector<8x128xf32>
    %65 = arith.mulf %63, %64 : vector<8x128xf32>
    %66 = vector.broadcast %5 : vector<1x128xf32> to vector<8x128xf32>
    %67 = arith.addf %65, %66 : vector<8x128xf32>
    %c5_40 = arith.constant 5 : index
    %c0_41 = arith.constant 0 : index
    %c0_42 = arith.constant 0 : index
    %68 = vector.load %arg10[%c5_40, %c0_41, %c0_42] : memref<32x8x128xf32, #tpu.memory_space<vmem>>, vector<1x8x128xf32>
    %69 = vector.shape_cast %68 : vector<1x8x128xf32> to vector<8x128xf32>
    %70 = vector.shape_cast %67 : vector<8x128xf32> to vector<1x8x128xf32>
    tpu.vector_store %arg10[%c5_40, %c0_41, %c0_42], %70 {strides = array<i32>} : memref<32x8x128xf32, #tpu.memory_space<vmem>>, vector<1x8x128xf32>,
    %c6 = arith.constant 6 : index
    %c0_43 = arith.constant 0 : index
    %c0_44 = arith.constant 0 : index
    %71 = vector.load %arg1[%c6, %c0_43, %c0_44] : memref<32x8x1xf32, #tpu.memory_space<vmem>>, vector<1x8x1xf32>
    %72 = vector.shape_cast %71 : vector<1x8x1xf32> to vector<8x1xf32>
    %73 = vector.broadcast %72 : vector<8x1xf32> to vector<8x128xf32>
    %74 = vector.broadcast %3 : vector<1x128xf32> to vector<8x128xf32>
    %75 = arith.mulf %73, %74 : vector<8x128xf32>
    %76 = vector.broadcast %5 : vector<1x128xf32> to vector<8x128xf32>
    %77 = arith.addf %75, %76 : vector<8x128xf32>
    %c6_45 = arith.constant 6 : index
    %c0_46 = arith.constant 0 : index
    %c0_47 = arith.constant 0 : index
    %78 = vector.load %arg10[%c6_45, %c0_46, %c0_47] : memref<32x8x128xf32, #tpu.memory_space<vmem>>, vector<1x8x128xf32>
    %79 = vector.shape_cast %78 : vector<1x8x128xf32> to vector<8x128xf32>
    %80 = vector.shape_cast %77 : vector<8x128xf32> to vector<1x8x128xf32>
    tpu.vector_store %arg10[%c6_45, %c0_46, %c0_47], %80 {strides = array<i32>} : memref<32x8x128xf32, #tpu.memory_space<vmem>>, vector<1x8x128xf32>,
    %c7 = arith.constant 7 : index
    %c0_48 = arith.constant 0 : index
    %c0_49 = arith.constant 0 : index
    %81 = vector.load %arg1[%c7, %c0_48, %c0_49] : memref<32x8x1xf32, #tpu.memory_space<vmem>>, vector<1x8x1xf32>
    %82 = vector.shape_cast %81 : vector<1x8x1xf32> to vector<8x1xf32>
    %83 = vector.broadcast %82 : vector<8x1xf32> to vector<8x128xf32>
    %84 = vector.broadcast %3 : vector<1x128xf32> to vector<8x128xf32>
    %85 = arith.mulf %83, %84 : vector<8x128xf32>
    %86 = vector.broadcast %5 : vector<1x128xf32> to vector<8x128xf32>
    %87 = arith.addf %85, %86 : vector<8x128xf32>
    %c7_50 = arith.constant 7 : index
    %c0_51 = arith.constant 0 : index
    %c0_52 = arith.constant 0 : index
    %88 = vector.load %arg10[%c7_50, %c0_51, %c0_52] : memref<32x8x128xf32, #tpu.memory_space<vmem>>, vector<1x8x128xf32>
    %89 = vector.shape_cast %88 : vector<1x8x128xf32> to vector<8x128xf32>
    %90 = vector.shape_cast %87 : vector<8x128xf32> to vector<1x8x128xf32>
    tpu.vector_store %arg10[%c7_50, %c0_51, %c0_52], %90 {strides = array<i32>} : memref<32x8x128xf32, #tpu.memory_space<vmem>>, vector<1x8x128xf32>,
    %c8 = arith.constant 8 : index
    %c0_53 = arith.constant 0 : index
    %c0_54 = arith.constant 0 : index
    %91 = vector.load %arg1[%c8, %c0_53, %c0_54] : memref<32x8x1xf32, #tpu.memory_space<vmem>>, vector<1x8x1xf32>
    %92 = vector.shape_cast %91 : vector<1x8x1xf32> to vector<8x1xf32>
    %93 = vector.broadcast %92 : vector<8x1xf32> to vector<8x128xf32>
    %94 = vector.broadcast %3 : vector<1x128xf32> to vector<8x128xf32>
    %95 = arith.mulf %93, %94 : vector<8x128xf32>
    %96 = vector.broadcast %5 : vector<1x128xf32> to vector<8x128xf32>
    %97 = arith.addf %95, %96 : vector<8x128xf32>
    %c8_55 = arith.constant 8 : index
    %c0_56 = arith.constant 0 : index
    %c0_57 = arith.constant 0 : index
    %98 = vector.load %arg10[%c8_55, %c0_56, %c0_57] : memref<32x8x128xf32, #tpu.memory_space<vmem>>, vector<1x8x128xf32>
    %99 = vector.shape_cast %98 : vector<1x8x128xf32> to vector<8x128xf32>
    %100 = vector.shape_cast %97 : vector<8x128xf32> to vector<1x8x128xf32>
    tpu.vector_store %arg10[%c8_55, %c0_56, %c0_57], %100 {strides = array<i32>} : memref<32x8x128xf32, #tpu.memory_space<vmem>>, vector<1x8x128xf32>,
    %c9 = arith.constant 9 : index
    %c0_58 = arith.constant 0 : index
    %c0_59 = arith.constant 0 : index
    %101 = vector.load %arg1[%c9, %c0_58, %c0_59] : memref<32x8x1xf32, #tpu.memory_space<vmem>>, vector<1x8x1xf32>
    %102 = vector.shape_cast %101 : vector<1x8x1xf32> to vector<8x1xf32>
    %103 = vector.broadcast %102 : vector<8x1xf32> to vector<8x128xf32>
    %104 = vector.broadcast %3 : vector<1x128xf32> to vector<8x128xf32>
    %105 = arith.mulf %103, %104 : vector<8x128xf32>
    %106 = vector.broadcast %5 : vector<1x128xf32> to vector<8x128xf32>
    %107 = arith.addf %105, %106 : vector<8x128xf32>
    %c9_60 = arith.constant 9 : index
    %c0_61 = arith.constant 0 : index
    %c0_62 = arith.constant 0 : index
    %108 = vector.load %arg10[%c9_60, %c0_61, %c0_62] : memref<32x8x128xf32, #tpu.memory_space<vmem>>, vector<1x8x128xf32>
    %109 = vector.shape_cast %108 : vector<1x8x128xf32> to vector<8x128xf32>
    %110 = vector.shape_cast %107 : vector<8x128xf32> to vector<1x8x128xf32>
    tpu.vector_store %arg10[%c9_60, %c0_61, %c0_62], %110 {strides = array<i32>} : memref<32x8x128xf32, #tpu.memory_space<vmem>>, vector<1x8x128xf32>,
    %c10 = arith.constant 10 : index
    %c0_63 = arith.constant 0 : index
    %c0_64 = arith.constant 0 : index
    %111 = vector.load %arg1[%c10, %c0_63, %c0_64] : memref<32x8x1xf32, #tpu.memory_space<vmem>>, vector<1x8x1xf32>
    %112 = vector.shape_cast %111 : vector<1x8x1xf32> to vector<8x1xf32>
    %113 = vector.broadcast %112 : vector<8x1xf32> to vector<8x128xf32>
    %114 = vector.broadcast %3 : vector<1x128xf32> to vector<8x128xf32>
    %115 = arith.mulf %113, %114 : vector<8x128xf32>
    %116 = vector.broadcast %5 : vector<1x128xf32> to vector<8x128xf32>
    %117 = arith.addf %115, %116 : vector<8x128xf32>
    %c10_65 = arith.constant 10 : index
    %c0_66 = arith.constant 0 : index
    %c0_67 = arith.constant 0 : index
    %118 = vector.load %arg10[%c10_65, %c0_66, %c0_67] : memref<32x8x128xf32, #tpu.memory_space<vmem>>, vector<1x8x128xf32>
    %119 = vector.shape_cast %118 : vector<1x8x128xf32> to vector<8x128xf32>
    %120 = vector.shape_cast %117 : vector<8x128xf32> to vector<1x8x128xf32>
    tpu.vector_store %arg10[%c10_65, %c0_66, %c0_67], %120 {strides = array<i32>} : memref<32x8x128xf32, #tpu.memory_space<vmem>>, vector<1x8x128xf32>,
    %c11 = arith.constant 11 : index
    %c0_68 = arith.constant 0 : index
    %c0_69 = arith.constant 0 : index
    %121 = vector.load %arg1[%c11, %c0_68, %c0_69] : memref<32x8x1xf32, #tpu.memory_space<vmem>>, vector<1x8x1xf32>
    %122 = vector.shape_cast %121 : vector<1x8x1xf32> to vector<8x1xf32>
    %123 = vector.broadcast %122 : vector<8x1xf32> to vector<8x128xf32>
    %124 = vector.broadcast %3 : vector<1x128xf32> to vector<8x128xf32>
    %125 = arith.mulf %123, %124 : vector<8x128xf32>
    %126 = vector.broadcast %5 : vector<1x128xf32> to vector<8x128xf32>
    %127 = arith.addf %125, %126 : vector<8x128xf32>
    %c11_70 = arith.constant 11 : index
    %c0_71 = arith.constant 0 : index
    %c0_72 = arith.constant 0 : index
    %128 = vector.load %arg10[%c11_70, %c0_71, %c0_72] : memref<32x8x128xf32, #tpu.memory_space<vmem>>, vector<1x8x128xf32>
    %129 = vector.shape_cast %128 : vector<1x8x128xf32> to vector<8x128xf32>
    %130 = vector.shape_cast %127 : vector<8x128xf32> to vector<1x8x128xf32>
    tpu.vector_store %arg10[%c11_70, %c0_71, %c0_72], %130 {strides = array<i32>} : memref<32x8x128xf32, #tpu.memory_space<vmem>>, vector<1x8x128xf32>,
    %c12 = arith.constant 12 : index
    %c0_73 = arith.constant 0 : index
    %c0_74 = arith.constant 0 : index
    %131 = vector.load %arg1[%c12, %c0_73, %c0_74] : memref<32x8x1xf32, #tpu.memory_space<vmem>>, vector<1x8x1xf32>
    %132 = vector.shape_cast %131 : vector<1x8x1xf32> to vector<8x1xf32>
    %133 = vector.broadcast %132 : vector<8x1xf32> to vector<8x128xf32>
    %134 = vector.broadcast %3 : vector<1x128xf32> to vector<8x128xf32>
    %135 = arith.mulf %133, %134 : vector<8x128xf32>
    %136 = vector.broadcast %5 : vector<1x128xf32> to vector<8x128xf32>
    %137 = arith.addf %135, %136 : vector<8x128xf32>
    %c12_75 = arith.constant 12 : index
    %c0_76 = arith.constant 0 : index
    %c0_77 = arith.constant 0 : index
    %138 = vector.load %arg10[%c12_75, %c0_76, %c0_77] : memref<32x8x128xf32, #tpu.memory_space<vmem>>, vector<1x8x128xf32>
    %139 = vector.shape_cast %138 : vector<1x8x128xf32> to vector<8x128xf32>
    %140 = vector.shape_cast %137 : vector<8x128xf32> to vector<1x8x128xf32>
    tpu.vector_store %arg10[%c12_75, %c0_76, %c0_77], %140 {strides = array<i32>} : memref<32x8x128xf32, #tpu.memory_space<vmem>>, vector<1x8x128xf32>,
    %c13 = arith.constant 13 : index
    %c0_78 = arith.constant 0 : index
    %c0_79 = arith.constant 0 : index
    %141 = vector.load %arg1[%c13, %c0_78, %c0_79] : memref<32x8x1xf32, #tpu.memory_space<vmem>>, vector<1x8x1xf32>
    %142 = vector.shape_cast %141 : vector<1x8x1xf32> to vector<8x1xf32>
    %143 = vector.broadcast %142 : vector<8x1xf32> to vector<8x128xf32>
    %144 = vector.broadcast %3 : vector<1x128xf32> to vector<8x128xf32>
    %145 = arith.mulf %143, %144 : vector<8x128xf32>
    %146 = vector.broadcast %5 : vector<1x128xf32> to vector<8x128xf32>
    %147 = arith.addf %145, %146 : vector<8x128xf32>
    %c13_80 = arith.constant 13 : index
    %c0_81 = arith.constant 0 : index
    %c0_82 = arith.constant 0 : index
    %148 = vector.load %arg10[%c13_80, %c0_81, %c0_82] : memref<32x8x128xf32, #tpu.memory_space<vmem>>, vector<1x8x128xf32>
    %149 = vector.shape_cast %148 : vector<1x8x128xf32> to vector<8x128xf32>
    %150 = vector.shape_cast %147 : vector<8x128xf32> to vector<1x8x128xf32>
    tpu.vector_store %arg10[%c13_80, %c0_81, %c0_82], %150 {strides = array<i32>} : memref<32x8x128xf32, #tpu.memory_space<vmem>>, vector<1x8x128xf32>,
    %c14 = arith.constant 14 : index
    %c0_83 = arith.constant 0 : index
    %c0_84 = arith.constant 0 : index
    %151 = vector.load %arg1[%c14, %c0_83, %c0_84] : memref<32x8x1xf32, #tpu.memory_space<vmem>>, vector<1x8x1xf32>
    %152 = vector.shape_cast %151 : vector<1x8x1xf32> to vector<8x1xf32>
    %153 = vector.broadcast %152 : vector<8x1xf32> to vector<8x128xf32>
    %154 = vector.broadcast %3 : vector<1x128xf32> to vector<8x128xf32>
    %155 = arith.mulf %153, %154 : vector<8x128xf32>
    %156 = vector.broadcast %5 : vector<1x128xf32> to vector<8x128xf32>
    %157 = arith.addf %155, %156 : vector<8x128xf32>
    %c14_85 = arith.constant 14 : index
    %c0_86 = arith.constant 0 : index
    %c0_87 = arith.constant 0 : index
    %158 = vector.load %arg10[%c14_85, %c0_86, %c0_87] : memref<32x8x128xf32, #tpu.memory_space<vmem>>, vector<1x8x128xf32>
    %159 = vector.shape_cast %158 : vector<1x8x128xf32> to vector<8x128xf32>
    %160 = vector.shape_cast %157 : vector<8x128xf32> to vector<1x8x128xf32>
    tpu.vector_store %arg10[%c14_85, %c0_86, %c0_87], %160 {strides = array<i32>} : memref<32x8x128xf32, #tpu.memory_space<vmem>>, vector<1x8x128xf32>,
    %c15 = arith.constant 15 : index
    %c0_88 = arith.constant 0 : index
    %c0_89 = arith.constant 0 : index
    %161 = vector.load %arg1[%c15, %c0_88, %c0_89] : memref<32x8x1xf32, #tpu.memory_space<vmem>>, vector<1x8x1xf32>
    %162 = vector.shape_cast %161 : vector<1x8x1xf32> to vector<8x1xf32>
    %163 = vector.broadcast %162 : vector<8x1xf32> to vector<8x128xf32>
    %164 = vector.broadcast %3 : vector<1x128xf32> to vector<8x128xf32>
    %165 = arith.mulf %163, %164 : vector<8x128xf32>
    %166 = vector.broadcast %5 : vector<1x128xf32> to vector<8x128xf32>
    %167 = arith.addf %165, %166 : vector<8x128xf32>
    %c15_90 = arith.constant 15 : index
    %c0_91 = arith.constant 0 : index
    %c0_92 = arith.constant 0 : index
    %168 = vector.load %arg10[%c15_90, %c0_91, %c0_92] : memref<32x8x128xf32, #tpu.memory_space<vmem>>, vector<1x8x128xf32>
    %169 = vector.shape_cast %168 : vector<1x8x128xf32> to vector<8x128xf32>
    %170 = vector.shape_cast %167 : vector<8x128xf32> to vector<1x8x128xf32>
    tpu.vector_store %arg10[%c15_90, %c0_91, %c0_92], %170 {strides = array<i32>} : memref<32x8x128xf32, #tpu.memory_space<vmem>>, vector<1x8x128xf32>,
    %c16 = arith.constant 16 : index
    %c0_93 = arith.constant 0 : index
    %c0_94 = arith.constant 0 : index
    %171 = vector.load %arg1[%c16, %c0_93, %c0_94] : memref<32x8x1xf32, #tpu.memory_space<vmem>>, vector<1x8x1xf32>
    %172 = vector.shape_cast %171 : vector<1x8x1xf32> to vector<8x1xf32>
    %173 = vector.broadcast %172 : vector<8x1xf32> to vector<8x128xf32>
    %174 = vector.broadcast %3 : vector<1x128xf32> to vector<8x128xf32>
    %175 = arith.mulf %173, %174 : vector<8x128xf32>
    %176 = vector.broadcast %5 : vector<1x128xf32> to vector<8x128xf32>
    %177 = arith.addf %175, %176 : vector<8x128xf32>
    %c16_95 = arith.constant 16 : index
    %c0_96 = arith.constant 0 : index
    %c0_97 = arith.constant 0 : index
    %178 = vector.load %arg10[%c16_95, %c0_96, %c0_97] : memref<32x8x128xf32, #tpu.memory_space<vmem>>, vector<1x8x128xf32>
    %179 = vector.shape_cast %178 : vector<1x8x128xf32> to vector<8x128xf32>
    %180 = vector.shape_cast %177 : vector<8x128xf32> to vector<1x8x128xf32>
    tpu.vector_store %arg10[%c16_95, %c0_96, %c0_97], %180 {strides = array<i32>} : memref<32x8x128xf32, #tpu.memory_space<vmem>>, vector<1x8x128xf32>,
    %c17 = arith.constant 17 : index
    %c0_98 = arith.constant 0 : index
    %c0_99 = arith.constant 0 : index
    %181 = vector.load %arg1[%c17, %c0_98, %c0_99] : memref<32x8x1xf32, #tpu.memory_space<vmem>>, vector<1x8x1xf32>
    %182 = vector.shape_cast %181 : vector<1x8x1xf32> to vector<8x1xf32>
    %183 = vector.broadcast %182 : vector<8x1xf32> to vector<8x128xf32>
    %184 = vector.broadcast %3 : vector<1x128xf32> to vector<8x128xf32>
    %185 = arith.mulf %183, %184 : vector<8x128xf32>
    %186 = vector.broadcast %5 : vector<1x128xf32> to vector<8x128xf32>
    %187 = arith.addf %185, %186 : vector<8x128xf32>
    %c17_100 = arith.constant 17 : index
    %c0_101 = arith.constant 0 : index
    %c0_102 = arith.constant 0 : index
    %188 = vector.load %arg10[%c17_100, %c0_101, %c0_102] : memref<32x8x128xf32, #tpu.memory_space<vmem>>, vector<1x8x128xf32>
    %189 = vector.shape_cast %188 : vector<1x8x128xf32> to vector<8x128xf32>
    %190 = vector.shape_cast %187 : vector<8x128xf32> to vector<1x8x128xf32>
    tpu.vector_store %arg10[%c17_100, %c0_101, %c0_102], %190 {strides = array<i32>} : memref<32x8x128xf32, #tpu.memory_space<vmem>>, vector<1x8x128xf32>,
    %c18 = arith.constant 18 : index
    %c0_103 = arith.constant 0 : index
    %c0_104 = arith.constant 0 : index
    %191 = vector.load %arg1[%c18, %c0_103, %c0_104] : memref<32x8x1xf32, #tpu.memory_space<vmem>>, vector<1x8x1xf32>
    %192 = vector.shape_cast %191 : vector<1x8x1xf32> to vector<8x1xf32>
    %193 = vector.broadcast %192 : vector<8x1xf32> to vector<8x128xf32>
    %194 = vector.broadcast %3 : vector<1x128xf32> to vector<8x128xf32>
    %195 = arith.mulf %193, %194 : vector<8x128xf32>
    %196 = vector.broadcast %5 : vector<1x128xf32> to vector<8x128xf32>
    %197 = arith.addf %195, %196 : vector<8x128xf32>
    %c18_105 = arith.constant 18 : index
    %c0_106 = arith.constant 0 : index
    %c0_107 = arith.constant 0 : index
    %198 = vector.load %arg10[%c18_105, %c0_106, %c0_107] : memref<32x8x128xf32, #tpu.memory_space<vmem>>, vector<1x8x128xf32>
    %199 = vector.shape_cast %198 : vector<1x8x128xf32> to vector<8x128xf32>
    %200 = vector.shape_cast %197 : vector<8x128xf32> to vector<1x8x128xf32>
    tpu.vector_store %arg10[%c18_105, %c0_106, %c0_107], %200 {strides = array<i32>} : memref<32x8x128xf32, #tpu.memory_space<vmem>>, vector<1x8x128xf32>,
    %c19 = arith.constant 19 : index
    %c0_108 = arith.constant 0 : index
    %c0_109 = arith.constant 0 : index
    %201 = vector.load %arg1[%c19, %c0_108, %c0_109] : memref<32x8x1xf32, #tpu.memory_space<vmem>>, vector<1x8x1xf32>
    %202 = vector.shape_cast %201 : vector<1x8x1xf32> to vector<8x1xf32>
    %203 = vector.broadcast %202 : vector<8x1xf32> to vector<8x128xf32>
    %204 = vector.broadcast %3 : vector<1x128xf32> to vector<8x128xf32>
    %205 = arith.mulf %203, %204 : vector<8x128xf32>
    %206 = vector.broadcast %5 : vector<1x128xf32> to vector<8x128xf32>
    %207 = arith.addf %205, %206 : vector<8x128xf32>
    %c19_110 = arith.constant 19 : index
    %c0_111 = arith.constant 0 : index
    %c0_112 = arith.constant 0 : index
    %208 = vector.load %arg10[%c19_110, %c0_111, %c0_112] : memref<32x8x128xf32, #tpu.memory_space<vmem>>, vector<1x8x128xf32>
    %209 = vector.shape_cast %208 : vector<1x8x128xf32> to vector<8x128xf32>
    %210 = vector.shape_cast %207 : vector<8x128xf32> to vector<1x8x128xf32>
    tpu.vector_store %arg10[%c19_110, %c0_111, %c0_112], %210 {strides = array<i32>} : memref<32x8x128xf32, #tpu.memory_space<vmem>>, vector<1x8x128xf32>,
    %c20 = arith.constant 20 : index
    %c0_113 = arith.constant 0 : index
    %c0_114 = arith.constant 0 : index
    %211 = vector.load %arg1[%c20, %c0_113, %c0_114] : memref<32x8x1xf32, #tpu.memory_space<vmem>>, vector<1x8x1xf32>
    %212 = vector.shape_cast %211 : vector<1x8x1xf32> to vector<8x1xf32>
    %213 = vector.broadcast %212 : vector<8x1xf32> to vector<8x128xf32>
    %214 = vector.broadcast %3 : vector<1x128xf32> to vector<8x128xf32>
    %215 = arith.mulf %213, %214 : vector<8x128xf32>
    %216 = vector.broadcast %5 : vector<1x128xf32> to vector<8x128xf32>
    %217 = arith.addf %215, %216 : vector<8x128xf32>
    %c20_115 = arith.constant 20 : index
    %c0_116 = arith.constant 0 : index
    %c0_117 = arith.constant 0 : index
    %218 = vector.load %arg10[%c20_115, %c0_116, %c0_117] : memref<32x8x128xf32, #tpu.memory_space<vmem>>, vector<1x8x128xf32>
    %219 = vector.shape_cast %218 : vector<1x8x128xf32> to vector<8x128xf32>
    %220 = vector.shape_cast %217 : vector<8x128xf32> to vector<1x8x128xf32>
    tpu.vector_store %arg10[%c20_115, %c0_116, %c0_117], %220 {strides = array<i32>} : memref<32x8x128xf32, #tpu.memory_space<vmem>>, vector<1x8x128xf32>,
    %c21 = arith.constant 21 : index
    %c0_118 = arith.constant 0 : index
    %c0_119 = arith.constant 0 : index
    %221 = vector.load %arg1[%c21, %c0_118, %c0_119] : memref<32x8x1xf32, #tpu.memory_space<vmem>>, vector<1x8x1xf32>
    %222 = vector.shape_cast %221 : vector<1x8x1xf32> to vector<8x1xf32>
    %223 = vector.broadcast %222 : vector<8x1xf32> to vector<8x128xf32>
    %224 = vector.broadcast %3 : vector<1x128xf32> to vector<8x128xf32>
    %225 = arith.mulf %223, %224 : vector<8x128xf32>
    %226 = vector.broadcast %5 : vector<1x128xf32> to vector<8x128xf32>
    %227 = arith.addf %225, %226 : vector<8x128xf32>
    %c21_120 = arith.constant 21 : index
    %c0_121 = arith.constant 0 : index
    %c0_122 = arith.constant 0 : index
    %228 = vector.load %arg10[%c21_120, %c0_121, %c0_122] : memref<32x8x128xf32, #tpu.memory_space<vmem>>, vector<1x8x128xf32>
    %229 = vector.shape_cast %228 : vector<1x8x128xf32> to vector<8x128xf32>
    %230 = vector.shape_cast %227 : vector<8x128xf32> to vector<1x8x128xf32>
    tpu.vector_store %arg10[%c21_120, %c0_121, %c0_122], %230 {strides = array<i32>} : memref<32x8x128xf32, #tpu.memory_space<vmem>>, vector<1x8x128xf32>,
    %c22 = arith.constant 22 : index
    %c0_123 = arith.constant 0 : index
    %c0_124 = arith.constant 0 : index
    %231 = vector.load %arg1[%c22, %c0_123, %c0_124] : memref<32x8x1xf32, #tpu.memory_space<vmem>>, vector<1x8x1xf32>
    %232 = vector.shape_cast %231 : vector<1x8x1xf32> to vector<8x1xf32>
    %233 = vector.broadcast %232 : vector<8x1xf32> to vector<8x128xf32>
    %234 = vector.broadcast %3 : vector<1x128xf32> to vector<8x128xf32>
    %235 = arith.mulf %233, %234 : vector<8x128xf32>
    %236 = vector.broadcast %5 : vector<1x128xf32> to vector<8x128xf32>
    %237 = arith.addf %235, %236 : vector<8x128xf32>
    %c22_125 = arith.constant 22 : index
    %c0_126 = arith.constant 0 : index
    %c0_127 = arith.constant 0 : index
    %238 = vector.load %arg10[%c22_125, %c0_126, %c0_127] : memref<32x8x128xf32, #tpu.memory_space<vmem>>, vector<1x8x128xf32>
    %239 = vector.shape_cast %238 : vector<1x8x128xf32> to vector<8x128xf32>
    %240 = vector.shape_cast %237 : vector<8x128xf32> to vector<1x8x128xf32>
    tpu.vector_store %arg10[%c22_125, %c0_126, %c0_127], %240 {strides = array<i32>} : memref<32x8x128xf32, #tpu.memory_space<vmem>>, vector<1x8x128xf32>,
    %c23 = arith.constant 23 : index
    %c0_128 = arith.constant 0 : index
    %c0_129 = arith.constant 0 : index
    %241 = vector.load %arg1[%c23, %c0_128, %c0_129] : memref<32x8x1xf32, #tpu.memory_space<vmem>>, vector<1x8x1xf32>
    %242 = vector.shape_cast %241 : vector<1x8x1xf32> to vector<8x1xf32>
    %243 = vector.broadcast %242 : vector<8x1xf32> to vector<8x128xf32>
    %244 = vector.broadcast %3 : vector<1x128xf32> to vector<8x128xf32>
    %245 = arith.mulf %243, %244 : vector<8x128xf32>
    %246 = vector.broadcast %5 : vector<1x128xf32> to vector<8x128xf32>
    %247 = arith.addf %245, %246 : vector<8x128xf32>
    %c23_130 = arith.constant 23 : index
    %c0_131 = arith.constant 0 : index
    %c0_132 = arith.constant 0 : index
    %248 = vector.load %arg10[%c23_130, %c0_131, %c0_132] : memref<32x8x128xf32, #tpu.memory_space<vmem>>, vector<1x8x128xf32>
    %249 = vector.shape_cast %248 : vector<1x8x128xf32> to vector<8x128xf32>
    %250 = vector.shape_cast %247 : vector<8x128xf32> to vector<1x8x128xf32>
    tpu.vector_store %arg10[%c23_130, %c0_131, %c0_132], %250 {strides = array<i32>} : memref<32x8x128xf32, #tpu.memory_space<vmem>>, vector<1x8x128xf32>,
    %c24 = arith.constant 24 : index
    %c0_133 = arith.constant 0 : index
    %c0_134 = arith.constant 0 : index
    %251 = vector.load %arg1[%c24, %c0_133, %c0_134] : memref<32x8x1xf32, #tpu.memory_space<vmem>>, vector<1x8x1xf32>
    %252 = vector.shape_cast %251 : vector<1x8x1xf32> to vector<8x1xf32>
    %253 = vector.broadcast %252 : vector<8x1xf32> to vector<8x128xf32>
    %254 = vector.broadcast %3 : vector<1x128xf32> to vector<8x128xf32>
    %255 = arith.mulf %253, %254 : vector<8x128xf32>
    %256 = vector.broadcast %5 : vector<1x128xf32> to vector<8x128xf32>
    %257 = arith.addf %255, %256 : vector<8x128xf32>
    %c24_135 = arith.constant 24 : index
    %c0_136 = arith.constant 0 : index
    %c0_137 = arith.constant 0 : index
    %258 = vector.load %arg10[%c24_135, %c0_136, %c0_137] : memref<32x8x128xf32, #tpu.memory_space<vmem>>, vector<1x8x128xf32>
    %259 = vector.shape_cast %258 : vector<1x8x128xf32> to vector<8x128xf32>
    %260 = vector.shape_cast %257 : vector<8x128xf32> to vector<1x8x128xf32>
    tpu.vector_store %arg10[%c24_135, %c0_136, %c0_137], %260 {strides = array<i32>} : memref<32x8x128xf32, #tpu.memory_space<vmem>>, vector<1x8x128xf32>,
    %c25 = arith.constant 25 : index
    %c0_138 = arith.constant 0 : index
    %c0_139 = arith.constant 0 : index
    %261 = vector.load %arg1[%c25, %c0_138, %c0_139] : memref<32x8x1xf32, #tpu.memory_space<vmem>>, vector<1x8x1xf32>
    %262 = vector.shape_cast %261 : vector<1x8x1xf32> to vector<8x1xf32>
    %263 = vector.broadcast %262 : vector<8x1xf32> to vector<8x128xf32>
    %264 = vector.broadcast %3 : vector<1x128xf32> to vector<8x128xf32>
    %265 = arith.mulf %263, %264 : vector<8x128xf32>
    %266 = vector.broadcast %5 : vector<1x128xf32> to vector<8x128xf32>
    %267 = arith.addf %265, %266 : vector<8x128xf32>
    %c25_140 = arith.constant 25 : index
    %c0_141 = arith.constant 0 : index
    %c0_142 = arith.constant 0 : index
    %268 = vector.load %arg10[%c25_140, %c0_141, %c0_142] : memref<32x8x128xf32, #tpu.memory_space<vmem>>, vector<1x8x128xf32>
    %269 = vector.shape_cast %268 : vector<1x8x128xf32> to vector<8x128xf32>
    %270 = vector.shape_cast %267 : vector<8x128xf32> to vector<1x8x128xf32>
    tpu.vector_store %arg10[%c25_140, %c0_141, %c0_142], %270 {strides = array<i32>} : memref<32x8x128xf32, #tpu.memory_space<vmem>>, vector<1x8x128xf32>,
    %c26 = arith.constant 26 : index
    %c0_143 = arith.constant 0 : index
    %c0_144 = arith.constant 0 : index
    %271 = vector.load %arg1[%c26, %c0_143, %c0_144] : memref<32x8x1xf32, #tpu.memory_space<vmem>>, vector<1x8x1xf32>
    %272 = vector.shape_cast %271 : vector<1x8x1xf32> to vector<8x1xf32>
    %273 = vector.broadcast %272 : vector<8x1xf32> to vector<8x128xf32>
    %274 = vector.broadcast %3 : vector<1x128xf32> to vector<8x128xf32>
    %275 = arith.mulf %273, %274 : vector<8x128xf32>
    %276 = vector.broadcast %5 : vector<1x128xf32> to vector<8x128xf32>
    %277 = arith.addf %275, %276 : vector<8x128xf32>
    %c26_145 = arith.constant 26 : index
    %c0_146 = arith.constant 0 : index
    %c0_147 = arith.constant 0 : index
    %278 = vector.load %arg10[%c26_145, %c0_146, %c0_147] : memref<32x8x128xf32, #tpu.memory_space<vmem>>, vector<1x8x128xf32>
    %279 = vector.shape_cast %278 : vector<1x8x128xf32> to vector<8x128xf32>
    %280 = vector.shape_cast %277 : vector<8x128xf32> to vector<1x8x128xf32>
    tpu.vector_store %arg10[%c26_145, %c0_146, %c0_147], %280 {strides = array<i32>} : memref<32x8x128xf32, #tpu.memory_space<vmem>>, vector<1x8x128xf32>,
    %c27 = arith.constant 27 : index
    %c0_148 = arith.constant 0 : index
    %c0_149 = arith.constant 0 : index
    %281 = vector.load %arg1[%c27, %c0_148, %c0_149] : memref<32x8x1xf32, #tpu.memory_space<vmem>>, vector<1x8x1xf32>
    %282 = vector.shape_cast %281 : vector<1x8x1xf32> to vector<8x1xf32>
    %283 = vector.broadcast %282 : vector<8x1xf32> to vector<8x128xf32>
    %284 = vector.broadcast %3 : vector<1x128xf32> to vector<8x128xf32>
    %285 = arith.mulf %283, %284 : vector<8x128xf32>
    %286 = vector.broadcast %5 : vector<1x128xf32> to vector<8x128xf32>
    %287 = arith.addf %285, %286 : vector<8x128xf32>
    %c27_150 = arith.constant 27 : index
    %c0_151 = arith.constant 0 : index
    %c0_152 = arith.constant 0 : index
    %288 = vector.load %arg10[%c27_150, %c0_151, %c0_152] : memref<32x8x128xf32, #tpu.memory_space<vmem>>, vector<1x8x128xf32>
    %289 = vector.shape_cast %288 : vector<1x8x128xf32> to vector<8x128xf32>
    %290 = vector.shape_cast %287 : vector<8x128xf32> to vector<1x8x128xf32>
    tpu.vector_store %arg10[%c27_150, %c0_151, %c0_152], %290 {strides = array<i32>} : memref<32x8x128xf32, #tpu.memory_space<vmem>>, vector<1x8x128xf32>,
    %c28 = arith.constant 28 : index
    %c0_153 = arith.constant 0 : index
    %c0_154 = arith.constant 0 : index
    %291 = vector.load %arg1[%c28, %c0_153, %c0_154] : memref<32x8x1xf32, #tpu.memory_space<vmem>>, vector<1x8x1xf32>
    %292 = vector.shape_cast %291 : vector<1x8x1xf32> to vector<8x1xf32>
    %293 = vector.broadcast %292 : vector<8x1xf32> to vector<8x128xf32>
    %294 = vector.broadcast %3 : vector<1x128xf32> to vector<8x128xf32>
    %295 = arith.mulf %293, %294 : vector<8x128xf32>
    %296 = vector.broadcast %5 : vector<1x128xf32> to vector<8x128xf32>
    %297 = arith.addf %295, %296 : vector<8x128xf32>
    %c28_155 = arith.constant 28 : index
    %c0_156 = arith.constant 0 : index
    %c0_157 = arith.constant 0 : index
    %298 = vector.load %arg10[%c28_155, %c0_156, %c0_157] : memref<32x8x128xf32, #tpu.memory_space<vmem>>, vector<1x8x128xf32>
    %299 = vector.shape_cast %298 : vector<1x8x128xf32> to vector<8x128xf32>
    %300 = vector.shape_cast %297 : vector<8x128xf32> to vector<1x8x128xf32>
    tpu.vector_store %arg10[%c28_155, %c0_156, %c0_157], %300 {strides = array<i32>} : memref<32x8x128xf32, #tpu.memory_space<vmem>>, vector<1x8x128xf32>,
    %c29 = arith.constant 29 : index
    %c0_158 = arith.constant 0 : index
    %c0_159 = arith.constant 0 : index
    %301 = vector.load %arg1[%c29, %c0_158, %c0_159] : memref<32x8x1xf32, #tpu.memory_space<vmem>>, vector<1x8x1xf32>
    %302 = vector.shape_cast %301 : vector<1x8x1xf32> to vector<8x1xf32>
    %303 = vector.broadcast %302 : vector<8x1xf32> to vector<8x128xf32>
    %304 = vector.broadcast %3 : vector<1x128xf32> to vector<8x128xf32>
    %305 = arith.mulf %303, %304 : vector<8x128xf32>
    %306 = vector.broadcast %5 : vector<1x128xf32> to vector<8x128xf32>
    %307 = arith.addf %305, %306 : vector<8x128xf32>
    %c29_160 = arith.constant 29 : index
    %c0_161 = arith.constant 0 : index
    %c0_162 = arith.constant 0 : index
    %308 = vector.load %arg10[%c29_160, %c0_161, %c0_162] : memref<32x8x128xf32, #tpu.memory_space<vmem>>, vector<1x8x128xf32>
    %309 = vector.shape_cast %308 : vector<1x8x128xf32> to vector<8x128xf32>
    %310 = vector.shape_cast %307 : vector<8x128xf32> to vector<1x8x128xf32>
    tpu.vector_store %arg10[%c29_160, %c0_161, %c0_162], %310 {strides = array<i32>} : memref<32x8x128xf32, #tpu.memory_space<vmem>>, vector<1x8x128xf32>,
    %c30 = arith.constant 30 : index
    %c0_163 = arith.constant 0 : index
    %c0_164 = arith.constant 0 : index
    %311 = vector.load %arg1[%c30, %c0_163, %c0_164] : memref<32x8x1xf32, #tpu.memory_space<vmem>>, vector<1x8x1xf32>
    %312 = vector.shape_cast %311 : vector<1x8x1xf32> to vector<8x1xf32>
    %313 = vector.broadcast %312 : vector<8x1xf32> to vector<8x128xf32>
    %314 = vector.broadcast %3 : vector<1x128xf32> to vector<8x128xf32>
    %315 = arith.mulf %313, %314 : vector<8x128xf32>
    %316 = vector.broadcast %5 : vector<1x128xf32> to vector<8x128xf32>
    %317 = arith.addf %315, %316 : vector<8x128xf32>
    %c30_165 = arith.constant 30 : index
    %c0_166 = arith.constant 0 : index
    %c0_167 = arith.constant 0 : index
    %318 = vector.load %arg10[%c30_165, %c0_166, %c0_167] : memref<32x8x128xf32, #tpu.memory_space<vmem>>, vector<1x8x128xf32>
    %319 = vector.shape_cast %318 : vector<1x8x128xf32> to vector<8x128xf32>
    %320 = vector.shape_cast %317 : vector<8x128xf32> to vector<1x8x128xf32>
    tpu.vector_store %arg10[%c30_165, %c0_166, %c0_167], %320 {strides = array<i32>} : memref<32x8x128xf32, #tpu.memory_space<vmem>>, vector<1x8x128xf32>,
    %c31 = arith.constant 31 : index
    %c0_168 = arith.constant 0 : index
    %c0_169 = arith.constant 0 : index
    %321 = vector.load %arg1[%c31, %c0_168, %c0_169] : memref<32x8x1xf32, #tpu.memory_space<vmem>>, vector<1x8x1xf32>
    %322 = vector.shape_cast %321 : vector<1x8x1xf32> to vector<8x1xf32>
    %323 = vector.broadcast %322 : vector<8x1xf32> to vector<8x128xf32>
    %324 = vector.broadcast %3 : vector<1x128xf32> to vector<8x128xf32>
    %325 = arith.mulf %323, %324 : vector<8x128xf32>
    %326 = vector.broadcast %5 : vector<1x128xf32> to vector<8x128xf32>
    %327 = arith.addf %325, %326 : vector<8x128xf32>
    %c31_170 = arith.constant 31 : index
    %c0_171 = arith.constant 0 : index
    %c0_172 = arith.constant 0 : index
    %328 = vector.load %arg10[%c31_170, %c0_171, %c0_172] : memref<32x8x128xf32, #tpu.memory_space<vmem>>, vector<1x8x128xf32>
    %329 = vector.shape_cast %328 : vector<1x8x128xf32> to vector<8x128xf32>
    %330 = vector.shape_cast %327 : vector<8x128xf32> to vector<1x8x128xf32>
    tpu.vector_store %arg10[%c31_170, %c0_171, %c0_172], %330 {strides = array<i32>} : memref<32x8x128xf32, #tpu.memory_space<vmem>>, vector<1x8x128xf32>,
    %331 = tpu.iota {dimensions = array<i32: 1>} : vector<8x3xi32>
    %c0_173 = arith.constant 0 : index
    %c0_174 = arith.constant 0 : index
    %332 = vector.load %arg7[%c0_173, %c0_174] : memref<8x128xf32, #tpu.memory_space<vmem>>, vector<8x128xf32>
    %c0_175 = arith.constant 0 : index
    %c0_176 = arith.constant 0 : index
    %333 = vector.load %arg8[%c0_175, %c0_176] : memref<8x32xf32, #tpu.memory_space<vmem>>, vector<8x32xf32>
    %c0_177 = arith.constant 0 : index
    %c0_178 = arith.constant 0 : index
    %334 = vector.load %arg9[%c0_177, %c0_178] : memref<8x1xf32, #tpu.memory_space<vmem>>, vector<8x1xf32>
    %335 = vector.broadcast %334 : vector<8x1xf32> to vector<8x128xf32>
    %336 = vector.broadcast %4 : vector<1x128xf32> to vector<8x128xf32>
    %337 = arith.mulf %335, %336 : vector<8x128xf32>
    %338 = arith.addf %337, %332 : vector<8x128xf32>
    %c0_179 = arith.constant 0 : index
    %c0_180 = arith.constant 0 : index
    %c0_181 = arith.constant 0 : index
    %339 = vector.load %arg10[%c0_179, %c0_180, %c0_181] : memref<32x8x128xf32, #tpu.memory_space<vmem>>, vector<1x8x128xf32>
    %340 = vector.shape_cast %339 : vector<1x8x128xf32> to vector<8x128xf32>
    %341 = arith.addf %338, %340 : vector<8x128xf32>
    %342 = arith.negf %341 : vector<8x128xf32>
    %343 = math.exp %342 : vector<8x128xf32>
    %cst = arith.constant 1.000000e+00 : f32
    %344 = vector.broadcast %cst : f32 to vector<8x128xf32>
    %345 = arith.addf %344, %343 : vector<8x128xf32>
    %346 = arith.divf %344, %345 : vector<8x128xf32>
    %347 = vector.extract_strided_slice %346 {offsets = [0, 0], sizes = [8, 32], strides = [1, 1]} : vector<8x128xf32> to vector<8x32xf32>
    %348 = vector.extract_strided_slice %346 {offsets = [0, 32], sizes = [8, 32], strides = [1, 1]} : vector<8x128xf32> to vector<8x32xf32>
    %349 = vector.extract_strided_slice %346 {offsets = [0, 64], sizes = [8, 32], strides = [1, 1]} : vector<8x128xf32> to vector<8x32xf32>
    %cst_182 = arith.constant 2.000000e+00 : f32
    %350 = vector.broadcast %cst_182 : f32 to vector<8x32xf32>
    %351 = arith.mulf %350, %349 : vector<8x32xf32>
    %cst_183 = arith.constant 1.000000e+00 : f32
    %352 = vector.broadcast %cst_183 : f32 to vector<8x32xf32>
    %353 = arith.subf %351, %352 : vector<8x32xf32>
    %354 = vector.extract_strided_slice %346 {offsets = [0, 96], sizes = [8, 32], strides = [1, 1]} : vector<8x128xf32> to vector<8x32xf32>
    %355 = arith.mulf %348, %333 : vector<8x32xf32>
    %356 = arith.mulf %347, %353 : vector<8x32xf32>
    %357 = arith.addf %355, %356 : vector<8x32xf32>
    %358 = math.tanh %357 : vector<8x32xf32>
    %359 = arith.mulf %354, %358 : vector<8x32xf32>
    %360 = arith.truncf %359 : vector<8x32xf32> to vector<8x32xbf16>
    %cst_184 = arith.constant dense<0.000000e+00> : vector<8x256xf32>
    %361 = tpu.matmul %360, %6, %cst_184 {dimension_numbers = #tpu.dot_dimension_numbers<[1], [0], [0], [1], [0, 0, 1, 1], [], []>} : vector<8x32xbf16>, vector<32x256xbf16>, vector<8x256xf32> -> vector<8x256xf32>
    %362 = vector.extract_strided_slice %361 {offsets = [0, 0], sizes = [8, 1], strides = [1, 1]} : vector<8x256xf32> to vector<8x1xf32>
    %363 = vector.broadcast %9 : f32 to vector<8x1xf32>
    %364 = arith.addf %362, %363 : vector<8x1xf32>
    %365 = vector.extract_strided_slice %361 {offsets = [0, 1], sizes = [8, 1], strides = [1, 1]} : vector<8x256xf32> to vector<8x1xf32>
    %366 = vector.broadcast %10 : f32 to vector<8x1xf32>
    %367 = arith.addf %365, %366 : vector<8x1xf32>
    %368 = vector.extract_strided_slice %361 {offsets = [0, 128], sizes = [8, 128], strides = [1, 1]} : vector<8x256xf32> to vector<8x128xf32>
    %c0_i32_185 = arith.constant 0 : i32
    %369 = arith.cmpi eq, %arg0, %c0_i32_185 : i32
    %cst_186 = arith.constant 1.000000e+00 : f32
    %370 = vector.broadcast %cst_186 : f32 to vector<8x1xf32>
    %371 = arith.select %369, %370, %364 : vector<8x1xf32>
    %cst_187 = arith.constant 1.000000e+00 : f32
    %372 = vector.broadcast %cst_187 : f32 to vector<8x1xf32>
    %373 = arith.select %369, %372, %367 : vector<8x1xf32>
    %cst_188 = arith.constant 0.000000e+00 : f32
    %374 = vector.broadcast %cst_188 : f32 to vector<8x32xf32>
    %375 = arith.select %369, %374, %357 : vector<8x32xf32>
    %cst_189 = arith.constant 0.000000e+00 : f32
    %376 = vector.broadcast %cst_189 : f32 to vector<8x128xf32>
    %377 = arith.select %369, %376, %368 : vector<8x128xf32>
    %c0_190 = arith.constant 0 : index
    %c0_191 = arith.constant 0 : index
    %c0_192 = arith.constant 0 : index
    %378 = vector.load %arg1[%c0_190, %c0_191, %c0_192] : memref<32x8x1xf32, #tpu.memory_space<vmem>>, vector<1x8x1xf32>
    %379 = vector.shape_cast %378 : vector<1x8x1xf32> to vector<8x1xf32>
    %380 = vector.broadcast %7 : f32 to vector<8x1xf32>
    %381 = arith.mulf %380, %379 : vector<8x1xf32>
    %382 = vector.broadcast %8 : f32 to vector<8x1xf32>
    %383 = arith.addf %381, %382 : vector<8x1xf32>
    %384 = arith.mulf %371, %383 : vector<8x1xf32>
    %385 = math.absf %384 : vector<8x1xf32>
    %cst_193 = arith.constant 0.000000e+00 : f32
    %386 = vector.broadcast %cst_193 : f32 to vector<8x1xf32>
    %387 = arith.subf %386, %385 : vector<8x1xf32>
    %388 = math.exp %387 : vector<8x1xf32>
    %cst_194 = arith.constant 1.000000e+00 : f32
    %389 = vector.broadcast %cst_194 : f32 to vector<8x1xf32>
    %390 = arith.addf %389, %388 : vector<8x1xf32>
    %391 = tpu.reciprocal %390 {approx = true} : vector<8x1xf32> -> vector<8x1xf32>
    %cst_195 = arith.constant 0.000000e+00 : f32
    %392 = vector.broadcast %cst_195 : f32 to vector<8x1xf32>
    %393 = arith.cmpf oge, %384, %392 : vector<8x1xf32>
    %cst_196 = arith.constant 1.000000e+00 : f32
    %394 = vector.broadcast %cst_196 : f32 to vector<8x1xf32>
    %395 = arith.subf %394, %391 : vector<8x1xf32>
    %396 = arith.select %393, %391, %395 : vector<8x1xi1>, vector<8x1xf32>
    %cst_197 = arith.constant 0.000000e+00 : f32
    %397 = vector.broadcast %cst_197 : f32 to vector<8x1xf32>
    %398 = arith.maximumf %384, %397 : vector<8x1xf32>
    %cst_198 = arith.constant 1.000000e+00 : f32
    %399 = vector.broadcast %cst_198 : f32 to vector<8x1xf32>
    %400 = arith.addf %399, %388 : vector<8x1xf32>
    %401 = math.log %400 : vector<8x1xf32>
    %402 = arith.addf %398, %401 : vector<8x1xf32>
    %403 = tpu.reciprocal %371 {approx = true} : vector<8x1xf32> -> vector<8x1xf32>
    %404 = arith.mulf %403, %402 : vector<8x1xf32>
    %cst_199 = arith.constant 1.000000e+00 : f32
    %405 = vector.broadcast %cst_199 : f32 to vector<8x1xf32>
    %406 = arith.subf %405, %373 : vector<8x1xf32>
    %407 = arith.mulf %406, %404 : vector<8x1xf32>
    %408 = arith.mulf %373, %396 : vector<8x1xf32>
    %409 = arith.addf %407, %408 : vector<8x1xf32>
    %c0_i32_200 = arith.constant 0 : i32
    %410 = vector.broadcast %c0_i32_200 : i32 to vector<8x3xi32>
    %411 = arith.cmpi eq, %331, %410 : vector<8x3xi32>
    %c1_i32 = arith.constant 1 : i32
    %412 = vector.broadcast %c1_i32 : i32 to vector<8x3xi32>
    %413 = arith.cmpi eq, %331, %412 : vector<8x3xi32>
    %414 = vector.shape_cast %371 : vector<8x1xf32> to vector<8x1xf32>
    %415 = vector.broadcast %414 : vector<8x1xf32> to vector<8x3xf32>
    %416 = vector.shape_cast %373 : vector<8x1xf32> to vector<8x1xf32>
    %417 = vector.broadcast %416 : vector<8x1xf32> to vector<8x3xf32>
    %418 = arith.select %413, %415, %417 : vector<8x3xi1>, vector<8x3xf32>
    %419 = vector.shape_cast %409 : vector<8x1xf32> to vector<8x1xf32>
    %420 = vector.broadcast %419 : vector<8x1xf32> to vector<8x3xf32>
    %421 = arith.select %411, %420, %418 : vector<8x3xi1>, vector<8x3xf32>
    %c0_201 = arith.constant 0 : index
    %c0_202 = arith.constant 0 : index
    %c0_203 = arith.constant 0 : index
    %422 = vector.load %arg6[%c0_201, %c0_202, %c0_203] : memref<32x8x3xf32, #tpu.memory_space<vmem>>, vector<1x8x3xf32>
    %423 = vector.shape_cast %422 : vector<1x8x3xf32> to vector<8x3xf32>
    %424 = vector.shape_cast %421 : vector<8x3xf32> to vector<1x8x3xf32>
    tpu.vector_store %arg6[%c0_201, %c0_202, %c0_203], %424 {strides = array<i32>} : memref<32x8x3xf32, #tpu.memory_space<vmem>>, vector<1x8x3xf32>,
    %425 = vector.broadcast %409 : vector<8x1xf32> to vector<8x128xf32>
    %426 = vector.broadcast %4 : vector<1x128xf32> to vector<8x128xf32>
    %427 = arith.mulf %425, %426 : vector<8x128xf32>
    %428 = arith.addf %427, %377 : vector<8x128xf32>
    %c1_204 = arith.constant 1 : index
    %c0_205 = arith.constant 0 : index
    %c0_206 = arith.constant 0 : index
    %429 = vector.load %arg10[%c1_204, %c0_205, %c0_206] : memref<32x8x128xf32, #tpu.memory_space<vmem>>, vector<1x8x128xf32>
    %430 = vector.shape_cast %429 : vector<1x8x128xf32> to vector<8x128xf32>
    %431 = arith.addf %428, %430 : vector<8x128xf32>
    %432 = arith.negf %431 : vector<8x128xf32>
    %433 = math.exp %432 : vector<8x128xf32>
    %cst_207 = arith.constant 1.000000e+00 : f32
    %434 = vector.broadcast %cst_207 : f32 to vector<8x128xf32>
    %435 = arith.addf %434, %433 : vector<8x128xf32>
    %436 = arith.divf %434, %435 : vector<8x128xf32>
    %437 = vector.extract_strided_slice %436 {offsets = [0, 0], sizes = [8, 32], strides = [1, 1]} : vector<8x128xf32> to vector<8x32xf32>
    %438 = vector.extract_strided_slice %436 {offsets = [0, 32], sizes = [8, 32], strides = [1, 1]} : vector<8x128xf32> to vector<8x32xf32>
    %439 = vector.extract_strided_slice %436 {offsets = [0, 64], sizes = [8, 32], strides = [1, 1]} : vector<8x128xf32> to vector<8x32xf32>
    %cst_208 = arith.constant 2.000000e+00 : f32
    %440 = vector.broadcast %cst_208 : f32 to vector<8x32xf32>
    %441 = arith.mulf %440, %439 : vector<8x32xf32>
    %cst_209 = arith.constant 1.000000e+00 : f32
    %442 = vector.broadcast %cst_209 : f32 to vector<8x32xf32>
    %443 = arith.subf %441, %442 : vector<8x32xf32>
    %444 = vector.extract_strided_slice %436 {offsets = [0, 96], sizes = [8, 32], strides = [1, 1]} : vector<8x128xf32> to vector<8x32xf32>
    %445 = arith.mulf %438, %375 : vector<8x32xf32>
    %446 = arith.mulf %437, %443 : vector<8x32xf32>
    %447 = arith.addf %445, %446 : vector<8x32xf32>
    %448 = math.tanh %447 : vector<8x32xf32>
    %449 = arith.mulf %444, %448 : vector<8x32xf32>
    %450 = arith.truncf %449 : vector<8x32xf32> to vector<8x32xbf16>
    %cst_210 = arith.constant dense<0.000000e+00> : vector<8x256xf32>
    %451 = tpu.matmul %450, %6, %cst_210 {dimension_numbers = #tpu.dot_dimension_numbers<[1], [0], [0], [1], [0, 0, 1, 1], [], []>} : vector<8x32xbf16>, vector<32x256xbf16>, vector<8x256xf32> -> vector<8x256xf32>
    %452 = vector.extract_strided_slice %451 {offsets = [0, 0], sizes = [8, 1], strides = [1, 1]} : vector<8x256xf32> to vector<8x1xf32>
    %453 = vector.broadcast %9 : f32 to vector<8x1xf32>
    %454 = arith.addf %452, %453 : vector<8x1xf32>
    %455 = vector.extract_strided_slice %451 {offsets = [0, 1], sizes = [8, 1], strides = [1, 1]} : vector<8x256xf32> to vector<8x1xf32>
    %456 = vector.broadcast %10 : f32 to vector<8x1xf32>
    %457 = arith.addf %455, %456 : vector<8x1xf32>
    %458 = vector.extract_strided_slice %451 {offsets = [0, 128], sizes = [8, 128], strides = [1, 1]} : vector<8x256xf32> to vector<8x128xf32>
    %c1_211 = arith.constant 1 : index
    %c0_212 = arith.constant 0 : index
    %c0_213 = arith.constant 0 : index
    %459 = vector.load %arg1[%c1_211, %c0_212, %c0_213] : memref<32x8x1xf32, #tpu.memory_space<vmem>>, vector<1x8x1xf32>
    %460 = vector.shape_cast %459 : vector<1x8x1xf32> to vector<8x1xf32>
    %461 = vector.broadcast %7 : f32 to vector<8x1xf32>
    %462 = arith.mulf %461, %460 : vector<8x1xf32>
    %463 = vector.broadcast %8 : f32 to vector<8x1xf32>
    %464 = arith.addf %462, %463 : vector<8x1xf32>
    %465 = arith.mulf %454, %464 : vector<8x1xf32>
    %466 = math.absf %465 : vector<8x1xf32>
    %cst_214 = arith.constant 0.000000e+00 : f32
    %467 = vector.broadcast %cst_214 : f32 to vector<8x1xf32>
    %468 = arith.subf %467, %466 : vector<8x1xf32>
    %469 = math.exp %468 : vector<8x1xf32>
    %cst_215 = arith.constant 1.000000e+00 : f32
    %470 = vector.broadcast %cst_215 : f32 to vector<8x1xf32>
    %471 = arith.addf %470, %469 : vector<8x1xf32>
    %472 = tpu.reciprocal %471 {approx = true} : vector<8x1xf32> -> vector<8x1xf32>
    %cst_216 = arith.constant 0.000000e+00 : f32
    %473 = vector.broadcast %cst_216 : f32 to vector<8x1xf32>
    %474 = arith.cmpf oge, %465, %473 : vector<8x1xf32>
    %cst_217 = arith.constant 1.000000e+00 : f32
    %475 = vector.broadcast %cst_217 : f32 to vector<8x1xf32>
    %476 = arith.subf %475, %472 : vector<8x1xf32>
    %477 = arith.select %474, %472, %476 : vector<8x1xi1>, vector<8x1xf32>
    %cst_218 = arith.constant 0.000000e+00 : f32
    %478 = vector.broadcast %cst_218 : f32 to vector<8x1xf32>
    %479 = arith.maximumf %465, %478 : vector<8x1xf32>
    %cst_219 = arith.constant 1.000000e+00 : f32
    %480 = vector.broadcast %cst_219 : f32 to vector<8x1xf32>
    %481 = arith.addf %480, %469 : vector<8x1xf32>
    %482 = math.log %481 : vector<8x1xf32>
    %483 = arith.addf %479, %482 : vector<8x1xf32>
    %484 = tpu.reciprocal %454 {approx = true} : vector<8x1xf32> -> vector<8x1xf32>
    %485 = arith.mulf %484, %483 : vector<8x1xf32>
    %cst_220 = arith.constant 1.000000e+00 : f32
    %486 = vector.broadcast %cst_220 : f32 to vector<8x1xf32>
    %487 = arith.subf %486, %457 : vector<8x1xf32>
    %488 = arith.mulf %487, %485 : vector<8x1xf32>
    %489 = arith.mulf %457, %477 : vector<8x1xf32>
    %490 = arith.addf %488, %489 : vector<8x1xf32>
    %c0_i32_221 = arith.constant 0 : i32
    %491 = vector.broadcast %c0_i32_221 : i32 to vector<8x3xi32>
    %492 = arith.cmpi eq, %331, %491 : vector<8x3xi32>
    %c1_i32_222 = arith.constant 1 : i32
    %493 = vector.broadcast %c1_i32_222 : i32 to vector<8x3xi32>
    %494 = arith.cmpi eq, %331, %493 : vector<8x3xi32>
    %495 = vector.shape_cast %454 : vector<8x1xf32> to vector<8x1xf32>
    %496 = vector.broadcast %495 : vector<8x1xf32> to vector<8x3xf32>
    %497 = vector.shape_cast %457 : vector<8x1xf32> to vector<8x1xf32>
    %498 = vector.broadcast %497 : vector<8x1xf32> to vector<8x3xf32>
    %499 = arith.select %494, %496, %498 : vector<8x3xi1>, vector<8x3xf32>
    %500 = vector.shape_cast %490 : vector<8x1xf32> to vector<8x1xf32>
    %501 = vector.broadcast %500 : vector<8x1xf32> to vector<8x3xf32>
    %502 = arith.select %492, %501, %499 : vector<8x3xi1>, vector<8x3xf32>
    %c1_223 = arith.constant 1 : index
    %c0_224 = arith.constant 0 : index
    %c0_225 = arith.constant 0 : index
    %503 = vector.load %arg6[%c1_223, %c0_224, %c0_225] : memref<32x8x3xf32, #tpu.memory_space<vmem>>, vector<1x8x3xf32>
    %504 = vector.shape_cast %503 : vector<1x8x3xf32> to vector<8x3xf32>
    %505 = vector.shape_cast %502 : vector<8x3xf32> to vector<1x8x3xf32>
    tpu.vector_store %arg6[%c1_223, %c0_224, %c0_225], %505 {strides = array<i32>} : memref<32x8x3xf32, #tpu.memory_space<vmem>>, vector<1x8x3xf32>,
    %506 = vector.broadcast %490 : vector<8x1xf32> to vector<8x128xf32>
    %507 = vector.broadcast %4 : vector<1x128xf32> to vector<8x128xf32>
    %508 = arith.mulf %506, %507 : vector<8x128xf32>
    %509 = arith.addf %508, %458 : vector<8x128xf32>
    %c2_226 = arith.constant 2 : index
    %c0_227 = arith.constant 0 : index
    %c0_228 = arith.constant 0 : index
    %510 = vector.load %arg10[%c2_226, %c0_227, %c0_228] : memref<32x8x128xf32, #tpu.memory_space<vmem>>, vector<1x8x128xf32>
    %511 = vector.shape_cast %510 : vector<1x8x128xf32> to vector<8x128xf32>
    %512 = arith.addf %509, %511 : vector<8x128xf32>
    %513 = arith.negf %512 : vector<8x128xf32>
    %514 = math.exp %513 : vector<8x128xf32>
    %cst_229 = arith.constant 1.000000e+00 : f32
    %515 = vector.broadcast %cst_229 : f32 to vector<8x128xf32>
    %516 = arith.addf %515, %514 : vector<8x128xf32>
    %517 = arith.divf %515, %516 : vector<8x128xf32>
    %518 = vector.extract_strided_slice %517 {offsets = [0, 0], sizes = [8, 32], strides = [1, 1]} : vector<8x128xf32> to vector<8x32xf32>
    %519 = vector.extract_strided_slice %517 {offsets = [0, 32], sizes = [8, 32], strides = [1, 1]} : vector<8x128xf32> to vector<8x32xf32>
    %520 = vector.extract_strided_slice %517 {offsets = [0, 64], sizes = [8, 32], strides = [1, 1]} : vector<8x128xf32> to vector<8x32xf32>
    %cst_230 = arith.constant 2.000000e+00 : f32
    %521 = vector.broadcast %cst_230 : f32 to vector<8x32xf32>
    %522 = arith.mulf %521, %520 : vector<8x32xf32>
    %cst_231 = arith.constant 1.000000e+00 : f32
    %523 = vector.broadcast %cst_231 : f32 to vector<8x32xf32>
    %524 = arith.subf %522, %523 : vector<8x32xf32>
    %525 = vector.extract_strided_slice %517 {offsets = [0, 96], sizes = [8, 32], strides = [1, 1]} : vector<8x128xf32> to vector<8x32xf32>
    %526 = arith.mulf %519, %447 : vector<8x32xf32>
    %527 = arith.mulf %518, %524 : vector<8x32xf32>
    %528 = arith.addf %526, %527 : vector<8x32xf32>
    %529 = math.tanh %528 : vector<8x32xf32>
    %530 = arith.mulf %525, %529 : vector<8x32xf32>
    %531 = arith.truncf %530 : vector<8x32xf32> to vector<8x32xbf16>
    %cst_232 = arith.constant dense<0.000000e+00> : vector<8x256xf32>
    %532 = tpu.matmul %531, %6, %cst_232 {dimension_numbers = #tpu.dot_dimension_numbers<[1], [0], [0], [1], [0, 0, 1, 1], [], []>} : vector<8x32xbf16>, vector<32x256xbf16>, vector<8x256xf32> -> vector<8x256xf32>
    %533 = vector.extract_strided_slice %532 {offsets = [0, 0], sizes = [8, 1], strides = [1, 1]} : vector<8x256xf32> to vector<8x1xf32>
    %534 = vector.broadcast %9 : f32 to vector<8x1xf32>
    %535 = arith.addf %533, %534 : vector<8x1xf32>
    %536 = vector.extract_strided_slice %532 {offsets = [0, 1], sizes = [8, 1], strides = [1, 1]} : vector<8x256xf32> to vector<8x1xf32>
    %537 = vector.broadcast %10 : f32 to vector<8x1xf32>
    %538 = arith.addf %536, %537 : vector<8x1xf32>
    %539 = vector.extract_strided_slice %532 {offsets = [0, 128], sizes = [8, 128], strides = [1, 1]} : vector<8x256xf32> to vector<8x128xf32>
    %c2_233 = arith.constant 2 : index
    %c0_234 = arith.constant 0 : index
    %c0_235 = arith.constant 0 : index
    %540 = vector.load %arg1[%c2_233, %c0_234, %c0_235] : memref<32x8x1xf32, #tpu.memory_space<vmem>>, vector<1x8x1xf32>
    %541 = vector.shape_cast %540 : vector<1x8x1xf32> to vector<8x1xf32>
    %542 = vector.broadcast %7 : f32 to vector<8x1xf32>
    %543 = arith.mulf %542, %541 : vector<8x1xf32>
    %544 = vector.broadcast %8 : f32 to vector<8x1xf32>
    %545 = arith.addf %543, %544 : vector<8x1xf32>
    %546 = arith.mulf %535, %545 : vector<8x1xf32>
    %547 = math.absf %546 : vector<8x1xf32>
    %cst_236 = arith.constant 0.000000e+00 : f32
    %548 = vector.broadcast %cst_236 : f32 to vector<8x1xf32>
    %549 = arith.subf %548, %547 : vector<8x1xf32>
    %550 = math.exp %549 : vector<8x1xf32>
    %cst_237 = arith.constant 1.000000e+00 : f32
    %551 = vector.broadcast %cst_237 : f32 to vector<8x1xf32>
    %552 = arith.addf %551, %550 : vector<8x1xf32>
    %553 = tpu.reciprocal %552 {approx = true} : vector<8x1xf32> -> vector<8x1xf32>
    %cst_238 = arith.constant 0.000000e+00 : f32
    %554 = vector.broadcast %cst_238 : f32 to vector<8x1xf32>
    %555 = arith.cmpf oge, %546, %554 : vector<8x1xf32>
    %cst_239 = arith.constant 1.000000e+00 : f32
    %556 = vector.broadcast %cst_239 : f32 to vector<8x1xf32>
    %557 = arith.subf %556, %553 : vector<8x1xf32>
    %558 = arith.select %555, %553, %557 : vector<8x1xi1>, vector<8x1xf32>
    %cst_240 = arith.constant 0.000000e+00 : f32
    %559 = vector.broadcast %cst_240 : f32 to vector<8x1xf32>
    %560 = arith.maximumf %546, %559 : vector<8x1xf32>
    %cst_241 = arith.constant 1.000000e+00 : f32
    %561 = vector.broadcast %cst_241 : f32 to vector<8x1xf32>
    %562 = arith.addf %561, %550 : vector<8x1xf32>
    %563 = math.log %562 : vector<8x1xf32>
    %564 = arith.addf %560, %563 : vector<8x1xf32>
    %565 = tpu.reciprocal %535 {approx = true} : vector<8x1xf32> -> vector<8x1xf32>
    %566 = arith.mulf %565, %564 : vector<8x1xf32>
    %cst_242 = arith.constant 1.000000e+00 : f32
    %567 = vector.broadcast %cst_242 : f32 to vector<8x1xf32>
    %568 = arith.subf %567, %538 : vector<8x1xf32>
    %569 = arith.mulf %568, %566 : vector<8x1xf32>
    %570 = arith.mulf %538, %558 : vector<8x1xf32>
    %571 = arith.addf %569, %570 : vector<8x1xf32>
    %c0_i32_243 = arith.constant 0 : i32
    %572 = vector.broadcast %c0_i32_243 : i32 to vector<8x3xi32>
    %573 = arith.cmpi eq, %331, %572 : vector<8x3xi32>
    %c1_i32_244 = arith.constant 1 : i32
    %574 = vector.broadcast %c1_i32_244 : i32 to vector<8x3xi32>
    %575 = arith.cmpi eq, %331, %574 : vector<8x3xi32>
    %576 = vector.shape_cast %535 : vector<8x1xf32> to vector<8x1xf32>
    %577 = vector.broadcast %576 : vector<8x1xf32> to vector<8x3xf32>
    %578 = vector.shape_cast %538 : vector<8x1xf32> to vector<8x1xf32>
    %579 = vector.broadcast %578 : vector<8x1xf32> to vector<8x3xf32>
    %580 = arith.select %575, %577, %579 : vector<8x3xi1>, vector<8x3xf32>
    %581 = vector.shape_cast %571 : vector<8x1xf32> to vector<8x1xf32>
    %582 = vector.broadcast %581 : vector<8x1xf32> to vector<8x3xf32>
    %583 = arith.select %573, %582, %580 : vector<8x3xi1>, vector<8x3xf32>
    %c2_245 = arith.constant 2 : index
    %c0_246 = arith.constant 0 : index
    %c0_247 = arith.constant 0 : index
    %584 = vector.load %arg6[%c2_245, %c0_246, %c0_247] : memref<32x8x3xf32, #tpu.memory_space<vmem>>, vector<1x8x3xf32>
    %585 = vector.shape_cast %584 : vector<1x8x3xf32> to vector<8x3xf32>
    %586 = vector.shape_cast %583 : vector<8x3xf32> to vector<1x8x3xf32>
    tpu.vector_store %arg6[%c2_245, %c0_246, %c0_247], %586 {strides = array<i32>} : memref<32x8x3xf32, #tpu.memory_space<vmem>>, vector<1x8x3xf32>,
    %587 = vector.broadcast %571 : vector<8x1xf32> to vector<8x128xf32>
    %588 = vector.broadcast %4 : vector<1x128xf32> to vector<8x128xf32>
    %589 = arith.mulf %587, %588 : vector<8x128xf32>
    %590 = arith.addf %589, %539 : vector<8x128xf32>
    %c3_248 = arith.constant 3 : index
    %c0_249 = arith.constant 0 : index
    %c0_250 = arith.constant 0 : index
    %591 = vector.load %arg10[%c3_248, %c0_249, %c0_250] : memref<32x8x128xf32, #tpu.memory_space<vmem>>, vector<1x8x128xf32>
    %592 = vector.shape_cast %591 : vector<1x8x128xf32> to vector<8x128xf32>
    %593 = arith.addf %590, %592 : vector<8x128xf32>
    %594 = arith.negf %593 : vector<8x128xf32>
    %595 = math.exp %594 : vector<8x128xf32>
    %cst_251 = arith.constant 1.000000e+00 : f32
    %596 = vector.broadcast %cst_251 : f32 to vector<8x128xf32>
    %597 = arith.addf %596, %595 : vector<8x128xf32>
    %598 = arith.divf %596, %597 : vector<8x128xf32>
    %599 = vector.extract_strided_slice %598 {offsets = [0, 0], sizes = [8, 32], strides = [1, 1]} : vector<8x128xf32> to vector<8x32xf32>
    %600 = vector.extract_strided_slice %598 {offsets = [0, 32], sizes = [8, 32], strides = [1, 1]} : vector<8x128xf32> to vector<8x32xf32>
    %601 = vector.extract_strided_slice %598 {offsets = [0, 64], sizes = [8, 32], strides = [1, 1]} : vector<8x128xf32> to vector<8x32xf32>
    %cst_252 = arith.constant 2.000000e+00 : f32
    %602 = vector.broadcast %cst_252 : f32 to vector<8x32xf32>
    %603 = arith.mulf %602, %601 : vector<8x32xf32>
    %cst_253 = arith.constant 1.000000e+00 : f32
    %604 = vector.broadcast %cst_253 : f32 to vector<8x32xf32>
    %605 = arith.subf %603, %604 : vector<8x32xf32>
    %606 = vector.extract_strided_slice %598 {offsets = [0, 96], sizes = [8, 32], strides = [1, 1]} : vector<8x128xf32> to vector<8x32xf32>
    %607 = arith.mulf %600, %528 : vector<8x32xf32>
    %608 = arith.mulf %599, %605 : vector<8x32xf32>
    %609 = arith.addf %607, %608 : vector<8x32xf32>
    %610 = math.tanh %609 : vector<8x32xf32>
    %611 = arith.mulf %606, %610 : vector<8x32xf32>
    %612 = arith.truncf %611 : vector<8x32xf32> to vector<8x32xbf16>
    %cst_254 = arith.constant dense<0.000000e+00> : vector<8x256xf32>
    %613 = tpu.matmul %612, %6, %cst_254 {dimension_numbers = #tpu.dot_dimension_numbers<[1], [0], [0], [1], [0, 0, 1, 1], [], []>} : vector<8x32xbf16>, vector<32x256xbf16>, vector<8x256xf32> -> vector<8x256xf32>
    %614 = vector.extract_strided_slice %613 {offsets = [0, 0], sizes = [8, 1], strides = [1, 1]} : vector<8x256xf32> to vector<8x1xf32>
    %615 = vector.broadcast %9 : f32 to vector<8x1xf32>
    %616 = arith.addf %614, %615 : vector<8x1xf32>
    %617 = vector.extract_strided_slice %613 {offsets = [0, 1], sizes = [8, 1], strides = [1, 1]} : vector<8x256xf32> to vector<8x1xf32>
    %618 = vector.broadcast %10 : f32 to vector<8x1xf32>
    %619 = arith.addf %617, %618 : vector<8x1xf32>
    %620 = vector.extract_strided_slice %613 {offsets = [0, 128], sizes = [8, 128], strides = [1, 1]} : vector<8x256xf32> to vector<8x128xf32>
    %c3_255 = arith.constant 3 : index
    %c0_256 = arith.constant 0 : index
    %c0_257 = arith.constant 0 : index
    %621 = vector.load %arg1[%c3_255, %c0_256, %c0_257] : memref<32x8x1xf32, #tpu.memory_space<vmem>>, vector<1x8x1xf32>
    %622 = vector.shape_cast %621 : vector<1x8x1xf32> to vector<8x1xf32>
    %623 = vector.broadcast %7 : f32 to vector<8x1xf32>
    %624 = arith.mulf %623, %622 : vector<8x1xf32>
    %625 = vector.broadcast %8 : f32 to vector<8x1xf32>
    %626 = arith.addf %624, %625 : vector<8x1xf32>
    %627 = arith.mulf %616, %626 : vector<8x1xf32>
    %628 = math.absf %627 : vector<8x1xf32>
    %cst_258 = arith.constant 0.000000e+00 : f32
    %629 = vector.broadcast %cst_258 : f32 to vector<8x1xf32>
    %630 = arith.subf %629, %628 : vector<8x1xf32>
    %631 = math.exp %630 : vector<8x1xf32>
    %cst_259 = arith.constant 1.000000e+00 : f32
    %632 = vector.broadcast %cst_259 : f32 to vector<8x1xf32>
    %633 = arith.addf %632, %631 : vector<8x1xf32>
    %634 = tpu.reciprocal %633 {approx = true} : vector<8x1xf32> -> vector<8x1xf32>
    %cst_260 = arith.constant 0.000000e+00 : f32
    %635 = vector.broadcast %cst_260 : f32 to vector<8x1xf32>
    %636 = arith.cmpf oge, %627, %635 : vector<8x1xf32>
    %cst_261 = arith.constant 1.000000e+00 : f32
    %637 = vector.broadcast %cst_261 : f32 to vector<8x1xf32>
    %638 = arith.subf %637, %634 : vector<8x1xf32>
    %639 = arith.select %636, %634, %638 : vector<8x1xi1>, vector<8x1xf32>
    %cst_262 = arith.constant 0.000000e+00 : f32
    %640 = vector.broadcast %cst_262 : f32 to vector<8x1xf32>
    %641 = arith.maximumf %627, %640 : vector<8x1xf32>
    %cst_263 = arith.constant 1.000000e+00 : f32
    %642 = vector.broadcast %cst_263 : f32 to vector<8x1xf32>
    %643 = arith.addf %642, %631 : vector<8x1xf32>
    %644 = math.log %643 : vector<8x1xf32>
    %645 = arith.addf %641, %644 : vector<8x1xf32>
    %646 = tpu.reciprocal %616 {approx = true} : vector<8x1xf32> -> vector<8x1xf32>
    %647 = arith.mulf %646, %645 : vector<8x1xf32>
    %cst_264 = arith.constant 1.000000e+00 : f32
    %648 = vector.broadcast %cst_264 : f32 to vector<8x1xf32>
    %649 = arith.subf %648, %619 : vector<8x1xf32>
    %650 = arith.mulf %649, %647 : vector<8x1xf32>
    %651 = arith.mulf %619, %639 : vector<8x1xf32>
    %652 = arith.addf %650, %651 : vector<8x1xf32>
    %c0_i32_265 = arith.constant 0 : i32
    %653 = vector.broadcast %c0_i32_265 : i32 to vector<8x3xi32>
    %654 = arith.cmpi eq, %331, %653 : vector<8x3xi32>
    %c1_i32_266 = arith.constant 1 : i32
    %655 = vector.broadcast %c1_i32_266 : i32 to vector<8x3xi32>
    %656 = arith.cmpi eq, %331, %655 : vector<8x3xi32>
    %657 = vector.shape_cast %616 : vector<8x1xf32> to vector<8x1xf32>
    %658 = vector.broadcast %657 : vector<8x1xf32> to vector<8x3xf32>
    %659 = vector.shape_cast %619 : vector<8x1xf32> to vector<8x1xf32>
    %660 = vector.broadcast %659 : vector<8x1xf32> to vector<8x3xf32>
    %661 = arith.select %656, %658, %660 : vector<8x3xi1>, vector<8x3xf32>
    %662 = vector.shape_cast %652 : vector<8x1xf32> to vector<8x1xf32>
    %663 = vector.broadcast %662 : vector<8x1xf32> to vector<8x3xf32>
    %664 = arith.select %654, %663, %661 : vector<8x3xi1>, vector<8x3xf32>
    %c3_267 = arith.constant 3 : index
    %c0_268 = arith.constant 0 : index
    %c0_269 = arith.constant 0 : index
    %665 = vector.load %arg6[%c3_267, %c0_268, %c0_269] : memref<32x8x3xf32, #tpu.memory_space<vmem>>, vector<1x8x3xf32>
    %666 = vector.shape_cast %665 : vector<1x8x3xf32> to vector<8x3xf32>
    %667 = vector.shape_cast %664 : vector<8x3xf32> to vector<1x8x3xf32>
    tpu.vector_store %arg6[%c3_267, %c0_268, %c0_269], %667 {strides = array<i32>} : memref<32x8x3xf32, #tpu.memory_space<vmem>>, vector<1x8x3xf32>,
    %668 = vector.broadcast %652 : vector<8x1xf32> to vector<8x128xf32>
    %669 = vector.broadcast %4 : vector<1x128xf32> to vector<8x128xf32>
    %670 = arith.mulf %668, %669 : vector<8x128xf32>
    %671 = arith.addf %670, %620 : vector<8x128xf32>
    %c4_270 = arith.constant 4 : index
    %c0_271 = arith.constant 0 : index
    %c0_272 = arith.constant 0 : index
    %672 = vector.load %arg10[%c4_270, %c0_271, %c0_272] : memref<32x8x128xf32, #tpu.memory_space<vmem>>, vector<1x8x128xf32>
    %673 = vector.shape_cast %672 : vector<1x8x128xf32> to vector<8x128xf32>
    %674 = arith.addf %671, %673 : vector<8x128xf32>
    %675 = arith.negf %674 : vector<8x128xf32>
    %676 = math.exp %675 : vector<8x128xf32>
    %cst_273 = arith.constant 1.000000e+00 : f32
    %677 = vector.broadcast %cst_273 : f32 to vector<8x128xf32>
    %678 = arith.addf %677, %676 : vector<8x128xf32>
    %679 = arith.divf %677, %678 : vector<8x128xf32>
    %680 = vector.extract_strided_slice %679 {offsets = [0, 0], sizes = [8, 32], strides = [1, 1]} : vector<8x128xf32> to vector<8x32xf32>
    %681 = vector.extract_strided_slice %679 {offsets = [0, 32], sizes = [8, 32], strides = [1, 1]} : vector<8x128xf32> to vector<8x32xf32>
    %682 = vector.extract_strided_slice %679 {offsets = [0, 64], sizes = [8, 32], strides = [1, 1]} : vector<8x128xf32> to vector<8x32xf32>
    %cst_274 = arith.constant 2.000000e+00 : f32
    %683 = vector.broadcast %cst_274 : f32 to vector<8x32xf32>
    %684 = arith.mulf %683, %682 : vector<8x32xf32>
    %cst_275 = arith.constant 1.000000e+00 : f32
    %685 = vector.broadcast %cst_275 : f32 to vector<8x32xf32>
    %686 = arith.subf %684, %685 : vector<8x32xf32>
    %687 = vector.extract_strided_slice %679 {offsets = [0, 96], sizes = [8, 32], strides = [1, 1]} : vector<8x128xf32> to vector<8x32xf32>
    %688 = arith.mulf %681, %609 : vector<8x32xf32>
    %689 = arith.mulf %680, %686 : vector<8x32xf32>
    %690 = arith.addf %688, %689 : vector<8x32xf32>
    %691 = math.tanh %690 : vector<8x32xf32>
    %692 = arith.mulf %687, %691 : vector<8x32xf32>
    %693 = arith.truncf %692 : vector<8x32xf32> to vector<8x32xbf16>
    %cst_276 = arith.constant dense<0.000000e+00> : vector<8x256xf32>
    %694 = tpu.matmul %693, %6, %cst_276 {dimension_numbers = #tpu.dot_dimension_numbers<[1], [0], [0], [1], [0, 0, 1, 1], [], []>} : vector<8x32xbf16>, vector<32x256xbf16>, vector<8x256xf32> -> vector<8x256xf32>
    %695 = vector.extract_strided_slice %694 {offsets = [0, 0], sizes = [8, 1], strides = [1, 1]} : vector<8x256xf32> to vector<8x1xf32>
    %696 = vector.broadcast %9 : f32 to vector<8x1xf32>
    %697 = arith.addf %695, %696 : vector<8x1xf32>
    %698 = vector.extract_strided_slice %694 {offsets = [0, 1], sizes = [8, 1], strides = [1, 1]} : vector<8x256xf32> to vector<8x1xf32>
    %699 = vector.broadcast %10 : f32 to vector<8x1xf32>
    %700 = arith.addf %698, %699 : vector<8x1xf32>
    %701 = vector.extract_strided_slice %694 {offsets = [0, 128], sizes = [8, 128], strides = [1, 1]} : vector<8x256xf32> to vector<8x128xf32>
    %c4_277 = arith.constant 4 : index
    %c0_278 = arith.constant 0 : index
    %c0_279 = arith.constant 0 : index
    %702 = vector.load %arg1[%c4_277, %c0_278, %c0_279] : memref<32x8x1xf32, #tpu.memory_space<vmem>>, vector<1x8x1xf32>
    %703 = vector.shape_cast %702 : vector<1x8x1xf32> to vector<8x1xf32>
    %704 = vector.broadcast %7 : f32 to vector<8x1xf32>
    %705 = arith.mulf %704, %703 : vector<8x1xf32>
    %706 = vector.broadcast %8 : f32 to vector<8x1xf32>
    %707 = arith.addf %705, %706 : vector<8x1xf32>
    %708 = arith.mulf %697, %707 : vector<8x1xf32>
    %709 = math.absf %708 : vector<8x1xf32>
    %cst_280 = arith.constant 0.000000e+00 : f32
    %710 = vector.broadcast %cst_280 : f32 to vector<8x1xf32>
    %711 = arith.subf %710, %709 : vector<8x1xf32>
    %712 = math.exp %711 : vector<8x1xf32>
    %cst_281 = arith.constant 1.000000e+00 : f32
    %713 = vector.broadcast %cst_281 : f32 to vector<8x1xf32>
    %714 = arith.addf %713, %712 : vector<8x1xf32>
    %715 = tpu.reciprocal %714 {approx = true} : vector<8x1xf32> -> vector<8x1xf32>
    %cst_282 = arith.constant 0.000000e+00 : f32
    %716 = vector.broadcast %cst_282 : f32 to vector<8x1xf32>
    %717 = arith.cmpf oge, %708, %716 : vector<8x1xf32>
    %cst_283 = arith.constant 1.000000e+00 : f32
    %718 = vector.broadcast %cst_283 : f32 to vector<8x1xf32>
    %719 = arith.subf %718, %715 : vector<8x1xf32>
    %720 = arith.select %717, %715, %719 : vector<8x1xi1>, vector<8x1xf32>
    %cst_284 = arith.constant 0.000000e+00 : f32
    %721 = vector.broadcast %cst_284 : f32 to vector<8x1xf32>
    %722 = arith.maximumf %708, %721 : vector<8x1xf32>
    %cst_285 = arith.constant 1.000000e+00 : f32
    %723 = vector.broadcast %cst_285 : f32 to vector<8x1xf32>
    %724 = arith.addf %723, %712 : vector<8x1xf32>
    %725 = math.log %724 : vector<8x1xf32>
    %726 = arith.addf %722, %725 : vector<8x1xf32>
    %727 = tpu.reciprocal %697 {approx = true} : vector<8x1xf32> -> vector<8x1xf32>
    %728 = arith.mulf %727, %726 : vector<8x1xf32>
    %cst_286 = arith.constant 1.000000e+00 : f32
    %729 = vector.broadcast %cst_286 : f32 to vector<8x1xf32>
    %730 = arith.subf %729, %700 : vector<8x1xf32>
    %731 = arith.mulf %730, %728 : vector<8x1xf32>
    %732 = arith.mulf %700, %720 : vector<8x1xf32>
    %733 = arith.addf %731, %732 : vector<8x1xf32>
    %c0_i32_287 = arith.constant 0 : i32
    %734 = vector.broadcast %c0_i32_287 : i32 to vector<8x3xi32>
    %735 = arith.cmpi eq, %331, %734 : vector<8x3xi32>
    %c1_i32_288 = arith.constant 1 : i32
    %736 = vector.broadcast %c1_i32_288 : i32 to vector<8x3xi32>
    %737 = arith.cmpi eq, %331, %736 : vector<8x3xi32>
    %738 = vector.shape_cast %697 : vector<8x1xf32> to vector<8x1xf32>
    %739 = vector.broadcast %738 : vector<8x1xf32> to vector<8x3xf32>
    %740 = vector.shape_cast %700 : vector<8x1xf32> to vector<8x1xf32>
    %741 = vector.broadcast %740 : vector<8x1xf32> to vector<8x3xf32>
    %742 = arith.select %737, %739, %741 : vector<8x3xi1>, vector<8x3xf32>
    %743 = vector.shape_cast %733 : vector<8x1xf32> to vector<8x1xf32>
    %744 = vector.broadcast %743 : vector<8x1xf32> to vector<8x3xf32>
    %745 = arith.select %735, %744, %742 : vector<8x3xi1>, vector<8x3xf32>
    %c4_289 = arith.constant 4 : index
    %c0_290 = arith.constant 0 : index
    %c0_291 = arith.constant 0 : index
    %746 = vector.load %arg6[%c4_289, %c0_290, %c0_291] : memref<32x8x3xf32, #tpu.memory_space<vmem>>, vector<1x8x3xf32>
    %747 = vector.shape_cast %746 : vector<1x8x3xf32> to vector<8x3xf32>
    %748 = vector.shape_cast %745 : vector<8x3xf32> to vector<1x8x3xf32>
    tpu.vector_store %arg6[%c4_289, %c0_290, %c0_291], %748 {strides = array<i32>} : memref<32x8x3xf32, #tpu.memory_space<vmem>>, vector<1x8x3xf32>,
    %749 = vector.broadcast %733 : vector<8x1xf32> to vector<8x128xf32>
    %750 = vector.broadcast %4 : vector<1x128xf32> to vector<8x128xf32>
    %751 = arith.mulf %749, %750 : vector<8x128xf32>
    %752 = arith.addf %751, %701 : vector<8x128xf32>
    %c5_292 = arith.constant 5 : index
    %c0_293 = arith.constant 0 : index
    %c0_294 = arith.constant 0 : index
    %753 = vector.load %arg10[%c5_292, %c0_293, %c0_294] : memref<32x8x128xf32, #tpu.memory_space<vmem>>, vector<1x8x128xf32>
    %754 = vector.shape_cast %753 : vector<1x8x128xf32> to vector<8x128xf32>
    %755 = arith.addf %752, %754 : vector<8x128xf32>
    %756 = arith.negf %755 : vector<8x128xf32>
    %757 = math.exp %756 : vector<8x128xf32>
    %cst_295 = arith.constant 1.000000e+00 : f32
    %758 = vector.broadcast %cst_295 : f32 to vector<8x128xf32>
    %759 = arith.addf %758, %757 : vector<8x128xf32>
    %760 = arith.divf %758, %759 : vector<8x128xf32>
    %761 = vector.extract_strided_slice %760 {offsets = [0, 0], sizes = [8, 32], strides = [1, 1]} : vector<8x128xf32> to vector<8x32xf32>
    %762 = vector.extract_strided_slice %760 {offsets = [0, 32], sizes = [8, 32], strides = [1, 1]} : vector<8x128xf32> to vector<8x32xf32>
    %763 = vector.extract_strided_slice %760 {offsets = [0, 64], sizes = [8, 32], strides = [1, 1]} : vector<8x128xf32> to vector<8x32xf32>
    %cst_296 = arith.constant 2.000000e+00 : f32
    %764 = vector.broadcast %cst_296 : f32 to vector<8x32xf32>
    %765 = arith.mulf %764, %763 : vector<8x32xf32>
    %cst_297 = arith.constant 1.000000e+00 : f32
    %766 = vector.broadcast %cst_297 : f32 to vector<8x32xf32>
    %767 = arith.subf %765, %766 : vector<8x32xf32>
    %768 = vector.extract_strided_slice %760 {offsets = [0, 96], sizes = [8, 32], strides = [1, 1]} : vector<8x128xf32> to vector<8x32xf32>
    %769 = arith.mulf %762, %690 : vector<8x32xf32>
    %770 = arith.mulf %761, %767 : vector<8x32xf32>
    %771 = arith.addf %769, %770 : vector<8x32xf32>
    %772 = math.tanh %771 : vector<8x32xf32>
    %773 = arith.mulf %768, %772 : vector<8x32xf32>
    %774 = arith.truncf %773 : vector<8x32xf32> to vector<8x32xbf16>
    %cst_298 = arith.constant dense<0.000000e+00> : vector<8x256xf32>
    %775 = tpu.matmul %774, %6, %cst_298 {dimension_numbers = #tpu.dot_dimension_numbers<[1], [0], [0], [1], [0, 0, 1, 1], [], []>} : vector<8x32xbf16>, vector<32x256xbf16>, vector<8x256xf32> -> vector<8x256xf32>
    %776 = vector.extract_strided_slice %775 {offsets = [0, 0], sizes = [8, 1], strides = [1, 1]} : vector<8x256xf32> to vector<8x1xf32>
    %777 = vector.broadcast %9 : f32 to vector<8x1xf32>
    %778 = arith.addf %776, %777 : vector<8x1xf32>
    %779 = vector.extract_strided_slice %775 {offsets = [0, 1], sizes = [8, 1], strides = [1, 1]} : vector<8x256xf32> to vector<8x1xf32>
    %780 = vector.broadcast %10 : f32 to vector<8x1xf32>
    %781 = arith.addf %779, %780 : vector<8x1xf32>
    %782 = vector.extract_strided_slice %775 {offsets = [0, 128], sizes = [8, 128], strides = [1, 1]} : vector<8x256xf32> to vector<8x128xf32>
    %c5_299 = arith.constant 5 : index
    %c0_300 = arith.constant 0 : index
    %c0_301 = arith.constant 0 : index
    %783 = vector.load %arg1[%c5_299, %c0_300, %c0_301] : memref<32x8x1xf32, #tpu.memory_space<vmem>>, vector<1x8x1xf32>
    %784 = vector.shape_cast %783 : vector<1x8x1xf32> to vector<8x1xf32>
    %785 = vector.broadcast %7 : f32 to vector<8x1xf32>
    %786 = arith.mulf %785, %784 : vector<8x1xf32>
    %787 = vector.broadcast %8 : f32 to vector<8x1xf32>
    %788 = arith.addf %786, %787 : vector<8x1xf32>
    %789 = arith.mulf %778, %788 : vector<8x1xf32>
    %790 = math.absf %789 : vector<8x1xf32>
    %cst_302 = arith.constant 0.000000e+00 : f32
    %791 = vector.broadcast %cst_302 : f32 to vector<8x1xf32>
    %792 = arith.subf %791, %790 : vector<8x1xf32>
    %793 = math.exp %792 : vector<8x1xf32>
    %cst_303 = arith.constant 1.000000e+00 : f32
    %794 = vector.broadcast %cst_303 : f32 to vector<8x1xf32>
    %795 = arith.addf %794, %793 : vector<8x1xf32>
    %796 = tpu.reciprocal %795 {approx = true} : vector<8x1xf32> -> vector<8x1xf32>
    %cst_304 = arith.constant 0.000000e+00 : f32
    %797 = vector.broadcast %cst_304 : f32 to vector<8x1xf32>
    %798 = arith.cmpf oge, %789, %797 : vector<8x1xf32>
    %cst_305 = arith.constant 1.000000e+00 : f32
    %799 = vector.broadcast %cst_305 : f32 to vector<8x1xf32>
    %800 = arith.subf %799, %796 : vector<8x1xf32>
    %801 = arith.select %798, %796, %800 : vector<8x1xi1>, vector<8x1xf32>
    %cst_306 = arith.constant 0.000000e+00 : f32
    %802 = vector.broadcast %cst_306 : f32 to vector<8x1xf32>
    %803 = arith.maximumf %789, %802 : vector<8x1xf32>
    %cst_307 = arith.constant 1.000000e+00 : f32
    %804 = vector.broadcast %cst_307 : f32 to vector<8x1xf32>
    %805 = arith.addf %804, %793 : vector<8x1xf32>
    %806 = math.log %805 : vector<8x1xf32>
    %807 = arith.addf %803, %806 : vector<8x1xf32>
    %808 = tpu.reciprocal %778 {approx = true} : vector<8x1xf32> -> vector<8x1xf32>
    %809 = arith.mulf %808, %807 : vector<8x1xf32>
    %cst_308 = arith.constant 1.000000e+00 : f32
    %810 = vector.broadcast %cst_308 : f32 to vector<8x1xf32>
    %811 = arith.subf %810, %781 : vector<8x1xf32>
    %812 = arith.mulf %811, %809 : vector<8x1xf32>
    %813 = arith.mulf %781, %801 : vector<8x1xf32>
    %814 = arith.addf %812, %813 : vector<8x1xf32>
    %c0_i32_309 = arith.constant 0 : i32
    %815 = vector.broadcast %c0_i32_309 : i32 to vector<8x3xi32>
    %816 = arith.cmpi eq, %331, %815 : vector<8x3xi32>
    %c1_i32_310 = arith.constant 1 : i32
    %817 = vector.broadcast %c1_i32_310 : i32 to vector<8x3xi32>
    %818 = arith.cmpi eq, %331, %817 : vector<8x3xi32>
    %819 = vector.shape_cast %778 : vector<8x1xf32> to vector<8x1xf32>
    %820 = vector.broadcast %819 : vector<8x1xf32> to vector<8x3xf32>
    %821 = vector.shape_cast %781 : vector<8x1xf32> to vector<8x1xf32>
    %822 = vector.broadcast %821 : vector<8x1xf32> to vector<8x3xf32>
    %823 = arith.select %818, %820, %822 : vector<8x3xi1>, vector<8x3xf32>
    %824 = vector.shape_cast %814 : vector<8x1xf32> to vector<8x1xf32>
    %825 = vector.broadcast %824 : vector<8x1xf32> to vector<8x3xf32>
    %826 = arith.select %816, %825, %823 : vector<8x3xi1>, vector<8x3xf32>
    %c5_311 = arith.constant 5 : index
    %c0_312 = arith.constant 0 : index
    %c0_313 = arith.constant 0 : index
    %827 = vector.load %arg6[%c5_311, %c0_312, %c0_313] : memref<32x8x3xf32, #tpu.memory_space<vmem>>, vector<1x8x3xf32>
    %828 = vector.shape_cast %827 : vector<1x8x3xf32> to vector<8x3xf32>
    %829 = vector.shape_cast %826 : vector<8x3xf32> to vector<1x8x3xf32>
    tpu.vector_store %arg6[%c5_311, %c0_312, %c0_313], %829 {strides = array<i32>} : memref<32x8x3xf32, #tpu.memory_space<vmem>>, vector<1x8x3xf32>,
    %830 = vector.broadcast %814 : vector<8x1xf32> to vector<8x128xf32>
    %831 = vector.broadcast %4 : vector<1x128xf32> to vector<8x128xf32>
    %832 = arith.mulf %830, %831 : vector<8x128xf32>
    %833 = arith.addf %832, %782 : vector<8x128xf32>
    %c6_314 = arith.constant 6 : index
    %c0_315 = arith.constant 0 : index
    %c0_316 = arith.constant 0 : index
    %834 = vector.load %arg10[%c6_314, %c0_315, %c0_316] : memref<32x8x128xf32, #tpu.memory_space<vmem>>, vector<1x8x128xf32>
    %835 = vector.shape_cast %834 : vector<1x8x128xf32> to vector<8x128xf32>
    %836 = arith.addf %833, %835 : vector<8x128xf32>
    %837 = arith.negf %836 : vector<8x128xf32>
    %838 = math.exp %837 : vector<8x128xf32>
    %cst_317 = arith.constant 1.000000e+00 : f32
    %839 = vector.broadcast %cst_317 : f32 to vector<8x128xf32>
    %840 = arith.addf %839, %838 : vector<8x128xf32>
    %841 = arith.divf %839, %840 : vector<8x128xf32>
    %842 = vector.extract_strided_slice %841 {offsets = [0, 0], sizes = [8, 32], strides = [1, 1]} : vector<8x128xf32> to vector<8x32xf32>
    %843 = vector.extract_strided_slice %841 {offsets = [0, 32], sizes = [8, 32], strides = [1, 1]} : vector<8x128xf32> to vector<8x32xf32>
    %844 = vector.extract_strided_slice %841 {offsets = [0, 64], sizes = [8, 32], strides = [1, 1]} : vector<8x128xf32> to vector<8x32xf32>
    %cst_318 = arith.constant 2.000000e+00 : f32
    %845 = vector.broadcast %cst_318 : f32 to vector<8x32xf32>
    %846 = arith.mulf %845, %844 : vector<8x32xf32>
    %cst_319 = arith.constant 1.000000e+00 : f32
    %847 = vector.broadcast %cst_319 : f32 to vector<8x32xf32>
    %848 = arith.subf %846, %847 : vector<8x32xf32>
    %849 = vector.extract_strided_slice %841 {offsets = [0, 96], sizes = [8, 32], strides = [1, 1]} : vector<8x128xf32> to vector<8x32xf32>
    %850 = arith.mulf %843, %771 : vector<8x32xf32>
    %851 = arith.mulf %842, %848 : vector<8x32xf32>
    %852 = arith.addf %850, %851 : vector<8x32xf32>
    %853 = math.tanh %852 : vector<8x32xf32>
    %854 = arith.mulf %849, %853 : vector<8x32xf32>
    %855 = arith.truncf %854 : vector<8x32xf32> to vector<8x32xbf16>
    %cst_320 = arith.constant dense<0.000000e+00> : vector<8x256xf32>
    %856 = tpu.matmul %855, %6, %cst_320 {dimension_numbers = #tpu.dot_dimension_numbers<[1], [0], [0], [1], [0, 0, 1, 1], [], []>} : vector<8x32xbf16>, vector<32x256xbf16>, vector<8x256xf32> -> vector<8x256xf32>
    %857 = vector.extract_strided_slice %856 {offsets = [0, 0], sizes = [8, 1], strides = [1, 1]} : vector<8x256xf32> to vector<8x1xf32>
    %858 = vector.broadcast %9 : f32 to vector<8x1xf32>
    %859 = arith.addf %857, %858 : vector<8x1xf32>
    %860 = vector.extract_strided_slice %856 {offsets = [0, 1], sizes = [8, 1], strides = [1, 1]} : vector<8x256xf32> to vector<8x1xf32>
    %861 = vector.broadcast %10 : f32 to vector<8x1xf32>
    %862 = arith.addf %860, %861 : vector<8x1xf32>
    %863 = vector.extract_strided_slice %856 {offsets = [0, 128], sizes = [8, 128], strides = [1, 1]} : vector<8x256xf32> to vector<8x128xf32>
    %c6_321 = arith.constant 6 : index
    %c0_322 = arith.constant 0 : index
    %c0_323 = arith.constant 0 : index
    %864 = vector.load %arg1[%c6_321, %c0_322, %c0_323] : memref<32x8x1xf32, #tpu.memory_space<vmem>>, vector<1x8x1xf32>
    %865 = vector.shape_cast %864 : vector<1x8x1xf32> to vector<8x1xf32>
    %866 = vector.broadcast %7 : f32 to vector<8x1xf32>
    %867 = arith.mulf %866, %865 : vector<8x1xf32>
    %868 = vector.broadcast %8 : f32 to vector<8x1xf32>
    %869 = arith.addf %867, %868 : vector<8x1xf32>
    %870 = arith.mulf %859, %869 : vector<8x1xf32>
    %871 = math.absf %870 : vector<8x1xf32>
    %cst_324 = arith.constant 0.000000e+00 : f32
    %872 = vector.broadcast %cst_324 : f32 to vector<8x1xf32>
    %873 = arith.subf %872, %871 : vector<8x1xf32>
    %874 = math.exp %873 : vector<8x1xf32>
    %cst_325 = arith.constant 1.000000e+00 : f32
    %875 = vector.broadcast %cst_325 : f32 to vector<8x1xf32>
    %876 = arith.addf %875, %874 : vector<8x1xf32>
    %877 = tpu.reciprocal %876 {approx = true} : vector<8x1xf32> -> vector<8x1xf32>
    %cst_326 = arith.constant 0.000000e+00 : f32
    %878 = vector.broadcast %cst_326 : f32 to vector<8x1xf32>
    %879 = arith.cmpf oge, %870, %878 : vector<8x1xf32>
    %cst_327 = arith.constant 1.000000e+00 : f32
    %880 = vector.broadcast %cst_327 : f32 to vector<8x1xf32>
    %881 = arith.subf %880, %877 : vector<8x1xf32>
    %882 = arith.select %879, %877, %881 : vector<8x1xi1>, vector<8x1xf32>
    %cst_328 = arith.constant 0.000000e+00 : f32
    %883 = vector.broadcast %cst_328 : f32 to vector<8x1xf32>
    %884 = arith.maximumf %870, %883 : vector<8x1xf32>
    %cst_329 = arith.constant 1.000000e+00 : f32
    %885 = vector.broadcast %cst_329 : f32 to vector<8x1xf32>
    %886 = arith.addf %885, %874 : vector<8x1xf32>
    %887 = math.log %886 : vector<8x1xf32>
    %888 = arith.addf %884, %887 : vector<8x1xf32>
    %889 = tpu.reciprocal %859 {approx = true} : vector<8x1xf32> -> vector<8x1xf32>
    %890 = arith.mulf %889, %888 : vector<8x1xf32>
    %cst_330 = arith.constant 1.000000e+00 : f32
    %891 = vector.broadcast %cst_330 : f32 to vector<8x1xf32>
    %892 = arith.subf %891, %862 : vector<8x1xf32>
    %893 = arith.mulf %892, %890 : vector<8x1xf32>
    %894 = arith.mulf %862, %882 : vector<8x1xf32>
    %895 = arith.addf %893, %894 : vector<8x1xf32>
    %c0_i32_331 = arith.constant 0 : i32
    %896 = vector.broadcast %c0_i32_331 : i32 to vector<8x3xi32>
    %897 = arith.cmpi eq, %331, %896 : vector<8x3xi32>
    %c1_i32_332 = arith.constant 1 : i32
    %898 = vector.broadcast %c1_i32_332 : i32 to vector<8x3xi32>
    %899 = arith.cmpi eq, %331, %898 : vector<8x3xi32>
    %900 = vector.shape_cast %859 : vector<8x1xf32> to vector<8x1xf32>
    %901 = vector.broadcast %900 : vector<8x1xf32> to vector<8x3xf32>
    %902 = vector.shape_cast %862 : vector<8x1xf32> to vector<8x1xf32>
    %903 = vector.broadcast %902 : vector<8x1xf32> to vector<8x3xf32>
    %904 = arith.select %899, %901, %903 : vector<8x3xi1>, vector<8x3xf32>
    %905 = vector.shape_cast %895 : vector<8x1xf32> to vector<8x1xf32>
    %906 = vector.broadcast %905 : vector<8x1xf32> to vector<8x3xf32>
    %907 = arith.select %897, %906, %904 : vector<8x3xi1>, vector<8x3xf32>
    %c6_333 = arith.constant 6 : index
    %c0_334 = arith.constant 0 : index
    %c0_335 = arith.constant 0 : index
    %908 = vector.load %arg6[%c6_333, %c0_334, %c0_335] : memref<32x8x3xf32, #tpu.memory_space<vmem>>, vector<1x8x3xf32>
    %909 = vector.shape_cast %908 : vector<1x8x3xf32> to vector<8x3xf32>
    %910 = vector.shape_cast %907 : vector<8x3xf32> to vector<1x8x3xf32>
    tpu.vector_store %arg6[%c6_333, %c0_334, %c0_335], %910 {strides = array<i32>} : memref<32x8x3xf32, #tpu.memory_space<vmem>>, vector<1x8x3xf32>,
    %911 = vector.broadcast %895 : vector<8x1xf32> to vector<8x128xf32>
    %912 = vector.broadcast %4 : vector<1x128xf32> to vector<8x128xf32>
    %913 = arith.mulf %911, %912 : vector<8x128xf32>
    %914 = arith.addf %913, %863 : vector<8x128xf32>
    %c7_336 = arith.constant 7 : index
    %c0_337 = arith.constant 0 : index
    %c0_338 = arith.constant 0 : index
    %915 = vector.load %arg10[%c7_336, %c0_337, %c0_338] : memref<32x8x128xf32, #tpu.memory_space<vmem>>, vector<1x8x128xf32>
    %916 = vector.shape_cast %915 : vector<1x8x128xf32> to vector<8x128xf32>
    %917 = arith.addf %914, %916 : vector<8x128xf32>
    %918 = arith.negf %917 : vector<8x128xf32>
    %919 = math.exp %918 : vector<8x128xf32>
    %cst_339 = arith.constant 1.000000e+00 : f32
    %920 = vector.broadcast %cst_339 : f32 to vector<8x128xf32>
    %921 = arith.addf %920, %919 : vector<8x128xf32>
    %922 = arith.divf %920, %921 : vector<8x128xf32>
    %923 = vector.extract_strided_slice %922 {offsets = [0, 0], sizes = [8, 32], strides = [1, 1]} : vector<8x128xf32> to vector<8x32xf32>
    %924 = vector.extract_strided_slice %922 {offsets = [0, 32], sizes = [8, 32], strides = [1, 1]} : vector<8x128xf32> to vector<8x32xf32>
    %925 = vector.extract_strided_slice %922 {offsets = [0, 64], sizes = [8, 32], strides = [1, 1]} : vector<8x128xf32> to vector<8x32xf32>
    %cst_340 = arith.constant 2.000000e+00 : f32
    %926 = vector.broadcast %cst_340 : f32 to vector<8x32xf32>
    %927 = arith.mulf %926, %925 : vector<8x32xf32>
    %cst_341 = arith.constant 1.000000e+00 : f32
    %928 = vector.broadcast %cst_341 : f32 to vector<8x32xf32>
    %929 = arith.subf %927, %928 : vector<8x32xf32>
    %930 = vector.extract_strided_slice %922 {offsets = [0, 96], sizes = [8, 32], strides = [1, 1]} : vector<8x128xf32> to vector<8x32xf32>
    %931 = arith.mulf %924, %852 : vector<8x32xf32>
    %932 = arith.mulf %923, %929 : vector<8x32xf32>
    %933 = arith.addf %931, %932 : vector<8x32xf32>
    %934 = math.tanh %933 : vector<8x32xf32>
    %935 = arith.mulf %930, %934 : vector<8x32xf32>
    %936 = arith.truncf %935 : vector<8x32xf32> to vector<8x32xbf16>
    %cst_342 = arith.constant dense<0.000000e+00> : vector<8x256xf32>
    %937 = tpu.matmul %936, %6, %cst_342 {dimension_numbers = #tpu.dot_dimension_numbers<[1], [0], [0], [1], [0, 0, 1, 1], [], []>} : vector<8x32xbf16>, vector<32x256xbf16>, vector<8x256xf32> -> vector<8x256xf32>
    %938 = vector.extract_strided_slice %937 {offsets = [0, 0], sizes = [8, 1], strides = [1, 1]} : vector<8x256xf32> to vector<8x1xf32>
    %939 = vector.broadcast %9 : f32 to vector<8x1xf32>
    %940 = arith.addf %938, %939 : vector<8x1xf32>
    %941 = vector.extract_strided_slice %937 {offsets = [0, 1], sizes = [8, 1], strides = [1, 1]} : vector<8x256xf32> to vector<8x1xf32>
    %942 = vector.broadcast %10 : f32 to vector<8x1xf32>
    %943 = arith.addf %941, %942 : vector<8x1xf32>
    %944 = vector.extract_strided_slice %937 {offsets = [0, 128], sizes = [8, 128], strides = [1, 1]} : vector<8x256xf32> to vector<8x128xf32>
    %c7_343 = arith.constant 7 : index
    %c0_344 = arith.constant 0 : index
    %c0_345 = arith.constant 0 : index
    %945 = vector.load %arg1[%c7_343, %c0_344, %c0_345] : memref<32x8x1xf32, #tpu.memory_space<vmem>>, vector<1x8x1xf32>
    %946 = vector.shape_cast %945 : vector<1x8x1xf32> to vector<8x1xf32>
    %947 = vector.broadcast %7 : f32 to vector<8x1xf32>
    %948 = arith.mulf %947, %946 : vector<8x1xf32>
    %949 = vector.broadcast %8 : f32 to vector<8x1xf32>
    %950 = arith.addf %948, %949 : vector<8x1xf32>
    %951 = arith.mulf %940, %950 : vector<8x1xf32>
    %952 = math.absf %951 : vector<8x1xf32>
    %cst_346 = arith.constant 0.000000e+00 : f32
    %953 = vector.broadcast %cst_346 : f32 to vector<8x1xf32>
    %954 = arith.subf %953, %952 : vector<8x1xf32>
    %955 = math.exp %954 : vector<8x1xf32>
    %cst_347 = arith.constant 1.000000e+00 : f32
    %956 = vector.broadcast %cst_347 : f32 to vector<8x1xf32>
    %957 = arith.addf %956, %955 : vector<8x1xf32>
    %958 = tpu.reciprocal %957 {approx = true} : vector<8x1xf32> -> vector<8x1xf32>
    %cst_348 = arith.constant 0.000000e+00 : f32
    %959 = vector.broadcast %cst_348 : f32 to vector<8x1xf32>
    %960 = arith.cmpf oge, %951, %959 : vector<8x1xf32>
    %cst_349 = arith.constant 1.000000e+00 : f32
    %961 = vector.broadcast %cst_349 : f32 to vector<8x1xf32>
    %962 = arith.subf %961, %958 : vector<8x1xf32>
    %963 = arith.select %960, %958, %962 : vector<8x1xi1>, vector<8x1xf32>
    %cst_350 = arith.constant 0.000000e+00 : f32
    %964 = vector.broadcast %cst_350 : f32 to vector<8x1xf32>
    %965 = arith.maximumf %951, %964 : vector<8x1xf32>
    %cst_351 = arith.constant 1.000000e+00 : f32
    %966 = vector.broadcast %cst_351 : f32 to vector<8x1xf32>
    %967 = arith.addf %966, %955 : vector<8x1xf32>
    %968 = math.log %967 : vector<8x1xf32>
    %969 = arith.addf %965, %968 : vector<8x1xf32>
    %970 = tpu.reciprocal %940 {approx = true} : vector<8x1xf32> -> vector<8x1xf32>
    %971 = arith.mulf %970, %969 : vector<8x1xf32>
    %cst_352 = arith.constant 1.000000e+00 : f32
    %972 = vector.broadcast %cst_352 : f32 to vector<8x1xf32>
    %973 = arith.subf %972, %943 : vector<8x1xf32>
    %974 = arith.mulf %973, %971 : vector<8x1xf32>
    %975 = arith.mulf %943, %963 : vector<8x1xf32>
    %976 = arith.addf %974, %975 : vector<8x1xf32>
    %c0_i32_353 = arith.constant 0 : i32
    %977 = vector.broadcast %c0_i32_353 : i32 to vector<8x3xi32>
    %978 = arith.cmpi eq, %331, %977 : vector<8x3xi32>
    %c1_i32_354 = arith.constant 1 : i32
    %979 = vector.broadcast %c1_i32_354 : i32 to vector<8x3xi32>
    %980 = arith.cmpi eq, %331, %979 : vector<8x3xi32>
    %981 = vector.shape_cast %940 : vector<8x1xf32> to vector<8x1xf32>
    %982 = vector.broadcast %981 : vector<8x1xf32> to vector<8x3xf32>
    %983 = vector.shape_cast %943 : vector<8x1xf32> to vector<8x1xf32>
    %984 = vector.broadcast %983 : vector<8x1xf32> to vector<8x3xf32>
    %985 = arith.select %980, %982, %984 : vector<8x3xi1>, vector<8x3xf32>
    %986 = vector.shape_cast %976 : vector<8x1xf32> to vector<8x1xf32>
    %987 = vector.broadcast %986 : vector<8x1xf32> to vector<8x3xf32>
    %988 = arith.select %978, %987, %985 : vector<8x3xi1>, vector<8x3xf32>
    %c7_355 = arith.constant 7 : index
    %c0_356 = arith.constant 0 : index
    %c0_357 = arith.constant 0 : index
    %989 = vector.load %arg6[%c7_355, %c0_356, %c0_357] : memref<32x8x3xf32, #tpu.memory_space<vmem>>, vector<1x8x3xf32>
    %990 = vector.shape_cast %989 : vector<1x8x3xf32> to vector<8x3xf32>
    %991 = vector.shape_cast %988 : vector<8x3xf32> to vector<1x8x3xf32>
    tpu.vector_store %arg6[%c7_355, %c0_356, %c0_357], %991 {strides = array<i32>} : memref<32x8x3xf32, #tpu.memory_space<vmem>>, vector<1x8x3xf32>,
    %992 = vector.broadcast %976 : vector<8x1xf32> to vector<8x128xf32>
    %993 = vector.broadcast %4 : vector<1x128xf32> to vector<8x128xf32>
    %994 = arith.mulf %992, %993 : vector<8x128xf32>
    %995 = arith.addf %994, %944 : vector<8x128xf32>
    %c8_358 = arith.constant 8 : index
    %c0_359 = arith.constant 0 : index
    %c0_360 = arith.constant 0 : index
    %996 = vector.load %arg10[%c8_358, %c0_359, %c0_360] : memref<32x8x128xf32, #tpu.memory_space<vmem>>, vector<1x8x128xf32>
    %997 = vector.shape_cast %996 : vector<1x8x128xf32> to vector<8x128xf32>
    %998 = arith.addf %995, %997 : vector<8x128xf32>
    %999 = arith.negf %998 : vector<8x128xf32>
    %1000 = math.exp %999 : vector<8x128xf32>
    %cst_361 = arith.constant 1.000000e+00 : f32
    %1001 = vector.broadcast %cst_361 : f32 to vector<8x128xf32>
    %1002 = arith.addf %1001, %1000 : vector<8x128xf32>
    %1003 = arith.divf %1001, %1002 : vector<8x128xf32>
    %1004 = vector.extract_strided_slice %1003 {offsets = [0, 0], sizes = [8, 32], strides = [1, 1]} : vector<8x128xf32> to vector<8x32xf32>
    %1005 = vector.extract_strided_slice %1003 {offsets = [0, 32], sizes = [8, 32], strides = [1, 1]} : vector<8x128xf32> to vector<8x32xf32>
    %1006 = vector.extract_strided_slice %1003 {offsets = [0, 64], sizes = [8, 32], strides = [1, 1]} : vector<8x128xf32> to vector<8x32xf32>
    %cst_362 = arith.constant 2.000000e+00 : f32
    %1007 = vector.broadcast %cst_362 : f32 to vector<8x32xf32>
    %1008 = arith.mulf %1007, %1006 : vector<8x32xf32>
    %cst_363 = arith.constant 1.000000e+00 : f32
    %1009 = vector.broadcast %cst_363 : f32 to vector<8x32xf32>
    %1010 = arith.subf %1008, %1009 : vector<8x32xf32>
    %1011 = vector.extract_strided_slice %1003 {offsets = [0, 96], sizes = [8, 32], strides = [1, 1]} : vector<8x128xf32> to vector<8x32xf32>
    %1012 = arith.mulf %1005, %933 : vector<8x32xf32>
    %1013 = arith.mulf %1004, %1010 : vector<8x32xf32>
    %1014 = arith.addf %1012, %1013 : vector<8x32xf32>
    %1015 = math.tanh %1014 : vector<8x32xf32>
    %1016 = arith.mulf %1011, %1015 : vector<8x32xf32>
    %1017 = arith.truncf %1016 : vector<8x32xf32> to vector<8x32xbf16>
    %cst_364 = arith.constant dense<0.000000e+00> : vector<8x256xf32>
    %1018 = tpu.matmul %1017, %6, %cst_364 {dimension_numbers = #tpu.dot_dimension_numbers<[1], [0], [0], [1], [0, 0, 1, 1], [], []>} : vector<8x32xbf16>, vector<32x256xbf16>, vector<8x256xf32> -> vector<8x256xf32>
    %1019 = vector.extract_strided_slice %1018 {offsets = [0, 0], sizes = [8, 1], strides = [1, 1]} : vector<8x256xf32> to vector<8x1xf32>
    %1020 = vector.broadcast %9 : f32 to vector<8x1xf32>
    %1021 = arith.addf %1019, %1020 : vector<8x1xf32>
    %1022 = vector.extract_strided_slice %1018 {offsets = [0, 1], sizes = [8, 1], strides = [1, 1]} : vector<8x256xf32> to vector<8x1xf32>
    %1023 = vector.broadcast %10 : f32 to vector<8x1xf32>
    %1024 = arith.addf %1022, %1023 : vector<8x1xf32>
    %1025 = vector.extract_strided_slice %1018 {offsets = [0, 128], sizes = [8, 128], strides = [1, 1]} : vector<8x256xf32> to vector<8x128xf32>
    %c8_365 = arith.constant 8 : index
    %c0_366 = arith.constant 0 : index
    %c0_367 = arith.constant 0 : index
    %1026 = vector.load %arg1[%c8_365, %c0_366, %c0_367] : memref<32x8x1xf32, #tpu.memory_space<vmem>>, vector<1x8x1xf32>
    %1027 = vector.shape_cast %1026 : vector<1x8x1xf32> to vector<8x1xf32>
    %1028 = vector.broadcast %7 : f32 to vector<8x1xf32>
    %1029 = arith.mulf %1028, %1027 : vector<8x1xf32>
    %1030 = vector.broadcast %8 : f32 to vector<8x1xf32>
    %1031 = arith.addf %1029, %1030 : vector<8x1xf32>
    %1032 = arith.mulf %1021, %1031 : vector<8x1xf32>
    %1033 = math.absf %1032 : vector<8x1xf32>
    %cst_368 = arith.constant 0.000000e+00 : f32
    %1034 = vector.broadcast %cst_368 : f32 to vector<8x1xf32>
    %1035 = arith.subf %1034, %1033 : vector<8x1xf32>
    %1036 = math.exp %1035 : vector<8x1xf32>
    %cst_369 = arith.constant 1.000000e+00 : f32
    %1037 = vector.broadcast %cst_369 : f32 to vector<8x1xf32>
    %1038 = arith.addf %1037, %1036 : vector<8x1xf32>
    %1039 = tpu.reciprocal %1038 {approx = true} : vector<8x1xf32> -> vector<8x1xf32>
    %cst_370 = arith.constant 0.000000e+00 : f32
    %1040 = vector.broadcast %cst_370 : f32 to vector<8x1xf32>
    %1041 = arith.cmpf oge, %1032, %1040 : vector<8x1xf32>
    %cst_371 = arith.constant 1.000000e+00 : f32
    %1042 = vector.broadcast %cst_371 : f32 to vector<8x1xf32>
    %1043 = arith.subf %1042, %1039 : vector<8x1xf32>
    %1044 = arith.select %1041, %1039, %1043 : vector<8x1xi1>, vector<8x1xf32>
    %cst_372 = arith.constant 0.000000e+00 : f32
    %1045 = vector.broadcast %cst_372 : f32 to vector<8x1xf32>
    %1046 = arith.maximumf %1032, %1045 : vector<8x1xf32>
    %cst_373 = arith.constant 1.000000e+00 : f32
    %1047 = vector.broadcast %cst_373 : f32 to vector<8x1xf32>
    %1048 = arith.addf %1047, %1036 : vector<8x1xf32>
    %1049 = math.log %1048 : vector<8x1xf32>
    %1050 = arith.addf %1046, %1049 : vector<8x1xf32>
    %1051 = tpu.reciprocal %1021 {approx = true} : vector<8x1xf32> -> vector<8x1xf32>
    %1052 = arith.mulf %1051, %1050 : vector<8x1xf32>
    %cst_374 = arith.constant 1.000000e+00 : f32
    %1053 = vector.broadcast %cst_374 : f32 to vector<8x1xf32>
    %1054 = arith.subf %1053, %1024 : vector<8x1xf32>
    %1055 = arith.mulf %1054, %1052 : vector<8x1xf32>
    %1056 = arith.mulf %1024, %1044 : vector<8x1xf32>
    %1057 = arith.addf %1055, %1056 : vector<8x1xf32>
    %c0_i32_375 = arith.constant 0 : i32
    %1058 = vector.broadcast %c0_i32_375 : i32 to vector<8x3xi32>
    %1059 = arith.cmpi eq, %331, %1058 : vector<8x3xi32>
    %c1_i32_376 = arith.constant 1 : i32
    %1060 = vector.broadcast %c1_i32_376 : i32 to vector<8x3xi32>
    %1061 = arith.cmpi eq, %331, %1060 : vector<8x3xi32>
    %1062 = vector.shape_cast %1021 : vector<8x1xf32> to vector<8x1xf32>
    %1063 = vector.broadcast %1062 : vector<8x1xf32> to vector<8x3xf32>
    %1064 = vector.shape_cast %1024 : vector<8x1xf32> to vector<8x1xf32>
    %1065 = vector.broadcast %1064 : vector<8x1xf32> to vector<8x3xf32>
    %1066 = arith.select %1061, %1063, %1065 : vector<8x3xi1>, vector<8x3xf32>
    %1067 = vector.shape_cast %1057 : vector<8x1xf32> to vector<8x1xf32>
    %1068 = vector.broadcast %1067 : vector<8x1xf32> to vector<8x3xf32>
    %1069 = arith.select %1059, %1068, %1066 : vector<8x3xi1>, vector<8x3xf32>
    %c8_377 = arith.constant 8 : index
    %c0_378 = arith.constant 0 : index
    %c0_379 = arith.constant 0 : index
    %1070 = vector.load %arg6[%c8_377, %c0_378, %c0_379] : memref<32x8x3xf32, #tpu.memory_space<vmem>>, vector<1x8x3xf32>
    %1071 = vector.shape_cast %1070 : vector<1x8x3xf32> to vector<8x3xf32>
    %1072 = vector.shape_cast %1069 : vector<8x3xf32> to vector<1x8x3xf32>
    tpu.vector_store %arg6[%c8_377, %c0_378, %c0_379], %1072 {strides = array<i32>} : memref<32x8x3xf32, #tpu.memory_space<vmem>>, vector<1x8x3xf32>,
    %1073 = vector.broadcast %1057 : vector<8x1xf32> to vector<8x128xf32>
    %1074 = vector.broadcast %4 : vector<1x128xf32> to vector<8x128xf32>
    %1075 = arith.mulf %1073, %1074 : vector<8x128xf32>
    %1076 = arith.addf %1075, %1025 : vector<8x128xf32>
    %c9_380 = arith.constant 9 : index
    %c0_381 = arith.constant 0 : index
    %c0_382 = arith.constant 0 : index
    %1077 = vector.load %arg10[%c9_380, %c0_381, %c0_382] : memref<32x8x128xf32, #tpu.memory_space<vmem>>, vector<1x8x128xf32>
    %1078 = vector.shape_cast %1077 : vector<1x8x128xf32> to vector<8x128xf32>
    %1079 = arith.addf %1076, %1078 : vector<8x128xf32>
    %1080 = arith.negf %1079 : vector<8x128xf32>
    %1081 = math.exp %1080 : vector<8x128xf32>
    %cst_383 = arith.constant 1.000000e+00 : f32
    %1082 = vector.broadcast %cst_383 : f32 to vector<8x128xf32>
    %1083 = arith.addf %1082, %1081 : vector<8x128xf32>
    %1084 = arith.divf %1082, %1083 : vector<8x128xf32>
    %1085 = vector.extract_strided_slice %1084 {offsets = [0, 0], sizes = [8, 32], strides = [1, 1]} : vector<8x128xf32> to vector<8x32xf32>
    %1086 = vector.extract_strided_slice %1084 {offsets = [0, 32], sizes = [8, 32], strides = [1, 1]} : vector<8x128xf32> to vector<8x32xf32>
    %1087 = vector.extract_strided_slice %1084 {offsets = [0, 64], sizes = [8, 32], strides = [1, 1]} : vector<8x128xf32> to vector<8x32xf32>
    %cst_384 = arith.constant 2.000000e+00 : f32
    %1088 = vector.broadcast %cst_384 : f32 to vector<8x32xf32>
    %1089 = arith.mulf %1088, %1087 : vector<8x32xf32>
    %cst_385 = arith.constant 1.000000e+00 : f32
    %1090 = vector.broadcast %cst_385 : f32 to vector<8x32xf32>
    %1091 = arith.subf %1089, %1090 : vector<8x32xf32>
    %1092 = vector.extract_strided_slice %1084 {offsets = [0, 96], sizes = [8, 32], strides = [1, 1]} : vector<8x128xf32> to vector<8x32xf32>
    %1093 = arith.mulf %1086, %1014 : vector<8x32xf32>
    %1094 = arith.mulf %1085, %1091 : vector<8x32xf32>
    %1095 = arith.addf %1093, %1094 : vector<8x32xf32>
    %1096 = math.tanh %1095 : vector<8x32xf32>
    %1097 = arith.mulf %1092, %1096 : vector<8x32xf32>
    %1098 = arith.truncf %1097 : vector<8x32xf32> to vector<8x32xbf16>
    %cst_386 = arith.constant dense<0.000000e+00> : vector<8x256xf32>
    %1099 = tpu.matmul %1098, %6, %cst_386 {dimension_numbers = #tpu.dot_dimension_numbers<[1], [0], [0], [1], [0, 0, 1, 1], [], []>} : vector<8x32xbf16>, vector<32x256xbf16>, vector<8x256xf32> -> vector<8x256xf32>
    %1100 = vector.extract_strided_slice %1099 {offsets = [0, 0], sizes = [8, 1], strides = [1, 1]} : vector<8x256xf32> to vector<8x1xf32>
    %1101 = vector.broadcast %9 : f32 to vector<8x1xf32>
    %1102 = arith.addf %1100, %1101 : vector<8x1xf32>
    %1103 = vector.extract_strided_slice %1099 {offsets = [0, 1], sizes = [8, 1], strides = [1, 1]} : vector<8x256xf32> to vector<8x1xf32>
    %1104 = vector.broadcast %10 : f32 to vector<8x1xf32>
    %1105 = arith.addf %1103, %1104 : vector<8x1xf32>
    %1106 = vector.extract_strided_slice %1099 {offsets = [0, 128], sizes = [8, 128], strides = [1, 1]} : vector<8x256xf32> to vector<8x128xf32>
    %c9_387 = arith.constant 9 : index
    %c0_388 = arith.constant 0 : index
    %c0_389 = arith.constant 0 : index
    %1107 = vector.load %arg1[%c9_387, %c0_388, %c0_389] : memref<32x8x1xf32, #tpu.memory_space<vmem>>, vector<1x8x1xf32>
    %1108 = vector.shape_cast %1107 : vector<1x8x1xf32> to vector<8x1xf32>
    %1109 = vector.broadcast %7 : f32 to vector<8x1xf32>
    %1110 = arith.mulf %1109, %1108 : vector<8x1xf32>
    %1111 = vector.broadcast %8 : f32 to vector<8x1xf32>
    %1112 = arith.addf %1110, %1111 : vector<8x1xf32>
    %1113 = arith.mulf %1102, %1112 : vector<8x1xf32>
    %1114 = math.absf %1113 : vector<8x1xf32>
    %cst_390 = arith.constant 0.000000e+00 : f32
    %1115 = vector.broadcast %cst_390 : f32 to vector<8x1xf32>
    %1116 = arith.subf %1115, %1114 : vector<8x1xf32>
    %1117 = math.exp %1116 : vector<8x1xf32>
    %cst_391 = arith.constant 1.000000e+00 : f32
    %1118 = vector.broadcast %cst_391 : f32 to vector<8x1xf32>
    %1119 = arith.addf %1118, %1117 : vector<8x1xf32>
    %1120 = tpu.reciprocal %1119 {approx = true} : vector<8x1xf32> -> vector<8x1xf32>
    %cst_392 = arith.constant 0.000000e+00 : f32
    %1121 = vector.broadcast %cst_392 : f32 to vector<8x1xf32>
    %1122 = arith.cmpf oge, %1113, %1121 : vector<8x1xf32>
    %cst_393 = arith.constant 1.000000e+00 : f32
    %1123 = vector.broadcast %cst_393 : f32 to vector<8x1xf32>
    %1124 = arith.subf %1123, %1120 : vector<8x1xf32>
    %1125 = arith.select %1122, %1120, %1124 : vector<8x1xi1>, vector<8x1xf32>
    %cst_394 = arith.constant 0.000000e+00 : f32
    %1126 = vector.broadcast %cst_394 : f32 to vector<8x1xf32>
    %1127 = arith.maximumf %1113, %1126 : vector<8x1xf32>
    %cst_395 = arith.constant 1.000000e+00 : f32
    %1128 = vector.broadcast %cst_395 : f32 to vector<8x1xf32>
    %1129 = arith.addf %1128, %1117 : vector<8x1xf32>
    %1130 = math.log %1129 : vector<8x1xf32>
    %1131 = arith.addf %1127, %1130 : vector<8x1xf32>
    %1132 = tpu.reciprocal %1102 {approx = true} : vector<8x1xf32> -> vector<8x1xf32>
    %1133 = arith.mulf %1132, %1131 : vector<8x1xf32>
    %cst_396 = arith.constant 1.000000e+00 : f32
    %1134 = vector.broadcast %cst_396 : f32 to vector<8x1xf32>
    %1135 = arith.subf %1134, %1105 : vector<8x1xf32>
    %1136 = arith.mulf %1135, %1133 : vector<8x1xf32>
    %1137 = arith.mulf %1105, %1125 : vector<8x1xf32>
    %1138 = arith.addf %1136, %1137 : vector<8x1xf32>
    %c0_i32_397 = arith.constant 0 : i32
    %1139 = vector.broadcast %c0_i32_397 : i32 to vector<8x3xi32>
    %1140 = arith.cmpi eq, %331, %1139 : vector<8x3xi32>
    %c1_i32_398 = arith.constant 1 : i32
    %1141 = vector.broadcast %c1_i32_398 : i32 to vector<8x3xi32>
    %1142 = arith.cmpi eq, %331, %1141 : vector<8x3xi32>
    %1143 = vector.shape_cast %1102 : vector<8x1xf32> to vector<8x1xf32>
    %1144 = vector.broadcast %1143 : vector<8x1xf32> to vector<8x3xf32>
    %1145 = vector.shape_cast %1105 : vector<8x1xf32> to vector<8x1xf32>
    %1146 = vector.broadcast %1145 : vector<8x1xf32> to vector<8x3xf32>
    %1147 = arith.select %1142, %1144, %1146 : vector<8x3xi1>, vector<8x3xf32>
    %1148 = vector.shape_cast %1138 : vector<8x1xf32> to vector<8x1xf32>
    %1149 = vector.broadcast %1148 : vector<8x1xf32> to vector<8x3xf32>
    %1150 = arith.select %1140, %1149, %1147 : vector<8x3xi1>, vector<8x3xf32>
    %c9_399 = arith.constant 9 : index
    %c0_400 = arith.constant 0 : index
    %c0_401 = arith.constant 0 : index
    %1151 = vector.load %arg6[%c9_399, %c0_400, %c0_401] : memref<32x8x3xf32, #tpu.memory_space<vmem>>, vector<1x8x3xf32>
    %1152 = vector.shape_cast %1151 : vector<1x8x3xf32> to vector<8x3xf32>
    %1153 = vector.shape_cast %1150 : vector<8x3xf32> to vector<1x8x3xf32>
    tpu.vector_store %arg6[%c9_399, %c0_400, %c0_401], %1153 {strides = array<i32>} : memref<32x8x3xf32, #tpu.memory_space<vmem>>, vector<1x8x3xf32>,
    %1154 = vector.broadcast %1138 : vector<8x1xf32> to vector<8x128xf32>
    %1155 = vector.broadcast %4 : vector<1x128xf32> to vector<8x128xf32>
    %1156 = arith.mulf %1154, %1155 : vector<8x128xf32>
    %1157 = arith.addf %1156, %1106 : vector<8x128xf32>
    %c10_402 = arith.constant 10 : index
    %c0_403 = arith.constant 0 : index
    %c0_404 = arith.constant 0 : index
    %1158 = vector.load %arg10[%c10_402, %c0_403, %c0_404] : memref<32x8x128xf32, #tpu.memory_space<vmem>>, vector<1x8x128xf32>
    %1159 = vector.shape_cast %1158 : vector<1x8x128xf32> to vector<8x128xf32>
    %1160 = arith.addf %1157, %1159 : vector<8x128xf32>
    %1161 = arith.negf %1160 : vector<8x128xf32>
    %1162 = math.exp %1161 : vector<8x128xf32>
    %cst_405 = arith.constant 1.000000e+00 : f32
    %1163 = vector.broadcast %cst_405 : f32 to vector<8x128xf32>
    %1164 = arith.addf %1163, %1162 : vector<8x128xf32>
    %1165 = arith.divf %1163, %1164 : vector<8x128xf32>
    %1166 = vector.extract_strided_slice %1165 {offsets = [0, 0], sizes = [8, 32], strides = [1, 1]} : vector<8x128xf32> to vector<8x32xf32>
    %1167 = vector.extract_strided_slice %1165 {offsets = [0, 32], sizes = [8, 32], strides = [1, 1]} : vector<8x128xf32> to vector<8x32xf32>
    %1168 = vector.extract_strided_slice %1165 {offsets = [0, 64], sizes = [8, 32], strides = [1, 1]} : vector<8x128xf32> to vector<8x32xf32>
    %cst_406 = arith.constant 2.000000e+00 : f32
    %1169 = vector.broadcast %cst_406 : f32 to vector<8x32xf32>
    %1170 = arith.mulf %1169, %1168 : vector<8x32xf32>
    %cst_407 = arith.constant 1.000000e+00 : f32
    %1171 = vector.broadcast %cst_407 : f32 to vector<8x32xf32>
    %1172 = arith.subf %1170, %1171 : vector<8x32xf32>
    %1173 = vector.extract_strided_slice %1165 {offsets = [0, 96], sizes = [8, 32], strides = [1, 1]} : vector<8x128xf32> to vector<8x32xf32>
    %1174 = arith.mulf %1167, %1095 : vector<8x32xf32>
    %1175 = arith.mulf %1166, %1172 : vector<8x32xf32>
    %1176 = arith.addf %1174, %1175 : vector<8x32xf32>
    %1177 = math.tanh %1176 : vector<8x32xf32>
    %1178 = arith.mulf %1173, %1177 : vector<8x32xf32>
    %1179 = arith.truncf %1178 : vector<8x32xf32> to vector<8x32xbf16>
    %cst_408 = arith.constant dense<0.000000e+00> : vector<8x256xf32>
    %1180 = tpu.matmul %1179, %6, %cst_408 {dimension_numbers = #tpu.dot_dimension_numbers<[1], [0], [0], [1], [0, 0, 1, 1], [], []>} : vector<8x32xbf16>, vector<32x256xbf16>, vector<8x256xf32> -> vector<8x256xf32>
    %1181 = vector.extract_strided_slice %1180 {offsets = [0, 0], sizes = [8, 1], strides = [1, 1]} : vector<8x256xf32> to vector<8x1xf32>
    %1182 = vector.broadcast %9 : f32 to vector<8x1xf32>
    %1183 = arith.addf %1181, %1182 : vector<8x1xf32>
    %1184 = vector.extract_strided_slice %1180 {offsets = [0, 1], sizes = [8, 1], strides = [1, 1]} : vector<8x256xf32> to vector<8x1xf32>
    %1185 = vector.broadcast %10 : f32 to vector<8x1xf32>
    %1186 = arith.addf %1184, %1185 : vector<8x1xf32>
    %1187 = vector.extract_strided_slice %1180 {offsets = [0, 128], sizes = [8, 128], strides = [1, 1]} : vector<8x256xf32> to vector<8x128xf32>
    %c10_409 = arith.constant 10 : index
    %c0_410 = arith.constant 0 : index
    %c0_411 = arith.constant 0 : index
    %1188 = vector.load %arg1[%c10_409, %c0_410, %c0_411] : memref<32x8x1xf32, #tpu.memory_space<vmem>>, vector<1x8x1xf32>
    %1189 = vector.shape_cast %1188 : vector<1x8x1xf32> to vector<8x1xf32>
    %1190 = vector.broadcast %7 : f32 to vector<8x1xf32>
    %1191 = arith.mulf %1190, %1189 : vector<8x1xf32>
    %1192 = vector.broadcast %8 : f32 to vector<8x1xf32>
    %1193 = arith.addf %1191, %1192 : vector<8x1xf32>
    %1194 = arith.mulf %1183, %1193 : vector<8x1xf32>
    %1195 = math.absf %1194 : vector<8x1xf32>
    %cst_412 = arith.constant 0.000000e+00 : f32
    %1196 = vector.broadcast %cst_412 : f32 to vector<8x1xf32>
    %1197 = arith.subf %1196, %1195 : vector<8x1xf32>
    %1198 = math.exp %1197 : vector<8x1xf32>
    %cst_413 = arith.constant 1.000000e+00 : f32
    %1199 = vector.broadcast %cst_413 : f32 to vector<8x1xf32>
    %1200 = arith.addf %1199, %1198 : vector<8x1xf32>
    %1201 = tpu.reciprocal %1200 {approx = true} : vector<8x1xf32> -> vector<8x1xf32>
    %cst_414 = arith.constant 0.000000e+00 : f32
    %1202 = vector.broadcast %cst_414 : f32 to vector<8x1xf32>
    %1203 = arith.cmpf oge, %1194, %1202 : vector<8x1xf32>
    %cst_415 = arith.constant 1.000000e+00 : f32
    %1204 = vector.broadcast %cst_415 : f32 to vector<8x1xf32>
    %1205 = arith.subf %1204, %1201 : vector<8x1xf32>
    %1206 = arith.select %1203, %1201, %1205 : vector<8x1xi1>, vector<8x1xf32>
    %cst_416 = arith.constant 0.000000e+00 : f32
    %1207 = vector.broadcast %cst_416 : f32 to vector<8x1xf32>
    %1208 = arith.maximumf %1194, %1207 : vector<8x1xf32>
    %cst_417 = arith.constant 1.000000e+00 : f32
    %1209 = vector.broadcast %cst_417 : f32 to vector<8x1xf32>
    %1210 = arith.addf %1209, %1198 : vector<8x1xf32>
    %1211 = math.log %1210 : vector<8x1xf32>
    %1212 = arith.addf %1208, %1211 : vector<8x1xf32>
    %1213 = tpu.reciprocal %1183 {approx = true} : vector<8x1xf32> -> vector<8x1xf32>
    %1214 = arith.mulf %1213, %1212 : vector<8x1xf32>
    %cst_418 = arith.constant 1.000000e+00 : f32
    %1215 = vector.broadcast %cst_418 : f32 to vector<8x1xf32>
    %1216 = arith.subf %1215, %1186 : vector<8x1xf32>
    %1217 = arith.mulf %1216, %1214 : vector<8x1xf32>
    %1218 = arith.mulf %1186, %1206 : vector<8x1xf32>
    %1219 = arith.addf %1217, %1218 : vector<8x1xf32>
    %c0_i32_419 = arith.constant 0 : i32
    %1220 = vector.broadcast %c0_i32_419 : i32 to vector<8x3xi32>
    %1221 = arith.cmpi eq, %331, %1220 : vector<8x3xi32>
    %c1_i32_420 = arith.constant 1 : i32
    %1222 = vector.broadcast %c1_i32_420 : i32 to vector<8x3xi32>
    %1223 = arith.cmpi eq, %331, %1222 : vector<8x3xi32>
    %1224 = vector.shape_cast %1183 : vector<8x1xf32> to vector<8x1xf32>
    %1225 = vector.broadcast %1224 : vector<8x1xf32> to vector<8x3xf32>
    %1226 = vector.shape_cast %1186 : vector<8x1xf32> to vector<8x1xf32>
    %1227 = vector.broadcast %1226 : vector<8x1xf32> to vector<8x3xf32>
    %1228 = arith.select %1223, %1225, %1227 : vector<8x3xi1>, vector<8x3xf32>
    %1229 = vector.shape_cast %1219 : vector<8x1xf32> to vector<8x1xf32>
    %1230 = vector.broadcast %1229 : vector<8x1xf32> to vector<8x3xf32>
    %1231 = arith.select %1221, %1230, %1228 : vector<8x3xi1>, vector<8x3xf32>
    %c10_421 = arith.constant 10 : index
    %c0_422 = arith.constant 0 : index
    %c0_423 = arith.constant 0 : index
    %1232 = vector.load %arg6[%c10_421, %c0_422, %c0_423] : memref<32x8x3xf32, #tpu.memory_space<vmem>>, vector<1x8x3xf32>
    %1233 = vector.shape_cast %1232 : vector<1x8x3xf32> to vector<8x3xf32>
    %1234 = vector.shape_cast %1231 : vector<8x3xf32> to vector<1x8x3xf32>
    tpu.vector_store %arg6[%c10_421, %c0_422, %c0_423], %1234 {strides = array<i32>} : memref<32x8x3xf32, #tpu.memory_space<vmem>>, vector<1x8x3xf32>,
    %1235 = vector.broadcast %1219 : vector<8x1xf32> to vector<8x128xf32>
    %1236 = vector.broadcast %4 : vector<1x128xf32> to vector<8x128xf32>
    %1237 = arith.mulf %1235, %1236 : vector<8x128xf32>
    %1238 = arith.addf %1237, %1187 : vector<8x128xf32>
    %c11_424 = arith.constant 11 : index
    %c0_425 = arith.constant 0 : index
    %c0_426 = arith.constant 0 : index
    %1239 = vector.load %arg10[%c11_424, %c0_425, %c0_426] : memref<32x8x128xf32, #tpu.memory_space<vmem>>, vector<1x8x128xf32>
    %1240 = vector.shape_cast %1239 : vector<1x8x128xf32> to vector<8x128xf32>
    %1241 = arith.addf %1238, %1240 : vector<8x128xf32>
    %1242 = arith.negf %1241 : vector<8x128xf32>
    %1243 = math.exp %1242 : vector<8x128xf32>
    %cst_427 = arith.constant 1.000000e+00 : f32
    %1244 = vector.broadcast %cst_427 : f32 to vector<8x128xf32>
    %1245 = arith.addf %1244, %1243 : vector<8x128xf32>
    %1246 = arith.divf %1244, %1245 : vector<8x128xf32>
    %1247 = vector.extract_strided_slice %1246 {offsets = [0, 0], sizes = [8, 32], strides = [1, 1]} : vector<8x128xf32> to vector<8x32xf32>
    %1248 = vector.extract_strided_slice %1246 {offsets = [0, 32], sizes = [8, 32], strides = [1, 1]} : vector<8x128xf32> to vector<8x32xf32>
    %1249 = vector.extract_strided_slice %1246 {offsets = [0, 64], sizes = [8, 32], strides = [1, 1]} : vector<8x128xf32> to vector<8x32xf32>
    %cst_428 = arith.constant 2.000000e+00 : f32
    %1250 = vector.broadcast %cst_428 : f32 to vector<8x32xf32>
    %1251 = arith.mulf %1250, %1249 : vector<8x32xf32>
    %cst_429 = arith.constant 1.000000e+00 : f32
    %1252 = vector.broadcast %cst_429 : f32 to vector<8x32xf32>
    %1253 = arith.subf %1251, %1252 : vector<8x32xf32>
    %1254 = vector.extract_strided_slice %1246 {offsets = [0, 96], sizes = [8, 32], strides = [1, 1]} : vector<8x128xf32> to vector<8x32xf32>
    %1255 = arith.mulf %1248, %1176 : vector<8x32xf32>
    %1256 = arith.mulf %1247, %1253 : vector<8x32xf32>
    %1257 = arith.addf %1255, %1256 : vector<8x32xf32>
    %1258 = math.tanh %1257 : vector<8x32xf32>
    %1259 = arith.mulf %1254, %1258 : vector<8x32xf32>
    %1260 = arith.truncf %1259 : vector<8x32xf32> to vector<8x32xbf16>
    %cst_430 = arith.constant dense<0.000000e+00> : vector<8x256xf32>
    %1261 = tpu.matmul %1260, %6, %cst_430 {dimension_numbers = #tpu.dot_dimension_numbers<[1], [0], [0], [1], [0, 0, 1, 1], [], []>} : vector<8x32xbf16>, vector<32x256xbf16>, vector<8x256xf32> -> vector<8x256xf32>
    %1262 = vector.extract_strided_slice %1261 {offsets = [0, 0], sizes = [8, 1], strides = [1, 1]} : vector<8x256xf32> to vector<8x1xf32>
    %1263 = vector.broadcast %9 : f32 to vector<8x1xf32>
    %1264 = arith.addf %1262, %1263 : vector<8x1xf32>
    %1265 = vector.extract_strided_slice %1261 {offsets = [0, 1], sizes = [8, 1], strides = [1, 1]} : vector<8x256xf32> to vector<8x1xf32>
    %1266 = vector.broadcast %10 : f32 to vector<8x1xf32>
    %1267 = arith.addf %1265, %1266 : vector<8x1xf32>
    %1268 = vector.extract_strided_slice %1261 {offsets = [0, 128], sizes = [8, 128], strides = [1, 1]} : vector<8x256xf32> to vector<8x128xf32>
    %c11_431 = arith.constant 11 : index
    %c0_432 = arith.constant 0 : index
    %c0_433 = arith.constant 0 : index
    %1269 = vector.load %arg1[%c11_431, %c0_432, %c0_433] : memref<32x8x1xf32, #tpu.memory_space<vmem>>, vector<1x8x1xf32>
    %1270 = vector.shape_cast %1269 : vector<1x8x1xf32> to vector<8x1xf32>
    %1271 = vector.broadcast %7 : f32 to vector<8x1xf32>
    %1272 = arith.mulf %1271, %1270 : vector<8x1xf32>
    %1273 = vector.broadcast %8 : f32 to vector<8x1xf32>
    %1274 = arith.addf %1272, %1273 : vector<8x1xf32>
    %1275 = arith.mulf %1264, %1274 : vector<8x1xf32>
    %1276 = math.absf %1275 : vector<8x1xf32>
    %cst_434 = arith.constant 0.000000e+00 : f32
    %1277 = vector.broadcast %cst_434 : f32 to vector<8x1xf32>
    %1278 = arith.subf %1277, %1276 : vector<8x1xf32>
    %1279 = math.exp %1278 : vector<8x1xf32>
    %cst_435 = arith.constant 1.000000e+00 : f32
    %1280 = vector.broadcast %cst_435 : f32 to vector<8x1xf32>
    %1281 = arith.addf %1280, %1279 : vector<8x1xf32>
    %1282 = tpu.reciprocal %1281 {approx = true} : vector<8x1xf32> -> vector<8x1xf32>
    %cst_436 = arith.constant 0.000000e+00 : f32
    %1283 = vector.broadcast %cst_436 : f32 to vector<8x1xf32>
    %1284 = arith.cmpf oge, %1275, %1283 : vector<8x1xf32>
    %cst_437 = arith.constant 1.000000e+00 : f32
    %1285 = vector.broadcast %cst_437 : f32 to vector<8x1xf32>
    %1286 = arith.subf %1285, %1282 : vector<8x1xf32>
    %1287 = arith.select %1284, %1282, %1286 : vector<8x1xi1>, vector<8x1xf32>
    %cst_438 = arith.constant 0.000000e+00 : f32
    %1288 = vector.broadcast %cst_438 : f32 to vector<8x1xf32>
    %1289 = arith.maximumf %1275, %1288 : vector<8x1xf32>
    %cst_439 = arith.constant 1.000000e+00 : f32
    %1290 = vector.broadcast %cst_439 : f32 to vector<8x1xf32>
    %1291 = arith.addf %1290, %1279 : vector<8x1xf32>
    %1292 = math.log %1291 : vector<8x1xf32>
    %1293 = arith.addf %1289, %1292 : vector<8x1xf32>
    %1294 = tpu.reciprocal %1264 {approx = true} : vector<8x1xf32> -> vector<8x1xf32>
    %1295 = arith.mulf %1294, %1293 : vector<8x1xf32>
    %cst_440 = arith.constant 1.000000e+00 : f32
    %1296 = vector.broadcast %cst_440 : f32 to vector<8x1xf32>
    %1297 = arith.subf %1296, %1267 : vector<8x1xf32>
    %1298 = arith.mulf %1297, %1295 : vector<8x1xf32>
    %1299 = arith.mulf %1267, %1287 : vector<8x1xf32>
    %1300 = arith.addf %1298, %1299 : vector<8x1xf32>
    %c0_i32_441 = arith.constant 0 : i32
    %1301 = vector.broadcast %c0_i32_441 : i32 to vector<8x3xi32>
    %1302 = arith.cmpi eq, %331, %1301 : vector<8x3xi32>
    %c1_i32_442 = arith.constant 1 : i32
    %1303 = vector.broadcast %c1_i32_442 : i32 to vector<8x3xi32>
    %1304 = arith.cmpi eq, %331, %1303 : vector<8x3xi32>
    %1305 = vector.shape_cast %1264 : vector<8x1xf32> to vector<8x1xf32>
    %1306 = vector.broadcast %1305 : vector<8x1xf32> to vector<8x3xf32>
    %1307 = vector.shape_cast %1267 : vector<8x1xf32> to vector<8x1xf32>
    %1308 = vector.broadcast %1307 : vector<8x1xf32> to vector<8x3xf32>
    %1309 = arith.select %1304, %1306, %1308 : vector<8x3xi1>, vector<8x3xf32>
    %1310 = vector.shape_cast %1300 : vector<8x1xf32> to vector<8x1xf32>
    %1311 = vector.broadcast %1310 : vector<8x1xf32> to vector<8x3xf32>
    %1312 = arith.select %1302, %1311, %1309 : vector<8x3xi1>, vector<8x3xf32>
    %c11_443 = arith.constant 11 : index
    %c0_444 = arith.constant 0 : index
    %c0_445 = arith.constant 0 : index
    %1313 = vector.load %arg6[%c11_443, %c0_444, %c0_445] : memref<32x8x3xf32, #tpu.memory_space<vmem>>, vector<1x8x3xf32>
    %1314 = vector.shape_cast %1313 : vector<1x8x3xf32> to vector<8x3xf32>
    %1315 = vector.shape_cast %1312 : vector<8x3xf32> to vector<1x8x3xf32>
    tpu.vector_store %arg6[%c11_443, %c0_444, %c0_445], %1315 {strides = array<i32>} : memref<32x8x3xf32, #tpu.memory_space<vmem>>, vector<1x8x3xf32>,
    %1316 = vector.broadcast %1300 : vector<8x1xf32> to vector<8x128xf32>
    %1317 = vector.broadcast %4 : vector<1x128xf32> to vector<8x128xf32>
    %1318 = arith.mulf %1316, %1317 : vector<8x128xf32>
    %1319 = arith.addf %1318, %1268 : vector<8x128xf32>
    %c12_446 = arith.constant 12 : index
    %c0_447 = arith.constant 0 : index
    %c0_448 = arith.constant 0 : index
    %1320 = vector.load %arg10[%c12_446, %c0_447, %c0_448] : memref<32x8x128xf32, #tpu.memory_space<vmem>>, vector<1x8x128xf32>
    %1321 = vector.shape_cast %1320 : vector<1x8x128xf32> to vector<8x128xf32>
    %1322 = arith.addf %1319, %1321 : vector<8x128xf32>
    %1323 = arith.negf %1322 : vector<8x128xf32>
    %1324 = math.exp %1323 : vector<8x128xf32>
    %cst_449 = arith.constant 1.000000e+00 : f32
    %1325 = vector.broadcast %cst_449 : f32 to vector<8x128xf32>
    %1326 = arith.addf %1325, %1324 : vector<8x128xf32>
    %1327 = arith.divf %1325, %1326 : vector<8x128xf32>
    %1328 = vector.extract_strided_slice %1327 {offsets = [0, 0], sizes = [8, 32], strides = [1, 1]} : vector<8x128xf32> to vector<8x32xf32>
    %1329 = vector.extract_strided_slice %1327 {offsets = [0, 32], sizes = [8, 32], strides = [1, 1]} : vector<8x128xf32> to vector<8x32xf32>
    %1330 = vector.extract_strided_slice %1327 {offsets = [0, 64], sizes = [8, 32], strides = [1, 1]} : vector<8x128xf32> to vector<8x32xf32>
    %cst_450 = arith.constant 2.000000e+00 : f32
    %1331 = vector.broadcast %cst_450 : f32 to vector<8x32xf32>
    %1332 = arith.mulf %1331, %1330 : vector<8x32xf32>
    %cst_451 = arith.constant 1.000000e+00 : f32
    %1333 = vector.broadcast %cst_451 : f32 to vector<8x32xf32>
    %1334 = arith.subf %1332, %1333 : vector<8x32xf32>
    %1335 = vector.extract_strided_slice %1327 {offsets = [0, 96], sizes = [8, 32], strides = [1, 1]} : vector<8x128xf32> to vector<8x32xf32>
    %1336 = arith.mulf %1329, %1257 : vector<8x32xf32>
    %1337 = arith.mulf %1328, %1334 : vector<8x32xf32>
    %1338 = arith.addf %1336, %1337 : vector<8x32xf32>
    %1339 = math.tanh %1338 : vector<8x32xf32>
    %1340 = arith.mulf %1335, %1339 : vector<8x32xf32>
    %1341 = arith.truncf %1340 : vector<8x32xf32> to vector<8x32xbf16>
    %cst_452 = arith.constant dense<0.000000e+00> : vector<8x256xf32>
    %1342 = tpu.matmul %1341, %6, %cst_452 {dimension_numbers = #tpu.dot_dimension_numbers<[1], [0], [0], [1], [0, 0, 1, 1], [], []>} : vector<8x32xbf16>, vector<32x256xbf16>, vector<8x256xf32> -> vector<8x256xf32>
    %1343 = vector.extract_strided_slice %1342 {offsets = [0, 0], sizes = [8, 1], strides = [1, 1]} : vector<8x256xf32> to vector<8x1xf32>
    %1344 = vector.broadcast %9 : f32 to vector<8x1xf32>
    %1345 = arith.addf %1343, %1344 : vector<8x1xf32>
    %1346 = vector.extract_strided_slice %1342 {offsets = [0, 1], sizes = [8, 1], strides = [1, 1]} : vector<8x256xf32> to vector<8x1xf32>
    %1347 = vector.broadcast %10 : f32 to vector<8x1xf32>
    %1348 = arith.addf %1346, %1347 : vector<8x1xf32>
    %1349 = vector.extract_strided_slice %1342 {offsets = [0, 128], sizes = [8, 128], strides = [1, 1]} : vector<8x256xf32> to vector<8x128xf32>
    %c12_453 = arith.constant 12 : index
    %c0_454 = arith.constant 0 : index
    %c0_455 = arith.constant 0 : index
    %1350 = vector.load %arg1[%c12_453, %c0_454, %c0_455] : memref<32x8x1xf32, #tpu.memory_space<vmem>>, vector<1x8x1xf32>
    %1351 = vector.shape_cast %1350 : vector<1x8x1xf32> to vector<8x1xf32>
    %1352 = vector.broadcast %7 : f32 to vector<8x1xf32>
    %1353 = arith.mulf %1352, %1351 : vector<8x1xf32>
    %1354 = vector.broadcast %8 : f32 to vector<8x1xf32>
    %1355 = arith.addf %1353, %1354 : vector<8x1xf32>
    %1356 = arith.mulf %1345, %1355 : vector<8x1xf32>
    %1357 = math.absf %1356 : vector<8x1xf32>
    %cst_456 = arith.constant 0.000000e+00 : f32
    %1358 = vector.broadcast %cst_456 : f32 to vector<8x1xf32>
    %1359 = arith.subf %1358, %1357 : vector<8x1xf32>
    %1360 = math.exp %1359 : vector<8x1xf32>
    %cst_457 = arith.constant 1.000000e+00 : f32
    %1361 = vector.broadcast %cst_457 : f32 to vector<8x1xf32>
    %1362 = arith.addf %1361, %1360 : vector<8x1xf32>
    %1363 = tpu.reciprocal %1362 {approx = true} : vector<8x1xf32> -> vector<8x1xf32>
    %cst_458 = arith.constant 0.000000e+00 : f32
    %1364 = vector.broadcast %cst_458 : f32 to vector<8x1xf32>
    %1365 = arith.cmpf oge, %1356, %1364 : vector<8x1xf32>
    %cst_459 = arith.constant 1.000000e+00 : f32
    %1366 = vector.broadcast %cst_459 : f32 to vector<8x1xf32>
    %1367 = arith.subf %1366, %1363 : vector<8x1xf32>
    %1368 = arith.select %1365, %1363, %1367 : vector<8x1xi1>, vector<8x1xf32>
    %cst_460 = arith.constant 0.000000e+00 : f32
    %1369 = vector.broadcast %cst_460 : f32 to vector<8x1xf32>
    %1370 = arith.maximumf %1356, %1369 : vector<8x1xf32>
    %cst_461 = arith.constant 1.000000e+00 : f32
    %1371 = vector.broadcast %cst_461 : f32 to vector<8x1xf32>
    %1372 = arith.addf %1371, %1360 : vector<8x1xf32>
    %1373 = math.log %1372 : vector<8x1xf32>
    %1374 = arith.addf %1370, %1373 : vector<8x1xf32>
    %1375 = tpu.reciprocal %1345 {approx = true} : vector<8x1xf32> -> vector<8x1xf32>
    %1376 = arith.mulf %1375, %1374 : vector<8x1xf32>
    %cst_462 = arith.constant 1.000000e+00 : f32
    %1377 = vector.broadcast %cst_462 : f32 to vector<8x1xf32>
    %1378 = arith.subf %1377, %1348 : vector<8x1xf32>
    %1379 = arith.mulf %1378, %1376 : vector<8x1xf32>
    %1380 = arith.mulf %1348, %1368 : vector<8x1xf32>
    %1381 = arith.addf %1379, %1380 : vector<8x1xf32>
    %c0_i32_463 = arith.constant 0 : i32
    %1382 = vector.broadcast %c0_i32_463 : i32 to vector<8x3xi32>
    %1383 = arith.cmpi eq, %331, %1382 : vector<8x3xi32>
    %c1_i32_464 = arith.constant 1 : i32
    %1384 = vector.broadcast %c1_i32_464 : i32 to vector<8x3xi32>
    %1385 = arith.cmpi eq, %331, %1384 : vector<8x3xi32>
    %1386 = vector.shape_cast %1345 : vector<8x1xf32> to vector<8x1xf32>
    %1387 = vector.broadcast %1386 : vector<8x1xf32> to vector<8x3xf32>
    %1388 = vector.shape_cast %1348 : vector<8x1xf32> to vector<8x1xf32>
    %1389 = vector.broadcast %1388 : vector<8x1xf32> to vector<8x3xf32>
    %1390 = arith.select %1385, %1387, %1389 : vector<8x3xi1>, vector<8x3xf32>
    %1391 = vector.shape_cast %1381 : vector<8x1xf32> to vector<8x1xf32>
    %1392 = vector.broadcast %1391 : vector<8x1xf32> to vector<8x3xf32>
    %1393 = arith.select %1383, %1392, %1390 : vector<8x3xi1>, vector<8x3xf32>
    %c12_465 = arith.constant 12 : index
    %c0_466 = arith.constant 0 : index
    %c0_467 = arith.constant 0 : index
    %1394 = vector.load %arg6[%c12_465, %c0_466, %c0_467] : memref<32x8x3xf32, #tpu.memory_space<vmem>>, vector<1x8x3xf32>
    %1395 = vector.shape_cast %1394 : vector<1x8x3xf32> to vector<8x3xf32>
    %1396 = vector.shape_cast %1393 : vector<8x3xf32> to vector<1x8x3xf32>
    tpu.vector_store %arg6[%c12_465, %c0_466, %c0_467], %1396 {strides = array<i32>} : memref<32x8x3xf32, #tpu.memory_space<vmem>>, vector<1x8x3xf32>,
    %1397 = vector.broadcast %1381 : vector<8x1xf32> to vector<8x128xf32>
    %1398 = vector.broadcast %4 : vector<1x128xf32> to vector<8x128xf32>
    %1399 = arith.mulf %1397, %1398 : vector<8x128xf32>
    %1400 = arith.addf %1399, %1349 : vector<8x128xf32>
    %c13_468 = arith.constant 13 : index
    %c0_469 = arith.constant 0 : index
    %c0_470 = arith.constant 0 : index
    %1401 = vector.load %arg10[%c13_468, %c0_469, %c0_470] : memref<32x8x128xf32, #tpu.memory_space<vmem>>, vector<1x8x128xf32>
    %1402 = vector.shape_cast %1401 : vector<1x8x128xf32> to vector<8x128xf32>
    %1403 = arith.addf %1400, %1402 : vector<8x128xf32>
    %1404 = arith.negf %1403 : vector<8x128xf32>
    %1405 = math.exp %1404 : vector<8x128xf32>
    %cst_471 = arith.constant 1.000000e+00 : f32
    %1406 = vector.broadcast %cst_471 : f32 to vector<8x128xf32>
    %1407 = arith.addf %1406, %1405 : vector<8x128xf32>
    %1408 = arith.divf %1406, %1407 : vector<8x128xf32>
    %1409 = vector.extract_strided_slice %1408 {offsets = [0, 0], sizes = [8, 32], strides = [1, 1]} : vector<8x128xf32> to vector<8x32xf32>
    %1410 = vector.extract_strided_slice %1408 {offsets = [0, 32], sizes = [8, 32], strides = [1, 1]} : vector<8x128xf32> to vector<8x32xf32>
    %1411 = vector.extract_strided_slice %1408 {offsets = [0, 64], sizes = [8, 32], strides = [1, 1]} : vector<8x128xf32> to vector<8x32xf32>
    %cst_472 = arith.constant 2.000000e+00 : f32
    %1412 = vector.broadcast %cst_472 : f32 to vector<8x32xf32>
    %1413 = arith.mulf %1412, %1411 : vector<8x32xf32>
    %cst_473 = arith.constant 1.000000e+00 : f32
    %1414 = vector.broadcast %cst_473 : f32 to vector<8x32xf32>
    %1415 = arith.subf %1413, %1414 : vector<8x32xf32>
    %1416 = vector.extract_strided_slice %1408 {offsets = [0, 96], sizes = [8, 32], strides = [1, 1]} : vector<8x128xf32> to vector<8x32xf32>
    %1417 = arith.mulf %1410, %1338 : vector<8x32xf32>
    %1418 = arith.mulf %1409, %1415 : vector<8x32xf32>
    %1419 = arith.addf %1417, %1418 : vector<8x32xf32>
    %1420 = math.tanh %1419 : vector<8x32xf32>
    %1421 = arith.mulf %1416, %1420 : vector<8x32xf32>
    %1422 = arith.truncf %1421 : vector<8x32xf32> to vector<8x32xbf16>
    %cst_474 = arith.constant dense<0.000000e+00> : vector<8x256xf32>
    %1423 = tpu.matmul %1422, %6, %cst_474 {dimension_numbers = #tpu.dot_dimension_numbers<[1], [0], [0], [1], [0, 0, 1, 1], [], []>} : vector<8x32xbf16>, vector<32x256xbf16>, vector<8x256xf32> -> vector<8x256xf32>
    %1424 = vector.extract_strided_slice %1423 {offsets = [0, 0], sizes = [8, 1], strides = [1, 1]} : vector<8x256xf32> to vector<8x1xf32>
    %1425 = vector.broadcast %9 : f32 to vector<8x1xf32>
    %1426 = arith.addf %1424, %1425 : vector<8x1xf32>
    %1427 = vector.extract_strided_slice %1423 {offsets = [0, 1], sizes = [8, 1], strides = [1, 1]} : vector<8x256xf32> to vector<8x1xf32>
    %1428 = vector.broadcast %10 : f32 to vector<8x1xf32>
    %1429 = arith.addf %1427, %1428 : vector<8x1xf32>
    %1430 = vector.extract_strided_slice %1423 {offsets = [0, 128], sizes = [8, 128], strides = [1, 1]} : vector<8x256xf32> to vector<8x128xf32>
    %c13_475 = arith.constant 13 : index
    %c0_476 = arith.constant 0 : index
    %c0_477 = arith.constant 0 : index
    %1431 = vector.load %arg1[%c13_475, %c0_476, %c0_477] : memref<32x8x1xf32, #tpu.memory_space<vmem>>, vector<1x8x1xf32>
    %1432 = vector.shape_cast %1431 : vector<1x8x1xf32> to vector<8x1xf32>
    %1433 = vector.broadcast %7 : f32 to vector<8x1xf32>
    %1434 = arith.mulf %1433, %1432 : vector<8x1xf32>
    %1435 = vector.broadcast %8 : f32 to vector<8x1xf32>
    %1436 = arith.addf %1434, %1435 : vector<8x1xf32>
    %1437 = arith.mulf %1426, %1436 : vector<8x1xf32>
    %1438 = math.absf %1437 : vector<8x1xf32>
    %cst_478 = arith.constant 0.000000e+00 : f32
    %1439 = vector.broadcast %cst_478 : f32 to vector<8x1xf32>
    %1440 = arith.subf %1439, %1438 : vector<8x1xf32>
    %1441 = math.exp %1440 : vector<8x1xf32>
    %cst_479 = arith.constant 1.000000e+00 : f32
    %1442 = vector.broadcast %cst_479 : f32 to vector<8x1xf32>
    %1443 = arith.addf %1442, %1441 : vector<8x1xf32>
    %1444 = tpu.reciprocal %1443 {approx = true} : vector<8x1xf32> -> vector<8x1xf32>
    %cst_480 = arith.constant 0.000000e+00 : f32
    %1445 = vector.broadcast %cst_480 : f32 to vector<8x1xf32>
    %1446 = arith.cmpf oge, %1437, %1445 : vector<8x1xf32>
    %cst_481 = arith.constant 1.000000e+00 : f32
    %1447 = vector.broadcast %cst_481 : f32 to vector<8x1xf32>
    %1448 = arith.subf %1447, %1444 : vector<8x1xf32>
    %1449 = arith.select %1446, %1444, %1448 : vector<8x1xi1>, vector<8x1xf32>
    %cst_482 = arith.constant 0.000000e+00 : f32
    %1450 = vector.broadcast %cst_482 : f32 to vector<8x1xf32>
    %1451 = arith.maximumf %1437, %1450 : vector<8x1xf32>
    %cst_483 = arith.constant 1.000000e+00 : f32
    %1452 = vector.broadcast %cst_483 : f32 to vector<8x1xf32>
    %1453 = arith.addf %1452, %1441 : vector<8x1xf32>
    %1454 = math.log %1453 : vector<8x1xf32>
    %1455 = arith.addf %1451, %1454 : vector<8x1xf32>
    %1456 = tpu.reciprocal %1426 {approx = true} : vector<8x1xf32> -> vector<8x1xf32>
    %1457 = arith.mulf %1456, %1455 : vector<8x1xf32>
    %cst_484 = arith.constant 1.000000e+00 : f32
    %1458 = vector.broadcast %cst_484 : f32 to vector<8x1xf32>
    %1459 = arith.subf %1458, %1429 : vector<8x1xf32>
    %1460 = arith.mulf %1459, %1457 : vector<8x1xf32>
    %1461 = arith.mulf %1429, %1449 : vector<8x1xf32>
    %1462 = arith.addf %1460, %1461 : vector<8x1xf32>
    %c0_i32_485 = arith.constant 0 : i32
    %1463 = vector.broadcast %c0_i32_485 : i32 to vector<8x3xi32>
    %1464 = arith.cmpi eq, %331, %1463 : vector<8x3xi32>
    %c1_i32_486 = arith.constant 1 : i32
    %1465 = vector.broadcast %c1_i32_486 : i32 to vector<8x3xi32>
    %1466 = arith.cmpi eq, %331, %1465 : vector<8x3xi32>
    %1467 = vector.shape_cast %1426 : vector<8x1xf32> to vector<8x1xf32>
    %1468 = vector.broadcast %1467 : vector<8x1xf32> to vector<8x3xf32>
    %1469 = vector.shape_cast %1429 : vector<8x1xf32> to vector<8x1xf32>
    %1470 = vector.broadcast %1469 : vector<8x1xf32> to vector<8x3xf32>
    %1471 = arith.select %1466, %1468, %1470 : vector<8x3xi1>, vector<8x3xf32>
    %1472 = vector.shape_cast %1462 : vector<8x1xf32> to vector<8x1xf32>
    %1473 = vector.broadcast %1472 : vector<8x1xf32> to vector<8x3xf32>
    %1474 = arith.select %1464, %1473, %1471 : vector<8x3xi1>, vector<8x3xf32>
    %c13_487 = arith.constant 13 : index
    %c0_488 = arith.constant 0 : index
    %c0_489 = arith.constant 0 : index
    %1475 = vector.load %arg6[%c13_487, %c0_488, %c0_489] : memref<32x8x3xf32, #tpu.memory_space<vmem>>, vector<1x8x3xf32>
    %1476 = vector.shape_cast %1475 : vector<1x8x3xf32> to vector<8x3xf32>
    %1477 = vector.shape_cast %1474 : vector<8x3xf32> to vector<1x8x3xf32>
    tpu.vector_store %arg6[%c13_487, %c0_488, %c0_489], %1477 {strides = array<i32>} : memref<32x8x3xf32, #tpu.memory_space<vmem>>, vector<1x8x3xf32>,
    %1478 = vector.broadcast %1462 : vector<8x1xf32> to vector<8x128xf32>
    %1479 = vector.broadcast %4 : vector<1x128xf32> to vector<8x128xf32>
    %1480 = arith.mulf %1478, %1479 : vector<8x128xf32>
    %1481 = arith.addf %1480, %1430 : vector<8x128xf32>
    %c14_490 = arith.constant 14 : index
    %c0_491 = arith.constant 0 : index
    %c0_492 = arith.constant 0 : index
    %1482 = vector.load %arg10[%c14_490, %c0_491, %c0_492] : memref<32x8x128xf32, #tpu.memory_space<vmem>>, vector<1x8x128xf32>
    %1483 = vector.shape_cast %1482 : vector<1x8x128xf32> to vector<8x128xf32>
    %1484 = arith.addf %1481, %1483 : vector<8x128xf32>
    %1485 = arith.negf %1484 : vector<8x128xf32>
    %1486 = math.exp %1485 : vector<8x128xf32>
    %cst_493 = arith.constant 1.000000e+00 : f32
    %1487 = vector.broadcast %cst_493 : f32 to vector<8x128xf32>
    %1488 = arith.addf %1487, %1486 : vector<8x128xf32>
    %1489 = arith.divf %1487, %1488 : vector<8x128xf32>
    %1490 = vector.extract_strided_slice %1489 {offsets = [0, 0], sizes = [8, 32], strides = [1, 1]} : vector<8x128xf32> to vector<8x32xf32>
    %1491 = vector.extract_strided_slice %1489 {offsets = [0, 32], sizes = [8, 32], strides = [1, 1]} : vector<8x128xf32> to vector<8x32xf32>
    %1492 = vector.extract_strided_slice %1489 {offsets = [0, 64], sizes = [8, 32], strides = [1, 1]} : vector<8x128xf32> to vector<8x32xf32>
    %cst_494 = arith.constant 2.000000e+00 : f32
    %1493 = vector.broadcast %cst_494 : f32 to vector<8x32xf32>
    %1494 = arith.mulf %1493, %1492 : vector<8x32xf32>
    %cst_495 = arith.constant 1.000000e+00 : f32
    %1495 = vector.broadcast %cst_495 : f32 to vector<8x32xf32>
    %1496 = arith.subf %1494, %1495 : vector<8x32xf32>
    %1497 = vector.extract_strided_slice %1489 {offsets = [0, 96], sizes = [8, 32], strides = [1, 1]} : vector<8x128xf32> to vector<8x32xf32>
    %1498 = arith.mulf %1491, %1419 : vector<8x32xf32>
    %1499 = arith.mulf %1490, %1496 : vector<8x32xf32>
    %1500 = arith.addf %1498, %1499 : vector<8x32xf32>
    %1501 = math.tanh %1500 : vector<8x32xf32>
    %1502 = arith.mulf %1497, %1501 : vector<8x32xf32>
    %1503 = arith.truncf %1502 : vector<8x32xf32> to vector<8x32xbf16>
    %cst_496 = arith.constant dense<0.000000e+00> : vector<8x256xf32>
    %1504 = tpu.matmul %1503, %6, %cst_496 {dimension_numbers = #tpu.dot_dimension_numbers<[1], [0], [0], [1], [0, 0, 1, 1], [], []>} : vector<8x32xbf16>, vector<32x256xbf16>, vector<8x256xf32> -> vector<8x256xf32>
    %1505 = vector.extract_strided_slice %1504 {offsets = [0, 0], sizes = [8, 1], strides = [1, 1]} : vector<8x256xf32> to vector<8x1xf32>
    %1506 = vector.broadcast %9 : f32 to vector<8x1xf32>
    %1507 = arith.addf %1505, %1506 : vector<8x1xf32>
    %1508 = vector.extract_strided_slice %1504 {offsets = [0, 1], sizes = [8, 1], strides = [1, 1]} : vector<8x256xf32> to vector<8x1xf32>
    %1509 = vector.broadcast %10 : f32 to vector<8x1xf32>
    %1510 = arith.addf %1508, %1509 : vector<8x1xf32>
    %1511 = vector.extract_strided_slice %1504 {offsets = [0, 128], sizes = [8, 128], strides = [1, 1]} : vector<8x256xf32> to vector<8x128xf32>
    %c14_497 = arith.constant 14 : index
    %c0_498 = arith.constant 0 : index
    %c0_499 = arith.constant 0 : index
    %1512 = vector.load %arg1[%c14_497, %c0_498, %c0_499] : memref<32x8x1xf32, #tpu.memory_space<vmem>>, vector<1x8x1xf32>
    %1513 = vector.shape_cast %1512 : vector<1x8x1xf32> to vector<8x1xf32>
    %1514 = vector.broadcast %7 : f32 to vector<8x1xf32>
    %1515 = arith.mulf %1514, %1513 : vector<8x1xf32>
    %1516 = vector.broadcast %8 : f32 to vector<8x1xf32>
    %1517 = arith.addf %1515, %1516 : vector<8x1xf32>
    %1518 = arith.mulf %1507, %1517 : vector<8x1xf32>
    %1519 = math.absf %1518 : vector<8x1xf32>
    %cst_500 = arith.constant 0.000000e+00 : f32
    %1520 = vector.broadcast %cst_500 : f32 to vector<8x1xf32>
    %1521 = arith.subf %1520, %1519 : vector<8x1xf32>
    %1522 = math.exp %1521 : vector<8x1xf32>
    %cst_501 = arith.constant 1.000000e+00 : f32
    %1523 = vector.broadcast %cst_501 : f32 to vector<8x1xf32>
    %1524 = arith.addf %1523, %1522 : vector<8x1xf32>
    %1525 = tpu.reciprocal %1524 {approx = true} : vector<8x1xf32> -> vector<8x1xf32>
    %cst_502 = arith.constant 0.000000e+00 : f32
    %1526 = vector.broadcast %cst_502 : f32 to vector<8x1xf32>
    %1527 = arith.cmpf oge, %1518, %1526 : vector<8x1xf32>
    %cst_503 = arith.constant 1.000000e+00 : f32
    %1528 = vector.broadcast %cst_503 : f32 to vector<8x1xf32>
    %1529 = arith.subf %1528, %1525 : vector<8x1xf32>
    %1530 = arith.select %1527, %1525, %1529 : vector<8x1xi1>, vector<8x1xf32>
    %cst_504 = arith.constant 0.000000e+00 : f32
    %1531 = vector.broadcast %cst_504 : f32 to vector<8x1xf32>
    %1532 = arith.maximumf %1518, %1531 : vector<8x1xf32>
    %cst_505 = arith.constant 1.000000e+00 : f32
    %1533 = vector.broadcast %cst_505 : f32 to vector<8x1xf32>
    %1534 = arith.addf %1533, %1522 : vector<8x1xf32>
    %1535 = math.log %1534 : vector<8x1xf32>
    %1536 = arith.addf %1532, %1535 : vector<8x1xf32>
    %1537 = tpu.reciprocal %1507 {approx = true} : vector<8x1xf32> -> vector<8x1xf32>
    %1538 = arith.mulf %1537, %1536 : vector<8x1xf32>
    %cst_506 = arith.constant 1.000000e+00 : f32
    %1539 = vector.broadcast %cst_506 : f32 to vector<8x1xf32>
    %1540 = arith.subf %1539, %1510 : vector<8x1xf32>
    %1541 = arith.mulf %1540, %1538 : vector<8x1xf32>
    %1542 = arith.mulf %1510, %1530 : vector<8x1xf32>
    %1543 = arith.addf %1541, %1542 : vector<8x1xf32>
    %c0_i32_507 = arith.constant 0 : i32
    %1544 = vector.broadcast %c0_i32_507 : i32 to vector<8x3xi32>
    %1545 = arith.cmpi eq, %331, %1544 : vector<8x3xi32>
    %c1_i32_508 = arith.constant 1 : i32
    %1546 = vector.broadcast %c1_i32_508 : i32 to vector<8x3xi32>
    %1547 = arith.cmpi eq, %331, %1546 : vector<8x3xi32>
    %1548 = vector.shape_cast %1507 : vector<8x1xf32> to vector<8x1xf32>
    %1549 = vector.broadcast %1548 : vector<8x1xf32> to vector<8x3xf32>
    %1550 = vector.shape_cast %1510 : vector<8x1xf32> to vector<8x1xf32>
    %1551 = vector.broadcast %1550 : vector<8x1xf32> to vector<8x3xf32>
    %1552 = arith.select %1547, %1549, %1551 : vector<8x3xi1>, vector<8x3xf32>
    %1553 = vector.shape_cast %1543 : vector<8x1xf32> to vector<8x1xf32>
    %1554 = vector.broadcast %1553 : vector<8x1xf32> to vector<8x3xf32>
    %1555 = arith.select %1545, %1554, %1552 : vector<8x3xi1>, vector<8x3xf32>
    %c14_509 = arith.constant 14 : index
    %c0_510 = arith.constant 0 : index
    %c0_511 = arith.constant 0 : index
    %1556 = vector.load %arg6[%c14_509, %c0_510, %c0_511] : memref<32x8x3xf32, #tpu.memory_space<vmem>>, vector<1x8x3xf32>
    %1557 = vector.shape_cast %1556 : vector<1x8x3xf32> to vector<8x3xf32>
    %1558 = vector.shape_cast %1555 : vector<8x3xf32> to vector<1x8x3xf32>
    tpu.vector_store %arg6[%c14_509, %c0_510, %c0_511], %1558 {strides = array<i32>} : memref<32x8x3xf32, #tpu.memory_space<vmem>>, vector<1x8x3xf32>,
    %1559 = vector.broadcast %1543 : vector<8x1xf32> to vector<8x128xf32>
    %1560 = vector.broadcast %4 : vector<1x128xf32> to vector<8x128xf32>
    %1561 = arith.mulf %1559, %1560 : vector<8x128xf32>
    %1562 = arith.addf %1561, %1511 : vector<8x128xf32>
    %c15_512 = arith.constant 15 : index
    %c0_513 = arith.constant 0 : index
    %c0_514 = arith.constant 0 : index
    %1563 = vector.load %arg10[%c15_512, %c0_513, %c0_514] : memref<32x8x128xf32, #tpu.memory_space<vmem>>, vector<1x8x128xf32>
    %1564 = vector.shape_cast %1563 : vector<1x8x128xf32> to vector<8x128xf32>
    %1565 = arith.addf %1562, %1564 : vector<8x128xf32>
    %1566 = arith.negf %1565 : vector<8x128xf32>
    %1567 = math.exp %1566 : vector<8x128xf32>
    %cst_515 = arith.constant 1.000000e+00 : f32
    %1568 = vector.broadcast %cst_515 : f32 to vector<8x128xf32>
    %1569 = arith.addf %1568, %1567 : vector<8x128xf32>
    %1570 = arith.divf %1568, %1569 : vector<8x128xf32>
    %1571 = vector.extract_strided_slice %1570 {offsets = [0, 0], sizes = [8, 32], strides = [1, 1]} : vector<8x128xf32> to vector<8x32xf32>
    %1572 = vector.extract_strided_slice %1570 {offsets = [0, 32], sizes = [8, 32], strides = [1, 1]} : vector<8x128xf32> to vector<8x32xf32>
    %1573 = vector.extract_strided_slice %1570 {offsets = [0, 64], sizes = [8, 32], strides = [1, 1]} : vector<8x128xf32> to vector<8x32xf32>
    %cst_516 = arith.constant 2.000000e+00 : f32
    %1574 = vector.broadcast %cst_516 : f32 to vector<8x32xf32>
    %1575 = arith.mulf %1574, %1573 : vector<8x32xf32>
    %cst_517 = arith.constant 1.000000e+00 : f32
    %1576 = vector.broadcast %cst_517 : f32 to vector<8x32xf32>
    %1577 = arith.subf %1575, %1576 : vector<8x32xf32>
    %1578 = vector.extract_strided_slice %1570 {offsets = [0, 96], sizes = [8, 32], strides = [1, 1]} : vector<8x128xf32> to vector<8x32xf32>
    %1579 = arith.mulf %1572, %1500 : vector<8x32xf32>
    %1580 = arith.mulf %1571, %1577 : vector<8x32xf32>
    %1581 = arith.addf %1579, %1580 : vector<8x32xf32>
    %1582 = math.tanh %1581 : vector<8x32xf32>
    %1583 = arith.mulf %1578, %1582 : vector<8x32xf32>
    %1584 = arith.truncf %1583 : vector<8x32xf32> to vector<8x32xbf16>
    %cst_518 = arith.constant dense<0.000000e+00> : vector<8x256xf32>
    %1585 = tpu.matmul %1584, %6, %cst_518 {dimension_numbers = #tpu.dot_dimension_numbers<[1], [0], [0], [1], [0, 0, 1, 1], [], []>} : vector<8x32xbf16>, vector<32x256xbf16>, vector<8x256xf32> -> vector<8x256xf32>
    %1586 = vector.extract_strided_slice %1585 {offsets = [0, 0], sizes = [8, 1], strides = [1, 1]} : vector<8x256xf32> to vector<8x1xf32>
    %1587 = vector.broadcast %9 : f32 to vector<8x1xf32>
    %1588 = arith.addf %1586, %1587 : vector<8x1xf32>
    %1589 = vector.extract_strided_slice %1585 {offsets = [0, 1], sizes = [8, 1], strides = [1, 1]} : vector<8x256xf32> to vector<8x1xf32>
    %1590 = vector.broadcast %10 : f32 to vector<8x1xf32>
    %1591 = arith.addf %1589, %1590 : vector<8x1xf32>
    %1592 = vector.extract_strided_slice %1585 {offsets = [0, 128], sizes = [8, 128], strides = [1, 1]} : vector<8x256xf32> to vector<8x128xf32>
    %c15_519 = arith.constant 15 : index
    %c0_520 = arith.constant 0 : index
    %c0_521 = arith.constant 0 : index
    %1593 = vector.load %arg1[%c15_519, %c0_520, %c0_521] : memref<32x8x1xf32, #tpu.memory_space<vmem>>, vector<1x8x1xf32>
    %1594 = vector.shape_cast %1593 : vector<1x8x1xf32> to vector<8x1xf32>
    %1595 = vector.broadcast %7 : f32 to vector<8x1xf32>
    %1596 = arith.mulf %1595, %1594 : vector<8x1xf32>
    %1597 = vector.broadcast %8 : f32 to vector<8x1xf32>
    %1598 = arith.addf %1596, %1597 : vector<8x1xf32>
    %1599 = arith.mulf %1588, %1598 : vector<8x1xf32>
    %1600 = math.absf %1599 : vector<8x1xf32>
    %cst_522 = arith.constant 0.000000e+00 : f32
    %1601 = vector.broadcast %cst_522 : f32 to vector<8x1xf32>
    %1602 = arith.subf %1601, %1600 : vector<8x1xf32>
    %1603 = math.exp %1602 : vector<8x1xf32>
    %cst_523 = arith.constant 1.000000e+00 : f32
    %1604 = vector.broadcast %cst_523 : f32 to vector<8x1xf32>
    %1605 = arith.addf %1604, %1603 : vector<8x1xf32>
    %1606 = tpu.reciprocal %1605 {approx = true} : vector<8x1xf32> -> vector<8x1xf32>
    %cst_524 = arith.constant 0.000000e+00 : f32
    %1607 = vector.broadcast %cst_524 : f32 to vector<8x1xf32>
    %1608 = arith.cmpf oge, %1599, %1607 : vector<8x1xf32>
    %cst_525 = arith.constant 1.000000e+00 : f32
    %1609 = vector.broadcast %cst_525 : f32 to vector<8x1xf32>
    %1610 = arith.subf %1609, %1606 : vector<8x1xf32>
    %1611 = arith.select %1608, %1606, %1610 : vector<8x1xi1>, vector<8x1xf32>
    %cst_526 = arith.constant 0.000000e+00 : f32
    %1612 = vector.broadcast %cst_526 : f32 to vector<8x1xf32>
    %1613 = arith.maximumf %1599, %1612 : vector<8x1xf32>
    %cst_527 = arith.constant 1.000000e+00 : f32
    %1614 = vector.broadcast %cst_527 : f32 to vector<8x1xf32>
    %1615 = arith.addf %1614, %1603 : vector<8x1xf32>
    %1616 = math.log %1615 : vector<8x1xf32>
    %1617 = arith.addf %1613, %1616 : vector<8x1xf32>
    %1618 = tpu.reciprocal %1588 {approx = true} : vector<8x1xf32> -> vector<8x1xf32>
    %1619 = arith.mulf %1618, %1617 : vector<8x1xf32>
    %cst_528 = arith.constant 1.000000e+00 : f32
    %1620 = vector.broadcast %cst_528 : f32 to vector<8x1xf32>
    %1621 = arith.subf %1620, %1591 : vector<8x1xf32>
    %1622 = arith.mulf %1621, %1619 : vector<8x1xf32>
    %1623 = arith.mulf %1591, %1611 : vector<8x1xf32>
    %1624 = arith.addf %1622, %1623 : vector<8x1xf32>
    %c0_i32_529 = arith.constant 0 : i32
    %1625 = vector.broadcast %c0_i32_529 : i32 to vector<8x3xi32>
    %1626 = arith.cmpi eq, %331, %1625 : vector<8x3xi32>
    %c1_i32_530 = arith.constant 1 : i32
    %1627 = vector.broadcast %c1_i32_530 : i32 to vector<8x3xi32>
    %1628 = arith.cmpi eq, %331, %1627 : vector<8x3xi32>
    %1629 = vector.shape_cast %1588 : vector<8x1xf32> to vector<8x1xf32>
    %1630 = vector.broadcast %1629 : vector<8x1xf32> to vector<8x3xf32>
    %1631 = vector.shape_cast %1591 : vector<8x1xf32> to vector<8x1xf32>
    %1632 = vector.broadcast %1631 : vector<8x1xf32> to vector<8x3xf32>
    %1633 = arith.select %1628, %1630, %1632 : vector<8x3xi1>, vector<8x3xf32>
    %1634 = vector.shape_cast %1624 : vector<8x1xf32> to vector<8x1xf32>
    %1635 = vector.broadcast %1634 : vector<8x1xf32> to vector<8x3xf32>
    %1636 = arith.select %1626, %1635, %1633 : vector<8x3xi1>, vector<8x3xf32>
    %c15_531 = arith.constant 15 : index
    %c0_532 = arith.constant 0 : index
    %c0_533 = arith.constant 0 : index
    %1637 = vector.load %arg6[%c15_531, %c0_532, %c0_533] : memref<32x8x3xf32, #tpu.memory_space<vmem>>, vector<1x8x3xf32>
    %1638 = vector.shape_cast %1637 : vector<1x8x3xf32> to vector<8x3xf32>
    %1639 = vector.shape_cast %1636 : vector<8x3xf32> to vector<1x8x3xf32>
    tpu.vector_store %arg6[%c15_531, %c0_532, %c0_533], %1639 {strides = array<i32>} : memref<32x8x3xf32, #tpu.memory_space<vmem>>, vector<1x8x3xf32>,
    %1640 = vector.broadcast %1624 : vector<8x1xf32> to vector<8x128xf32>
    %1641 = vector.broadcast %4 : vector<1x128xf32> to vector<8x128xf32>
    %1642 = arith.mulf %1640, %1641 : vector<8x128xf32>
    %1643 = arith.addf %1642, %1592 : vector<8x128xf32>
    %c16_534 = arith.constant 16 : index
    %c0_535 = arith.constant 0 : index
    %c0_536 = arith.constant 0 : index
    %1644 = vector.load %arg10[%c16_534, %c0_535, %c0_536] : memref<32x8x128xf32, #tpu.memory_space<vmem>>, vector<1x8x128xf32>
    %1645 = vector.shape_cast %1644 : vector<1x8x128xf32> to vector<8x128xf32>
    %1646 = arith.addf %1643, %1645 : vector<8x128xf32>
    %1647 = arith.negf %1646 : vector<8x128xf32>
    %1648 = math.exp %1647 : vector<8x128xf32>
    %cst_537 = arith.constant 1.000000e+00 : f32
    %1649 = vector.broadcast %cst_537 : f32 to vector<8x128xf32>
    %1650 = arith.addf %1649, %1648 : vector<8x128xf32>
    %1651 = arith.divf %1649, %1650 : vector<8x128xf32>
    %1652 = vector.extract_strided_slice %1651 {offsets = [0, 0], sizes = [8, 32], strides = [1, 1]} : vector<8x128xf32> to vector<8x32xf32>
    %1653 = vector.extract_strided_slice %1651 {offsets = [0, 32], sizes = [8, 32], strides = [1, 1]} : vector<8x128xf32> to vector<8x32xf32>
    %1654 = vector.extract_strided_slice %1651 {offsets = [0, 64], sizes = [8, 32], strides = [1, 1]} : vector<8x128xf32> to vector<8x32xf32>
    %cst_538 = arith.constant 2.000000e+00 : f32
    %1655 = vector.broadcast %cst_538 : f32 to vector<8x32xf32>
    %1656 = arith.mulf %1655, %1654 : vector<8x32xf32>
    %cst_539 = arith.constant 1.000000e+00 : f32
    %1657 = vector.broadcast %cst_539 : f32 to vector<8x32xf32>
    %1658 = arith.subf %1656, %1657 : vector<8x32xf32>
    %1659 = vector.extract_strided_slice %1651 {offsets = [0, 96], sizes = [8, 32], strides = [1, 1]} : vector<8x128xf32> to vector<8x32xf32>
    %1660 = arith.mulf %1653, %1581 : vector<8x32xf32>
    %1661 = arith.mulf %1652, %1658 : vector<8x32xf32>
    %1662 = arith.addf %1660, %1661 : vector<8x32xf32>
    %1663 = math.tanh %1662 : vector<8x32xf32>
    %1664 = arith.mulf %1659, %1663 : vector<8x32xf32>
    %1665 = arith.truncf %1664 : vector<8x32xf32> to vector<8x32xbf16>
    %cst_540 = arith.constant dense<0.000000e+00> : vector<8x256xf32>
    %1666 = tpu.matmul %1665, %6, %cst_540 {dimension_numbers = #tpu.dot_dimension_numbers<[1], [0], [0], [1], [0, 0, 1, 1], [], []>} : vector<8x32xbf16>, vector<32x256xbf16>, vector<8x256xf32> -> vector<8x256xf32>
    %1667 = vector.extract_strided_slice %1666 {offsets = [0, 0], sizes = [8, 1], strides = [1, 1]} : vector<8x256xf32> to vector<8x1xf32>
    %1668 = vector.broadcast %9 : f32 to vector<8x1xf32>
    %1669 = arith.addf %1667, %1668 : vector<8x1xf32>
    %1670 = vector.extract_strided_slice %1666 {offsets = [0, 1], sizes = [8, 1], strides = [1, 1]} : vector<8x256xf32> to vector<8x1xf32>
    %1671 = vector.broadcast %10 : f32 to vector<8x1xf32>
    %1672 = arith.addf %1670, %1671 : vector<8x1xf32>
    %1673 = vector.extract_strided_slice %1666 {offsets = [0, 128], sizes = [8, 128], strides = [1, 1]} : vector<8x256xf32> to vector<8x128xf32>
    %c16_541 = arith.constant 16 : index
    %c0_542 = arith.constant 0 : index
    %c0_543 = arith.constant 0 : index
    %1674 = vector.load %arg1[%c16_541, %c0_542, %c0_543] : memref<32x8x1xf32, #tpu.memory_space<vmem>>, vector<1x8x1xf32>
    %1675 = vector.shape_cast %1674 : vector<1x8x1xf32> to vector<8x1xf32>
    %1676 = vector.broadcast %7 : f32 to vector<8x1xf32>
    %1677 = arith.mulf %1676, %1675 : vector<8x1xf32>
    %1678 = vector.broadcast %8 : f32 to vector<8x1xf32>
    %1679 = arith.addf %1677, %1678 : vector<8x1xf32>
    %1680 = arith.mulf %1669, %1679 : vector<8x1xf32>
    %1681 = math.absf %1680 : vector<8x1xf32>
    %cst_544 = arith.constant 0.000000e+00 : f32
    %1682 = vector.broadcast %cst_544 : f32 to vector<8x1xf32>
    %1683 = arith.subf %1682, %1681 : vector<8x1xf32>
    %1684 = math.exp %1683 : vector<8x1xf32>
    %cst_545 = arith.constant 1.000000e+00 : f32
    %1685 = vector.broadcast %cst_545 : f32 to vector<8x1xf32>
    %1686 = arith.addf %1685, %1684 : vector<8x1xf32>
    %1687 = tpu.reciprocal %1686 {approx = true} : vector<8x1xf32> -> vector<8x1xf32>
    %cst_546 = arith.constant 0.000000e+00 : f32
    %1688 = vector.broadcast %cst_546 : f32 to vector<8x1xf32>
    %1689 = arith.cmpf oge, %1680, %1688 : vector<8x1xf32>
    %cst_547 = arith.constant 1.000000e+00 : f32
    %1690 = vector.broadcast %cst_547 : f32 to vector<8x1xf32>
    %1691 = arith.subf %1690, %1687 : vector<8x1xf32>
    %1692 = arith.select %1689, %1687, %1691 : vector<8x1xi1>, vector<8x1xf32>
    %cst_548 = arith.constant 0.000000e+00 : f32
    %1693 = vector.broadcast %cst_548 : f32 to vector<8x1xf32>
    %1694 = arith.maximumf %1680, %1693 : vector<8x1xf32>
    %cst_549 = arith.constant 1.000000e+00 : f32
    %1695 = vector.broadcast %cst_549 : f32 to vector<8x1xf32>
    %1696 = arith.addf %1695, %1684 : vector<8x1xf32>
    %1697 = math.log %1696 : vector<8x1xf32>
    %1698 = arith.addf %1694, %1697 : vector<8x1xf32>
    %1699 = tpu.reciprocal %1669 {approx = true} : vector<8x1xf32> -> vector<8x1xf32>
    %1700 = arith.mulf %1699, %1698 : vector<8x1xf32>
    %cst_550 = arith.constant 1.000000e+00 : f32
    %1701 = vector.broadcast %cst_550 : f32 to vector<8x1xf32>
    %1702 = arith.subf %1701, %1672 : vector<8x1xf32>
    %1703 = arith.mulf %1702, %1700 : vector<8x1xf32>
    %1704 = arith.mulf %1672, %1692 : vector<8x1xf32>
    %1705 = arith.addf %1703, %1704 : vector<8x1xf32>
    %c0_i32_551 = arith.constant 0 : i32
    %1706 = vector.broadcast %c0_i32_551 : i32 to vector<8x3xi32>
    %1707 = arith.cmpi eq, %331, %1706 : vector<8x3xi32>
    %c1_i32_552 = arith.constant 1 : i32
    %1708 = vector.broadcast %c1_i32_552 : i32 to vector<8x3xi32>
    %1709 = arith.cmpi eq, %331, %1708 : vector<8x3xi32>
    %1710 = vector.shape_cast %1669 : vector<8x1xf32> to vector<8x1xf32>
    %1711 = vector.broadcast %1710 : vector<8x1xf32> to vector<8x3xf32>
    %1712 = vector.shape_cast %1672 : vector<8x1xf32> to vector<8x1xf32>
    %1713 = vector.broadcast %1712 : vector<8x1xf32> to vector<8x3xf32>
    %1714 = arith.select %1709, %1711, %1713 : vector<8x3xi1>, vector<8x3xf32>
    %1715 = vector.shape_cast %1705 : vector<8x1xf32> to vector<8x1xf32>
    %1716 = vector.broadcast %1715 : vector<8x1xf32> to vector<8x3xf32>
    %1717 = arith.select %1707, %1716, %1714 : vector<8x3xi1>, vector<8x3xf32>
    %c16_553 = arith.constant 16 : index
    %c0_554 = arith.constant 0 : index
    %c0_555 = arith.constant 0 : index
    %1718 = vector.load %arg6[%c16_553, %c0_554, %c0_555] : memref<32x8x3xf32, #tpu.memory_space<vmem>>, vector<1x8x3xf32>
    %1719 = vector.shape_cast %1718 : vector<1x8x3xf32> to vector<8x3xf32>
    %1720 = vector.shape_cast %1717 : vector<8x3xf32> to vector<1x8x3xf32>
    tpu.vector_store %arg6[%c16_553, %c0_554, %c0_555], %1720 {strides = array<i32>} : memref<32x8x3xf32, #tpu.memory_space<vmem>>, vector<1x8x3xf32>,
    %1721 = vector.broadcast %1705 : vector<8x1xf32> to vector<8x128xf32>
    %1722 = vector.broadcast %4 : vector<1x128xf32> to vector<8x128xf32>
    %1723 = arith.mulf %1721, %1722 : vector<8x128xf32>
    %1724 = arith.addf %1723, %1673 : vector<8x128xf32>
    %c17_556 = arith.constant 17 : index
    %c0_557 = arith.constant 0 : index
    %c0_558 = arith.constant 0 : index
    %1725 = vector.load %arg10[%c17_556, %c0_557, %c0_558] : memref<32x8x128xf32, #tpu.memory_space<vmem>>, vector<1x8x128xf32>
    %1726 = vector.shape_cast %1725 : vector<1x8x128xf32> to vector<8x128xf32>
    %1727 = arith.addf %1724, %1726 : vector<8x128xf32>
    %1728 = arith.negf %1727 : vector<8x128xf32>
    %1729 = math.exp %1728 : vector<8x128xf32>
    %cst_559 = arith.constant 1.000000e+00 : f32
    %1730 = vector.broadcast %cst_559 : f32 to vector<8x128xf32>
    %1731 = arith.addf %1730, %1729 : vector<8x128xf32>
    %1732 = arith.divf %1730, %1731 : vector<8x128xf32>
    %1733 = vector.extract_strided_slice %1732 {offsets = [0, 0], sizes = [8, 32], strides = [1, 1]} : vector<8x128xf32> to vector<8x32xf32>
    %1734 = vector.extract_strided_slice %1732 {offsets = [0, 32], sizes = [8, 32], strides = [1, 1]} : vector<8x128xf32> to vector<8x32xf32>
    %1735 = vector.extract_strided_slice %1732 {offsets = [0, 64], sizes = [8, 32], strides = [1, 1]} : vector<8x128xf32> to vector<8x32xf32>
    %cst_560 = arith.constant 2.000000e+00 : f32
    %1736 = vector.broadcast %cst_560 : f32 to vector<8x32xf32>
    %1737 = arith.mulf %1736, %1735 : vector<8x32xf32>
    %cst_561 = arith.constant 1.000000e+00 : f32
    %1738 = vector.broadcast %cst_561 : f32 to vector<8x32xf32>
    %1739 = arith.subf %1737, %1738 : vector<8x32xf32>
    %1740 = vector.extract_strided_slice %1732 {offsets = [0, 96], sizes = [8, 32], strides = [1, 1]} : vector<8x128xf32> to vector<8x32xf32>
    %1741 = arith.mulf %1734, %1662 : vector<8x32xf32>
    %1742 = arith.mulf %1733, %1739 : vector<8x32xf32>
    %1743 = arith.addf %1741, %1742 : vector<8x32xf32>
    %1744 = math.tanh %1743 : vector<8x32xf32>
    %1745 = arith.mulf %1740, %1744 : vector<8x32xf32>
    %1746 = arith.truncf %1745 : vector<8x32xf32> to vector<8x32xbf16>
    %cst_562 = arith.constant dense<0.000000e+00> : vector<8x256xf32>
    %1747 = tpu.matmul %1746, %6, %cst_562 {dimension_numbers = #tpu.dot_dimension_numbers<[1], [0], [0], [1], [0, 0, 1, 1], [], []>} : vector<8x32xbf16>, vector<32x256xbf16>, vector<8x256xf32> -> vector<8x256xf32>
    %1748 = vector.extract_strided_slice %1747 {offsets = [0, 0], sizes = [8, 1], strides = [1, 1]} : vector<8x256xf32> to vector<8x1xf32>
    %1749 = vector.broadcast %9 : f32 to vector<8x1xf32>
    %1750 = arith.addf %1748, %1749 : vector<8x1xf32>
    %1751 = vector.extract_strided_slice %1747 {offsets = [0, 1], sizes = [8, 1], strides = [1, 1]} : vector<8x256xf32> to vector<8x1xf32>
    %1752 = vector.broadcast %10 : f32 to vector<8x1xf32>
    %1753 = arith.addf %1751, %1752 : vector<8x1xf32>
    %1754 = vector.extract_strided_slice %1747 {offsets = [0, 128], sizes = [8, 128], strides = [1, 1]} : vector<8x256xf32> to vector<8x128xf32>
    %c17_563 = arith.constant 17 : index
    %c0_564 = arith.constant 0 : index
    %c0_565 = arith.constant 0 : index
    %1755 = vector.load %arg1[%c17_563, %c0_564, %c0_565] : memref<32x8x1xf32, #tpu.memory_space<vmem>>, vector<1x8x1xf32>
    %1756 = vector.shape_cast %1755 : vector<1x8x1xf32> to vector<8x1xf32>
    %1757 = vector.broadcast %7 : f32 to vector<8x1xf32>
    %1758 = arith.mulf %1757, %1756 : vector<8x1xf32>
    %1759 = vector.broadcast %8 : f32 to vector<8x1xf32>
    %1760 = arith.addf %1758, %1759 : vector<8x1xf32>
    %1761 = arith.mulf %1750, %1760 : vector<8x1xf32>
    %1762 = math.absf %1761 : vector<8x1xf32>
    %cst_566 = arith.constant 0.000000e+00 : f32
    %1763 = vector.broadcast %cst_566 : f32 to vector<8x1xf32>
    %1764 = arith.subf %1763, %1762 : vector<8x1xf32>
    %1765 = math.exp %1764 : vector<8x1xf32>
    %cst_567 = arith.constant 1.000000e+00 : f32
    %1766 = vector.broadcast %cst_567 : f32 to vector<8x1xf32>
    %1767 = arith.addf %1766, %1765 : vector<8x1xf32>
    %1768 = tpu.reciprocal %1767 {approx = true} : vector<8x1xf32> -> vector<8x1xf32>
    %cst_568 = arith.constant 0.000000e+00 : f32
    %1769 = vector.broadcast %cst_568 : f32 to vector<8x1xf32>
    %1770 = arith.cmpf oge, %1761, %1769 : vector<8x1xf32>
    %cst_569 = arith.constant 1.000000e+00 : f32
    %1771 = vector.broadcast %cst_569 : f32 to vector<8x1xf32>
    %1772 = arith.subf %1771, %1768 : vector<8x1xf32>
    %1773 = arith.select %1770, %1768, %1772 : vector<8x1xi1>, vector<8x1xf32>
    %cst_570 = arith.constant 0.000000e+00 : f32
    %1774 = vector.broadcast %cst_570 : f32 to vector<8x1xf32>
    %1775 = arith.maximumf %1761, %1774 : vector<8x1xf32>
    %cst_571 = arith.constant 1.000000e+00 : f32
    %1776 = vector.broadcast %cst_571 : f32 to vector<8x1xf32>
    %1777 = arith.addf %1776, %1765 : vector<8x1xf32>
    %1778 = math.log %1777 : vector<8x1xf32>
    %1779 = arith.addf %1775, %1778 : vector<8x1xf32>
    %1780 = tpu.reciprocal %1750 {approx = true} : vector<8x1xf32> -> vector<8x1xf32>
    %1781 = arith.mulf %1780, %1779 : vector<8x1xf32>
    %cst_572 = arith.constant 1.000000e+00 : f32
    %1782 = vector.broadcast %cst_572 : f32 to vector<8x1xf32>
    %1783 = arith.subf %1782, %1753 : vector<8x1xf32>
    %1784 = arith.mulf %1783, %1781 : vector<8x1xf32>
    %1785 = arith.mulf %1753, %1773 : vector<8x1xf32>
    %1786 = arith.addf %1784, %1785 : vector<8x1xf32>
    %c0_i32_573 = arith.constant 0 : i32
    %1787 = vector.broadcast %c0_i32_573 : i32 to vector<8x3xi32>
    %1788 = arith.cmpi eq, %331, %1787 : vector<8x3xi32>
    %c1_i32_574 = arith.constant 1 : i32
    %1789 = vector.broadcast %c1_i32_574 : i32 to vector<8x3xi32>
    %1790 = arith.cmpi eq, %331, %1789 : vector<8x3xi32>
    %1791 = vector.shape_cast %1750 : vector<8x1xf32> to vector<8x1xf32>
    %1792 = vector.broadcast %1791 : vector<8x1xf32> to vector<8x3xf32>
    %1793 = vector.shape_cast %1753 : vector<8x1xf32> to vector<8x1xf32>
    %1794 = vector.broadcast %1793 : vector<8x1xf32> to vector<8x3xf32>
    %1795 = arith.select %1790, %1792, %1794 : vector<8x3xi1>, vector<8x3xf32>
    %1796 = vector.shape_cast %1786 : vector<8x1xf32> to vector<8x1xf32>
    %1797 = vector.broadcast %1796 : vector<8x1xf32> to vector<8x3xf32>
    %1798 = arith.select %1788, %1797, %1795 : vector<8x3xi1>, vector<8x3xf32>
    %c17_575 = arith.constant 17 : index
    %c0_576 = arith.constant 0 : index
    %c0_577 = arith.constant 0 : index
    %1799 = vector.load %arg6[%c17_575, %c0_576, %c0_577] : memref<32x8x3xf32, #tpu.memory_space<vmem>>, vector<1x8x3xf32>
    %1800 = vector.shape_cast %1799 : vector<1x8x3xf32> to vector<8x3xf32>
    %1801 = vector.shape_cast %1798 : vector<8x3xf32> to vector<1x8x3xf32>
    tpu.vector_store %arg6[%c17_575, %c0_576, %c0_577], %1801 {strides = array<i32>} : memref<32x8x3xf32, #tpu.memory_space<vmem>>, vector<1x8x3xf32>,
    %1802 = vector.broadcast %1786 : vector<8x1xf32> to vector<8x128xf32>
    %1803 = vector.broadcast %4 : vector<1x128xf32> to vector<8x128xf32>
    %1804 = arith.mulf %1802, %1803 : vector<8x128xf32>
    %1805 = arith.addf %1804, %1754 : vector<8x128xf32>
    %c18_578 = arith.constant 18 : index
    %c0_579 = arith.constant 0 : index
    %c0_580 = arith.constant 0 : index
    %1806 = vector.load %arg10[%c18_578, %c0_579, %c0_580] : memref<32x8x128xf32, #tpu.memory_space<vmem>>, vector<1x8x128xf32>
    %1807 = vector.shape_cast %1806 : vector<1x8x128xf32> to vector<8x128xf32>
    %1808 = arith.addf %1805, %1807 : vector<8x128xf32>
    %1809 = arith.negf %1808 : vector<8x128xf32>
    %1810 = math.exp %1809 : vector<8x128xf32>
    %cst_581 = arith.constant 1.000000e+00 : f32
    %1811 = vector.broadcast %cst_581 : f32 to vector<8x128xf32>
    %1812 = arith.addf %1811, %1810 : vector<8x128xf32>
    %1813 = arith.divf %1811, %1812 : vector<8x128xf32>
    %1814 = vector.extract_strided_slice %1813 {offsets = [0, 0], sizes = [8, 32], strides = [1, 1]} : vector<8x128xf32> to vector<8x32xf32>
    %1815 = vector.extract_strided_slice %1813 {offsets = [0, 32], sizes = [8, 32], strides = [1, 1]} : vector<8x128xf32> to vector<8x32xf32>
    %1816 = vector.extract_strided_slice %1813 {offsets = [0, 64], sizes = [8, 32], strides = [1, 1]} : vector<8x128xf32> to vector<8x32xf32>
    %cst_582 = arith.constant 2.000000e+00 : f32
    %1817 = vector.broadcast %cst_582 : f32 to vector<8x32xf32>
    %1818 = arith.mulf %1817, %1816 : vector<8x32xf32>
    %cst_583 = arith.constant 1.000000e+00 : f32
    %1819 = vector.broadcast %cst_583 : f32 to vector<8x32xf32>
    %1820 = arith.subf %1818, %1819 : vector<8x32xf32>
    %1821 = vector.extract_strided_slice %1813 {offsets = [0, 96], sizes = [8, 32], strides = [1, 1]} : vector<8x128xf32> to vector<8x32xf32>
    %1822 = arith.mulf %1815, %1743 : vector<8x32xf32>
    %1823 = arith.mulf %1814, %1820 : vector<8x32xf32>
    %1824 = arith.addf %1822, %1823 : vector<8x32xf32>
    %1825 = math.tanh %1824 : vector<8x32xf32>
    %1826 = arith.mulf %1821, %1825 : vector<8x32xf32>
    %1827 = arith.truncf %1826 : vector<8x32xf32> to vector<8x32xbf16>
    %cst_584 = arith.constant dense<0.000000e+00> : vector<8x256xf32>
    %1828 = tpu.matmul %1827, %6, %cst_584 {dimension_numbers = #tpu.dot_dimension_numbers<[1], [0], [0], [1], [0, 0, 1, 1], [], []>} : vector<8x32xbf16>, vector<32x256xbf16>, vector<8x256xf32> -> vector<8x256xf32>
    %1829 = vector.extract_strided_slice %1828 {offsets = [0, 0], sizes = [8, 1], strides = [1, 1]} : vector<8x256xf32> to vector<8x1xf32>
    %1830 = vector.broadcast %9 : f32 to vector<8x1xf32>
    %1831 = arith.addf %1829, %1830 : vector<8x1xf32>
    %1832 = vector.extract_strided_slice %1828 {offsets = [0, 1], sizes = [8, 1], strides = [1, 1]} : vector<8x256xf32> to vector<8x1xf32>
    %1833 = vector.broadcast %10 : f32 to vector<8x1xf32>
    %1834 = arith.addf %1832, %1833 : vector<8x1xf32>
    %1835 = vector.extract_strided_slice %1828 {offsets = [0, 128], sizes = [8, 128], strides = [1, 1]} : vector<8x256xf32> to vector<8x128xf32>
    %c18_585 = arith.constant 18 : index
    %c0_586 = arith.constant 0 : index
    %c0_587 = arith.constant 0 : index
    %1836 = vector.load %arg1[%c18_585, %c0_586, %c0_587] : memref<32x8x1xf32, #tpu.memory_space<vmem>>, vector<1x8x1xf32>
    %1837 = vector.shape_cast %1836 : vector<1x8x1xf32> to vector<8x1xf32>
    %1838 = vector.broadcast %7 : f32 to vector<8x1xf32>
    %1839 = arith.mulf %1838, %1837 : vector<8x1xf32>
    %1840 = vector.broadcast %8 : f32 to vector<8x1xf32>
    %1841 = arith.addf %1839, %1840 : vector<8x1xf32>
    %1842 = arith.mulf %1831, %1841 : vector<8x1xf32>
    %1843 = math.absf %1842 : vector<8x1xf32>
    %cst_588 = arith.constant 0.000000e+00 : f32
    %1844 = vector.broadcast %cst_588 : f32 to vector<8x1xf32>
    %1845 = arith.subf %1844, %1843 : vector<8x1xf32>
    %1846 = math.exp %1845 : vector<8x1xf32>
    %cst_589 = arith.constant 1.000000e+00 : f32
    %1847 = vector.broadcast %cst_589 : f32 to vector<8x1xf32>
    %1848 = arith.addf %1847, %1846 : vector<8x1xf32>
    %1849 = tpu.reciprocal %1848 {approx = true} : vector<8x1xf32> -> vector<8x1xf32>
    %cst_590 = arith.constant 0.000000e+00 : f32
    %1850 = vector.broadcast %cst_590 : f32 to vector<8x1xf32>
    %1851 = arith.cmpf oge, %1842, %1850 : vector<8x1xf32>
    %cst_591 = arith.constant 1.000000e+00 : f32
    %1852 = vector.broadcast %cst_591 : f32 to vector<8x1xf32>
    %1853 = arith.subf %1852, %1849 : vector<8x1xf32>
    %1854 = arith.select %1851, %1849, %1853 : vector<8x1xi1>, vector<8x1xf32>
    %cst_592 = arith.constant 0.000000e+00 : f32
    %1855 = vector.broadcast %cst_592 : f32 to vector<8x1xf32>
    %1856 = arith.maximumf %1842, %1855 : vector<8x1xf32>
    %cst_593 = arith.constant 1.000000e+00 : f32
    %1857 = vector.broadcast %cst_593 : f32 to vector<8x1xf32>
    %1858 = arith.addf %1857, %1846 : vector<8x1xf32>
    %1859 = math.log %1858 : vector<8x1xf32>
    %1860 = arith.addf %1856, %1859 : vector<8x1xf32>
    %1861 = tpu.reciprocal %1831 {approx = true} : vector<8x1xf32> -> vector<8x1xf32>
    %1862 = arith.mulf %1861, %1860 : vector<8x1xf32>
    %cst_594 = arith.constant 1.000000e+00 : f32
    %1863 = vector.broadcast %cst_594 : f32 to vector<8x1xf32>
    %1864 = arith.subf %1863, %1834 : vector<8x1xf32>
    %1865 = arith.mulf %1864, %1862 : vector<8x1xf32>
    %1866 = arith.mulf %1834, %1854 : vector<8x1xf32>
    %1867 = arith.addf %1865, %1866 : vector<8x1xf32>
    %c0_i32_595 = arith.constant 0 : i32
    %1868 = vector.broadcast %c0_i32_595 : i32 to vector<8x3xi32>
    %1869 = arith.cmpi eq, %331, %1868 : vector<8x3xi32>
    %c1_i32_596 = arith.constant 1 : i32
    %1870 = vector.broadcast %c1_i32_596 : i32 to vector<8x3xi32>
    %1871 = arith.cmpi eq, %331, %1870 : vector<8x3xi32>
    %1872 = vector.shape_cast %1831 : vector<8x1xf32> to vector<8x1xf32>
    %1873 = vector.broadcast %1872 : vector<8x1xf32> to vector<8x3xf32>
    %1874 = vector.shape_cast %1834 : vector<8x1xf32> to vector<8x1xf32>
    %1875 = vector.broadcast %1874 : vector<8x1xf32> to vector<8x3xf32>
    %1876 = arith.select %1871, %1873, %1875 : vector<8x3xi1>, vector<8x3xf32>
    %1877 = vector.shape_cast %1867 : vector<8x1xf32> to vector<8x1xf32>
    %1878 = vector.broadcast %1877 : vector<8x1xf32> to vector<8x3xf32>
    %1879 = arith.select %1869, %1878, %1876 : vector<8x3xi1>, vector<8x3xf32>
    %c18_597 = arith.constant 18 : index
    %c0_598 = arith.constant 0 : index
    %c0_599 = arith.constant 0 : index
    %1880 = vector.load %arg6[%c18_597, %c0_598, %c0_599] : memref<32x8x3xf32, #tpu.memory_space<vmem>>, vector<1x8x3xf32>
    %1881 = vector.shape_cast %1880 : vector<1x8x3xf32> to vector<8x3xf32>
    %1882 = vector.shape_cast %1879 : vector<8x3xf32> to vector<1x8x3xf32>
    tpu.vector_store %arg6[%c18_597, %c0_598, %c0_599], %1882 {strides = array<i32>} : memref<32x8x3xf32, #tpu.memory_space<vmem>>, vector<1x8x3xf32>,
    %1883 = vector.broadcast %1867 : vector<8x1xf32> to vector<8x128xf32>
    %1884 = vector.broadcast %4 : vector<1x128xf32> to vector<8x128xf32>
    %1885 = arith.mulf %1883, %1884 : vector<8x128xf32>
    %1886 = arith.addf %1885, %1835 : vector<8x128xf32>
    %c19_600 = arith.constant 19 : index
    %c0_601 = arith.constant 0 : index
    %c0_602 = arith.constant 0 : index
    %1887 = vector.load %arg10[%c19_600, %c0_601, %c0_602] : memref<32x8x128xf32, #tpu.memory_space<vmem>>, vector<1x8x128xf32>
    %1888 = vector.shape_cast %1887 : vector<1x8x128xf32> to vector<8x128xf32>
    %1889 = arith.addf %1886, %1888 : vector<8x128xf32>
    %1890 = arith.negf %1889 : vector<8x128xf32>
    %1891 = math.exp %1890 : vector<8x128xf32>
    %cst_603 = arith.constant 1.000000e+00 : f32
    %1892 = vector.broadcast %cst_603 : f32 to vector<8x128xf32>
    %1893 = arith.addf %1892, %1891 : vector<8x128xf32>
    %1894 = arith.divf %1892, %1893 : vector<8x128xf32>
    %1895 = vector.extract_strided_slice %1894 {offsets = [0, 0], sizes = [8, 32], strides = [1, 1]} : vector<8x128xf32> to vector<8x32xf32>
    %1896 = vector.extract_strided_slice %1894 {offsets = [0, 32], sizes = [8, 32], strides = [1, 1]} : vector<8x128xf32> to vector<8x32xf32>
    %1897 = vector.extract_strided_slice %1894 {offsets = [0, 64], sizes = [8, 32], strides = [1, 1]} : vector<8x128xf32> to vector<8x32xf32>
    %cst_604 = arith.constant 2.000000e+00 : f32
    %1898 = vector.broadcast %cst_604 : f32 to vector<8x32xf32>
    %1899 = arith.mulf %1898, %1897 : vector<8x32xf32>
    %cst_605 = arith.constant 1.000000e+00 : f32
    %1900 = vector.broadcast %cst_605 : f32 to vector<8x32xf32>
    %1901 = arith.subf %1899, %1900 : vector<8x32xf32>
    %1902 = vector.extract_strided_slice %1894 {offsets = [0, 96], sizes = [8, 32], strides = [1, 1]} : vector<8x128xf32> to vector<8x32xf32>
    %1903 = arith.mulf %1896, %1824 : vector<8x32xf32>
    %1904 = arith.mulf %1895, %1901 : vector<8x32xf32>
    %1905 = arith.addf %1903, %1904 : vector<8x32xf32>
    %1906 = math.tanh %1905 : vector<8x32xf32>
    %1907 = arith.mulf %1902, %1906 : vector<8x32xf32>
    %1908 = arith.truncf %1907 : vector<8x32xf32> to vector<8x32xbf16>
    %cst_606 = arith.constant dense<0.000000e+00> : vector<8x256xf32>
    %1909 = tpu.matmul %1908, %6, %cst_606 {dimension_numbers = #tpu.dot_dimension_numbers<[1], [0], [0], [1], [0, 0, 1, 1], [], []>} : vector<8x32xbf16>, vector<32x256xbf16>, vector<8x256xf32> -> vector<8x256xf32>
    %1910 = vector.extract_strided_slice %1909 {offsets = [0, 0], sizes = [8, 1], strides = [1, 1]} : vector<8x256xf32> to vector<8x1xf32>
    %1911 = vector.broadcast %9 : f32 to vector<8x1xf32>
    %1912 = arith.addf %1910, %1911 : vector<8x1xf32>
    %1913 = vector.extract_strided_slice %1909 {offsets = [0, 1], sizes = [8, 1], strides = [1, 1]} : vector<8x256xf32> to vector<8x1xf32>
    %1914 = vector.broadcast %10 : f32 to vector<8x1xf32>
    %1915 = arith.addf %1913, %1914 : vector<8x1xf32>
    %1916 = vector.extract_strided_slice %1909 {offsets = [0, 128], sizes = [8, 128], strides = [1, 1]} : vector<8x256xf32> to vector<8x128xf32>
    %c19_607 = arith.constant 19 : index
    %c0_608 = arith.constant 0 : index
    %c0_609 = arith.constant 0 : index
    %1917 = vector.load %arg1[%c19_607, %c0_608, %c0_609] : memref<32x8x1xf32, #tpu.memory_space<vmem>>, vector<1x8x1xf32>
    %1918 = vector.shape_cast %1917 : vector<1x8x1xf32> to vector<8x1xf32>
    %1919 = vector.broadcast %7 : f32 to vector<8x1xf32>
    %1920 = arith.mulf %1919, %1918 : vector<8x1xf32>
    %1921 = vector.broadcast %8 : f32 to vector<8x1xf32>
    %1922 = arith.addf %1920, %1921 : vector<8x1xf32>
    %1923 = arith.mulf %1912, %1922 : vector<8x1xf32>
    %1924 = math.absf %1923 : vector<8x1xf32>
    %cst_610 = arith.constant 0.000000e+00 : f32
    %1925 = vector.broadcast %cst_610 : f32 to vector<8x1xf32>
    %1926 = arith.subf %1925, %1924 : vector<8x1xf32>
    %1927 = math.exp %1926 : vector<8x1xf32>
    %cst_611 = arith.constant 1.000000e+00 : f32
    %1928 = vector.broadcast %cst_611 : f32 to vector<8x1xf32>
    %1929 = arith.addf %1928, %1927 : vector<8x1xf32>
    %1930 = tpu.reciprocal %1929 {approx = true} : vector<8x1xf32> -> vector<8x1xf32>
    %cst_612 = arith.constant 0.000000e+00 : f32
    %1931 = vector.broadcast %cst_612 : f32 to vector<8x1xf32>
    %1932 = arith.cmpf oge, %1923, %1931 : vector<8x1xf32>
    %cst_613 = arith.constant 1.000000e+00 : f32
    %1933 = vector.broadcast %cst_613 : f32 to vector<8x1xf32>
    %1934 = arith.subf %1933, %1930 : vector<8x1xf32>
    %1935 = arith.select %1932, %1930, %1934 : vector<8x1xi1>, vector<8x1xf32>
    %cst_614 = arith.constant 0.000000e+00 : f32
    %1936 = vector.broadcast %cst_614 : f32 to vector<8x1xf32>
    %1937 = arith.maximumf %1923, %1936 : vector<8x1xf32>
    %cst_615 = arith.constant 1.000000e+00 : f32
    %1938 = vector.broadcast %cst_615 : f32 to vector<8x1xf32>
    %1939 = arith.addf %1938, %1927 : vector<8x1xf32>
    %1940 = math.log %1939 : vector<8x1xf32>
    %1941 = arith.addf %1937, %1940 : vector<8x1xf32>
    %1942 = tpu.reciprocal %1912 {approx = true} : vector<8x1xf32> -> vector<8x1xf32>
    %1943 = arith.mulf %1942, %1941 : vector<8x1xf32>
    %cst_616 = arith.constant 1.000000e+00 : f32
    %1944 = vector.broadcast %cst_616 : f32 to vector<8x1xf32>
    %1945 = arith.subf %1944, %1915 : vector<8x1xf32>
    %1946 = arith.mulf %1945, %1943 : vector<8x1xf32>
    %1947 = arith.mulf %1915, %1935 : vector<8x1xf32>
    %1948 = arith.addf %1946, %1947 : vector<8x1xf32>
    %c0_i32_617 = arith.constant 0 : i32
    %1949 = vector.broadcast %c0_i32_617 : i32 to vector<8x3xi32>
    %1950 = arith.cmpi eq, %331, %1949 : vector<8x3xi32>
    %c1_i32_618 = arith.constant 1 : i32
    %1951 = vector.broadcast %c1_i32_618 : i32 to vector<8x3xi32>
    %1952 = arith.cmpi eq, %331, %1951 : vector<8x3xi32>
    %1953 = vector.shape_cast %1912 : vector<8x1xf32> to vector<8x1xf32>
    %1954 = vector.broadcast %1953 : vector<8x1xf32> to vector<8x3xf32>
    %1955 = vector.shape_cast %1915 : vector<8x1xf32> to vector<8x1xf32>
    %1956 = vector.broadcast %1955 : vector<8x1xf32> to vector<8x3xf32>
    %1957 = arith.select %1952, %1954, %1956 : vector<8x3xi1>, vector<8x3xf32>
    %1958 = vector.shape_cast %1948 : vector<8x1xf32> to vector<8x1xf32>
    %1959 = vector.broadcast %1958 : vector<8x1xf32> to vector<8x3xf32>
    %1960 = arith.select %1950, %1959, %1957 : vector<8x3xi1>, vector<8x3xf32>
    %c19_619 = arith.constant 19 : index
    %c0_620 = arith.constant 0 : index
    %c0_621 = arith.constant 0 : index
    %1961 = vector.load %arg6[%c19_619, %c0_620, %c0_621] : memref<32x8x3xf32, #tpu.memory_space<vmem>>, vector<1x8x3xf32>
    %1962 = vector.shape_cast %1961 : vector<1x8x3xf32> to vector<8x3xf32>
    %1963 = vector.shape_cast %1960 : vector<8x3xf32> to vector<1x8x3xf32>
    tpu.vector_store %arg6[%c19_619, %c0_620, %c0_621], %1963 {strides = array<i32>} : memref<32x8x3xf32, #tpu.memory_space<vmem>>, vector<1x8x3xf32>,
    %1964 = vector.broadcast %1948 : vector<8x1xf32> to vector<8x128xf32>
    %1965 = vector.broadcast %4 : vector<1x128xf32> to vector<8x128xf32>
    %1966 = arith.mulf %1964, %1965 : vector<8x128xf32>
    %1967 = arith.addf %1966, %1916 : vector<8x128xf32>
    %c20_622 = arith.constant 20 : index
    %c0_623 = arith.constant 0 : index
    %c0_624 = arith.constant 0 : index
    %1968 = vector.load %arg10[%c20_622, %c0_623, %c0_624] : memref<32x8x128xf32, #tpu.memory_space<vmem>>, vector<1x8x128xf32>
    %1969 = vector.shape_cast %1968 : vector<1x8x128xf32> to vector<8x128xf32>
    %1970 = arith.addf %1967, %1969 : vector<8x128xf32>
    %1971 = arith.negf %1970 : vector<8x128xf32>
    %1972 = math.exp %1971 : vector<8x128xf32>
    %cst_625 = arith.constant 1.000000e+00 : f32
    %1973 = vector.broadcast %cst_625 : f32 to vector<8x128xf32>
    %1974 = arith.addf %1973, %1972 : vector<8x128xf32>
    %1975 = arith.divf %1973, %1974 : vector<8x128xf32>
    %1976 = vector.extract_strided_slice %1975 {offsets = [0, 0], sizes = [8, 32], strides = [1, 1]} : vector<8x128xf32> to vector<8x32xf32>
    %1977 = vector.extract_strided_slice %1975 {offsets = [0, 32], sizes = [8, 32], strides = [1, 1]} : vector<8x128xf32> to vector<8x32xf32>
    %1978 = vector.extract_strided_slice %1975 {offsets = [0, 64], sizes = [8, 32], strides = [1, 1]} : vector<8x128xf32> to vector<8x32xf32>
    %cst_626 = arith.constant 2.000000e+00 : f32
    %1979 = vector.broadcast %cst_626 : f32 to vector<8x32xf32>
    %1980 = arith.mulf %1979, %1978 : vector<8x32xf32>
    %cst_627 = arith.constant 1.000000e+00 : f32
    %1981 = vector.broadcast %cst_627 : f32 to vector<8x32xf32>
    %1982 = arith.subf %1980, %1981 : vector<8x32xf32>
    %1983 = vector.extract_strided_slice %1975 {offsets = [0, 96], sizes = [8, 32], strides = [1, 1]} : vector<8x128xf32> to vector<8x32xf32>
    %1984 = arith.mulf %1977, %1905 : vector<8x32xf32>
    %1985 = arith.mulf %1976, %1982 : vector<8x32xf32>
    %1986 = arith.addf %1984, %1985 : vector<8x32xf32>
    %1987 = math.tanh %1986 : vector<8x32xf32>
    %1988 = arith.mulf %1983, %1987 : vector<8x32xf32>
    %1989 = arith.truncf %1988 : vector<8x32xf32> to vector<8x32xbf16>
    %cst_628 = arith.constant dense<0.000000e+00> : vector<8x256xf32>
    %1990 = tpu.matmul %1989, %6, %cst_628 {dimension_numbers = #tpu.dot_dimension_numbers<[1], [0], [0], [1], [0, 0, 1, 1], [], []>} : vector<8x32xbf16>, vector<32x256xbf16>, vector<8x256xf32> -> vector<8x256xf32>
    %1991 = vector.extract_strided_slice %1990 {offsets = [0, 0], sizes = [8, 1], strides = [1, 1]} : vector<8x256xf32> to vector<8x1xf32>
    %1992 = vector.broadcast %9 : f32 to vector<8x1xf32>
    %1993 = arith.addf %1991, %1992 : vector<8x1xf32>
    %1994 = vector.extract_strided_slice %1990 {offsets = [0, 1], sizes = [8, 1], strides = [1, 1]} : vector<8x256xf32> to vector<8x1xf32>
    %1995 = vector.broadcast %10 : f32 to vector<8x1xf32>
    %1996 = arith.addf %1994, %1995 : vector<8x1xf32>
    %1997 = vector.extract_strided_slice %1990 {offsets = [0, 128], sizes = [8, 128], strides = [1, 1]} : vector<8x256xf32> to vector<8x128xf32>
    %c20_629 = arith.constant 20 : index
    %c0_630 = arith.constant 0 : index
    %c0_631 = arith.constant 0 : index
    %1998 = vector.load %arg1[%c20_629, %c0_630, %c0_631] : memref<32x8x1xf32, #tpu.memory_space<vmem>>, vector<1x8x1xf32>
    %1999 = vector.shape_cast %1998 : vector<1x8x1xf32> to vector<8x1xf32>
    %2000 = vector.broadcast %7 : f32 to vector<8x1xf32>
    %2001 = arith.mulf %2000, %1999 : vector<8x1xf32>
    %2002 = vector.broadcast %8 : f32 to vector<8x1xf32>
    %2003 = arith.addf %2001, %2002 : vector<8x1xf32>
    %2004 = arith.mulf %1993, %2003 : vector<8x1xf32>
    %2005 = math.absf %2004 : vector<8x1xf32>
    %cst_632 = arith.constant 0.000000e+00 : f32
    %2006 = vector.broadcast %cst_632 : f32 to vector<8x1xf32>
    %2007 = arith.subf %2006, %2005 : vector<8x1xf32>
    %2008 = math.exp %2007 : vector<8x1xf32>
    %cst_633 = arith.constant 1.000000e+00 : f32
    %2009 = vector.broadcast %cst_633 : f32 to vector<8x1xf32>
    %2010 = arith.addf %2009, %2008 : vector<8x1xf32>
    %2011 = tpu.reciprocal %2010 {approx = true} : vector<8x1xf32> -> vector<8x1xf32>
    %cst_634 = arith.constant 0.000000e+00 : f32
    %2012 = vector.broadcast %cst_634 : f32 to vector<8x1xf32>
    %2013 = arith.cmpf oge, %2004, %2012 : vector<8x1xf32>
    %cst_635 = arith.constant 1.000000e+00 : f32
    %2014 = vector.broadcast %cst_635 : f32 to vector<8x1xf32>
    %2015 = arith.subf %2014, %2011 : vector<8x1xf32>
    %2016 = arith.select %2013, %2011, %2015 : vector<8x1xi1>, vector<8x1xf32>
    %cst_636 = arith.constant 0.000000e+00 : f32
    %2017 = vector.broadcast %cst_636 : f32 to vector<8x1xf32>
    %2018 = arith.maximumf %2004, %2017 : vector<8x1xf32>
    %cst_637 = arith.constant 1.000000e+00 : f32
    %2019 = vector.broadcast %cst_637 : f32 to vector<8x1xf32>
    %2020 = arith.addf %2019, %2008 : vector<8x1xf32>
    %2021 = math.log %2020 : vector<8x1xf32>
    %2022 = arith.addf %2018, %2021 : vector<8x1xf32>
    %2023 = tpu.reciprocal %1993 {approx = true} : vector<8x1xf32> -> vector<8x1xf32>
    %2024 = arith.mulf %2023, %2022 : vector<8x1xf32>
    %cst_638 = arith.constant 1.000000e+00 : f32
    %2025 = vector.broadcast %cst_638 : f32 to vector<8x1xf32>
    %2026 = arith.subf %2025, %1996 : vector<8x1xf32>
    %2027 = arith.mulf %2026, %2024 : vector<8x1xf32>
    %2028 = arith.mulf %1996, %2016 : vector<8x1xf32>
    %2029 = arith.addf %2027, %2028 : vector<8x1xf32>
    %c0_i32_639 = arith.constant 0 : i32
    %2030 = vector.broadcast %c0_i32_639 : i32 to vector<8x3xi32>
    %2031 = arith.cmpi eq, %331, %2030 : vector<8x3xi32>
    %c1_i32_640 = arith.constant 1 : i32
    %2032 = vector.broadcast %c1_i32_640 : i32 to vector<8x3xi32>
    %2033 = arith.cmpi eq, %331, %2032 : vector<8x3xi32>
    %2034 = vector.shape_cast %1993 : vector<8x1xf32> to vector<8x1xf32>
    %2035 = vector.broadcast %2034 : vector<8x1xf32> to vector<8x3xf32>
    %2036 = vector.shape_cast %1996 : vector<8x1xf32> to vector<8x1xf32>
    %2037 = vector.broadcast %2036 : vector<8x1xf32> to vector<8x3xf32>
    %2038 = arith.select %2033, %2035, %2037 : vector<8x3xi1>, vector<8x3xf32>
    %2039 = vector.shape_cast %2029 : vector<8x1xf32> to vector<8x1xf32>
    %2040 = vector.broadcast %2039 : vector<8x1xf32> to vector<8x3xf32>
    %2041 = arith.select %2031, %2040, %2038 : vector<8x3xi1>, vector<8x3xf32>
    %c20_641 = arith.constant 20 : index
    %c0_642 = arith.constant 0 : index
    %c0_643 = arith.constant 0 : index
    %2042 = vector.load %arg6[%c20_641, %c0_642, %c0_643] : memref<32x8x3xf32, #tpu.memory_space<vmem>>, vector<1x8x3xf32>
    %2043 = vector.shape_cast %2042 : vector<1x8x3xf32> to vector<8x3xf32>
    %2044 = vector.shape_cast %2041 : vector<8x3xf32> to vector<1x8x3xf32>
    tpu.vector_store %arg6[%c20_641, %c0_642, %c0_643], %2044 {strides = array<i32>} : memref<32x8x3xf32, #tpu.memory_space<vmem>>, vector<1x8x3xf32>,
    %2045 = vector.broadcast %2029 : vector<8x1xf32> to vector<8x128xf32>
    %2046 = vector.broadcast %4 : vector<1x128xf32> to vector<8x128xf32>
    %2047 = arith.mulf %2045, %2046 : vector<8x128xf32>
    %2048 = arith.addf %2047, %1997 : vector<8x128xf32>
    %c21_644 = arith.constant 21 : index
    %c0_645 = arith.constant 0 : index
    %c0_646 = arith.constant 0 : index
    %2049 = vector.load %arg10[%c21_644, %c0_645, %c0_646] : memref<32x8x128xf32, #tpu.memory_space<vmem>>, vector<1x8x128xf32>
    %2050 = vector.shape_cast %2049 : vector<1x8x128xf32> to vector<8x128xf32>
    %2051 = arith.addf %2048, %2050 : vector<8x128xf32>
    %2052 = arith.negf %2051 : vector<8x128xf32>
    %2053 = math.exp %2052 : vector<8x128xf32>
    %cst_647 = arith.constant 1.000000e+00 : f32
    %2054 = vector.broadcast %cst_647 : f32 to vector<8x128xf32>
    %2055 = arith.addf %2054, %2053 : vector<8x128xf32>
    %2056 = arith.divf %2054, %2055 : vector<8x128xf32>
    %2057 = vector.extract_strided_slice %2056 {offsets = [0, 0], sizes = [8, 32], strides = [1, 1]} : vector<8x128xf32> to vector<8x32xf32>
    %2058 = vector.extract_strided_slice %2056 {offsets = [0, 32], sizes = [8, 32], strides = [1, 1]} : vector<8x128xf32> to vector<8x32xf32>
    %2059 = vector.extract_strided_slice %2056 {offsets = [0, 64], sizes = [8, 32], strides = [1, 1]} : vector<8x128xf32> to vector<8x32xf32>
    %cst_648 = arith.constant 2.000000e+00 : f32
    %2060 = vector.broadcast %cst_648 : f32 to vector<8x32xf32>
    %2061 = arith.mulf %2060, %2059 : vector<8x32xf32>
    %cst_649 = arith.constant 1.000000e+00 : f32
    %2062 = vector.broadcast %cst_649 : f32 to vector<8x32xf32>
    %2063 = arith.subf %2061, %2062 : vector<8x32xf32>
    %2064 = vector.extract_strided_slice %2056 {offsets = [0, 96], sizes = [8, 32], strides = [1, 1]} : vector<8x128xf32> to vector<8x32xf32>
    %2065 = arith.mulf %2058, %1986 : vector<8x32xf32>
    %2066 = arith.mulf %2057, %2063 : vector<8x32xf32>
    %2067 = arith.addf %2065, %2066 : vector<8x32xf32>
    %2068 = math.tanh %2067 : vector<8x32xf32>
    %2069 = arith.mulf %2064, %2068 : vector<8x32xf32>
    %2070 = arith.truncf %2069 : vector<8x32xf32> to vector<8x32xbf16>
    %cst_650 = arith.constant dense<0.000000e+00> : vector<8x256xf32>
    %2071 = tpu.matmul %2070, %6, %cst_650 {dimension_numbers = #tpu.dot_dimension_numbers<[1], [0], [0], [1], [0, 0, 1, 1], [], []>} : vector<8x32xbf16>, vector<32x256xbf16>, vector<8x256xf32> -> vector<8x256xf32>
    %2072 = vector.extract_strided_slice %2071 {offsets = [0, 0], sizes = [8, 1], strides = [1, 1]} : vector<8x256xf32> to vector<8x1xf32>
    %2073 = vector.broadcast %9 : f32 to vector<8x1xf32>
    %2074 = arith.addf %2072, %2073 : vector<8x1xf32>
    %2075 = vector.extract_strided_slice %2071 {offsets = [0, 1], sizes = [8, 1], strides = [1, 1]} : vector<8x256xf32> to vector<8x1xf32>
    %2076 = vector.broadcast %10 : f32 to vector<8x1xf32>
    %2077 = arith.addf %2075, %2076 : vector<8x1xf32>
    %2078 = vector.extract_strided_slice %2071 {offsets = [0, 128], sizes = [8, 128], strides = [1, 1]} : vector<8x256xf32> to vector<8x128xf32>
    %c21_651 = arith.constant 21 : index
    %c0_652 = arith.constant 0 : index
    %c0_653 = arith.constant 0 : index
    %2079 = vector.load %arg1[%c21_651, %c0_652, %c0_653] : memref<32x8x1xf32, #tpu.memory_space<vmem>>, vector<1x8x1xf32>
    %2080 = vector.shape_cast %2079 : vector<1x8x1xf32> to vector<8x1xf32>
    %2081 = vector.broadcast %7 : f32 to vector<8x1xf32>
    %2082 = arith.mulf %2081, %2080 : vector<8x1xf32>
    %2083 = vector.broadcast %8 : f32 to vector<8x1xf32>
    %2084 = arith.addf %2082, %2083 : vector<8x1xf32>
    %2085 = arith.mulf %2074, %2084 : vector<8x1xf32>
    %2086 = math.absf %2085 : vector<8x1xf32>
    %cst_654 = arith.constant 0.000000e+00 : f32
    %2087 = vector.broadcast %cst_654 : f32 to vector<8x1xf32>
    %2088 = arith.subf %2087, %2086 : vector<8x1xf32>
    %2089 = math.exp %2088 : vector<8x1xf32>
    %cst_655 = arith.constant 1.000000e+00 : f32
    %2090 = vector.broadcast %cst_655 : f32 to vector<8x1xf32>
    %2091 = arith.addf %2090, %2089 : vector<8x1xf32>
    %2092 = tpu.reciprocal %2091 {approx = true} : vector<8x1xf32> -> vector<8x1xf32>
    %cst_656 = arith.constant 0.000000e+00 : f32
    %2093 = vector.broadcast %cst_656 : f32 to vector<8x1xf32>
    %2094 = arith.cmpf oge, %2085, %2093 : vector<8x1xf32>
    %cst_657 = arith.constant 1.000000e+00 : f32
    %2095 = vector.broadcast %cst_657 : f32 to vector<8x1xf32>
    %2096 = arith.subf %2095, %2092 : vector<8x1xf32>
    %2097 = arith.select %2094, %2092, %2096 : vector<8x1xi1>, vector<8x1xf32>
    %cst_658 = arith.constant 0.000000e+00 : f32
    %2098 = vector.broadcast %cst_658 : f32 to vector<8x1xf32>
    %2099 = arith.maximumf %2085, %2098 : vector<8x1xf32>
    %cst_659 = arith.constant 1.000000e+00 : f32
    %2100 = vector.broadcast %cst_659 : f32 to vector<8x1xf32>
    %2101 = arith.addf %2100, %2089 : vector<8x1xf32>
    %2102 = math.log %2101 : vector<8x1xf32>
    %2103 = arith.addf %2099, %2102 : vector<8x1xf32>
    %2104 = tpu.reciprocal %2074 {approx = true} : vector<8x1xf32> -> vector<8x1xf32>
    %2105 = arith.mulf %2104, %2103 : vector<8x1xf32>
    %cst_660 = arith.constant 1.000000e+00 : f32
    %2106 = vector.broadcast %cst_660 : f32 to vector<8x1xf32>
    %2107 = arith.subf %2106, %2077 : vector<8x1xf32>
    %2108 = arith.mulf %2107, %2105 : vector<8x1xf32>
    %2109 = arith.mulf %2077, %2097 : vector<8x1xf32>
    %2110 = arith.addf %2108, %2109 : vector<8x1xf32>
    %c0_i32_661 = arith.constant 0 : i32
    %2111 = vector.broadcast %c0_i32_661 : i32 to vector<8x3xi32>
    %2112 = arith.cmpi eq, %331, %2111 : vector<8x3xi32>
    %c1_i32_662 = arith.constant 1 : i32
    %2113 = vector.broadcast %c1_i32_662 : i32 to vector<8x3xi32>
    %2114 = arith.cmpi eq, %331, %2113 : vector<8x3xi32>
    %2115 = vector.shape_cast %2074 : vector<8x1xf32> to vector<8x1xf32>
    %2116 = vector.broadcast %2115 : vector<8x1xf32> to vector<8x3xf32>
    %2117 = vector.shape_cast %2077 : vector<8x1xf32> to vector<8x1xf32>
    %2118 = vector.broadcast %2117 : vector<8x1xf32> to vector<8x3xf32>
    %2119 = arith.select %2114, %2116, %2118 : vector<8x3xi1>, vector<8x3xf32>
    %2120 = vector.shape_cast %2110 : vector<8x1xf32> to vector<8x1xf32>
    %2121 = vector.broadcast %2120 : vector<8x1xf32> to vector<8x3xf32>
    %2122 = arith.select %2112, %2121, %2119 : vector<8x3xi1>, vector<8x3xf32>
    %c21_663 = arith.constant 21 : index
    %c0_664 = arith.constant 0 : index
    %c0_665 = arith.constant 0 : index
    %2123 = vector.load %arg6[%c21_663, %c0_664, %c0_665] : memref<32x8x3xf32, #tpu.memory_space<vmem>>, vector<1x8x3xf32>
    %2124 = vector.shape_cast %2123 : vector<1x8x3xf32> to vector<8x3xf32>
    %2125 = vector.shape_cast %2122 : vector<8x3xf32> to vector<1x8x3xf32>
    tpu.vector_store %arg6[%c21_663, %c0_664, %c0_665], %2125 {strides = array<i32>} : memref<32x8x3xf32, #tpu.memory_space<vmem>>, vector<1x8x3xf32>,
    %2126 = vector.broadcast %2110 : vector<8x1xf32> to vector<8x128xf32>
    %2127 = vector.broadcast %4 : vector<1x128xf32> to vector<8x128xf32>
    %2128 = arith.mulf %2126, %2127 : vector<8x128xf32>
    %2129 = arith.addf %2128, %2078 : vector<8x128xf32>
    %c22_666 = arith.constant 22 : index
    %c0_667 = arith.constant 0 : index
    %c0_668 = arith.constant 0 : index
    %2130 = vector.load %arg10[%c22_666, %c0_667, %c0_668] : memref<32x8x128xf32, #tpu.memory_space<vmem>>, vector<1x8x128xf32>
    %2131 = vector.shape_cast %2130 : vector<1x8x128xf32> to vector<8x128xf32>
    %2132 = arith.addf %2129, %2131 : vector<8x128xf32>
    %2133 = arith.negf %2132 : vector<8x128xf32>
    %2134 = math.exp %2133 : vector<8x128xf32>
    %cst_669 = arith.constant 1.000000e+00 : f32
    %2135 = vector.broadcast %cst_669 : f32 to vector<8x128xf32>
    %2136 = arith.addf %2135, %2134 : vector<8x128xf32>
    %2137 = arith.divf %2135, %2136 : vector<8x128xf32>
    %2138 = vector.extract_strided_slice %2137 {offsets = [0, 0], sizes = [8, 32], strides = [1, 1]} : vector<8x128xf32> to vector<8x32xf32>
    %2139 = vector.extract_strided_slice %2137 {offsets = [0, 32], sizes = [8, 32], strides = [1, 1]} : vector<8x128xf32> to vector<8x32xf32>
    %2140 = vector.extract_strided_slice %2137 {offsets = [0, 64], sizes = [8, 32], strides = [1, 1]} : vector<8x128xf32> to vector<8x32xf32>
    %cst_670 = arith.constant 2.000000e+00 : f32
    %2141 = vector.broadcast %cst_670 : f32 to vector<8x32xf32>
    %2142 = arith.mulf %2141, %2140 : vector<8x32xf32>
    %cst_671 = arith.constant 1.000000e+00 : f32
    %2143 = vector.broadcast %cst_671 : f32 to vector<8x32xf32>
    %2144 = arith.subf %2142, %2143 : vector<8x32xf32>
    %2145 = vector.extract_strided_slice %2137 {offsets = [0, 96], sizes = [8, 32], strides = [1, 1]} : vector<8x128xf32> to vector<8x32xf32>
    %2146 = arith.mulf %2139, %2067 : vector<8x32xf32>
    %2147 = arith.mulf %2138, %2144 : vector<8x32xf32>
    %2148 = arith.addf %2146, %2147 : vector<8x32xf32>
    %2149 = math.tanh %2148 : vector<8x32xf32>
    %2150 = arith.mulf %2145, %2149 : vector<8x32xf32>
    %2151 = arith.truncf %2150 : vector<8x32xf32> to vector<8x32xbf16>
    %cst_672 = arith.constant dense<0.000000e+00> : vector<8x256xf32>
    %2152 = tpu.matmul %2151, %6, %cst_672 {dimension_numbers = #tpu.dot_dimension_numbers<[1], [0], [0], [1], [0, 0, 1, 1], [], []>} : vector<8x32xbf16>, vector<32x256xbf16>, vector<8x256xf32> -> vector<8x256xf32>
    %2153 = vector.extract_strided_slice %2152 {offsets = [0, 0], sizes = [8, 1], strides = [1, 1]} : vector<8x256xf32> to vector<8x1xf32>
    %2154 = vector.broadcast %9 : f32 to vector<8x1xf32>
    %2155 = arith.addf %2153, %2154 : vector<8x1xf32>
    %2156 = vector.extract_strided_slice %2152 {offsets = [0, 1], sizes = [8, 1], strides = [1, 1]} : vector<8x256xf32> to vector<8x1xf32>
    %2157 = vector.broadcast %10 : f32 to vector<8x1xf32>
    %2158 = arith.addf %2156, %2157 : vector<8x1xf32>
    %2159 = vector.extract_strided_slice %2152 {offsets = [0, 128], sizes = [8, 128], strides = [1, 1]} : vector<8x256xf32> to vector<8x128xf32>
    %c22_673 = arith.constant 22 : index
    %c0_674 = arith.constant 0 : index
    %c0_675 = arith.constant 0 : index
    %2160 = vector.load %arg1[%c22_673, %c0_674, %c0_675] : memref<32x8x1xf32, #tpu.memory_space<vmem>>, vector<1x8x1xf32>
    %2161 = vector.shape_cast %2160 : vector<1x8x1xf32> to vector<8x1xf32>
    %2162 = vector.broadcast %7 : f32 to vector<8x1xf32>
    %2163 = arith.mulf %2162, %2161 : vector<8x1xf32>
    %2164 = vector.broadcast %8 : f32 to vector<8x1xf32>
    %2165 = arith.addf %2163, %2164 : vector<8x1xf32>
    %2166 = arith.mulf %2155, %2165 : vector<8x1xf32>
    %2167 = math.absf %2166 : vector<8x1xf32>
    %cst_676 = arith.constant 0.000000e+00 : f32
    %2168 = vector.broadcast %cst_676 : f32 to vector<8x1xf32>
    %2169 = arith.subf %2168, %2167 : vector<8x1xf32>
    %2170 = math.exp %2169 : vector<8x1xf32>
    %cst_677 = arith.constant 1.000000e+00 : f32
    %2171 = vector.broadcast %cst_677 : f32 to vector<8x1xf32>
    %2172 = arith.addf %2171, %2170 : vector<8x1xf32>
    %2173 = tpu.reciprocal %2172 {approx = true} : vector<8x1xf32> -> vector<8x1xf32>
    %cst_678 = arith.constant 0.000000e+00 : f32
    %2174 = vector.broadcast %cst_678 : f32 to vector<8x1xf32>
    %2175 = arith.cmpf oge, %2166, %2174 : vector<8x1xf32>
    %cst_679 = arith.constant 1.000000e+00 : f32
    %2176 = vector.broadcast %cst_679 : f32 to vector<8x1xf32>
    %2177 = arith.subf %2176, %2173 : vector<8x1xf32>
    %2178 = arith.select %2175, %2173, %2177 : vector<8x1xi1>, vector<8x1xf32>
    %cst_680 = arith.constant 0.000000e+00 : f32
    %2179 = vector.broadcast %cst_680 : f32 to vector<8x1xf32>
    %2180 = arith.maximumf %2166, %2179 : vector<8x1xf32>
    %cst_681 = arith.constant 1.000000e+00 : f32
    %2181 = vector.broadcast %cst_681 : f32 to vector<8x1xf32>
    %2182 = arith.addf %2181, %2170 : vector<8x1xf32>
    %2183 = math.log %2182 : vector<8x1xf32>
    %2184 = arith.addf %2180, %2183 : vector<8x1xf32>
    %2185 = tpu.reciprocal %2155 {approx = true} : vector<8x1xf32> -> vector<8x1xf32>
    %2186 = arith.mulf %2185, %2184 : vector<8x1xf32>
    %cst_682 = arith.constant 1.000000e+00 : f32
    %2187 = vector.broadcast %cst_682 : f32 to vector<8x1xf32>
    %2188 = arith.subf %2187, %2158 : vector<8x1xf32>
    %2189 = arith.mulf %2188, %2186 : vector<8x1xf32>
    %2190 = arith.mulf %2158, %2178 : vector<8x1xf32>
    %2191 = arith.addf %2189, %2190 : vector<8x1xf32>
    %c0_i32_683 = arith.constant 0 : i32
    %2192 = vector.broadcast %c0_i32_683 : i32 to vector<8x3xi32>
    %2193 = arith.cmpi eq, %331, %2192 : vector<8x3xi32>
    %c1_i32_684 = arith.constant 1 : i32
    %2194 = vector.broadcast %c1_i32_684 : i32 to vector<8x3xi32>
    %2195 = arith.cmpi eq, %331, %2194 : vector<8x3xi32>
    %2196 = vector.shape_cast %2155 : vector<8x1xf32> to vector<8x1xf32>
    %2197 = vector.broadcast %2196 : vector<8x1xf32> to vector<8x3xf32>
    %2198 = vector.shape_cast %2158 : vector<8x1xf32> to vector<8x1xf32>
    %2199 = vector.broadcast %2198 : vector<8x1xf32> to vector<8x3xf32>
    %2200 = arith.select %2195, %2197, %2199 : vector<8x3xi1>, vector<8x3xf32>
    %2201 = vector.shape_cast %2191 : vector<8x1xf32> to vector<8x1xf32>
    %2202 = vector.broadcast %2201 : vector<8x1xf32> to vector<8x3xf32>
    %2203 = arith.select %2193, %2202, %2200 : vector<8x3xi1>, vector<8x3xf32>
    %c22_685 = arith.constant 22 : index
    %c0_686 = arith.constant 0 : index
    %c0_687 = arith.constant 0 : index
    %2204 = vector.load %arg6[%c22_685, %c0_686, %c0_687] : memref<32x8x3xf32, #tpu.memory_space<vmem>>, vector<1x8x3xf32>
    %2205 = vector.shape_cast %2204 : vector<1x8x3xf32> to vector<8x3xf32>
    %2206 = vector.shape_cast %2203 : vector<8x3xf32> to vector<1x8x3xf32>
    tpu.vector_store %arg6[%c22_685, %c0_686, %c0_687], %2206 {strides = array<i32>} : memref<32x8x3xf32, #tpu.memory_space<vmem>>, vector<1x8x3xf32>,
    %2207 = vector.broadcast %2191 : vector<8x1xf32> to vector<8x128xf32>
    %2208 = vector.broadcast %4 : vector<1x128xf32> to vector<8x128xf32>
    %2209 = arith.mulf %2207, %2208 : vector<8x128xf32>
    %2210 = arith.addf %2209, %2159 : vector<8x128xf32>
    %c23_688 = arith.constant 23 : index
    %c0_689 = arith.constant 0 : index
    %c0_690 = arith.constant 0 : index
    %2211 = vector.load %arg10[%c23_688, %c0_689, %c0_690] : memref<32x8x128xf32, #tpu.memory_space<vmem>>, vector<1x8x128xf32>
    %2212 = vector.shape_cast %2211 : vector<1x8x128xf32> to vector<8x128xf32>
    %2213 = arith.addf %2210, %2212 : vector<8x128xf32>
    %2214 = arith.negf %2213 : vector<8x128xf32>
    %2215 = math.exp %2214 : vector<8x128xf32>
    %cst_691 = arith.constant 1.000000e+00 : f32
    %2216 = vector.broadcast %cst_691 : f32 to vector<8x128xf32>
    %2217 = arith.addf %2216, %2215 : vector<8x128xf32>
    %2218 = arith.divf %2216, %2217 : vector<8x128xf32>
    %2219 = vector.extract_strided_slice %2218 {offsets = [0, 0], sizes = [8, 32], strides = [1, 1]} : vector<8x128xf32> to vector<8x32xf32>
    %2220 = vector.extract_strided_slice %2218 {offsets = [0, 32], sizes = [8, 32], strides = [1, 1]} : vector<8x128xf32> to vector<8x32xf32>
    %2221 = vector.extract_strided_slice %2218 {offsets = [0, 64], sizes = [8, 32], strides = [1, 1]} : vector<8x128xf32> to vector<8x32xf32>
    %cst_692 = arith.constant 2.000000e+00 : f32
    %2222 = vector.broadcast %cst_692 : f32 to vector<8x32xf32>
    %2223 = arith.mulf %2222, %2221 : vector<8x32xf32>
    %cst_693 = arith.constant 1.000000e+00 : f32
    %2224 = vector.broadcast %cst_693 : f32 to vector<8x32xf32>
    %2225 = arith.subf %2223, %2224 : vector<8x32xf32>
    %2226 = vector.extract_strided_slice %2218 {offsets = [0, 96], sizes = [8, 32], strides = [1, 1]} : vector<8x128xf32> to vector<8x32xf32>
    %2227 = arith.mulf %2220, %2148 : vector<8x32xf32>
    %2228 = arith.mulf %2219, %2225 : vector<8x32xf32>
    %2229 = arith.addf %2227, %2228 : vector<8x32xf32>
    %2230 = math.tanh %2229 : vector<8x32xf32>
    %2231 = arith.mulf %2226, %2230 : vector<8x32xf32>
    %2232 = arith.truncf %2231 : vector<8x32xf32> to vector<8x32xbf16>
    %cst_694 = arith.constant dense<0.000000e+00> : vector<8x256xf32>
    %2233 = tpu.matmul %2232, %6, %cst_694 {dimension_numbers = #tpu.dot_dimension_numbers<[1], [0], [0], [1], [0, 0, 1, 1], [], []>} : vector<8x32xbf16>, vector<32x256xbf16>, vector<8x256xf32> -> vector<8x256xf32>
    %2234 = vector.extract_strided_slice %2233 {offsets = [0, 0], sizes = [8, 1], strides = [1, 1]} : vector<8x256xf32> to vector<8x1xf32>
    %2235 = vector.broadcast %9 : f32 to vector<8x1xf32>
    %2236 = arith.addf %2234, %2235 : vector<8x1xf32>
    %2237 = vector.extract_strided_slice %2233 {offsets = [0, 1], sizes = [8, 1], strides = [1, 1]} : vector<8x256xf32> to vector<8x1xf32>
    %2238 = vector.broadcast %10 : f32 to vector<8x1xf32>
    %2239 = arith.addf %2237, %2238 : vector<8x1xf32>
    %2240 = vector.extract_strided_slice %2233 {offsets = [0, 128], sizes = [8, 128], strides = [1, 1]} : vector<8x256xf32> to vector<8x128xf32>
    %c23_695 = arith.constant 23 : index
    %c0_696 = arith.constant 0 : index
    %c0_697 = arith.constant 0 : index
    %2241 = vector.load %arg1[%c23_695, %c0_696, %c0_697] : memref<32x8x1xf32, #tpu.memory_space<vmem>>, vector<1x8x1xf32>
    %2242 = vector.shape_cast %2241 : vector<1x8x1xf32> to vector<8x1xf32>
    %2243 = vector.broadcast %7 : f32 to vector<8x1xf32>
    %2244 = arith.mulf %2243, %2242 : vector<8x1xf32>
    %2245 = vector.broadcast %8 : f32 to vector<8x1xf32>
    %2246 = arith.addf %2244, %2245 : vector<8x1xf32>
    %2247 = arith.mulf %2236, %2246 : vector<8x1xf32>
    %2248 = math.absf %2247 : vector<8x1xf32>
    %cst_698 = arith.constant 0.000000e+00 : f32
    %2249 = vector.broadcast %cst_698 : f32 to vector<8x1xf32>
    %2250 = arith.subf %2249, %2248 : vector<8x1xf32>
    %2251 = math.exp %2250 : vector<8x1xf32>
    %cst_699 = arith.constant 1.000000e+00 : f32
    %2252 = vector.broadcast %cst_699 : f32 to vector<8x1xf32>
    %2253 = arith.addf %2252, %2251 : vector<8x1xf32>
    %2254 = tpu.reciprocal %2253 {approx = true} : vector<8x1xf32> -> vector<8x1xf32>
    %cst_700 = arith.constant 0.000000e+00 : f32
    %2255 = vector.broadcast %cst_700 : f32 to vector<8x1xf32>
    %2256 = arith.cmpf oge, %2247, %2255 : vector<8x1xf32>
    %cst_701 = arith.constant 1.000000e+00 : f32
    %2257 = vector.broadcast %cst_701 : f32 to vector<8x1xf32>
    %2258 = arith.subf %2257, %2254 : vector<8x1xf32>
    %2259 = arith.select %2256, %2254, %2258 : vector<8x1xi1>, vector<8x1xf32>
    %cst_702 = arith.constant 0.000000e+00 : f32
    %2260 = vector.broadcast %cst_702 : f32 to vector<8x1xf32>
    %2261 = arith.maximumf %2247, %2260 : vector<8x1xf32>
    %cst_703 = arith.constant 1.000000e+00 : f32
    %2262 = vector.broadcast %cst_703 : f32 to vector<8x1xf32>
    %2263 = arith.addf %2262, %2251 : vector<8x1xf32>
    %2264 = math.log %2263 : vector<8x1xf32>
    %2265 = arith.addf %2261, %2264 : vector<8x1xf32>
    %2266 = tpu.reciprocal %2236 {approx = true} : vector<8x1xf32> -> vector<8x1xf32>
    %2267 = arith.mulf %2266, %2265 : vector<8x1xf32>
    %cst_704 = arith.constant 1.000000e+00 : f32
    %2268 = vector.broadcast %cst_704 : f32 to vector<8x1xf32>
    %2269 = arith.subf %2268, %2239 : vector<8x1xf32>
    %2270 = arith.mulf %2269, %2267 : vector<8x1xf32>
    %2271 = arith.mulf %2239, %2259 : vector<8x1xf32>
    %2272 = arith.addf %2270, %2271 : vector<8x1xf32>
    %c0_i32_705 = arith.constant 0 : i32
    %2273 = vector.broadcast %c0_i32_705 : i32 to vector<8x3xi32>
    %2274 = arith.cmpi eq, %331, %2273 : vector<8x3xi32>
    %c1_i32_706 = arith.constant 1 : i32
    %2275 = vector.broadcast %c1_i32_706 : i32 to vector<8x3xi32>
    %2276 = arith.cmpi eq, %331, %2275 : vector<8x3xi32>
    %2277 = vector.shape_cast %2236 : vector<8x1xf32> to vector<8x1xf32>
    %2278 = vector.broadcast %2277 : vector<8x1xf32> to vector<8x3xf32>
    %2279 = vector.shape_cast %2239 : vector<8x1xf32> to vector<8x1xf32>
    %2280 = vector.broadcast %2279 : vector<8x1xf32> to vector<8x3xf32>
    %2281 = arith.select %2276, %2278, %2280 : vector<8x3xi1>, vector<8x3xf32>
    %2282 = vector.shape_cast %2272 : vector<8x1xf32> to vector<8x1xf32>
    %2283 = vector.broadcast %2282 : vector<8x1xf32> to vector<8x3xf32>
    %2284 = arith.select %2274, %2283, %2281 : vector<8x3xi1>, vector<8x3xf32>
    %c23_707 = arith.constant 23 : index
    %c0_708 = arith.constant 0 : index
    %c0_709 = arith.constant 0 : index
    %2285 = vector.load %arg6[%c23_707, %c0_708, %c0_709] : memref<32x8x3xf32, #tpu.memory_space<vmem>>, vector<1x8x3xf32>
    %2286 = vector.shape_cast %2285 : vector<1x8x3xf32> to vector<8x3xf32>
    %2287 = vector.shape_cast %2284 : vector<8x3xf32> to vector<1x8x3xf32>
    tpu.vector_store %arg6[%c23_707, %c0_708, %c0_709], %2287 {strides = array<i32>} : memref<32x8x3xf32, #tpu.memory_space<vmem>>, vector<1x8x3xf32>,
    %2288 = vector.broadcast %2272 : vector<8x1xf32> to vector<8x128xf32>
    %2289 = vector.broadcast %4 : vector<1x128xf32> to vector<8x128xf32>
    %2290 = arith.mulf %2288, %2289 : vector<8x128xf32>
    %2291 = arith.addf %2290, %2240 : vector<8x128xf32>
    %c24_710 = arith.constant 24 : index
    %c0_711 = arith.constant 0 : index
    %c0_712 = arith.constant 0 : index
    %2292 = vector.load %arg10[%c24_710, %c0_711, %c0_712] : memref<32x8x128xf32, #tpu.memory_space<vmem>>, vector<1x8x128xf32>
    %2293 = vector.shape_cast %2292 : vector<1x8x128xf32> to vector<8x128xf32>
    %2294 = arith.addf %2291, %2293 : vector<8x128xf32>
    %2295 = arith.negf %2294 : vector<8x128xf32>
    %2296 = math.exp %2295 : vector<8x128xf32>
    %cst_713 = arith.constant 1.000000e+00 : f32
    %2297 = vector.broadcast %cst_713 : f32 to vector<8x128xf32>
    %2298 = arith.addf %2297, %2296 : vector<8x128xf32>
    %2299 = arith.divf %2297, %2298 : vector<8x128xf32>
    %2300 = vector.extract_strided_slice %2299 {offsets = [0, 0], sizes = [8, 32], strides = [1, 1]} : vector<8x128xf32> to vector<8x32xf32>
    %2301 = vector.extract_strided_slice %2299 {offsets = [0, 32], sizes = [8, 32], strides = [1, 1]} : vector<8x128xf32> to vector<8x32xf32>
    %2302 = vector.extract_strided_slice %2299 {offsets = [0, 64], sizes = [8, 32], strides = [1, 1]} : vector<8x128xf32> to vector<8x32xf32>
    %cst_714 = arith.constant 2.000000e+00 : f32
    %2303 = vector.broadcast %cst_714 : f32 to vector<8x32xf32>
    %2304 = arith.mulf %2303, %2302 : vector<8x32xf32>
    %cst_715 = arith.constant 1.000000e+00 : f32
    %2305 = vector.broadcast %cst_715 : f32 to vector<8x32xf32>
    %2306 = arith.subf %2304, %2305 : vector<8x32xf32>
    %2307 = vector.extract_strided_slice %2299 {offsets = [0, 96], sizes = [8, 32], strides = [1, 1]} : vector<8x128xf32> to vector<8x32xf32>
    %2308 = arith.mulf %2301, %2229 : vector<8x32xf32>
    %2309 = arith.mulf %2300, %2306 : vector<8x32xf32>
    %2310 = arith.addf %2308, %2309 : vector<8x32xf32>
    %2311 = math.tanh %2310 : vector<8x32xf32>
    %2312 = arith.mulf %2307, %2311 : vector<8x32xf32>
    %2313 = arith.truncf %2312 : vector<8x32xf32> to vector<8x32xbf16>
    %cst_716 = arith.constant dense<0.000000e+00> : vector<8x256xf32>
    %2314 = tpu.matmul %2313, %6, %cst_716 {dimension_numbers = #tpu.dot_dimension_numbers<[1], [0], [0], [1], [0, 0, 1, 1], [], []>} : vector<8x32xbf16>, vector<32x256xbf16>, vector<8x256xf32> -> vector<8x256xf32>
    %2315 = vector.extract_strided_slice %2314 {offsets = [0, 0], sizes = [8, 1], strides = [1, 1]} : vector<8x256xf32> to vector<8x1xf32>
    %2316 = vector.broadcast %9 : f32 to vector<8x1xf32>
    %2317 = arith.addf %2315, %2316 : vector<8x1xf32>
    %2318 = vector.extract_strided_slice %2314 {offsets = [0, 1], sizes = [8, 1], strides = [1, 1]} : vector<8x256xf32> to vector<8x1xf32>
    %2319 = vector.broadcast %10 : f32 to vector<8x1xf32>
    %2320 = arith.addf %2318, %2319 : vector<8x1xf32>
    %2321 = vector.extract_strided_slice %2314 {offsets = [0, 128], sizes = [8, 128], strides = [1, 1]} : vector<8x256xf32> to vector<8x128xf32>
    %c24_717 = arith.constant 24 : index
    %c0_718 = arith.constant 0 : index
    %c0_719 = arith.constant 0 : index
    %2322 = vector.load %arg1[%c24_717, %c0_718, %c0_719] : memref<32x8x1xf32, #tpu.memory_space<vmem>>, vector<1x8x1xf32>
    %2323 = vector.shape_cast %2322 : vector<1x8x1xf32> to vector<8x1xf32>
    %2324 = vector.broadcast %7 : f32 to vector<8x1xf32>
    %2325 = arith.mulf %2324, %2323 : vector<8x1xf32>
    %2326 = vector.broadcast %8 : f32 to vector<8x1xf32>
    %2327 = arith.addf %2325, %2326 : vector<8x1xf32>
    %2328 = arith.mulf %2317, %2327 : vector<8x1xf32>
    %2329 = math.absf %2328 : vector<8x1xf32>
    %cst_720 = arith.constant 0.000000e+00 : f32
    %2330 = vector.broadcast %cst_720 : f32 to vector<8x1xf32>
    %2331 = arith.subf %2330, %2329 : vector<8x1xf32>
    %2332 = math.exp %2331 : vector<8x1xf32>
    %cst_721 = arith.constant 1.000000e+00 : f32
    %2333 = vector.broadcast %cst_721 : f32 to vector<8x1xf32>
    %2334 = arith.addf %2333, %2332 : vector<8x1xf32>
    %2335 = tpu.reciprocal %2334 {approx = true} : vector<8x1xf32> -> vector<8x1xf32>
    %cst_722 = arith.constant 0.000000e+00 : f32
    %2336 = vector.broadcast %cst_722 : f32 to vector<8x1xf32>
    %2337 = arith.cmpf oge, %2328, %2336 : vector<8x1xf32>
    %cst_723 = arith.constant 1.000000e+00 : f32
    %2338 = vector.broadcast %cst_723 : f32 to vector<8x1xf32>
    %2339 = arith.subf %2338, %2335 : vector<8x1xf32>
    %2340 = arith.select %2337, %2335, %2339 : vector<8x1xi1>, vector<8x1xf32>
    %cst_724 = arith.constant 0.000000e+00 : f32
    %2341 = vector.broadcast %cst_724 : f32 to vector<8x1xf32>
    %2342 = arith.maximumf %2328, %2341 : vector<8x1xf32>
    %cst_725 = arith.constant 1.000000e+00 : f32
    %2343 = vector.broadcast %cst_725 : f32 to vector<8x1xf32>
    %2344 = arith.addf %2343, %2332 : vector<8x1xf32>
    %2345 = math.log %2344 : vector<8x1xf32>
    %2346 = arith.addf %2342, %2345 : vector<8x1xf32>
    %2347 = tpu.reciprocal %2317 {approx = true} : vector<8x1xf32> -> vector<8x1xf32>
    %2348 = arith.mulf %2347, %2346 : vector<8x1xf32>
    %cst_726 = arith.constant 1.000000e+00 : f32
    %2349 = vector.broadcast %cst_726 : f32 to vector<8x1xf32>
    %2350 = arith.subf %2349, %2320 : vector<8x1xf32>
    %2351 = arith.mulf %2350, %2348 : vector<8x1xf32>
    %2352 = arith.mulf %2320, %2340 : vector<8x1xf32>
    %2353 = arith.addf %2351, %2352 : vector<8x1xf32>
    %c0_i32_727 = arith.constant 0 : i32
    %2354 = vector.broadcast %c0_i32_727 : i32 to vector<8x3xi32>
    %2355 = arith.cmpi eq, %331, %2354 : vector<8x3xi32>
    %c1_i32_728 = arith.constant 1 : i32
    %2356 = vector.broadcast %c1_i32_728 : i32 to vector<8x3xi32>
    %2357 = arith.cmpi eq, %331, %2356 : vector<8x3xi32>
    %2358 = vector.shape_cast %2317 : vector<8x1xf32> to vector<8x1xf32>
    %2359 = vector.broadcast %2358 : vector<8x1xf32> to vector<8x3xf32>
    %2360 = vector.shape_cast %2320 : vector<8x1xf32> to vector<8x1xf32>
    %2361 = vector.broadcast %2360 : vector<8x1xf32> to vector<8x3xf32>
    %2362 = arith.select %2357, %2359, %2361 : vector<8x3xi1>, vector<8x3xf32>
    %2363 = vector.shape_cast %2353 : vector<8x1xf32> to vector<8x1xf32>
    %2364 = vector.broadcast %2363 : vector<8x1xf32> to vector<8x3xf32>
    %2365 = arith.select %2355, %2364, %2362 : vector<8x3xi1>, vector<8x3xf32>
    %c24_729 = arith.constant 24 : index
    %c0_730 = arith.constant 0 : index
    %c0_731 = arith.constant 0 : index
    %2366 = vector.load %arg6[%c24_729, %c0_730, %c0_731] : memref<32x8x3xf32, #tpu.memory_space<vmem>>, vector<1x8x3xf32>
    %2367 = vector.shape_cast %2366 : vector<1x8x3xf32> to vector<8x3xf32>
    %2368 = vector.shape_cast %2365 : vector<8x3xf32> to vector<1x8x3xf32>
    tpu.vector_store %arg6[%c24_729, %c0_730, %c0_731], %2368 {strides = array<i32>} : memref<32x8x3xf32, #tpu.memory_space<vmem>>, vector<1x8x3xf32>,
    %2369 = vector.broadcast %2353 : vector<8x1xf32> to vector<8x128xf32>
    %2370 = vector.broadcast %4 : vector<1x128xf32> to vector<8x128xf32>
    %2371 = arith.mulf %2369, %2370 : vector<8x128xf32>
    %2372 = arith.addf %2371, %2321 : vector<8x128xf32>
    %c25_732 = arith.constant 25 : index
    %c0_733 = arith.constant 0 : index
    %c0_734 = arith.constant 0 : index
    %2373 = vector.load %arg10[%c25_732, %c0_733, %c0_734] : memref<32x8x128xf32, #tpu.memory_space<vmem>>, vector<1x8x128xf32>
    %2374 = vector.shape_cast %2373 : vector<1x8x128xf32> to vector<8x128xf32>
    %2375 = arith.addf %2372, %2374 : vector<8x128xf32>
    %2376 = arith.negf %2375 : vector<8x128xf32>
    %2377 = math.exp %2376 : vector<8x128xf32>
    %cst_735 = arith.constant 1.000000e+00 : f32
    %2378 = vector.broadcast %cst_735 : f32 to vector<8x128xf32>
    %2379 = arith.addf %2378, %2377 : vector<8x128xf32>
    %2380 = arith.divf %2378, %2379 : vector<8x128xf32>
    %2381 = vector.extract_strided_slice %2380 {offsets = [0, 0], sizes = [8, 32], strides = [1, 1]} : vector<8x128xf32> to vector<8x32xf32>
    %2382 = vector.extract_strided_slice %2380 {offsets = [0, 32], sizes = [8, 32], strides = [1, 1]} : vector<8x128xf32> to vector<8x32xf32>
    %2383 = vector.extract_strided_slice %2380 {offsets = [0, 64], sizes = [8, 32], strides = [1, 1]} : vector<8x128xf32> to vector<8x32xf32>
    %cst_736 = arith.constant 2.000000e+00 : f32
    %2384 = vector.broadcast %cst_736 : f32 to vector<8x32xf32>
    %2385 = arith.mulf %2384, %2383 : vector<8x32xf32>
    %cst_737 = arith.constant 1.000000e+00 : f32
    %2386 = vector.broadcast %cst_737 : f32 to vector<8x32xf32>
    %2387 = arith.subf %2385, %2386 : vector<8x32xf32>
    %2388 = vector.extract_strided_slice %2380 {offsets = [0, 96], sizes = [8, 32], strides = [1, 1]} : vector<8x128xf32> to vector<8x32xf32>
    %2389 = arith.mulf %2382, %2310 : vector<8x32xf32>
    %2390 = arith.mulf %2381, %2387 : vector<8x32xf32>
    %2391 = arith.addf %2389, %2390 : vector<8x32xf32>
    %2392 = math.tanh %2391 : vector<8x32xf32>
    %2393 = arith.mulf %2388, %2392 : vector<8x32xf32>
    %2394 = arith.truncf %2393 : vector<8x32xf32> to vector<8x32xbf16>
    %cst_738 = arith.constant dense<0.000000e+00> : vector<8x256xf32>
    %2395 = tpu.matmul %2394, %6, %cst_738 {dimension_numbers = #tpu.dot_dimension_numbers<[1], [0], [0], [1], [0, 0, 1, 1], [], []>} : vector<8x32xbf16>, vector<32x256xbf16>, vector<8x256xf32> -> vector<8x256xf32>
    %2396 = vector.extract_strided_slice %2395 {offsets = [0, 0], sizes = [8, 1], strides = [1, 1]} : vector<8x256xf32> to vector<8x1xf32>
    %2397 = vector.broadcast %9 : f32 to vector<8x1xf32>
    %2398 = arith.addf %2396, %2397 : vector<8x1xf32>
    %2399 = vector.extract_strided_slice %2395 {offsets = [0, 1], sizes = [8, 1], strides = [1, 1]} : vector<8x256xf32> to vector<8x1xf32>
    %2400 = vector.broadcast %10 : f32 to vector<8x1xf32>
    %2401 = arith.addf %2399, %2400 : vector<8x1xf32>
    %2402 = vector.extract_strided_slice %2395 {offsets = [0, 128], sizes = [8, 128], strides = [1, 1]} : vector<8x256xf32> to vector<8x128xf32>
    %c25_739 = arith.constant 25 : index
    %c0_740 = arith.constant 0 : index
    %c0_741 = arith.constant 0 : index
    %2403 = vector.load %arg1[%c25_739, %c0_740, %c0_741] : memref<32x8x1xf32, #tpu.memory_space<vmem>>, vector<1x8x1xf32>
    %2404 = vector.shape_cast %2403 : vector<1x8x1xf32> to vector<8x1xf32>
    %2405 = vector.broadcast %7 : f32 to vector<8x1xf32>
    %2406 = arith.mulf %2405, %2404 : vector<8x1xf32>
    %2407 = vector.broadcast %8 : f32 to vector<8x1xf32>
    %2408 = arith.addf %2406, %2407 : vector<8x1xf32>
    %2409 = arith.mulf %2398, %2408 : vector<8x1xf32>
    %2410 = math.absf %2409 : vector<8x1xf32>
    %cst_742 = arith.constant 0.000000e+00 : f32
    %2411 = vector.broadcast %cst_742 : f32 to vector<8x1xf32>
    %2412 = arith.subf %2411, %2410 : vector<8x1xf32>
    %2413 = math.exp %2412 : vector<8x1xf32>
    %cst_743 = arith.constant 1.000000e+00 : f32
    %2414 = vector.broadcast %cst_743 : f32 to vector<8x1xf32>
    %2415 = arith.addf %2414, %2413 : vector<8x1xf32>
    %2416 = tpu.reciprocal %2415 {approx = true} : vector<8x1xf32> -> vector<8x1xf32>
    %cst_744 = arith.constant 0.000000e+00 : f32
    %2417 = vector.broadcast %cst_744 : f32 to vector<8x1xf32>
    %2418 = arith.cmpf oge, %2409, %2417 : vector<8x1xf32>
    %cst_745 = arith.constant 1.000000e+00 : f32
    %2419 = vector.broadcast %cst_745 : f32 to vector<8x1xf32>
    %2420 = arith.subf %2419, %2416 : vector<8x1xf32>
    %2421 = arith.select %2418, %2416, %2420 : vector<8x1xi1>, vector<8x1xf32>
    %cst_746 = arith.constant 0.000000e+00 : f32
    %2422 = vector.broadcast %cst_746 : f32 to vector<8x1xf32>
    %2423 = arith.maximumf %2409, %2422 : vector<8x1xf32>
    %cst_747 = arith.constant 1.000000e+00 : f32
    %2424 = vector.broadcast %cst_747 : f32 to vector<8x1xf32>
    %2425 = arith.addf %2424, %2413 : vector<8x1xf32>
    %2426 = math.log %2425 : vector<8x1xf32>
    %2427 = arith.addf %2423, %2426 : vector<8x1xf32>
    %2428 = tpu.reciprocal %2398 {approx = true} : vector<8x1xf32> -> vector<8x1xf32>
    %2429 = arith.mulf %2428, %2427 : vector<8x1xf32>
    %cst_748 = arith.constant 1.000000e+00 : f32
    %2430 = vector.broadcast %cst_748 : f32 to vector<8x1xf32>
    %2431 = arith.subf %2430, %2401 : vector<8x1xf32>
    %2432 = arith.mulf %2431, %2429 : vector<8x1xf32>
    %2433 = arith.mulf %2401, %2421 : vector<8x1xf32>
    %2434 = arith.addf %2432, %2433 : vector<8x1xf32>
    %c0_i32_749 = arith.constant 0 : i32
    %2435 = vector.broadcast %c0_i32_749 : i32 to vector<8x3xi32>
    %2436 = arith.cmpi eq, %331, %2435 : vector<8x3xi32>
    %c1_i32_750 = arith.constant 1 : i32
    %2437 = vector.broadcast %c1_i32_750 : i32 to vector<8x3xi32>
    %2438 = arith.cmpi eq, %331, %2437 : vector<8x3xi32>
    %2439 = vector.shape_cast %2398 : vector<8x1xf32> to vector<8x1xf32>
    %2440 = vector.broadcast %2439 : vector<8x1xf32> to vector<8x3xf32>
    %2441 = vector.shape_cast %2401 : vector<8x1xf32> to vector<8x1xf32>
    %2442 = vector.broadcast %2441 : vector<8x1xf32> to vector<8x3xf32>
    %2443 = arith.select %2438, %2440, %2442 : vector<8x3xi1>, vector<8x3xf32>
    %2444 = vector.shape_cast %2434 : vector<8x1xf32> to vector<8x1xf32>
    %2445 = vector.broadcast %2444 : vector<8x1xf32> to vector<8x3xf32>
    %2446 = arith.select %2436, %2445, %2443 : vector<8x3xi1>, vector<8x3xf32>
    %c25_751 = arith.constant 25 : index
    %c0_752 = arith.constant 0 : index
    %c0_753 = arith.constant 0 : index
    %2447 = vector.load %arg6[%c25_751, %c0_752, %c0_753] : memref<32x8x3xf32, #tpu.memory_space<vmem>>, vector<1x8x3xf32>
    %2448 = vector.shape_cast %2447 : vector<1x8x3xf32> to vector<8x3xf32>
    %2449 = vector.shape_cast %2446 : vector<8x3xf32> to vector<1x8x3xf32>
    tpu.vector_store %arg6[%c25_751, %c0_752, %c0_753], %2449 {strides = array<i32>} : memref<32x8x3xf32, #tpu.memory_space<vmem>>, vector<1x8x3xf32>,
    %2450 = vector.broadcast %2434 : vector<8x1xf32> to vector<8x128xf32>
    %2451 = vector.broadcast %4 : vector<1x128xf32> to vector<8x128xf32>
    %2452 = arith.mulf %2450, %2451 : vector<8x128xf32>
    %2453 = arith.addf %2452, %2402 : vector<8x128xf32>
    %c26_754 = arith.constant 26 : index
    %c0_755 = arith.constant 0 : index
    %c0_756 = arith.constant 0 : index
    %2454 = vector.load %arg10[%c26_754, %c0_755, %c0_756] : memref<32x8x128xf32, #tpu.memory_space<vmem>>, vector<1x8x128xf32>
    %2455 = vector.shape_cast %2454 : vector<1x8x128xf32> to vector<8x128xf32>
    %2456 = arith.addf %2453, %2455 : vector<8x128xf32>
    %2457 = arith.negf %2456 : vector<8x128xf32>
    %2458 = math.exp %2457 : vector<8x128xf32>
    %cst_757 = arith.constant 1.000000e+00 : f32
    %2459 = vector.broadcast %cst_757 : f32 to vector<8x128xf32>
    %2460 = arith.addf %2459, %2458 : vector<8x128xf32>
    %2461 = arith.divf %2459, %2460 : vector<8x128xf32>
    %2462 = vector.extract_strided_slice %2461 {offsets = [0, 0], sizes = [8, 32], strides = [1, 1]} : vector<8x128xf32> to vector<8x32xf32>
    %2463 = vector.extract_strided_slice %2461 {offsets = [0, 32], sizes = [8, 32], strides = [1, 1]} : vector<8x128xf32> to vector<8x32xf32>
    %2464 = vector.extract_strided_slice %2461 {offsets = [0, 64], sizes = [8, 32], strides = [1, 1]} : vector<8x128xf32> to vector<8x32xf32>
    %cst_758 = arith.constant 2.000000e+00 : f32
    %2465 = vector.broadcast %cst_758 : f32 to vector<8x32xf32>
    %2466 = arith.mulf %2465, %2464 : vector<8x32xf32>
    %cst_759 = arith.constant 1.000000e+00 : f32
    %2467 = vector.broadcast %cst_759 : f32 to vector<8x32xf32>
    %2468 = arith.subf %2466, %2467 : vector<8x32xf32>
    %2469 = vector.extract_strided_slice %2461 {offsets = [0, 96], sizes = [8, 32], strides = [1, 1]} : vector<8x128xf32> to vector<8x32xf32>
    %2470 = arith.mulf %2463, %2391 : vector<8x32xf32>
    %2471 = arith.mulf %2462, %2468 : vector<8x32xf32>
    %2472 = arith.addf %2470, %2471 : vector<8x32xf32>
    %2473 = math.tanh %2472 : vector<8x32xf32>
    %2474 = arith.mulf %2469, %2473 : vector<8x32xf32>
    %2475 = arith.truncf %2474 : vector<8x32xf32> to vector<8x32xbf16>
    %cst_760 = arith.constant dense<0.000000e+00> : vector<8x256xf32>
    %2476 = tpu.matmul %2475, %6, %cst_760 {dimension_numbers = #tpu.dot_dimension_numbers<[1], [0], [0], [1], [0, 0, 1, 1], [], []>} : vector<8x32xbf16>, vector<32x256xbf16>, vector<8x256xf32> -> vector<8x256xf32>
    %2477 = vector.extract_strided_slice %2476 {offsets = [0, 0], sizes = [8, 1], strides = [1, 1]} : vector<8x256xf32> to vector<8x1xf32>
    %2478 = vector.broadcast %9 : f32 to vector<8x1xf32>
    %2479 = arith.addf %2477, %2478 : vector<8x1xf32>
    %2480 = vector.extract_strided_slice %2476 {offsets = [0, 1], sizes = [8, 1], strides = [1, 1]} : vector<8x256xf32> to vector<8x1xf32>
    %2481 = vector.broadcast %10 : f32 to vector<8x1xf32>
    %2482 = arith.addf %2480, %2481 : vector<8x1xf32>
    %2483 = vector.extract_strided_slice %2476 {offsets = [0, 128], sizes = [8, 128], strides = [1, 1]} : vector<8x256xf32> to vector<8x128xf32>
    %c26_761 = arith.constant 26 : index
    %c0_762 = arith.constant 0 : index
    %c0_763 = arith.constant 0 : index
    %2484 = vector.load %arg1[%c26_761, %c0_762, %c0_763] : memref<32x8x1xf32, #tpu.memory_space<vmem>>, vector<1x8x1xf32>
    %2485 = vector.shape_cast %2484 : vector<1x8x1xf32> to vector<8x1xf32>
    %2486 = vector.broadcast %7 : f32 to vector<8x1xf32>
    %2487 = arith.mulf %2486, %2485 : vector<8x1xf32>
    %2488 = vector.broadcast %8 : f32 to vector<8x1xf32>
    %2489 = arith.addf %2487, %2488 : vector<8x1xf32>
    %2490 = arith.mulf %2479, %2489 : vector<8x1xf32>
    %2491 = math.absf %2490 : vector<8x1xf32>
    %cst_764 = arith.constant 0.000000e+00 : f32
    %2492 = vector.broadcast %cst_764 : f32 to vector<8x1xf32>
    %2493 = arith.subf %2492, %2491 : vector<8x1xf32>
    %2494 = math.exp %2493 : vector<8x1xf32>
    %cst_765 = arith.constant 1.000000e+00 : f32
    %2495 = vector.broadcast %cst_765 : f32 to vector<8x1xf32>
    %2496 = arith.addf %2495, %2494 : vector<8x1xf32>
    %2497 = tpu.reciprocal %2496 {approx = true} : vector<8x1xf32> -> vector<8x1xf32>
    %cst_766 = arith.constant 0.000000e+00 : f32
    %2498 = vector.broadcast %cst_766 : f32 to vector<8x1xf32>
    %2499 = arith.cmpf oge, %2490, %2498 : vector<8x1xf32>
    %cst_767 = arith.constant 1.000000e+00 : f32
    %2500 = vector.broadcast %cst_767 : f32 to vector<8x1xf32>
    %2501 = arith.subf %2500, %2497 : vector<8x1xf32>
    %2502 = arith.select %2499, %2497, %2501 : vector<8x1xi1>, vector<8x1xf32>
    %cst_768 = arith.constant 0.000000e+00 : f32
    %2503 = vector.broadcast %cst_768 : f32 to vector<8x1xf32>
    %2504 = arith.maximumf %2490, %2503 : vector<8x1xf32>
    %cst_769 = arith.constant 1.000000e+00 : f32
    %2505 = vector.broadcast %cst_769 : f32 to vector<8x1xf32>
    %2506 = arith.addf %2505, %2494 : vector<8x1xf32>
    %2507 = math.log %2506 : vector<8x1xf32>
    %2508 = arith.addf %2504, %2507 : vector<8x1xf32>
    %2509 = tpu.reciprocal %2479 {approx = true} : vector<8x1xf32> -> vector<8x1xf32>
    %2510 = arith.mulf %2509, %2508 : vector<8x1xf32>
    %cst_770 = arith.constant 1.000000e+00 : f32
    %2511 = vector.broadcast %cst_770 : f32 to vector<8x1xf32>
    %2512 = arith.subf %2511, %2482 : vector<8x1xf32>
    %2513 = arith.mulf %2512, %2510 : vector<8x1xf32>
    %2514 = arith.mulf %2482, %2502 : vector<8x1xf32>
    %2515 = arith.addf %2513, %2514 : vector<8x1xf32>
    %c0_i32_771 = arith.constant 0 : i32
    %2516 = vector.broadcast %c0_i32_771 : i32 to vector<8x3xi32>
    %2517 = arith.cmpi eq, %331, %2516 : vector<8x3xi32>
    %c1_i32_772 = arith.constant 1 : i32
    %2518 = vector.broadcast %c1_i32_772 : i32 to vector<8x3xi32>
    %2519 = arith.cmpi eq, %331, %2518 : vector<8x3xi32>
    %2520 = vector.shape_cast %2479 : vector<8x1xf32> to vector<8x1xf32>
    %2521 = vector.broadcast %2520 : vector<8x1xf32> to vector<8x3xf32>
    %2522 = vector.shape_cast %2482 : vector<8x1xf32> to vector<8x1xf32>
    %2523 = vector.broadcast %2522 : vector<8x1xf32> to vector<8x3xf32>
    %2524 = arith.select %2519, %2521, %2523 : vector<8x3xi1>, vector<8x3xf32>
    %2525 = vector.shape_cast %2515 : vector<8x1xf32> to vector<8x1xf32>
    %2526 = vector.broadcast %2525 : vector<8x1xf32> to vector<8x3xf32>
    %2527 = arith.select %2517, %2526, %2524 : vector<8x3xi1>, vector<8x3xf32>
    %c26_773 = arith.constant 26 : index
    %c0_774 = arith.constant 0 : index
    %c0_775 = arith.constant 0 : index
    %2528 = vector.load %arg6[%c26_773, %c0_774, %c0_775] : memref<32x8x3xf32, #tpu.memory_space<vmem>>, vector<1x8x3xf32>
    %2529 = vector.shape_cast %2528 : vector<1x8x3xf32> to vector<8x3xf32>
    %2530 = vector.shape_cast %2527 : vector<8x3xf32> to vector<1x8x3xf32>
    tpu.vector_store %arg6[%c26_773, %c0_774, %c0_775], %2530 {strides = array<i32>} : memref<32x8x3xf32, #tpu.memory_space<vmem>>, vector<1x8x3xf32>,
    %2531 = vector.broadcast %2515 : vector<8x1xf32> to vector<8x128xf32>
    %2532 = vector.broadcast %4 : vector<1x128xf32> to vector<8x128xf32>
    %2533 = arith.mulf %2531, %2532 : vector<8x128xf32>
    %2534 = arith.addf %2533, %2483 : vector<8x128xf32>
    %c27_776 = arith.constant 27 : index
    %c0_777 = arith.constant 0 : index
    %c0_778 = arith.constant 0 : index
    %2535 = vector.load %arg10[%c27_776, %c0_777, %c0_778] : memref<32x8x128xf32, #tpu.memory_space<vmem>>, vector<1x8x128xf32>
    %2536 = vector.shape_cast %2535 : vector<1x8x128xf32> to vector<8x128xf32>
    %2537 = arith.addf %2534, %2536 : vector<8x128xf32>
    %2538 = arith.negf %2537 : vector<8x128xf32>
    %2539 = math.exp %2538 : vector<8x128xf32>
    %cst_779 = arith.constant 1.000000e+00 : f32
    %2540 = vector.broadcast %cst_779 : f32 to vector<8x128xf32>
    %2541 = arith.addf %2540, %2539 : vector<8x128xf32>
    %2542 = arith.divf %2540, %2541 : vector<8x128xf32>
    %2543 = vector.extract_strided_slice %2542 {offsets = [0, 0], sizes = [8, 32], strides = [1, 1]} : vector<8x128xf32> to vector<8x32xf32>
    %2544 = vector.extract_strided_slice %2542 {offsets = [0, 32], sizes = [8, 32], strides = [1, 1]} : vector<8x128xf32> to vector<8x32xf32>
    %2545 = vector.extract_strided_slice %2542 {offsets = [0, 64], sizes = [8, 32], strides = [1, 1]} : vector<8x128xf32> to vector<8x32xf32>
    %cst_780 = arith.constant 2.000000e+00 : f32
    %2546 = vector.broadcast %cst_780 : f32 to vector<8x32xf32>
    %2547 = arith.mulf %2546, %2545 : vector<8x32xf32>
    %cst_781 = arith.constant 1.000000e+00 : f32
    %2548 = vector.broadcast %cst_781 : f32 to vector<8x32xf32>
    %2549 = arith.subf %2547, %2548 : vector<8x32xf32>
    %2550 = vector.extract_strided_slice %2542 {offsets = [0, 96], sizes = [8, 32], strides = [1, 1]} : vector<8x128xf32> to vector<8x32xf32>
    %2551 = arith.mulf %2544, %2472 : vector<8x32xf32>
    %2552 = arith.mulf %2543, %2549 : vector<8x32xf32>
    %2553 = arith.addf %2551, %2552 : vector<8x32xf32>
    %2554 = math.tanh %2553 : vector<8x32xf32>
    %2555 = arith.mulf %2550, %2554 : vector<8x32xf32>
    %2556 = arith.truncf %2555 : vector<8x32xf32> to vector<8x32xbf16>
    %cst_782 = arith.constant dense<0.000000e+00> : vector<8x256xf32>
    %2557 = tpu.matmul %2556, %6, %cst_782 {dimension_numbers = #tpu.dot_dimension_numbers<[1], [0], [0], [1], [0, 0, 1, 1], [], []>} : vector<8x32xbf16>, vector<32x256xbf16>, vector<8x256xf32> -> vector<8x256xf32>
    %2558 = vector.extract_strided_slice %2557 {offsets = [0, 0], sizes = [8, 1], strides = [1, 1]} : vector<8x256xf32> to vector<8x1xf32>
    %2559 = vector.broadcast %9 : f32 to vector<8x1xf32>
    %2560 = arith.addf %2558, %2559 : vector<8x1xf32>
    %2561 = vector.extract_strided_slice %2557 {offsets = [0, 1], sizes = [8, 1], strides = [1, 1]} : vector<8x256xf32> to vector<8x1xf32>
    %2562 = vector.broadcast %10 : f32 to vector<8x1xf32>
    %2563 = arith.addf %2561, %2562 : vector<8x1xf32>
    %2564 = vector.extract_strided_slice %2557 {offsets = [0, 128], sizes = [8, 128], strides = [1, 1]} : vector<8x256xf32> to vector<8x128xf32>
    %c27_783 = arith.constant 27 : index
    %c0_784 = arith.constant 0 : index
    %c0_785 = arith.constant 0 : index
    %2565 = vector.load %arg1[%c27_783, %c0_784, %c0_785] : memref<32x8x1xf32, #tpu.memory_space<vmem>>, vector<1x8x1xf32>
    %2566 = vector.shape_cast %2565 : vector<1x8x1xf32> to vector<8x1xf32>
    %2567 = vector.broadcast %7 : f32 to vector<8x1xf32>
    %2568 = arith.mulf %2567, %2566 : vector<8x1xf32>
    %2569 = vector.broadcast %8 : f32 to vector<8x1xf32>
    %2570 = arith.addf %2568, %2569 : vector<8x1xf32>
    %2571 = arith.mulf %2560, %2570 : vector<8x1xf32>
    %2572 = math.absf %2571 : vector<8x1xf32>
    %cst_786 = arith.constant 0.000000e+00 : f32
    %2573 = vector.broadcast %cst_786 : f32 to vector<8x1xf32>
    %2574 = arith.subf %2573, %2572 : vector<8x1xf32>
    %2575 = math.exp %2574 : vector<8x1xf32>
    %cst_787 = arith.constant 1.000000e+00 : f32
    %2576 = vector.broadcast %cst_787 : f32 to vector<8x1xf32>
    %2577 = arith.addf %2576, %2575 : vector<8x1xf32>
    %2578 = tpu.reciprocal %2577 {approx = true} : vector<8x1xf32> -> vector<8x1xf32>
    %cst_788 = arith.constant 0.000000e+00 : f32
    %2579 = vector.broadcast %cst_788 : f32 to vector<8x1xf32>
    %2580 = arith.cmpf oge, %2571, %2579 : vector<8x1xf32>
    %cst_789 = arith.constant 1.000000e+00 : f32
    %2581 = vector.broadcast %cst_789 : f32 to vector<8x1xf32>
    %2582 = arith.subf %2581, %2578 : vector<8x1xf32>
    %2583 = arith.select %2580, %2578, %2582 : vector<8x1xi1>, vector<8x1xf32>
    %cst_790 = arith.constant 0.000000e+00 : f32
    %2584 = vector.broadcast %cst_790 : f32 to vector<8x1xf32>
    %2585 = arith.maximumf %2571, %2584 : vector<8x1xf32>
    %cst_791 = arith.constant 1.000000e+00 : f32
    %2586 = vector.broadcast %cst_791 : f32 to vector<8x1xf32>
    %2587 = arith.addf %2586, %2575 : vector<8x1xf32>
    %2588 = math.log %2587 : vector<8x1xf32>
    %2589 = arith.addf %2585, %2588 : vector<8x1xf32>
    %2590 = tpu.reciprocal %2560 {approx = true} : vector<8x1xf32> -> vector<8x1xf32>
    %2591 = arith.mulf %2590, %2589 : vector<8x1xf32>
    %cst_792 = arith.constant 1.000000e+00 : f32
    %2592 = vector.broadcast %cst_792 : f32 to vector<8x1xf32>
    %2593 = arith.subf %2592, %2563 : vector<8x1xf32>
    %2594 = arith.mulf %2593, %2591 : vector<8x1xf32>
    %2595 = arith.mulf %2563, %2583 : vector<8x1xf32>
    %2596 = arith.addf %2594, %2595 : vector<8x1xf32>
    %c0_i32_793 = arith.constant 0 : i32
    %2597 = vector.broadcast %c0_i32_793 : i32 to vector<8x3xi32>
    %2598 = arith.cmpi eq, %331, %2597 : vector<8x3xi32>
    %c1_i32_794 = arith.constant 1 : i32
    %2599 = vector.broadcast %c1_i32_794 : i32 to vector<8x3xi32>
    %2600 = arith.cmpi eq, %331, %2599 : vector<8x3xi32>
    %2601 = vector.shape_cast %2560 : vector<8x1xf32> to vector<8x1xf32>
    %2602 = vector.broadcast %2601 : vector<8x1xf32> to vector<8x3xf32>
    %2603 = vector.shape_cast %2563 : vector<8x1xf32> to vector<8x1xf32>
    %2604 = vector.broadcast %2603 : vector<8x1xf32> to vector<8x3xf32>
    %2605 = arith.select %2600, %2602, %2604 : vector<8x3xi1>, vector<8x3xf32>
    %2606 = vector.shape_cast %2596 : vector<8x1xf32> to vector<8x1xf32>
    %2607 = vector.broadcast %2606 : vector<8x1xf32> to vector<8x3xf32>
    %2608 = arith.select %2598, %2607, %2605 : vector<8x3xi1>, vector<8x3xf32>
    %c27_795 = arith.constant 27 : index
    %c0_796 = arith.constant 0 : index
    %c0_797 = arith.constant 0 : index
    %2609 = vector.load %arg6[%c27_795, %c0_796, %c0_797] : memref<32x8x3xf32, #tpu.memory_space<vmem>>, vector<1x8x3xf32>
    %2610 = vector.shape_cast %2609 : vector<1x8x3xf32> to vector<8x3xf32>
    %2611 = vector.shape_cast %2608 : vector<8x3xf32> to vector<1x8x3xf32>
    tpu.vector_store %arg6[%c27_795, %c0_796, %c0_797], %2611 {strides = array<i32>} : memref<32x8x3xf32, #tpu.memory_space<vmem>>, vector<1x8x3xf32>,
    %2612 = vector.broadcast %2596 : vector<8x1xf32> to vector<8x128xf32>
    %2613 = vector.broadcast %4 : vector<1x128xf32> to vector<8x128xf32>
    %2614 = arith.mulf %2612, %2613 : vector<8x128xf32>
    %2615 = arith.addf %2614, %2564 : vector<8x128xf32>
    %c28_798 = arith.constant 28 : index
    %c0_799 = arith.constant 0 : index
    %c0_800 = arith.constant 0 : index
    %2616 = vector.load %arg10[%c28_798, %c0_799, %c0_800] : memref<32x8x128xf32, #tpu.memory_space<vmem>>, vector<1x8x128xf32>
    %2617 = vector.shape_cast %2616 : vector<1x8x128xf32> to vector<8x128xf32>
    %2618 = arith.addf %2615, %2617 : vector<8x128xf32>
    %2619 = arith.negf %2618 : vector<8x128xf32>
    %2620 = math.exp %2619 : vector<8x128xf32>
    %cst_801 = arith.constant 1.000000e+00 : f32
    %2621 = vector.broadcast %cst_801 : f32 to vector<8x128xf32>
    %2622 = arith.addf %2621, %2620 : vector<8x128xf32>
    %2623 = arith.divf %2621, %2622 : vector<8x128xf32>
    %2624 = vector.extract_strided_slice %2623 {offsets = [0, 0], sizes = [8, 32], strides = [1, 1]} : vector<8x128xf32> to vector<8x32xf32>
    %2625 = vector.extract_strided_slice %2623 {offsets = [0, 32], sizes = [8, 32], strides = [1, 1]} : vector<8x128xf32> to vector<8x32xf32>
    %2626 = vector.extract_strided_slice %2623 {offsets = [0, 64], sizes = [8, 32], strides = [1, 1]} : vector<8x128xf32> to vector<8x32xf32>
    %cst_802 = arith.constant 2.000000e+00 : f32
    %2627 = vector.broadcast %cst_802 : f32 to vector<8x32xf32>
    %2628 = arith.mulf %2627, %2626 : vector<8x32xf32>
    %cst_803 = arith.constant 1.000000e+00 : f32
    %2629 = vector.broadcast %cst_803 : f32 to vector<8x32xf32>
    %2630 = arith.subf %2628, %2629 : vector<8x32xf32>
    %2631 = vector.extract_strided_slice %2623 {offsets = [0, 96], sizes = [8, 32], strides = [1, 1]} : vector<8x128xf32> to vector<8x32xf32>
    %2632 = arith.mulf %2625, %2553 : vector<8x32xf32>
    %2633 = arith.mulf %2624, %2630 : vector<8x32xf32>
    %2634 = arith.addf %2632, %2633 : vector<8x32xf32>
    %2635 = math.tanh %2634 : vector<8x32xf32>
    %2636 = arith.mulf %2631, %2635 : vector<8x32xf32>
    %2637 = arith.truncf %2636 : vector<8x32xf32> to vector<8x32xbf16>
    %cst_804 = arith.constant dense<0.000000e+00> : vector<8x256xf32>
    %2638 = tpu.matmul %2637, %6, %cst_804 {dimension_numbers = #tpu.dot_dimension_numbers<[1], [0], [0], [1], [0, 0, 1, 1], [], []>} : vector<8x32xbf16>, vector<32x256xbf16>, vector<8x256xf32> -> vector<8x256xf32>
    %2639 = vector.extract_strided_slice %2638 {offsets = [0, 0], sizes = [8, 1], strides = [1, 1]} : vector<8x256xf32> to vector<8x1xf32>
    %2640 = vector.broadcast %9 : f32 to vector<8x1xf32>
    %2641 = arith.addf %2639, %2640 : vector<8x1xf32>
    %2642 = vector.extract_strided_slice %2638 {offsets = [0, 1], sizes = [8, 1], strides = [1, 1]} : vector<8x256xf32> to vector<8x1xf32>
    %2643 = vector.broadcast %10 : f32 to vector<8x1xf32>
    %2644 = arith.addf %2642, %2643 : vector<8x1xf32>
    %2645 = vector.extract_strided_slice %2638 {offsets = [0, 128], sizes = [8, 128], strides = [1, 1]} : vector<8x256xf32> to vector<8x128xf32>
    %c28_805 = arith.constant 28 : index
    %c0_806 = arith.constant 0 : index
    %c0_807 = arith.constant 0 : index
    %2646 = vector.load %arg1[%c28_805, %c0_806, %c0_807] : memref<32x8x1xf32, #tpu.memory_space<vmem>>, vector<1x8x1xf32>
    %2647 = vector.shape_cast %2646 : vector<1x8x1xf32> to vector<8x1xf32>
    %2648 = vector.broadcast %7 : f32 to vector<8x1xf32>
    %2649 = arith.mulf %2648, %2647 : vector<8x1xf32>
    %2650 = vector.broadcast %8 : f32 to vector<8x1xf32>
    %2651 = arith.addf %2649, %2650 : vector<8x1xf32>
    %2652 = arith.mulf %2641, %2651 : vector<8x1xf32>
    %2653 = math.absf %2652 : vector<8x1xf32>
    %cst_808 = arith.constant 0.000000e+00 : f32
    %2654 = vector.broadcast %cst_808 : f32 to vector<8x1xf32>
    %2655 = arith.subf %2654, %2653 : vector<8x1xf32>
    %2656 = math.exp %2655 : vector<8x1xf32>
    %cst_809 = arith.constant 1.000000e+00 : f32
    %2657 = vector.broadcast %cst_809 : f32 to vector<8x1xf32>
    %2658 = arith.addf %2657, %2656 : vector<8x1xf32>
    %2659 = tpu.reciprocal %2658 {approx = true} : vector<8x1xf32> -> vector<8x1xf32>
    %cst_810 = arith.constant 0.000000e+00 : f32
    %2660 = vector.broadcast %cst_810 : f32 to vector<8x1xf32>
    %2661 = arith.cmpf oge, %2652, %2660 : vector<8x1xf32>
    %cst_811 = arith.constant 1.000000e+00 : f32
    %2662 = vector.broadcast %cst_811 : f32 to vector<8x1xf32>
    %2663 = arith.subf %2662, %2659 : vector<8x1xf32>
    %2664 = arith.select %2661, %2659, %2663 : vector<8x1xi1>, vector<8x1xf32>
    %cst_812 = arith.constant 0.000000e+00 : f32
    %2665 = vector.broadcast %cst_812 : f32 to vector<8x1xf32>
    %2666 = arith.maximumf %2652, %2665 : vector<8x1xf32>
    %cst_813 = arith.constant 1.000000e+00 : f32
    %2667 = vector.broadcast %cst_813 : f32 to vector<8x1xf32>
    %2668 = arith.addf %2667, %2656 : vector<8x1xf32>
    %2669 = math.log %2668 : vector<8x1xf32>
    %2670 = arith.addf %2666, %2669 : vector<8x1xf32>
    %2671 = tpu.reciprocal %2641 {approx = true} : vector<8x1xf32> -> vector<8x1xf32>
    %2672 = arith.mulf %2671, %2670 : vector<8x1xf32>
    %cst_814 = arith.constant 1.000000e+00 : f32
    %2673 = vector.broadcast %cst_814 : f32 to vector<8x1xf32>
    %2674 = arith.subf %2673, %2644 : vector<8x1xf32>
    %2675 = arith.mulf %2674, %2672 : vector<8x1xf32>
    %2676 = arith.mulf %2644, %2664 : vector<8x1xf32>
    %2677 = arith.addf %2675, %2676 : vector<8x1xf32>
    %c0_i32_815 = arith.constant 0 : i32
    %2678 = vector.broadcast %c0_i32_815 : i32 to vector<8x3xi32>
    %2679 = arith.cmpi eq, %331, %2678 : vector<8x3xi32>
    %c1_i32_816 = arith.constant 1 : i32
    %2680 = vector.broadcast %c1_i32_816 : i32 to vector<8x3xi32>
    %2681 = arith.cmpi eq, %331, %2680 : vector<8x3xi32>
    %2682 = vector.shape_cast %2641 : vector<8x1xf32> to vector<8x1xf32>
    %2683 = vector.broadcast %2682 : vector<8x1xf32> to vector<8x3xf32>
    %2684 = vector.shape_cast %2644 : vector<8x1xf32> to vector<8x1xf32>
    %2685 = vector.broadcast %2684 : vector<8x1xf32> to vector<8x3xf32>
    %2686 = arith.select %2681, %2683, %2685 : vector<8x3xi1>, vector<8x3xf32>
    %2687 = vector.shape_cast %2677 : vector<8x1xf32> to vector<8x1xf32>
    %2688 = vector.broadcast %2687 : vector<8x1xf32> to vector<8x3xf32>
    %2689 = arith.select %2679, %2688, %2686 : vector<8x3xi1>, vector<8x3xf32>
    %c28_817 = arith.constant 28 : index
    %c0_818 = arith.constant 0 : index
    %c0_819 = arith.constant 0 : index
    %2690 = vector.load %arg6[%c28_817, %c0_818, %c0_819] : memref<32x8x3xf32, #tpu.memory_space<vmem>>, vector<1x8x3xf32>
    %2691 = vector.shape_cast %2690 : vector<1x8x3xf32> to vector<8x3xf32>
    %2692 = vector.shape_cast %2689 : vector<8x3xf32> to vector<1x8x3xf32>
    tpu.vector_store %arg6[%c28_817, %c0_818, %c0_819], %2692 {strides = array<i32>} : memref<32x8x3xf32, #tpu.memory_space<vmem>>, vector<1x8x3xf32>,
    %2693 = vector.broadcast %2677 : vector<8x1xf32> to vector<8x128xf32>
    %2694 = vector.broadcast %4 : vector<1x128xf32> to vector<8x128xf32>
    %2695 = arith.mulf %2693, %2694 : vector<8x128xf32>
    %2696 = arith.addf %2695, %2645 : vector<8x128xf32>
    %c29_820 = arith.constant 29 : index
    %c0_821 = arith.constant 0 : index
    %c0_822 = arith.constant 0 : index
    %2697 = vector.load %arg10[%c29_820, %c0_821, %c0_822] : memref<32x8x128xf32, #tpu.memory_space<vmem>>, vector<1x8x128xf32>
    %2698 = vector.shape_cast %2697 : vector<1x8x128xf32> to vector<8x128xf32>
    %2699 = arith.addf %2696, %2698 : vector<8x128xf32>
    %2700 = arith.negf %2699 : vector<8x128xf32>
    %2701 = math.exp %2700 : vector<8x128xf32>
    %cst_823 = arith.constant 1.000000e+00 : f32
    %2702 = vector.broadcast %cst_823 : f32 to vector<8x128xf32>
    %2703 = arith.addf %2702, %2701 : vector<8x128xf32>
    %2704 = arith.divf %2702, %2703 : vector<8x128xf32>
    %2705 = vector.extract_strided_slice %2704 {offsets = [0, 0], sizes = [8, 32], strides = [1, 1]} : vector<8x128xf32> to vector<8x32xf32>
    %2706 = vector.extract_strided_slice %2704 {offsets = [0, 32], sizes = [8, 32], strides = [1, 1]} : vector<8x128xf32> to vector<8x32xf32>
    %2707 = vector.extract_strided_slice %2704 {offsets = [0, 64], sizes = [8, 32], strides = [1, 1]} : vector<8x128xf32> to vector<8x32xf32>
    %cst_824 = arith.constant 2.000000e+00 : f32
    %2708 = vector.broadcast %cst_824 : f32 to vector<8x32xf32>
    %2709 = arith.mulf %2708, %2707 : vector<8x32xf32>
    %cst_825 = arith.constant 1.000000e+00 : f32
    %2710 = vector.broadcast %cst_825 : f32 to vector<8x32xf32>
    %2711 = arith.subf %2709, %2710 : vector<8x32xf32>
    %2712 = vector.extract_strided_slice %2704 {offsets = [0, 96], sizes = [8, 32], strides = [1, 1]} : vector<8x128xf32> to vector<8x32xf32>
    %2713 = arith.mulf %2706, %2634 : vector<8x32xf32>
    %2714 = arith.mulf %2705, %2711 : vector<8x32xf32>
    %2715 = arith.addf %2713, %2714 : vector<8x32xf32>
    %2716 = math.tanh %2715 : vector<8x32xf32>
    %2717 = arith.mulf %2712, %2716 : vector<8x32xf32>
    %2718 = arith.truncf %2717 : vector<8x32xf32> to vector<8x32xbf16>
    %cst_826 = arith.constant dense<0.000000e+00> : vector<8x256xf32>
    %2719 = tpu.matmul %2718, %6, %cst_826 {dimension_numbers = #tpu.dot_dimension_numbers<[1], [0], [0], [1], [0, 0, 1, 1], [], []>} : vector<8x32xbf16>, vector<32x256xbf16>, vector<8x256xf32> -> vector<8x256xf32>
    %2720 = vector.extract_strided_slice %2719 {offsets = [0, 0], sizes = [8, 1], strides = [1, 1]} : vector<8x256xf32> to vector<8x1xf32>
    %2721 = vector.broadcast %9 : f32 to vector<8x1xf32>
    %2722 = arith.addf %2720, %2721 : vector<8x1xf32>
    %2723 = vector.extract_strided_slice %2719 {offsets = [0, 1], sizes = [8, 1], strides = [1, 1]} : vector<8x256xf32> to vector<8x1xf32>
    %2724 = vector.broadcast %10 : f32 to vector<8x1xf32>
    %2725 = arith.addf %2723, %2724 : vector<8x1xf32>
    %2726 = vector.extract_strided_slice %2719 {offsets = [0, 128], sizes = [8, 128], strides = [1, 1]} : vector<8x256xf32> to vector<8x128xf32>
    %c29_827 = arith.constant 29 : index
    %c0_828 = arith.constant 0 : index
    %c0_829 = arith.constant 0 : index
    %2727 = vector.load %arg1[%c29_827, %c0_828, %c0_829] : memref<32x8x1xf32, #tpu.memory_space<vmem>>, vector<1x8x1xf32>
    %2728 = vector.shape_cast %2727 : vector<1x8x1xf32> to vector<8x1xf32>
    %2729 = vector.broadcast %7 : f32 to vector<8x1xf32>
    %2730 = arith.mulf %2729, %2728 : vector<8x1xf32>
    %2731 = vector.broadcast %8 : f32 to vector<8x1xf32>
    %2732 = arith.addf %2730, %2731 : vector<8x1xf32>
    %2733 = arith.mulf %2722, %2732 : vector<8x1xf32>
    %2734 = math.absf %2733 : vector<8x1xf32>
    %cst_830 = arith.constant 0.000000e+00 : f32
    %2735 = vector.broadcast %cst_830 : f32 to vector<8x1xf32>
    %2736 = arith.subf %2735, %2734 : vector<8x1xf32>
    %2737 = math.exp %2736 : vector<8x1xf32>
    %cst_831 = arith.constant 1.000000e+00 : f32
    %2738 = vector.broadcast %cst_831 : f32 to vector<8x1xf32>
    %2739 = arith.addf %2738, %2737 : vector<8x1xf32>
    %2740 = tpu.reciprocal %2739 {approx = true} : vector<8x1xf32> -> vector<8x1xf32>
    %cst_832 = arith.constant 0.000000e+00 : f32
    %2741 = vector.broadcast %cst_832 : f32 to vector<8x1xf32>
    %2742 = arith.cmpf oge, %2733, %2741 : vector<8x1xf32>
    %cst_833 = arith.constant 1.000000e+00 : f32
    %2743 = vector.broadcast %cst_833 : f32 to vector<8x1xf32>
    %2744 = arith.subf %2743, %2740 : vector<8x1xf32>
    %2745 = arith.select %2742, %2740, %2744 : vector<8x1xi1>, vector<8x1xf32>
    %cst_834 = arith.constant 0.000000e+00 : f32
    %2746 = vector.broadcast %cst_834 : f32 to vector<8x1xf32>
    %2747 = arith.maximumf %2733, %2746 : vector<8x1xf32>
    %cst_835 = arith.constant 1.000000e+00 : f32
    %2748 = vector.broadcast %cst_835 : f32 to vector<8x1xf32>
    %2749 = arith.addf %2748, %2737 : vector<8x1xf32>
    %2750 = math.log %2749 : vector<8x1xf32>
    %2751 = arith.addf %2747, %2750 : vector<8x1xf32>
    %2752 = tpu.reciprocal %2722 {approx = true} : vector<8x1xf32> -> vector<8x1xf32>
    %2753 = arith.mulf %2752, %2751 : vector<8x1xf32>
    %cst_836 = arith.constant 1.000000e+00 : f32
    %2754 = vector.broadcast %cst_836 : f32 to vector<8x1xf32>
    %2755 = arith.subf %2754, %2725 : vector<8x1xf32>
    %2756 = arith.mulf %2755, %2753 : vector<8x1xf32>
    %2757 = arith.mulf %2725, %2745 : vector<8x1xf32>
    %2758 = arith.addf %2756, %2757 : vector<8x1xf32>
    %c0_i32_837 = arith.constant 0 : i32
    %2759 = vector.broadcast %c0_i32_837 : i32 to vector<8x3xi32>
    %2760 = arith.cmpi eq, %331, %2759 : vector<8x3xi32>
    %c1_i32_838 = arith.constant 1 : i32
    %2761 = vector.broadcast %c1_i32_838 : i32 to vector<8x3xi32>
    %2762 = arith.cmpi eq, %331, %2761 : vector<8x3xi32>
    %2763 = vector.shape_cast %2722 : vector<8x1xf32> to vector<8x1xf32>
    %2764 = vector.broadcast %2763 : vector<8x1xf32> to vector<8x3xf32>
    %2765 = vector.shape_cast %2725 : vector<8x1xf32> to vector<8x1xf32>
    %2766 = vector.broadcast %2765 : vector<8x1xf32> to vector<8x3xf32>
    %2767 = arith.select %2762, %2764, %2766 : vector<8x3xi1>, vector<8x3xf32>
    %2768 = vector.shape_cast %2758 : vector<8x1xf32> to vector<8x1xf32>
    %2769 = vector.broadcast %2768 : vector<8x1xf32> to vector<8x3xf32>
    %2770 = arith.select %2760, %2769, %2767 : vector<8x3xi1>, vector<8x3xf32>
    %c29_839 = arith.constant 29 : index
    %c0_840 = arith.constant 0 : index
    %c0_841 = arith.constant 0 : index
    %2771 = vector.load %arg6[%c29_839, %c0_840, %c0_841] : memref<32x8x3xf32, #tpu.memory_space<vmem>>, vector<1x8x3xf32>
    %2772 = vector.shape_cast %2771 : vector<1x8x3xf32> to vector<8x3xf32>
    %2773 = vector.shape_cast %2770 : vector<8x3xf32> to vector<1x8x3xf32>
    tpu.vector_store %arg6[%c29_839, %c0_840, %c0_841], %2773 {strides = array<i32>} : memref<32x8x3xf32, #tpu.memory_space<vmem>>, vector<1x8x3xf32>,
    %2774 = vector.broadcast %2758 : vector<8x1xf32> to vector<8x128xf32>
    %2775 = vector.broadcast %4 : vector<1x128xf32> to vector<8x128xf32>
    %2776 = arith.mulf %2774, %2775 : vector<8x128xf32>
    %2777 = arith.addf %2776, %2726 : vector<8x128xf32>
    %c30_842 = arith.constant 30 : index
    %c0_843 = arith.constant 0 : index
    %c0_844 = arith.constant 0 : index
    %2778 = vector.load %arg10[%c30_842, %c0_843, %c0_844] : memref<32x8x128xf32, #tpu.memory_space<vmem>>, vector<1x8x128xf32>
    %2779 = vector.shape_cast %2778 : vector<1x8x128xf32> to vector<8x128xf32>
    %2780 = arith.addf %2777, %2779 : vector<8x128xf32>
    %2781 = arith.negf %2780 : vector<8x128xf32>
    %2782 = math.exp %2781 : vector<8x128xf32>
    %cst_845 = arith.constant 1.000000e+00 : f32
    %2783 = vector.broadcast %cst_845 : f32 to vector<8x128xf32>
    %2784 = arith.addf %2783, %2782 : vector<8x128xf32>
    %2785 = arith.divf %2783, %2784 : vector<8x128xf32>
    %2786 = vector.extract_strided_slice %2785 {offsets = [0, 0], sizes = [8, 32], strides = [1, 1]} : vector<8x128xf32> to vector<8x32xf32>
    %2787 = vector.extract_strided_slice %2785 {offsets = [0, 32], sizes = [8, 32], strides = [1, 1]} : vector<8x128xf32> to vector<8x32xf32>
    %2788 = vector.extract_strided_slice %2785 {offsets = [0, 64], sizes = [8, 32], strides = [1, 1]} : vector<8x128xf32> to vector<8x32xf32>
    %cst_846 = arith.constant 2.000000e+00 : f32
    %2789 = vector.broadcast %cst_846 : f32 to vector<8x32xf32>
    %2790 = arith.mulf %2789, %2788 : vector<8x32xf32>
    %cst_847 = arith.constant 1.000000e+00 : f32
    %2791 = vector.broadcast %cst_847 : f32 to vector<8x32xf32>
    %2792 = arith.subf %2790, %2791 : vector<8x32xf32>
    %2793 = vector.extract_strided_slice %2785 {offsets = [0, 96], sizes = [8, 32], strides = [1, 1]} : vector<8x128xf32> to vector<8x32xf32>
    %2794 = arith.mulf %2787, %2715 : vector<8x32xf32>
    %2795 = arith.mulf %2786, %2792 : vector<8x32xf32>
    %2796 = arith.addf %2794, %2795 : vector<8x32xf32>
    %2797 = math.tanh %2796 : vector<8x32xf32>
    %2798 = arith.mulf %2793, %2797 : vector<8x32xf32>
    %2799 = arith.truncf %2798 : vector<8x32xf32> to vector<8x32xbf16>
    %cst_848 = arith.constant dense<0.000000e+00> : vector<8x256xf32>
    %2800 = tpu.matmul %2799, %6, %cst_848 {dimension_numbers = #tpu.dot_dimension_numbers<[1], [0], [0], [1], [0, 0, 1, 1], [], []>} : vector<8x32xbf16>, vector<32x256xbf16>, vector<8x256xf32> -> vector<8x256xf32>
    %2801 = vector.extract_strided_slice %2800 {offsets = [0, 0], sizes = [8, 1], strides = [1, 1]} : vector<8x256xf32> to vector<8x1xf32>
    %2802 = vector.broadcast %9 : f32 to vector<8x1xf32>
    %2803 = arith.addf %2801, %2802 : vector<8x1xf32>
    %2804 = vector.extract_strided_slice %2800 {offsets = [0, 1], sizes = [8, 1], strides = [1, 1]} : vector<8x256xf32> to vector<8x1xf32>
    %2805 = vector.broadcast %10 : f32 to vector<8x1xf32>
    %2806 = arith.addf %2804, %2805 : vector<8x1xf32>
    %2807 = vector.extract_strided_slice %2800 {offsets = [0, 128], sizes = [8, 128], strides = [1, 1]} : vector<8x256xf32> to vector<8x128xf32>
    %c30_849 = arith.constant 30 : index
    %c0_850 = arith.constant 0 : index
    %c0_851 = arith.constant 0 : index
    %2808 = vector.load %arg1[%c30_849, %c0_850, %c0_851] : memref<32x8x1xf32, #tpu.memory_space<vmem>>, vector<1x8x1xf32>
    %2809 = vector.shape_cast %2808 : vector<1x8x1xf32> to vector<8x1xf32>
    %2810 = vector.broadcast %7 : f32 to vector<8x1xf32>
    %2811 = arith.mulf %2810, %2809 : vector<8x1xf32>
    %2812 = vector.broadcast %8 : f32 to vector<8x1xf32>
    %2813 = arith.addf %2811, %2812 : vector<8x1xf32>
    %2814 = arith.mulf %2803, %2813 : vector<8x1xf32>
    %2815 = math.absf %2814 : vector<8x1xf32>
    %cst_852 = arith.constant 0.000000e+00 : f32
    %2816 = vector.broadcast %cst_852 : f32 to vector<8x1xf32>
    %2817 = arith.subf %2816, %2815 : vector<8x1xf32>
    %2818 = math.exp %2817 : vector<8x1xf32>
    %cst_853 = arith.constant 1.000000e+00 : f32
    %2819 = vector.broadcast %cst_853 : f32 to vector<8x1xf32>
    %2820 = arith.addf %2819, %2818 : vector<8x1xf32>
    %2821 = tpu.reciprocal %2820 {approx = true} : vector<8x1xf32> -> vector<8x1xf32>
    %cst_854 = arith.constant 0.000000e+00 : f32
    %2822 = vector.broadcast %cst_854 : f32 to vector<8x1xf32>
    %2823 = arith.cmpf oge, %2814, %2822 : vector<8x1xf32>
    %cst_855 = arith.constant 1.000000e+00 : f32
    %2824 = vector.broadcast %cst_855 : f32 to vector<8x1xf32>
    %2825 = arith.subf %2824, %2821 : vector<8x1xf32>
    %2826 = arith.select %2823, %2821, %2825 : vector<8x1xi1>, vector<8x1xf32>
    %cst_856 = arith.constant 0.000000e+00 : f32
    %2827 = vector.broadcast %cst_856 : f32 to vector<8x1xf32>
    %2828 = arith.maximumf %2814, %2827 : vector<8x1xf32>
    %cst_857 = arith.constant 1.000000e+00 : f32
    %2829 = vector.broadcast %cst_857 : f32 to vector<8x1xf32>
    %2830 = arith.addf %2829, %2818 : vector<8x1xf32>
    %2831 = math.log %2830 : vector<8x1xf32>
    %2832 = arith.addf %2828, %2831 : vector<8x1xf32>
    %2833 = tpu.reciprocal %2803 {approx = true} : vector<8x1xf32> -> vector<8x1xf32>
    %2834 = arith.mulf %2833, %2832 : vector<8x1xf32>
    %cst_858 = arith.constant 1.000000e+00 : f32
    %2835 = vector.broadcast %cst_858 : f32 to vector<8x1xf32>
    %2836 = arith.subf %2835, %2806 : vector<8x1xf32>
    %2837 = arith.mulf %2836, %2834 : vector<8x1xf32>
    %2838 = arith.mulf %2806, %2826 : vector<8x1xf32>
    %2839 = arith.addf %2837, %2838 : vector<8x1xf32>
    %c0_i32_859 = arith.constant 0 : i32
    %2840 = vector.broadcast %c0_i32_859 : i32 to vector<8x3xi32>
    %2841 = arith.cmpi eq, %331, %2840 : vector<8x3xi32>
    %c1_i32_860 = arith.constant 1 : i32
    %2842 = vector.broadcast %c1_i32_860 : i32 to vector<8x3xi32>
    %2843 = arith.cmpi eq, %331, %2842 : vector<8x3xi32>
    %2844 = vector.shape_cast %2803 : vector<8x1xf32> to vector<8x1xf32>
    %2845 = vector.broadcast %2844 : vector<8x1xf32> to vector<8x3xf32>
    %2846 = vector.shape_cast %2806 : vector<8x1xf32> to vector<8x1xf32>
    %2847 = vector.broadcast %2846 : vector<8x1xf32> to vector<8x3xf32>
    %2848 = arith.select %2843, %2845, %2847 : vector<8x3xi1>, vector<8x3xf32>
    %2849 = vector.shape_cast %2839 : vector<8x1xf32> to vector<8x1xf32>
    %2850 = vector.broadcast %2849 : vector<8x1xf32> to vector<8x3xf32>
    %2851 = arith.select %2841, %2850, %2848 : vector<8x3xi1>, vector<8x3xf32>
    %c30_861 = arith.constant 30 : index
    %c0_862 = arith.constant 0 : index
    %c0_863 = arith.constant 0 : index
    %2852 = vector.load %arg6[%c30_861, %c0_862, %c0_863] : memref<32x8x3xf32, #tpu.memory_space<vmem>>, vector<1x8x3xf32>
    %2853 = vector.shape_cast %2852 : vector<1x8x3xf32> to vector<8x3xf32>
    %2854 = vector.shape_cast %2851 : vector<8x3xf32> to vector<1x8x3xf32>
    tpu.vector_store %arg6[%c30_861, %c0_862, %c0_863], %2854 {strides = array<i32>} : memref<32x8x3xf32, #tpu.memory_space<vmem>>, vector<1x8x3xf32>,
    %2855 = vector.broadcast %2839 : vector<8x1xf32> to vector<8x128xf32>
    %2856 = vector.broadcast %4 : vector<1x128xf32> to vector<8x128xf32>
    %2857 = arith.mulf %2855, %2856 : vector<8x128xf32>
    %2858 = arith.addf %2857, %2807 : vector<8x128xf32>
    %c31_864 = arith.constant 31 : index
    %c0_865 = arith.constant 0 : index
    %c0_866 = arith.constant 0 : index
    %2859 = vector.load %arg10[%c31_864, %c0_865, %c0_866] : memref<32x8x128xf32, #tpu.memory_space<vmem>>, vector<1x8x128xf32>
    %2860 = vector.shape_cast %2859 : vector<1x8x128xf32> to vector<8x128xf32>
    %2861 = arith.addf %2858, %2860 : vector<8x128xf32>
    %2862 = arith.negf %2861 : vector<8x128xf32>
    %2863 = math.exp %2862 : vector<8x128xf32>
    %cst_867 = arith.constant 1.000000e+00 : f32
    %2864 = vector.broadcast %cst_867 : f32 to vector<8x128xf32>
    %2865 = arith.addf %2864, %2863 : vector<8x128xf32>
    %2866 = arith.divf %2864, %2865 : vector<8x128xf32>
    %2867 = vector.extract_strided_slice %2866 {offsets = [0, 0], sizes = [8, 32], strides = [1, 1]} : vector<8x128xf32> to vector<8x32xf32>
    %2868 = vector.extract_strided_slice %2866 {offsets = [0, 32], sizes = [8, 32], strides = [1, 1]} : vector<8x128xf32> to vector<8x32xf32>
    %2869 = vector.extract_strided_slice %2866 {offsets = [0, 64], sizes = [8, 32], strides = [1, 1]} : vector<8x128xf32> to vector<8x32xf32>
    %cst_868 = arith.constant 2.000000e+00 : f32
    %2870 = vector.broadcast %cst_868 : f32 to vector<8x32xf32>
    %2871 = arith.mulf %2870, %2869 : vector<8x32xf32>
    %cst_869 = arith.constant 1.000000e+00 : f32
    %2872 = vector.broadcast %cst_869 : f32 to vector<8x32xf32>
    %2873 = arith.subf %2871, %2872 : vector<8x32xf32>
    %2874 = vector.extract_strided_slice %2866 {offsets = [0, 96], sizes = [8, 32], strides = [1, 1]} : vector<8x128xf32> to vector<8x32xf32>
    %2875 = arith.mulf %2868, %2796 : vector<8x32xf32>
    %2876 = arith.mulf %2867, %2873 : vector<8x32xf32>
    %2877 = arith.addf %2875, %2876 : vector<8x32xf32>
    %2878 = math.tanh %2877 : vector<8x32xf32>
    %2879 = arith.mulf %2874, %2878 : vector<8x32xf32>
    %2880 = arith.truncf %2879 : vector<8x32xf32> to vector<8x32xbf16>
    %cst_870 = arith.constant dense<0.000000e+00> : vector<8x256xf32>
    %2881 = tpu.matmul %2880, %6, %cst_870 {dimension_numbers = #tpu.dot_dimension_numbers<[1], [0], [0], [1], [0, 0, 1, 1], [], []>} : vector<8x32xbf16>, vector<32x256xbf16>, vector<8x256xf32> -> vector<8x256xf32>
    %2882 = vector.extract_strided_slice %2881 {offsets = [0, 0], sizes = [8, 1], strides = [1, 1]} : vector<8x256xf32> to vector<8x1xf32>
    %2883 = vector.broadcast %9 : f32 to vector<8x1xf32>
    %2884 = arith.addf %2882, %2883 : vector<8x1xf32>
    %2885 = vector.extract_strided_slice %2881 {offsets = [0, 1], sizes = [8, 1], strides = [1, 1]} : vector<8x256xf32> to vector<8x1xf32>
    %2886 = vector.broadcast %10 : f32 to vector<8x1xf32>
    %2887 = arith.addf %2885, %2886 : vector<8x1xf32>
    %2888 = vector.extract_strided_slice %2881 {offsets = [0, 128], sizes = [8, 128], strides = [1, 1]} : vector<8x256xf32> to vector<8x128xf32>
    %c31_871 = arith.constant 31 : index
    %c0_872 = arith.constant 0 : index
    %c0_873 = arith.constant 0 : index
    %2889 = vector.load %arg1[%c31_871, %c0_872, %c0_873] : memref<32x8x1xf32, #tpu.memory_space<vmem>>, vector<1x8x1xf32>
    %2890 = vector.shape_cast %2889 : vector<1x8x1xf32> to vector<8x1xf32>
    %2891 = vector.broadcast %7 : f32 to vector<8x1xf32>
    %2892 = arith.mulf %2891, %2890 : vector<8x1xf32>
    %2893 = vector.broadcast %8 : f32 to vector<8x1xf32>
    %2894 = arith.addf %2892, %2893 : vector<8x1xf32>
    %2895 = arith.mulf %2884, %2894 : vector<8x1xf32>
    %2896 = math.absf %2895 : vector<8x1xf32>
    %cst_874 = arith.constant 0.000000e+00 : f32
    %2897 = vector.broadcast %cst_874 : f32 to vector<8x1xf32>
    %2898 = arith.subf %2897, %2896 : vector<8x1xf32>
    %2899 = math.exp %2898 : vector<8x1xf32>
    %cst_875 = arith.constant 1.000000e+00 : f32
    %2900 = vector.broadcast %cst_875 : f32 to vector<8x1xf32>
    %2901 = arith.addf %2900, %2899 : vector<8x1xf32>
    %2902 = tpu.reciprocal %2901 {approx = true} : vector<8x1xf32> -> vector<8x1xf32>
    %cst_876 = arith.constant 0.000000e+00 : f32
    %2903 = vector.broadcast %cst_876 : f32 to vector<8x1xf32>
    %2904 = arith.cmpf oge, %2895, %2903 : vector<8x1xf32>
    %cst_877 = arith.constant 1.000000e+00 : f32
    %2905 = vector.broadcast %cst_877 : f32 to vector<8x1xf32>
    %2906 = arith.subf %2905, %2902 : vector<8x1xf32>
    %2907 = arith.select %2904, %2902, %2906 : vector<8x1xi1>, vector<8x1xf32>
    %cst_878 = arith.constant 0.000000e+00 : f32
    %2908 = vector.broadcast %cst_878 : f32 to vector<8x1xf32>
    %2909 = arith.maximumf %2895, %2908 : vector<8x1xf32>
    %cst_879 = arith.constant 1.000000e+00 : f32
    %2910 = vector.broadcast %cst_879 : f32 to vector<8x1xf32>
    %2911 = arith.addf %2910, %2899 : vector<8x1xf32>
    %2912 = math.log %2911 : vector<8x1xf32>
    %2913 = arith.addf %2909, %2912 : vector<8x1xf32>
    %2914 = tpu.reciprocal %2884 {approx = true} : vector<8x1xf32> -> vector<8x1xf32>
    %2915 = arith.mulf %2914, %2913 : vector<8x1xf32>
    %cst_880 = arith.constant 1.000000e+00 : f32
    %2916 = vector.broadcast %cst_880 : f32 to vector<8x1xf32>
    %2917 = arith.subf %2916, %2887 : vector<8x1xf32>
    %2918 = arith.mulf %2917, %2915 : vector<8x1xf32>
    %2919 = arith.mulf %2887, %2907 : vector<8x1xf32>
    %2920 = arith.addf %2918, %2919 : vector<8x1xf32>
    %c0_i32_881 = arith.constant 0 : i32
    %2921 = vector.broadcast %c0_i32_881 : i32 to vector<8x3xi32>
    %2922 = arith.cmpi eq, %331, %2921 : vector<8x3xi32>
    %c1_i32_882 = arith.constant 1 : i32
    %2923 = vector.broadcast %c1_i32_882 : i32 to vector<8x3xi32>
    %2924 = arith.cmpi eq, %331, %2923 : vector<8x3xi32>
    %2925 = vector.shape_cast %2884 : vector<8x1xf32> to vector<8x1xf32>
    %2926 = vector.broadcast %2925 : vector<8x1xf32> to vector<8x3xf32>
    %2927 = vector.shape_cast %2887 : vector<8x1xf32> to vector<8x1xf32>
    %2928 = vector.broadcast %2927 : vector<8x1xf32> to vector<8x3xf32>
    %2929 = arith.select %2924, %2926, %2928 : vector<8x3xi1>, vector<8x3xf32>
    %2930 = vector.shape_cast %2920 : vector<8x1xf32> to vector<8x1xf32>
    %2931 = vector.broadcast %2930 : vector<8x1xf32> to vector<8x3xf32>
    %2932 = arith.select %2922, %2931, %2929 : vector<8x3xi1>, vector<8x3xf32>
    %c31_883 = arith.constant 31 : index
    %c0_884 = arith.constant 0 : index
    %c0_885 = arith.constant 0 : index
    %2933 = vector.load %arg6[%c31_883, %c0_884, %c0_885] : memref<32x8x3xf32, #tpu.memory_space<vmem>>, vector<1x8x3xf32>
    %2934 = vector.shape_cast %2933 : vector<1x8x3xf32> to vector<8x3xf32>
    %2935 = vector.shape_cast %2932 : vector<8x3xf32> to vector<1x8x3xf32>
    tpu.vector_store %arg6[%c31_883, %c0_884, %c0_885], %2935 {strides = array<i32>} : memref<32x8x3xf32, #tpu.memory_space<vmem>>, vector<1x8x3xf32>,
    %c0_886 = arith.constant 0 : index
    %c0_887 = arith.constant 0 : index
    %2936 = vector.load %arg7[%c0_886, %c0_887] : memref<8x128xf32, #tpu.memory_space<vmem>>, vector<8x128xf32>
    tpu.vector_store %arg7[%c0_886, %c0_887], %2888 {strides = array<i32>} : memref<8x128xf32, #tpu.memory_space<vmem>>, vector<8x128xf32>,
    %c0_888 = arith.constant 0 : index
    %c0_889 = arith.constant 0 : index
    %2937 = vector.load %arg8[%c0_888, %c0_889] : memref<8x32xf32, #tpu.memory_space<vmem>>, vector<8x32xf32>
    tpu.vector_store %arg8[%c0_888, %c0_889], %2877 {strides = array<i32>} : memref<8x32xf32, #tpu.memory_space<vmem>>, vector<8x32xf32>,
    %c0_890 = arith.constant 0 : index
    %c0_891 = arith.constant 0 : index
    %2938 = vector.load %arg9[%c0_890, %c0_891] : memref<8x1xf32, #tpu.memory_space<vmem>>, vector<8x1xf32>
    tpu.vector_store %arg9[%c0_890, %c0_891], %2920 {strides = array<i32>} : memref<8x1xf32, #tpu.memory_space<vmem>>, vector<8x1xf32>,
    return
  }
  func.func @transform_0(%arg0: i32) -> (i32, i32, i32) {
    %c0_i32 = arith.constant 0 : i32
    %c0_i32_0 = arith.constant 0 : i32
    %c0_i32_1 = arith.constant 0 : i32
    return %arg0, %c0_i32, %c0_i32_0 : i32, i32, i32
  }
  func.func @transform_1(%arg0: i32) -> (i32, i32) {
    %c0_i32 = arith.constant 0 : i32
    %c0_i32_0 = arith.constant 0 : i32
    %c0_i32_1 = arith.constant 0 : i32
    return %c0_i32, %c0_i32_0 : i32, i32
  }
  func.func @transform_2(%arg0: i32) -> (i32, i32) {
    %c0_i32 = arith.constant 0 : i32
    %c0_i32_0 = arith.constant 0 : i32
    %c0_i32_1 = arith.constant 0 : i32
    return %c0_i32, %c0_i32_0 : i32, i32
  }
  func.func @transform_3(%arg0: i32) -> (i32, i32) {
    %c0_i32 = arith.constant 0 : i32
    %c0_i32_0 = arith.constant 0 : i32
    %c0_i32_1 = arith.constant 0 : i32
    return %c0_i32, %c0_i32_0 : i32, i32
  }
  func.func @transform_4(%arg0: i32) -> i32 {
    %c0_i32 = arith.constant 0 : i32
    %c0_i32_0 = arith.constant 0 : i32
    return %c0_i32 : i32
  }
  func.func @transform_5(%arg0: i32) -> (i32, i32, i32) {
    %c0_i32 = arith.constant 0 : i32
    %c0_i32_0 = arith.constant 0 : i32
    %c0_i32_1 = arith.constant 0 : i32
    return %arg0, %c0_i32, %c0_i32_0 : i32, i32, i32
  }
}

</mosaic_0001>

<llo_original>
// kernel: tpu_custom_call.1
$region0: #{tpu_custom_call.1}
  #allocation0 [shape = 'u32[]', space=smem, size = 0x4, offset = 0x4, fixed_abs, tag = 'smem constant byte address 0x4 - core index']
  #allocation1 [shape = 'u32[72,128]{1,0:T(1,128)}', space=vmem, size = 0x9000, scoped, tag = 'internal scratch']
  #allocation2 [shape = 'f32[8,128]{1,0:T(8,128)}', space=vmem, size = 0x1000, scoped, tag = 'scratch operand']
  #allocation3 [shape = 'f32[8,32]{1,0:T(8,128)}', space=vmem, size = 0x1000, scoped, tag = 'scratch operand']
  #allocation4 [shape = 'f32[8,1]{1,0:T(8,128)}', space=vmem, size = 0x1000, scoped, tag = 'scratch operand']
  #allocation5 [shape = 'f32[32,8,128]{2,1,0:T(8,128)}', space=vmem, size = 0x20000, scoped, tag = 'scratch operand']
  %s0 = inlined_call_operand.vmem [shape: f32[32,8,1], index: 0, kind: input, shape index: {}]
  %s1 = inlined_call_operand.vmem [shape: f32[2,128], index: 1, kind: input, shape index: {}]
  %s2 = inlined_call_operand.vmem [shape: bf16[32,256], index: 2, kind: input, shape index: {}]
  %s3 = inlined_call_operand.vmem [shape: f32[1,128], index: 3, kind: input, shape index: {}]
  %s4 = inlined_call_operand.vmem [shape: f32[4], index: 4, kind: input, shape index: {}]
  %s5 = inlined_call_operand.vmem [shape: f32[32,8,3], index: 5, kind: output, shape index: {}]
  %s6 = sld [smem:[#allocation0]]
  $region38: #{tpu_custom_call.1} parent=0
    _
  %s8 = ssub.s32 1, %s6
  %s9 = scalar_select 0, %s8, %s6
  $region1: #{tpu_custom_call.1} parent=0
    #allocation6 [shape = 'u8[512]{0}', space=smem, size = 0x200, scoped, tag = 'input window, operand 4, single buffered']
    #allocation7 [shape = 's32[1]{0}', space=sflag, size = 0x4, scoped, tag = 'scoped memory for tpu_custom_call.1']
    %10 = vsyncpa [#allocation7], 0
    // Predicated region
    $region2: #{tpu_custom_call.1} parent=1 // pred_check
      _
    $region3: #{tpu_custom_call.1} parent=1 // pred_check_branch
      %12 = sbr.rel (0) target = $region5
    $region4: #{tpu_custom_call.1} parent=1 // pred_region
      _
    $region5: #{tpu_custom_call.1} parent=1 // pred_fallthru
      _
    // Predicated region
    $region6: #{tpu_custom_call.1} parent=1 // pred_check
      _
    $region7: #{tpu_custom_call.1} parent=1 // pred_check_branch
      %14 = sbr.rel (0) target = $region9
    $region8: #{tpu_custom_call.1} parent=1 // pred_region
      _
    $region9: #{tpu_custom_call.1} parent=1 // pred_fallthru
      _
    // Predicated region
    $region10: #{tpu_custom_call.1} parent=1 // pred_check
      _
    $region11: #{tpu_custom_call.1} parent=1 // pred_check_branch
      %16 = sbr.rel (0) target = $region13
    $region12: #{tpu_custom_call.1} parent=1 // pred_region
      _
    $region13: #{tpu_custom_call.1} parent=1 // pred_fallthru
      _
    // Predicated region
    $region14: #{tpu_custom_call.1} parent=1 // pred_check
      _
    $region15: #{tpu_custom_call.1} parent=1 // pred_check_branch
      %18 = sbr.rel (0) target = $region17
    $region16: #{tpu_custom_call.1} parent=1 // pred_region
      _
    $region17: #{tpu_custom_call.1} parent=1 // pred_fallthru
      _
    // Predicated region
    $region18: #{tpu_custom_call.1} parent=1 // pred_check
      _
    $region19: #{tpu_custom_call.1} parent=1 // pred_check_branch
      %20 = sbr.rel (0) target = $region21
    $region20: #{tpu_custom_call.1} parent=1 // pred_region
      %22 = vsyncadd [#allocation7], 0
      %s24 = sshll.u32 %s4, 4
      %s25 = int_to_ptr.vmem [resolvable:$true] %s24
      %27 = dma.vmem_to_smem %s25, 16, [#allocation6], [#allocation7]
    $region21: #{tpu_custom_call.1} parent=1 // pred_fallthru
      _
    // Predicated region
    $region22: #{tpu_custom_call.1} parent=1 // pred_check
      _
    $region23: #{tpu_custom_call.1} parent=1 // pred_check_branch
      %29 = sbr.rel (0) target = $region25
    $region24: #{tpu_custom_call.1} parent=1 // pred_region
      %31 = dma.done [#allocation7], 16
    $region25: #{tpu_custom_call.1} parent=1 // pred_fallthru
      _
    %32 = sfence
    %p34 = scmp.eq.s32.totalorder 0, 0
    // Predicated region
    $region26: #{tpu_custom_call.1} parent=1 // pred_check
      %p35 = pneg %p34
    $region27: #{tpu_custom_call.1} parent=1 // pred_check_branch
      %37 = sbr.rel (%p35) target = $region29
    $region28: #{tpu_custom_call.1} parent=1 // pred_region
      %38 = vst [vmem:[#allocation2] sm:$0xff] 0.0
      %vm39 = vcmask 261120
      %40 = vst.msk [vmem:[#allocation3] sm:$0xff] %vm39, 0.0
      %vm41 = vcmask 7168
      %42 = vst.msk [vmem:[#allocation4] sm:$0xff] %vm41, 0.0
    $region29: #{tpu_custom_call.1} parent=1 // pred_fallthru
      _
    %v43 = vld [vmem:[%s1] sm:$0x1]
    %v44 = vld [vmem:[%s1 + $0x1] sm:$0x1]
    %v45 = vld [vmem:[%s3] sm:$0x1]
    %v46 = vld [vmem:[%s2] sm:$0xff]
    %v47 = vld [vmem:[%s2 + $0x8] sm:$0xff]
    %v48 = vld [vmem:[%s2 + $0x10] sm:$0xff]
    %v49 = vld [vmem:[%s2 + $0x18] sm:$0xff]
    %s50 = sld [smem:[#allocation6]]
    %s51 = sld [smem:[#allocation6 + $0x1]]
    %s52 = sld [smem:[#allocation6 + $0x2]]
    %s53 = sld [smem:[#allocation6 + $0x3]]
    %v54 = vld [vmem:[%s0] sm:$0xff]
    %56 = vset.pattern.permute.xlu0 0
    %57 = vperm.xlu0 %56, %v54
    %v58 = vpop.permute.xlu0 %57
    %v60 = vperm.slane %v43, 0
    %v61 = vmul.f32 %v58, %v60
    %v63 = vperm.slane %v45, 0
    %v65 = vadd.f32 %v61, %v63
    %66 = vst [vmem:[#allocation5] sm:$0xff] %v65
    %s67 = scalar_lea.vmem %s0, 8
    %v68 = vld [vmem:[%s67] sm:$0xff]
    %70 = vset.pattern.permute.xlu0 0
    %71 = vperm.xlu0 %70, %v68
    %v72 = vpop.permute.xlu0 %71
    %v74 = vmul.f32 %v72, %v60
    %v75 = vadd.f32 %v74, %v63
    %s76 = scalar_lea.vmem [#allocation5], 8
    %77 = vst [vmem:[%s76] sm:$0xff] %v75
    %s78 = scalar_lea.vmem %s0, 16
    %v79 = vld [vmem:[%s78] sm:$0xff]
    %81 = vset.pattern.permute.xlu0 0
    %82 = vperm.xlu0 %81, %v79
    %v83 = vpop.permute.xlu0 %82
    %v85 = vmul.f32 %v83, %v60
    %v86 = vadd.f32 %v85, %v63
    %s87 = scalar_lea.vmem [#allocation5], 16
    %88 = vst [vmem:[%s87] sm:$0xff] %v86
    %s89 = scalar_lea.vmem %s0, 24
    %v90 = vld [vmem:[%s89] sm:$0xff]
    %92 = vset.pattern.permute.xlu0 0
    %93 = vperm.xlu0 %92, %v90
    %v94 = vpop.permute.xlu0 %93
    %v96 = vmul.f32 %v94, %v60
    %v97 = vadd.f32 %v96, %v63
    %s98 = scalar_lea.vmem [#allocation5], 24
    %99 = vst [vmem:[%s98] sm:$0xff] %v97
    %s100 = scalar_lea.vmem %s0, 32
    %v101 = vld [vmem:[%s100] sm:$0xff]
    %103 = vset.pattern.permute.xlu0 0
    %104 = vperm.xlu0 %103, %v101
    %v105 = vpop.permute.xlu0 %104
    %v107 = vmul.f32 %v105, %v60
    %v108 = vadd.f32 %v107, %v63
    %s109 = scalar_lea.vmem [#allocation5], 32
    %110 = vst [vmem:[%s109] sm:$0xff] %v108
    %s111 = scalar_lea.vmem %s0, 40
    %v112 = vld [vmem:[%s111] sm:$0xff]
    %114 = vset.pattern.permute.xlu0 0
    %115 = vperm.xlu0 %114, %v112
    %v116 = vpop.permute.xlu0 %115
    %v118 = vmul.f32 %v116, %v60
    %v119 = vadd.f32 %v118, %v63
    %s120 = scalar_lea.vmem [#allocation5], 40
    %121 = vst [vmem:[%s120] sm:$0xff] %v119
    %s122 = scalar_lea.vmem %s0, 48
    %v123 = vld [vmem:[%s122] sm:$0xff]
    %125 = vset.pattern.permute.xlu0 0
    %126 = vperm.xlu0 %125, %v123
    %v127 = vpop.permute.xlu0 %126
    %v129 = vmul.f32 %v127, %v60
    %v130 = vadd.f32 %v129, %v63
    %s131 = scalar_lea.vmem [#allocation5], 48
    %132 = vst [vmem:[%s131] sm:$0xff] %v130
    %s133 = scalar_lea.vmem %s0, 56
    %v134 = vld [vmem:[%s133] sm:$0xff]
    %136 = vset.pattern.permute.xlu0 0
    %137 = vperm.xlu0 %136, %v134
    %v138 = vpop.permute.xlu0 %137
    %v140 = vmul.f32 %v138, %v60
    %v141 = vadd.f32 %v140, %v63
    %s142 = scalar_lea.vmem [#allocation5], 56
    %143 = vst [vmem:[%s142] sm:$0xff] %v141
    %s144 = scalar_lea.vmem %s0, 64
    %v145 = vld [vmem:[%s144] sm:$0xff]
    %147 = vset.pattern.permute.xlu0 0
    %148 = vperm.xlu0 %147, %v145
    %v149 = vpop.permute.xlu0 %148
    %v151 = vmul.f32 %v149, %v60
    %v152 = vadd.f32 %v151, %v63
    %s153 = scalar_lea.vmem [#allocation5], 64
    %154 = vst [vmem:[%s153] sm:$0xff] %v152
    %s155 = scalar_lea.vmem %s0, 72
    %v156 = vld [vmem:[%s155] sm:$0xff]
    %158 = vset.pattern.permute.xlu0 0
    %159 = vperm.xlu0 %158, %v156
    %v160 = vpop.permute.xlu0 %159
    %v162 = vmul.f32 %v160, %v60
    %v163 = vadd.f32 %v162, %v63
    %s164 = scalar_lea.vmem [#allocation5], 72
    %165 = vst [vmem:[%s164] sm:$0xff] %v163
    %s166 = scalar_lea.vmem %s0, 80
    %v167 = vld [vmem:[%s166] sm:$0xff]
    %169 = vset.pattern.permute.xlu0 0
    %170 = vperm.xlu0 %169, %v167
    %v171 = vpop.permute.xlu0 %170
    %v173 = vmul.f32 %v171, %v60
    %v174 = vadd.f32 %v173, %v63
    %s175 = scalar_lea.vmem [#allocation5], 80
    %176 = vst [vmem:[%s175] sm:$0xff] %v174
    %s177 = scalar_lea.vmem %s0, 88
    %v178 = vld [vmem:[%s177] sm:$0xff]
    %180 = vset.pattern.permute.xlu0 0
    %181 = vperm.xlu0 %180, %v178
    %v182 = vpop.permute.xlu0 %181
    %v184 = vmul.f32 %v182, %v60
    %v185 = vadd.f32 %v184, %v63
    %s186 = scalar_lea.vmem [#allocation5], 88
    %187 = vst [vmem:[%s186] sm:$0xff] %v185
    %s188 = scalar_lea.vmem %s0, 96
    %v189 = vld [vmem:[%s188] sm:$0xff]
    %191 = vset.pattern.permute.xlu0 0
    %192 = vperm.xlu0 %191, %v189
    %v193 = vpop.permute.xlu0 %192
    %v195 = vmul.f32 %v193, %v60
    %v196 = vadd.f32 %v195, %v63
    %s197 = scalar_lea.vmem [#allocation5], 96
    %198 = vst [vmem:[%s197] sm:$0xff] %v196
    %s199 = scalar_lea.vmem %s0, 104
    %v200 = vld [vmem:[%s199] sm:$0xff]
    %202 = vset.pattern.permute.xlu0 0
    %203 = vperm.xlu0 %202, %v200
    %v204 = vpop.permute.xlu0 %203
    %v206 = vmul.f32 %v204, %v60
    %v207 = vadd.f32 %v206, %v63
    %s208 = scalar_lea.vmem [#allocation5], 104
    %209 = vst [vmem:[%s208] sm:$0xff] %v207
    %s210 = scalar_lea.vmem %s0, 112
    %v211 = vld [vmem:[%s210] sm:$0xff]
    %213 = vset.pattern.permute.xlu0 0
    %214 = vperm.xlu0 %213, %v211
    %v215 = vpop.permute.xlu0 %214
    %v217 = vmul.f32 %v215, %v60
    %v218 = vadd.f32 %v217, %v63
    %s219 = scalar_lea.vmem [#allocation5], 112
    %220 = vst [vmem:[%s219] sm:$0xff] %v218
    %s221 = scalar_lea.vmem %s0, 120
    %v222 = vld [vmem:[%s221] sm:$0xff]
    %224 = vset.pattern.permute.xlu0 0
    %225 = vperm.xlu0 %224, %v222
    %v226 = vpop.permute.xlu0 %225
    %v228 = vmul.f32 %v226, %v60
    %v229 = vadd.f32 %v228, %v63
    %s230 = scalar_lea.vmem [#allocation5], 120
    %231 = vst [vmem:[%s230] sm:$0xff] %v229
    %s232 = scalar_lea.vmem %s0, 128
    %v233 = vld [vmem:[%s232] sm:$0xff]
    %235 = vset.pattern.permute.xlu0 0
    %236 = vperm.xlu0 %235, %v233
    %v237 = vpop.permute.xlu0 %236
    %v239 = vmul.f32 %v237, %v60
    %v240 = vadd.f32 %v239, %v63
    %s241 = scalar_lea.vmem [#allocation5], 128
    %242 = vst [vmem:[%s241] sm:$0xff] %v240
    %s243 = scalar_lea.vmem %s0, 136
    %v244 = vld [vmem:[%s243] sm:$0xff]
    %246 = vset.pattern.permute.xlu0 0
    %247 = vperm.xlu0 %246, %v244
    %v248 = vpop.permute.xlu0 %247
    %v250 = vmul.f32 %v248, %v60
    %v251 = vadd.f32 %v250, %v63
    %s252 = scalar_lea.vmem [#allocation5], 136
    %253 = vst [vmem:[%s252] sm:$0xff] %v251
    %s254 = scalar_lea.vmem %s0, 144
    %v255 = vld [vmem:[%s254] sm:$0xff]
    %257 = vset.pattern.permute.xlu0 0
    %258 = vperm.xlu0 %257, %v255
    %v259 = vpop.permute.xlu0 %258
    %v261 = vmul.f32 %v259, %v60
    %v262 = vadd.f32 %v261, %v63
    %s263 = scalar_lea.vmem [#allocation5], 144
    %264 = vst [vmem:[%s263] sm:$0xff] %v262
    %s265 = scalar_lea.vmem %s0, 152
    %v266 = vld [vmem:[%s265] sm:$0xff]
    %268 = vset.pattern.permute.xlu0 0
    %269 = vperm.xlu0 %268, %v266
    %v270 = vpop.permute.xlu0 %269
    %v272 = vmul.f32 %v270, %v60
    %v273 = vadd.f32 %v272, %v63
    %s274 = scalar_lea.vmem [#allocation5], 152
    %275 = vst [vmem:[%s274] sm:$0xff] %v273
    %s276 = scalar_lea.vmem %s0, 160
    %v277 = vld [vmem:[%s276] sm:$0xff]
    %279 = vset.pattern.permute.xlu0 0
    %280 = vperm.xlu0 %279, %v277
    %v281 = vpop.permute.xlu0 %280
    %v283 = vmul.f32 %v281, %v60
    %v284 = vadd.f32 %v283, %v63
    %s285 = scalar_lea.vmem [#allocation5], 160
    %286 = vst [vmem:[%s285] sm:$0xff] %v284
    %s287 = scalar_lea.vmem %s0, 168
    %v288 = vld [vmem:[%s287] sm:$0xff]
    %290 = vset.pattern.permute.xlu0 0
    %291 = vperm.xlu0 %290, %v288
    %v292 = vpop.permute.xlu0 %291
    %v294 = vmul.f32 %v292, %v60
    %v295 = vadd.f32 %v294, %v63
    %s296 = scalar_lea.vmem [#allocation5], 168
    %297 = vst [vmem:[%s296] sm:$0xff] %v295
    %s298 = scalar_lea.vmem %s0, 176
    %v299 = vld [vmem:[%s298] sm:$0xff]
    %301 = vset.pattern.permute.xlu0 0
    %302 = vperm.xlu0 %301, %v299
    %v303 = vpop.permute.xlu0 %302
    %v305 = vmul.f32 %v303, %v60
    %v306 = vadd.f32 %v305, %v63
    %s307 = scalar_lea.vmem [#allocation5], 176
    %308 = vst [vmem:[%s307] sm:$0xff] %v306
    %s309 = scalar_lea.vmem %s0, 184
    %v310 = vld [vmem:[%s309] sm:$0xff]
    %312 = vset.pattern.permute.xlu0 0
    %313 = vperm.xlu0 %312, %v310
    %v314 = vpop.permute.xlu0 %313
    %v316 = vmul.f32 %v314, %v60
    %v317 = vadd.f32 %v316, %v63
    %s318 = scalar_lea.vmem [#allocation5], 184
    %319 = vst [vmem:[%s318] sm:$0xff] %v317
    %s320 = scalar_lea.vmem %s0, 192
    %v321 = vld [vmem:[%s320] sm:$0xff]
    %323 = vset.pattern.permute.xlu0 0
    %324 = vperm.xlu0 %323, %v321
    %v325 = vpop.permute.xlu0 %324
    %v327 = vmul.f32 %v325, %v60
    %v328 = vadd.f32 %v327, %v63
    %s329 = scalar_lea.vmem [#allocation5], 192
    %330 = vst [vmem:[%s329] sm:$0xff] %v328
    %s331 = scalar_lea.vmem %s0, 200
    %v332 = vld [vmem:[%s331] sm:$0xff]
    %334 = vset.pattern.permute.xlu0 0
    %335 = vperm.xlu0 %334, %v332
    %v336 = vpop.permute.xlu0 %335
    %v338 = vmul.f32 %v336, %v60
    %v339 = vadd.f32 %v338, %v63
    %s340 = scalar_lea.vmem [#allocation5], 200
    %341 = vst [vmem:[%s340] sm:$0xff] %v339
    %s342 = scalar_lea.vmem %s0, 208
    %v343 = vld [vmem:[%s342] sm:$0xff]
    %345 = vset.pattern.permute.xlu0 0
    %346 = vperm.xlu0 %345, %v343
    %v347 = vpop.permute.xlu0 %346
    %v349 = vmul.f32 %v347, %v60
    %v350 = vadd.f32 %v349, %v63
    %s351 = scalar_lea.vmem [#allocation5], 208
    %352 = vst [vmem:[%s351] sm:$0xff] %v350
    %s353 = scalar_lea.vmem %s0, 216
    %v354 = vld [vmem:[%s353] sm:$0xff]
    %356 = vset.pattern.permute.xlu0 0
    %357 = vperm.xlu0 %356, %v354
    %v358 = vpop.permute.xlu0 %357
    %v360 = vmul.f32 %v358, %v60
    %v361 = vadd.f32 %v360, %v63
    %s362 = scalar_lea.vmem [#allocation5], 216
    %363 = vst [vmem:[%s362] sm:$0xff] %v361
    %s364 = scalar_lea.vmem %s0, 224
    %v365 = vld [vmem:[%s364] sm:$0xff]
    %367 = vset.pattern.permute.xlu0 0
    %368 = vperm.xlu0 %367, %v365
    %v369 = vpop.permute.xlu0 %368
    %v371 = vmul.f32 %v369, %v60
    %v372 = vadd.f32 %v371, %v63
    %s373 = scalar_lea.vmem [#allocation5], 224
    %374 = vst [vmem:[%s373] sm:$0xff] %v372
    %s375 = scalar_lea.vmem %s0, 232
    %v376 = vld [vmem:[%s375] sm:$0xff]
    %378 = vset.pattern.permute.xlu0 0
    %379 = vperm.xlu0 %378, %v376
    %v380 = vpop.permute.xlu0 %379
    %v382 = vmul.f32 %v380, %v60
    %v383 = vadd.f32 %v382, %v63
    %s384 = scalar_lea.vmem [#allocation5], 232
    %385 = vst [vmem:[%s384] sm:$0xff] %v383
    %s386 = scalar_lea.vmem %s0, 240
    %v387 = vld [vmem:[%s386] sm:$0xff]
    %389 = vset.pattern.permute.xlu0 0
    %390 = vperm.xlu0 %389, %v387
    %v391 = vpop.permute.xlu0 %390
    %v393 = vmul.f32 %v391, %v60
    %v394 = vadd.f32 %v393, %v63
    %s395 = scalar_lea.vmem [#allocation5], 240
    %396 = vst [vmem:[%s395] sm:$0xff] %v394
    %s397 = scalar_lea.vmem %s0, 248
    %v398 = vld [vmem:[%s397] sm:$0xff]
    %400 = vset.pattern.permute.xlu0 0
    %401 = vperm.xlu0 %400, %v398
    %v402 = vpop.permute.xlu0 %401
    %v404 = vmul.f32 %v402, %v60
    %v405 = vadd.f32 %v404, %v63
    %s406 = scalar_lea.vmem [#allocation5], 248
    %407 = vst [vmem:[%s406] sm:$0xff] %v405
    %v408 = vlaneseq
    %v409 = vand.u32 %v408, 127
    %v410 = vld [vmem:[#allocation2] sm:$0xff]
    %v411 = vld [vmem:[#allocation3] sm:$0xff]
    %v412 = vld [vmem:[#allocation4] sm:$0xff]
    %414 = vset.pattern.permute.xlu0 0
    %415 = vperm.xlu0 %414, %v412
    %v416 = vpop.permute.xlu0 %415
    %v418 = vperm.slane %v44, 0
    %v419 = vmul.f32 %v416, %v418
    %v420 = vadd.f32 %v419, %v410
    %v421 = vld [vmem:[#allocation5] sm:$0xff]
    %v422 = vadd.f32 %v420, %v421
    %v423 = vxor.u32 %v422, 2147483648
    %v424 = vmul.f32 %v423, 1.442695
    %v425 = vpow.pop %v424
    %v426 = vadd.f32 %v425, 1.0
    %v427 = vrcp.pop %v426
    %v428 = vmul.f32 %v426, %v427
    %v429 = vsub.f32 1.0, %v428
    %v430 = vmul.f32 %v427, %v429
    %v431 = vadd.f32 %v427, %v430
    %vm432 = vweird.f32 %v426
    %vm433 = vweird.f32 %v427
    %vm434 = vmor %vm432, %vm433
    %v435 = vsel %vm434, %v427, %v431
    %v436 = vand.u32 2147483647, %v426
    %vm437 = vcmp.eq.f32.partialorder %v436, 8.507059e+37
    %v438 = vand.u32 %v426, 2147483648
    %v439 = vor.u32 1.1754944e-38, %v438
    %v440 = vsel %vm437, %v439, %v435
    %v441 = vmul.f32 1.0, %v440
    %v442 = vmul.f32 %v441, 2.0
    %v443 = vsub.f32 %v442, 1.0
    %445 = vrot.lane.b32.xlu0 %v411, 32
    %v446 = vpop.permute.xlu0 %445
    %v448 = vmul.f32 %v441, %v446
    %450 = vrot.lane.b32.xlu0 %v443, 64
    %v451 = vpop.permute.xlu0 %450
    %v453 = vmul.f32 %v441, %v451
    %455 = vrot.lane.b32.xlu0 %v453, 32
    %v456 = vpop.permute.xlu0 %455
    %v458 = vadd.f32 %v448, %v456
    %v459 = vtanh.pop %v458
    %461 = vrot.lane.b32.xlu0 %v459, 64
    %v462 = vpop.permute.xlu0 %461
    %v464 = vmul.f32 %v441, %v462
    %v465 = vpack.c.bf16 %v464, %v464
    %467 = vrot.lane.b32.xlu0 %v465, 32
    %v468 = vpop.permute.xlu0 %467
    %v473 = vunpack.c.l.b16 %v46
    %v474 = vunpack.c.h.b16 %v46
    %v475 = vunpack.c.l.b16 %v47
    %v476 = vunpack.c.h.b16 %v47
    %v477 = vunpack.c.l.b16 %v48
    %v478 = vunpack.c.h.b16 %v48
    %v479 = vunpack.c.l.b16 %v49
    %v480 = vunpack.c.h.b16 %v49
    %v481 = vpack.c.b16 %v475, %v473
    %v482 = vpack.c.b16 %v476, %v474
    %v483 = vpack.c.b16 %v479, %v477
    %v484 = vpack.c.b16 %v480, %v478
    %vm489 = vcmask 261120
    %v491 = vsel %vm489, %v468, 0
    %493 = vmatpush.bf16.msra.mxu0 0
    %494 = vmatpush.bf16.msra.mxu0 0
    %495 = vmatpush.bf16.msra.mxu0 0
    %496 = vmatpush.bf16.msra.mxu0 0
    %497 = vmatpush.bf16.msra.mxu0 0
    %498 = vmatpush.bf16.msra.mxu0 0
    %499 = vmatpush.bf16.msra.mxu0 %v483
    %500 = vmatpush.bf16.msra.mxu0 %v481
    %501 = vmatmul.bf16.gmra.mxu0 %v491
    %v502 = vpop.f32.mrf.mxu0
    %v503 = vadd.f32 0.0, %v502
    %v504 = vpop.f32.mrf.mxu0
    %505 = vdwg.mxu0
    %506 = vmatpush.bf16.msra.mxu0 0
    %507 = vmatpush.bf16.msra.mxu0 0
    %508 = vmatpush.bf16.msra.mxu0 0
    %509 = vmatpush.bf16.msra.mxu0 0
    %510 = vmatpush.bf16.msra.mxu0 0
    %511 = vmatpush.bf16.msra.mxu0 0
    %512 = vmatpush.bf16.msra.mxu0 %v484
    %513 = vmatpush.bf16.msra.mxu0 %v482
    %514 = vmatmul.bf16.gmra.mxu0 %v491
    %v515 = vpop.f32.mrf.mxu0
    %v516 = vadd.f32 0.0, %v515
    %v517 = vpop.f32.mrf.mxu0
    %518 = vdwg.mxu0
    %v519 = vstv %s52
    %v520 = vadd.f32 %v503, %v519
    %v521 = vstv %s53
    %v522 = vadd.f32 %v503, %v521
    %s523 = scalar_select %p34, 1, 0
    %v524 = vstv %s523
    %vm525 = vcmp.eq.s32.totalorder %v524, 1
    %v526 = vsel %vm525, 1.0, %v520
    %v527 = vsel %vm525, 1.0, %v522
    %v528 = vsel %vm525, 0.0, %v458
    %v529 = vsel %vm525, 0.0, %v516
    %v530 = vld [vmem:[%s0] sm:$0xff]
    %v531 = vstv %s50
    %v532 = vmul.f32 %v531, %v530
    %v533 = vstv %s51
    %v534 = vadd.f32 %v532, %v533
    %v535 = vmul.f32 %v526, %v534
    %v536 = vand.u32 2147483647, %v535
    %v537 = vsub.f32 0.0, %v536
    %v538 = vmul.f32 %v537, 1.442695
    %v539 = vpow.pop %v538
    %v540 = vadd.f32 %v539, 1.0
    %v541 = vrcp.pop %v540
    %vm542 = vcmp.ge.f32.partialorder %v535, 0.0
    %v543 = vsub.f32 1.0, %v541
    %v544 = vsel %vm542, %v541, %v543
    %v545 = vmax.f32 %v535, 0.0
    %v546 = vlog2.pop %v540
    %v547 = vmul.f32 %v546, 0.6931472
    %v548 = vadd.f32 %v545, %v547
    %v549 = vrcp.pop %v526
    %v550 = vmul.f32 %v549, %v548
    %v551 = vsub.f32 1.0, %v527
    %553 = vrot.lane.b32.xlu0 %v550, 1
    %v554 = vpop.permute.xlu0 %553
    %v556 = vmul.f32 %v551, %v554
    %558 = vrot.lane.b32.xlu0 %v544, 1
    %v559 = vpop.permute.xlu0 %558
    %v561 = vmul.f32 %v527, %v559
    %v562 = vadd.f32 %v556, %v561
    %vm563 = vcmp.eq.s32.totalorder %v409, 0
    %vm564 = vcmp.eq.s32.totalorder %v409, 1
    %566 = vset.pattern.permute.xlu0 0
    %567 = vperm.xlu0 %566, %v526
    %v568 = vpop.permute.xlu0 %567
    %571 = vset.pattern.permute.xlu0 1
    %572 = vperm.xlu0 %571, %v527
    %v573 = vpop.permute.xlu0 %572
    %v575 = vsel %vm564, %v568, %v573
    %577 = vset.pattern.permute.xlu0 1
    %578 = vperm.xlu0 %577, %v562
    %v579 = vpop.permute.xlu0 %578
    %v581 = vsel %vm563, %v579, %v575
    %vm582 = vcmask 23552
    %583 = vst.msk [vmem:[%s5] sm:$0xff] %vm582, %v581
    %v584 = vmul.f32 %v579, %v418
    %v585 = vadd.f32 %v584, %v529
    %v586 = vld [vmem:[%s76] sm:$0xff]
    %v587 = vadd.f32 %v585, %v586
    %v588 = vxor.u32 %v587, 2147483648
    %v589 = vmul.f32 %v588, 1.442695
    %v590 = vpow.pop %v589
    %v591 = vadd.f32 %v590, 1.0
    %v592 = vrcp.pop %v591
    %v593 = vmul.f32 %v591, %v592
    %v594 = vsub.f32 1.0, %v593
    %v595 = vmul.f32 %v592, %v594
    %v596 = vadd.f32 %v592, %v595
    %vm597 = vweird.f32 %v591
    %vm598 = vweird.f32 %v592
    %vm599 = vmor %vm597, %vm598
    %v600 = vsel %vm599, %v592, %v596
    %v601 = vand.u32 2147483647, %v591
    %vm602 = vcmp.eq.f32.partialorder %v601, 8.507059e+37
    %v603 = vand.u32 %v591, 2147483648
    %v604 = vor.u32 1.1754944e-38, %v603
    %v605 = vsel %vm602, %v604, %v600
    %v606 = vmul.f32 1.0, %v605
    %v607 = vmul.f32 %v606, 2.0
    %v608 = vsub.f32 %v607, 1.0
    %v609 = vmul.f32 %v606, %v528
    %611 = vrot.lane.b32.xlu0 %v608, 64
    %v612 = vpop.permute.xlu0 %611
    %v614 = vmul.f32 %v606, %v612
    %616 = vrot.lane.b32.xlu0 %v614, 32
    %v617 = vpop.permute.xlu0 %616
    %v619 = vadd.f32 %v609, %v617
    %v620 = vtanh.pop %v619
    %622 = vrot.lane.b32.xlu0 %v620, 64
    %v623 = vpop.permute.xlu0 %622
    %v625 = vmul.f32 %v606, %v623
    %v626 = vpack.c.bf16 %v625, %v625
    %628 = vrot.lane.b32.xlu0 %v626, 32
    %v629 = vpop.permute.xlu0 %628
    %v631 = vsel %vm489, %v629, 0
    %633 = vmatpush.bf16.msra.mxu0 0
    %634 = vmatpush.bf16.msra.mxu0 0
    %635 = vmatpush.bf16.msra.mxu0 0
    %636 = vmatpush.bf16.msra.mxu0 0
    %637 = vmatpush.bf16.msra.mxu0 0
    %638 = vmatpush.bf16.msra.mxu0 0
    %639 = vmatpush.bf16.msra.mxu0 %v483
    %640 = vmatpush.bf16.msra.mxu0 %v481
    %641 = vmatmul.bf16.gmra.mxu0 %v631
    %v642 = vpop.f32.mrf.mxu0
    %v643 = vadd.f32 0.0, %v642
    %v644 = vpop.f32.mrf.mxu0
    %645 = vdwg.mxu0
    %646 = vmatpush.bf16.msra.mxu0 0
    %647 = vmatpush.bf16.msra.mxu0 0
    %648 = vmatpush.bf16.msra.mxu0 0
    %649 = vmatpush.bf16.msra.mxu0 0
    %650 = vmatpush.bf16.msra.mxu0 0
    %651 = vmatpush.bf16.msra.mxu0 0
    %652 = vmatpush.bf16.msra.mxu0 %v484
    %653 = vmatpush.bf16.msra.mxu0 %v482
    %654 = vmatmul.bf16.gmra.mxu0 %v631
    %v655 = vpop.f32.mrf.mxu0
    %v656 = vadd.f32 0.0, %v655
    %v657 = vpop.f32.mrf.mxu0
    %658 = vdwg.mxu0
    %v659 = vadd.f32 %v643, %v519
    %v660 = vadd.f32 %v643, %v521
    %v661 = vld [vmem:[%s67] sm:$0xff]
    %v662 = vmul.f32 %v531, %v661
    %v663 = vadd.f32 %v662, %v533
    %v664 = vmul.f32 %v659, %v663
    %v665 = vand.u32 2147483647, %v664
    %v666 = vsub.f32 0.0, %v665
    %v667 = vmul.f32 %v666, 1.442695
    %v668 = vpow.pop %v667
    %v669 = vadd.f32 %v668, 1.0
    %v670 = vrcp.pop %v669
    %vm671 = vcmp.ge.f32.partialorder %v664, 0.0
    %v672 = vsub.f32 1.0, %v670
    %v673 = vsel %vm671, %v670, %v672
    %v674 = vmax.f32 %v664, 0.0
    %v675 = vlog2.pop %v669
    %v676 = vmul.f32 %v675, 0.6931472
    %v677 = vadd.f32 %v674, %v676
    %v678 = vrcp.pop %v659
    %v679 = vmul.f32 %v678, %v677
    %v680 = vsub.f32 1.0, %v660
    %682 = vrot.lane.b32.xlu0 %v679, 1
    %v683 = vpop.permute.xlu0 %682
    %v685 = vmul.f32 %v680, %v683
    %687 = vrot.lane.b32.xlu0 %v673, 1
    %v688 = vpop.permute.xlu0 %687
    %v690 = vmul.f32 %v660, %v688
    %v691 = vadd.f32 %v685, %v690
    %693 = vset.pattern.permute.xlu0 0
    %694 = vperm.xlu0 %693, %v659
    %v695 = vpop.permute.xlu0 %694
    %698 = vset.pattern.permute.xlu0 1
    %699 = vperm.xlu0 %698, %v660
    %v700 = vpop.permute.xlu0 %699
    %v702 = vsel %vm564, %v695, %v700
    %704 = vset.pattern.permute.xlu0 1
    %705 = vperm.xlu0 %704, %v691
    %v706 = vpop.permute.xlu0 %705
    %v708 = vsel %vm563, %v706, %v702
    %s709 = scalar_lea.vmem %s5, 8
    %710 = vst.msk [vmem:[%s709] sm:$0xff] %vm582, %v708
    %v711 = vmul.f32 %v706, %v418
    %v712 = vadd.f32 %v711, %v656
    %v713 = vld [vmem:[%s87] sm:$0xff]
    %v714 = vadd.f32 %v712, %v713
    %v715 = vxor.u32 %v714, 2147483648
    %v716 = vmul.f32 %v715, 1.442695
    %v717 = vpow.pop %v716
    %v718 = vadd.f32 %v717, 1.0
    %v719 = vrcp.pop %v718
    %v720 = vmul.f32 %v718, %v719
    %v721 = vsub.f32 1.0, %v720
    %v722 = vmul.f32 %v719, %v721
    %v723 = vadd.f32 %v719, %v722
    %vm724 = vweird.f32 %v718
    %vm725 = vweird.f32 %v719
    %vm726 = vmor %vm724, %vm725
    %v727 = vsel %vm726, %v719, %v723
    %v728 = vand.u32 2147483647, %v718
    %vm729 = vcmp.eq.f32.partialorder %v728, 8.507059e+37
    %v730 = vand.u32 %v718, 2147483648
    %v731 = vor.u32 1.1754944e-38, %v730
    %v732 = vsel %vm729, %v731, %v727
    %v733 = vmul.f32 1.0, %v732
    %v734 = vmul.f32 %v733, 2.0
    %v735 = vsub.f32 %v734, 1.0
    %v736 = vmul.f32 %v733, %v619
    %738 = vrot.lane.b32.xlu0 %v735, 64
    %v739 = vpop.permute.xlu0 %738
    %v741 = vmul.f32 %v733, %v739
    %743 = vrot.lane.b32.xlu0 %v741, 32
    %v744 = vpop.permute.xlu0 %743
    %v746 = vadd.f32 %v736, %v744
    %v747 = vtanh.pop %v746
    %749 = vrot.lane.b32.xlu0 %v747, 64
    %v750 = vpop.permute.xlu0 %749
    %v752 = vmul.f32 %v733, %v750
    %v753 = vpack.c.bf16 %v752, %v752
    %755 = vrot.lane.b32.xlu0 %v753, 32
    %v756 = vpop.permute.xlu0 %755
    %v758 = vsel %vm489, %v756, 0
    %760 = vmatpush.bf16.msra.mxu0 0
    %761 = vmatpush.bf16.msra.mxu0 0
    %762 = vmatpush.bf16.msra.mxu0 0
    %763 = vmatpush.bf16.msra.mxu0 0
    %764 = vmatpush.bf16.msra.mxu0 0
    %765 = vmatpush.bf16.msra.mxu0 0
    %766 = vmatpush.bf16.msra.mxu0 %v483
    %767 = vmatpush.bf16.msra.mxu0 %v481
    %768 = vmatmul.bf16.gmra.mxu0 %v758
    %v769 = vpop.f32.mrf.mxu0
    %v770 = vadd.f32 0.0, %v769
    %v771 = vpop.f32.mrf.mxu0
    %772 = vdwg.mxu0
    %773 = vmatpush.bf16.msra.mxu0 0
    %774 = vmatpush.bf16.msra.mxu0 0
    %775 = vmatpush.bf16.msra.mxu0 0
    %776 = vmatpush.bf16.msra.mxu0 0
    %777 = vmatpush.bf16.msra.mxu0 0
    %778 = vmatpush.bf16.msra.mxu0 0
    %779 = vmatpush.bf16.msra.mxu0 %v484
    %780 = vmatpush.bf16.msra.mxu0 %v482
    %781 = vmatmul.bf16.gmra.mxu0 %v758
    %v782 = vpop.f32.mrf.mxu0
    %v783 = vadd.f32 0.0, %v782
    %v784 = vpop.f32.mrf.mxu0
    %785 = vdwg.mxu0
    %v786 = vadd.f32 %v770, %v519
    %v787 = vadd.f32 %v770, %v521
    %v788 = vld [vmem:[%s78] sm:$0xff]
    %v789 = vmul.f32 %v531, %v788
    %v790 = vadd.f32 %v789, %v533
    %v791 = vmul.f32 %v786, %v790
    %v792 = vand.u32 2147483647, %v791
    %v793 = vsub.f32 0.0, %v792
    %v794 = vmul.f32 %v793, 1.442695
    %v795 = vpow.pop %v794
    %v796 = vadd.f32 %v795, 1.0
    %v797 = vrcp.pop %v796
    %vm798 = vcmp.ge.f32.partialorder %v791, 0.0
    %v799 = vsub.f32 1.0, %v797
    %v800 = vsel %vm798, %v797, %v799
    %v801 = vmax.f32 %v791, 0.0
    %v802 = vlog2.pop %v796
    %v803 = vmul.f32 %v802, 0.6931472
    %v804 = vadd.f32 %v801, %v803
    %v805 = vrcp.pop %v786
    %v806 = vmul.f32 %v805, %v804
    %v807 = vsub.f32 1.0, %v787
    %809 = vrot.lane.b32.xlu0 %v806, 1
    %v810 = vpop.permute.xlu0 %809
    %v812 = vmul.f32 %v807, %v810
    %814 = vrot.lane.b32.xlu0 %v800, 1
    %v815 = vpop.permute.xlu0 %814
    %v817 = vmul.f32 %v787, %v815
    %v818 = vadd.f32 %v812, %v817
    %820 = vset.pattern.permute.xlu0 0
    %821 = vperm.xlu0 %820, %v786
    %v822 = vpop.permute.xlu0 %821
    %825 = vset.pattern.permute.xlu0 1
    %826 = vperm.xlu0 %825, %v787
    %v827 = vpop.permute.xlu0 %826
    %v829 = vsel %vm564, %v822, %v827
    %831 = vset.pattern.permute.xlu0 1
    %832 = vperm.xlu0 %831, %v818
    %v833 = vpop.permute.xlu0 %832
    %v835 = vsel %vm563, %v833, %v829
    %s836 = scalar_lea.vmem %s5, 16
    %837 = vst.msk [vmem:[%s836] sm:$0xff] %vm582, %v835
    %v838 = vmul.f32 %v833, %v418
    %v839 = vadd.f32 %v838, %v783
    %v840 = vld [vmem:[%s98] sm:$0xff]
    %v841 = vadd.f32 %v839, %v840
    %v842 = vxor.u32 %v841, 2147483648
    %v843 = vmul.f32 %v842, 1.442695
    %v844 = vpow.pop %v843
    %v845 = vadd.f32 %v844, 1.0
    %v846 = vrcp.pop %v845
    %v847 = vmul.f32 %v845, %v846
    %v848 = vsub.f32 1.0, %v847
    %v849 = vmul.f32 %v846, %v848
    %v850 = vadd.f32 %v846, %v849
    %vm851 = vweird.f32 %v845
    %vm852 = vweird.f32 %v846
    %vm853 = vmor %vm851, %vm852
    %v854 = vsel %vm853, %v846, %v850
    %v855 = vand.u32 2147483647, %v845
    %vm856 = vcmp.eq.f32.partialorder %v855, 8.507059e+37
    %v857 = vand.u32 %v845, 2147483648
    %v858 = vor.u32 1.1754944e-38, %v857
    %v859 = vsel %vm856, %v858, %v854
    %v860 = vmul.f32 1.0, %v859
    %v861 = vmul.f32 %v860, 2.0
    %v862 = vsub.f32 %v861, 1.0
    %v863 = vmul.f32 %v860, %v746
    %865 = vrot.lane.b32.xlu0 %v862, 64
    %v866 = vpop.permute.xlu0 %865
    %v868 = vmul.f32 %v860, %v866
    %870 = vrot.lane.b32.xlu0 %v868, 32
    %v871 = vpop.permute.xlu0 %870
    %v873 = vadd.f32 %v863, %v871
    %v874 = vtanh.pop %v873
    %876 = vrot.lane.b32.xlu0 %v874, 64
    %v877 = vpop.permute.xlu0 %876
    %v879 = vmul.f32 %v860, %v877
    %v880 = vpack.c.bf16 %v879, %v879
    %882 = vrot.lane.b32.xlu0 %v880, 32
    %v883 = vpop.permute.xlu0 %882
    %v885 = vsel %vm489, %v883, 0
    %887 = vmatpush.bf16.msra.mxu0 0
    %888 = vmatpush.bf16.msra.mxu0 0
    %889 = vmatpush.bf16.msra.mxu0 0
    %890 = vmatpush.bf16.msra.mxu0 0
    %891 = vmatpush.bf16.msra.mxu0 0
    %892 = vmatpush.bf16.msra.mxu0 0
    %893 = vmatpush.bf16.msra.mxu0 %v483
    %894 = vmatpush.bf16.msra.mxu0 %v481
    %895 = vmatmul.bf16.gmra.mxu0 %v885
    %v896 = vpop.f32.mrf.mxu0
    %v897 = vadd.f32 0.0, %v896
    %v898 = vpop.f32.mrf.mxu0
    %899 = vdwg.mxu0
    %900 = vmatpush.bf16.msra.mxu0 0
    %901 = vmatpush.bf16.msra.mxu0 0
    %902 = vmatpush.bf16.msra.mxu0 0
    %903 = vmatpush.bf16.msra.mxu0 0
    %904 = vmatpush.bf16.msra.mxu0 0
    %905 = vmatpush.bf16.msra.mxu0 0
    %906 = vmatpush.bf16.msra.mxu0 %v484
    %907 = vmatpush.bf16.msra.mxu0 %v482
    %908 = vmatmul.bf16.gmra.mxu0 %v885
    %v909 = vpop.f32.mrf.mxu0
    %v910 = vadd.f32 0.0, %v909
    %v911 = vpop.f32.mrf.mxu0
    %912 = vdwg.mxu0
    %v913 = vadd.f32 %v897, %v519
    %v914 = vadd.f32 %v897, %v521
    %v915 = vld [vmem:[%s89] sm:$0xff]
    %v916 = vmul.f32 %v531, %v915
    %v917 = vadd.f32 %v916, %v533
    %v918 = vmul.f32 %v913, %v917
    %v919 = vand.u32 2147483647, %v918
    %v920 = vsub.f32 0.0, %v919
    %v921 = vmul.f32 %v920, 1.442695
    %v922 = vpow.pop %v921
    %v923 = vadd.f32 %v922, 1.0
    %v924 = vrcp.pop %v923
    %vm925 = vcmp.ge.f32.partialorder %v918, 0.0
    %v926 = vsub.f32 1.0, %v924
    %v927 = vsel %vm925, %v924, %v926
    %v928 = vmax.f32 %v918, 0.0
    %v929 = vlog2.pop %v923
    %v930 = vmul.f32 %v929, 0.6931472
    %v931 = vadd.f32 %v928, %v930
    %v932 = vrcp.pop %v913
    %v933 = vmul.f32 %v932, %v931
    %v934 = vsub.f32 1.0, %v914
    %936 = vrot.lane.b32.xlu0 %v933, 1
    %v937 = vpop.permute.xlu0 %936
    %v939 = vmul.f32 %v934, %v937
    %941 = vrot.lane.b32.xlu0 %v927, 1
    %v942 = vpop.permute.xlu0 %941
    %v944 = vmul.f32 %v914, %v942
    %v945 = vadd.f32 %v939, %v944
    %947 = vset.pattern.permute.xlu0 0
    %948 = vperm.xlu0 %947, %v913
    %v949 = vpop.permute.xlu0 %948
    %952 = vset.pattern.permute.xlu0 1
    %953 = vperm.xlu0 %952, %v914
    %v954 = vpop.permute.xlu0 %953
    %v956 = vsel %vm564, %v949, %v954
    %958 = vset.pattern.permute.xlu0 1
    %959 = vperm.xlu0 %958, %v945
    %v960 = vpop.permute.xlu0 %959
    %v962 = vsel %vm563, %v960, %v956
    %s963 = scalar_lea.vmem %s5, 24
    %964 = vst.msk [vmem:[%s963] sm:$0xff] %vm582, %v962
    %v965 = vmul.f32 %v960, %v418
    %v966 = vadd.f32 %v965, %v910
    %v967 = vld [vmem:[%s109] sm:$0xff]
    %v968 = vadd.f32 %v966, %v967
    %v969 = vxor.u32 %v968, 2147483648
    %v970 = vmul.f32 %v969, 1.442695
    %v971 = vpow.pop %v970
    %v972 = vadd.f32 %v971, 1.0
    %v973 = vrcp.pop %v972
    %v974 = vmul.f32 %v972, %v973
    %v975 = vsub.f32 1.0, %v974
    %v976 = vmul.f32 %v973, %v975
    %v977 = vadd.f32 %v973, %v976
    %vm978 = vweird.f32 %v972
    %vm979 = vweird.f32 %v973
    %vm980 = vmor %vm978, %vm979
    %v981 = vsel %vm980, %v973, %v977
    %v982 = vand.u32 2147483647, %v972
    %vm983 = vcmp.eq.f32.partialorder %v982, 8.507059e+37
    %v984 = vand.u32 %v972, 2147483648
    %v985 = vor.u32 1.1754944e-38, %v984
    %v986 = vsel %vm983, %v985, %v981
    %v987 = vmul.f32 1.0, %v986
    %v988 = vmul.f32 %v987, 2.0
    %v989 = vsub.f32 %v988, 1.0
    %v990 = vmul.f32 %v987, %v873
    %992 = vrot.lane.b32.xlu0 %v989, 64
    %v993 = vpop.permute.xlu0 %992
    %v995 = vmul.f32 %v987, %v993
    %997 = vrot.lane.b32.xlu0 %v995, 32
    %v998 = vpop.permute.xlu0 %997
    %v1000 = vadd.f32 %v990, %v998
    %v1001 = vtanh.pop %v1000
    %1003 = vrot.lane.b32.xlu0 %v1001, 64
    %v1004 = vpop.permute.xlu0 %1003
    %v1006 = vmul.f32 %v987, %v1004
    %v1007 = vpack.c.bf16 %v1006, %v1006
    %1009 = vrot.lane.b32.xlu0 %v1007, 32
    %v1010 = vpop.permute.xlu0 %1009
    %v1012 = vsel %vm489, %v1010, 0
    %1014 = vmatpush.bf16.msra.mxu0 0
    %1015 = vmatpush.bf16.msra.mxu0 0
    %1016 = vmatpush.bf16.msra.mxu0 0
    %1017 = vmatpush.bf16.msra.mxu0 0
    %1018 = vmatpush.bf16.msra.mxu0 0
    %1019 = vmatpush.bf16.msra.mxu0 0
    %1020 = vmatpush.bf16.msra.mxu0 %v483
    %1021 = vmatpush.bf16.msra.mxu0 %v481
    %1022 = vmatmul.bf16.gmra.mxu0 %v1012
    %v1023 = vpop.f32.mrf.mxu0
    %v1024 = vadd.f32 0.0, %v1023
    %v1025 = vpop.f32.mrf.mxu0
    %1026 = vdwg.mxu0
    %1027 = vmatpush.bf16.msra.mxu0 0
    %1028 = vmatpush.bf16.msra.mxu0 0
    %1029 = vmatpush.bf16.msra.mxu0 0
    %1030 = vmatpush.bf16.msra.mxu0 0
    %1031 = vmatpush.bf16.msra.mxu0 0
    %1032 = vmatpush.bf16.msra.mxu0 0
    %1033 = vmatpush.bf16.msra.mxu0 %v484
    %1034 = vmatpush.bf16.msra.mxu0 %v482
    %1035 = vmatmul.bf16.gmra.mxu0 %v1012
    %v1036 = vpop.f32.mrf.mxu0
    %v1037 = vadd.f32 0.0, %v1036
    %v1038 = vpop.f32.mrf.mxu0
    %1039 = vdwg.mxu0
    %v1040 = vadd.f32 %v1024, %v519
    %v1041 = vadd.f32 %v1024, %v521
    %v1042 = vld [vmem:[%s100] sm:$0xff]
    %v1043 = vmul.f32 %v531, %v1042
    %v1044 = vadd.f32 %v1043, %v533
    %v1045 = vmul.f32 %v1040, %v1044
    %v1046 = vand.u32 2147483647, %v1045
    %v1047 = vsub.f32 0.0, %v1046
    %v1048 = vmul.f32 %v1047, 1.442695
    %v1049 = vpow.pop %v1048
    %v1050 = vadd.f32 %v1049, 1.0
    %v1051 = vrcp.pop %v1050
    %vm1052 = vcmp.ge.f32.partialorder %v1045, 0.0
    %v1053 = vsub.f32 1.0, %v1051
    %v1054 = vsel %vm1052, %v1051, %v1053
    %v1055 = vmax.f32 %v1045, 0.0
    %v1056 = vlog2.pop %v1050
    %v1057 = vmul.f32 %v1056, 0.6931472
    %v1058 = vadd.f32 %v1055, %v1057
    %v1059 = vrcp.pop %v1040
    %v1060 = vmul.f32 %v1059, %v1058
    %v1061 = vsub.f32 1.0, %v1041
    %1063 = vrot.lane.b32.xlu0 %v1060, 1
    %v1064 = vpop.permute.xlu0 %1063
    %v1066 = vmul.f32 %v1061, %v1064
    %1068 = vrot.lane.b32.xlu0 %v1054, 1
    %v1069 = vpop.permute.xlu0 %1068
    %v1071 = vmul.f32 %v1041, %v1069
    %v1072 = vadd.f32 %v1066, %v1071
    %1074 = vset.pattern.permute.xlu0 0
    %1075 = vperm.xlu0 %1074, %v1040
    %v1076 = vpop.permute.xlu0 %1075
    %1079 = vset.pattern.permute.xlu0 1
    %1080 = vperm.xlu0 %1079, %v1041
    %v1081 = vpop.permute.xlu0 %1080
    %v1083 = vsel %vm564, %v1076, %v1081
    %1085 = vset.pattern.permute.xlu0 1
    %1086 = vperm.xlu0 %1085, %v1072
    %v1087 = vpop.permute.xlu0 %1086
    %v1089 = vsel %vm563, %v1087, %v1083
    %s1090 = scalar_lea.vmem %s5, 32
    %1091 = vst.msk [vmem:[%s1090] sm:$0xff] %vm582, %v1089
    %v1092 = vmul.f32 %v1087, %v418
    %v1093 = vadd.f32 %v1092, %v1037
    %v1094 = vld [vmem:[%s120] sm:$0xff]
    %v1095 = vadd.f32 %v1093, %v1094
    %v1096 = vxor.u32 %v1095, 2147483648
    %v1097 = vmul.f32 %v1096, 1.442695
    %v1098 = vpow.pop %v1097
    %v1099 = vadd.f32 %v1098, 1.0
    %v1100 = vrcp.pop %v1099
    %v1101 = vmul.f32 %v1099, %v1100
    %v1102 = vsub.f32 1.0, %v1101
    %v1103 = vmul.f32 %v1100, %v1102
    %v1104 = vadd.f32 %v1100, %v1103
    %vm1105 = vweird.f32 %v1099
    %vm1106 = vweird.f32 %v1100
    %vm1107 = vmor %vm1105, %vm1106
    %v1108 = vsel %vm1107, %v1100, %v1104
    %v1109 = vand.u32 2147483647, %v1099
    %vm1110 = vcmp.eq.f32.partialorder %v1109, 8.507059e+37
    %v1111 = vand.u32 %v1099, 2147483648
    %v1112 = vor.u32 1.1754944e-38, %v1111
    %v1113 = vsel %vm1110, %v1112, %v1108
    %v1114 = vmul.f32 1.0, %v1113
    %v1115 = vmul.f32 %v1114, 2.0
    %v1116 = vsub.f32 %v1115, 1.0
    %v1117 = vmul.f32 %v1114, %v1000
    %1119 = vrot.lane.b32.xlu0 %v1116, 64
    %v1120 = vpop.permute.xlu0 %1119
    %v1122 = vmul.f32 %v1114, %v1120
    %1124 = vrot.lane.b32.xlu0 %v1122, 32
    %v1125 = vpop.permute.xlu0 %1124
    %v1127 = vadd.f32 %v1117, %v1125
    %v1128 = vtanh.pop %v1127
    %1130 = vrot.lane.b32.xlu0 %v1128, 64
    %v1131 = vpop.permute.xlu0 %1130
    %v1133 = vmul.f32 %v1114, %v1131
    %v1134 = vpack.c.bf16 %v1133, %v1133
    %1136 = vrot.lane.b32.xlu0 %v1134, 32
    %v1137 = vpop.permute.xlu0 %1136
    %v1139 = vsel %vm489, %v1137, 0
    %1141 = vmatpush.bf16.msra.mxu0 0
    %1142 = vmatpush.bf16.msra.mxu0 0
    %1143 = vmatpush.bf16.msra.mxu0 0
    %1144 = vmatpush.bf16.msra.mxu0 0
    %1145 = vmatpush.bf16.msra.mxu0 0
    %1146 = vmatpush.bf16.msra.mxu0 0
    %1147 = vmatpush.bf16.msra.mxu0 %v483
    %1148 = vmatpush.bf16.msra.mxu0 %v481
    %1149 = vmatmul.bf16.gmra.mxu0 %v1139
    %v1150 = vpop.f32.mrf.mxu0
    %v1151 = vadd.f32 0.0, %v1150
    %v1152 = vpop.f32.mrf.mxu0
    %1153 = vdwg.mxu0
    %1154 = vmatpush.bf16.msra.mxu0 0
    %1155 = vmatpush.bf16.msra.mxu0 0
    %1156 = vmatpush.bf16.msra.mxu0 0
    %1157 = vmatpush.bf16.msra.mxu0 0
    %1158 = vmatpush.bf16.msra.mxu0 0
    %1159 = vmatpush.bf16.msra.mxu0 0
    %1160 = vmatpush.bf16.msra.mxu0 %v484
    %1161 = vmatpush.bf16.msra.mxu0 %v482
    %1162 = vmatmul.bf16.gmra.mxu0 %v1139
    %v1163 = vpop.f32.mrf.mxu0
    %v1164 = vadd.f32 0.0, %v1163
    %v1165 = vpop.f32.mrf.mxu0
    %1166 = vdwg.mxu0
    %v1167 = vadd.f32 %v1151, %v519
    %v1168 = vadd.f32 %v1151, %v521
    %v1169 = vld [vmem:[%s111] sm:$0xff]
    %v1170 = vmul.f32 %v531, %v1169
    %v1171 = vadd.f32 %v1170, %v533
    %v1172 = vmul.f32 %v1167, %v1171
    %v1173 = vand.u32 2147483647, %v1172
    %v1174 = vsub.f32 0.0, %v1173
    %v1175 = vmul.f32 %v1174, 1.442695
    %v1176 = vpow.pop %v1175
    %v1177 = vadd.f32 %v1176, 1.0
    %v1178 = vrcp.pop %v1177
    %vm1179 = vcmp.ge.f32.partialorder %v1172, 0.0
    %v1180 = vsub.f32 1.0, %v1178
    %v1181 = vsel %vm1179, %v1178, %v1180
    %v1182 = vmax.f32 %v1172, 0.0
    %v1183 = vlog2.pop %v1177
    %v1184 = vmul.f32 %v1183, 0.6931472
    %v1185 = vadd.f32 %v1182, %v1184
    %v1186 = vrcp.pop %v1167
    %v1187 = vmul.f32 %v1186, %v1185
    %v1188 = vsub.f32 1.0, %v1168
    %1190 = vrot.lane.b32.xlu0 %v1187, 1
    %v1191 = vpop.permute.xlu0 %1190
    %v1193 = vmul.f32 %v1188, %v1191
    %1195 = vrot.lane.b32.xlu0 %v1181, 1
    %v1196 = vpop.permute.xlu0 %1195
    %v1198 = vmul.f32 %v1168, %v1196
    %v1199 = vadd.f32 %v1193, %v1198
    %1201 = vset.pattern.permute.xlu0 0
    %1202 = vperm.xlu0 %1201, %v1167
    %v1203 = vpop.permute.xlu0 %1202
    %1206 = vset.pattern.permute.xlu0 1
    %1207 = vperm.xlu0 %1206, %v1168
    %v1208 = vpop.permute.xlu0 %1207
    %v1210 = vsel %vm564, %v1203, %v1208
    %1212 = vset.pattern.permute.xlu0 1
    %1213 = vperm.xlu0 %1212, %v1199
    %v1214 = vpop.permute.xlu0 %1213
    %v1216 = vsel %vm563, %v1214, %v1210
    %s1217 = scalar_lea.vmem %s5, 40
    %1218 = vst.msk [vmem:[%s1217] sm:$0xff] %vm582, %v1216
    %v1219 = vmul.f32 %v1214, %v418
    %v1220 = vadd.f32 %v1219, %v1164
    %v1221 = vld [vmem:[%s131] sm:$0xff]
    %v1222 = vadd.f32 %v1220, %v1221
    %v1223 = vxor.u32 %v1222, 2147483648
    %v1224 = vmul.f32 %v1223, 1.442695
    %v1225 = vpow.pop %v1224
    %v1226 = vadd.f32 %v1225, 1.0
    %v1227 = vrcp.pop %v1226
    %v1228 = vmul.f32 %v1226, %v1227
    %v1229 = vsub.f32 1.0, %v1228
    %v1230 = vmul.f32 %v1227, %v1229
    %v1231 = vadd.f32 %v1227, %v1230
    %vm1232 = vweird.f32 %v1226
    %vm1233 = vweird.f32 %v1227
    %vm1234 = vmor %vm1232, %vm1233
    %v1235 = vsel %vm1234, %v1227, %v1231
    %v1236 = vand.u32 2147483647, %v1226
    %vm1237 = vcmp.eq.f32.partialorder %v1236, 8.507059e+37
    %v1238 = vand.u32 %v1226, 2147483648
    %v1239 = vor.u32 1.1754944e-38, %v1238
    %v1240 = vsel %vm1237, %v1239, %v1235
    %v1241 = vmul.f32 1.0, %v1240
    %v1242 = vmul.f32 %v1241, 2.0
    %v1243 = vsub.f32 %v1242, 1.0
    %v1244 = vmul.f32 %v1241, %v1127
    %1246 = vrot.lane.b32.xlu0 %v1243, 64
    %v1247 = vpop.permute.xlu0 %1246
    %v1249 = vmul.f32 %v1241, %v1247
    %1251 = vrot.lane.b32.xlu0 %v1249, 32
    %v1252 = vpop.permute.xlu0 %1251
    %v1254 = vadd.f32 %v1244, %v1252
    %v1255 = vtanh.pop %v1254
    %1257 = vrot.lane.b32.xlu0 %v1255, 64
    %v1258 = vpop.permute.xlu0 %1257
    %v1260 = vmul.f32 %v1241, %v1258
    %v1261 = vpack.c.bf16 %v1260, %v1260
    %1263 = vrot.lane.b32.xlu0 %v1261, 32
    %v1264 = vpop.permute.xlu0 %1263
    %v1266 = vsel %vm489, %v1264, 0
    %1268 = vmatpush.bf16.msra.mxu0 0
    %1269 = vmatpush.bf16.msra.mxu0 0
    %1270 = vmatpush.bf16.msra.mxu0 0
    %1271 = vmatpush.bf16.msra.mxu0 0
    %1272 = vmatpush.bf16.msra.mxu0 0
    %1273 = vmatpush.bf16.msra.mxu0 0
    %1274 = vmatpush.bf16.msra.mxu0 %v483
    %1275 = vmatpush.bf16.msra.mxu0 %v481
    %1276 = vmatmul.bf16.gmra.mxu0 %v1266
    %v1277 = vpop.f32.mrf.mxu0
    %v1278 = vadd.f32 0.0, %v1277
    %v1279 = vpop.f32.mrf.mxu0
    %1280 = vdwg.mxu0
    %1281 = vmatpush.bf16.msra.mxu0 0
    %1282 = vmatpush.bf16.msra.mxu0 0
    %1283 = vmatpush.bf16.msra.mxu0 0
    %1284 = vmatpush.bf16.msra.mxu0 0
    %1285 = vmatpush.bf16.msra.mxu0 0
    %1286 = vmatpush.bf16.msra.mxu0 0
    %1287 = vmatpush.bf16.msra.mxu0 %v484
    %1288 = vmatpush.bf16.msra.mxu0 %v482
    %1289 = vmatmul.bf16.gmra.mxu0 %v1266
    %v1290 = vpop.f32.mrf.mxu0
    %v1291 = vadd.f32 0.0, %v1290
    %v1292 = vpop.f32.mrf.mxu0
    %1293 = vdwg.mxu0
    %v1294 = vadd.f32 %v1278, %v519
    %v1295 = vadd.f32 %v1278, %v521
    %v1296 = vld [vmem:[%s122] sm:$0xff]
    %v1297 = vmul.f32 %v531, %v1296
    %v1298 = vadd.f32 %v1297, %v533
    %v1299 = vmul.f32 %v1294, %v1298
    %v1300 = vand.u32 2147483647, %v1299
    %v1301 = vsub.f32 0.0, %v1300
    %v1302 = vmul.f32 %v1301, 1.442695
    %v1303 = vpow.pop %v1302
    %v1304 = vadd.f32 %v1303, 1.0
    %v1305 = vrcp.pop %v1304
    %vm1306 = vcmp.ge.f32.partialorder %v1299, 0.0
    %v1307 = vsub.f32 1.0, %v1305
    %v1308 = vsel %vm1306, %v1305, %v1307
    %v1309 = vmax.f32 %v1299, 0.0
    %v1310 = vlog2.pop %v1304
    %v1311 = vmul.f32 %v1310, 0.6931472
    %v1312 = vadd.f32 %v1309, %v1311
    %v1313 = vrcp.pop %v1294
    %v1314 = vmul.f32 %v1313, %v1312
    %v1315 = vsub.f32 1.0, %v1295
    %1317 = vrot.lane.b32.xlu0 %v1314, 1
    %v1318 = vpop.permute.xlu0 %1317
    %v1320 = vmul.f32 %v1315, %v1318
    %1322 = vrot.lane.b32.xlu0 %v1308, 1
    %v1323 = vpop.permute.xlu0 %1322
    %v1325 = vmul.f32 %v1295, %v1323
    %v1326 = vadd.f32 %v1320, %v1325
    %1328 = vset.pattern.permute.xlu0 0
    %1329 = vperm.xlu0 %1328, %v1294
    %v1330 = vpop.permute.xlu0 %1329
    %1333 = vset.pattern.permute.xlu0 1
    %1334 = vperm.xlu0 %1333, %v1295
    %v1335 = vpop.permute.xlu0 %1334
    %v1337 = vsel %vm564, %v1330, %v1335
    %1339 = vset.pattern.permute.xlu0 1
    %1340 = vperm.xlu0 %1339, %v1326
    %v1341 = vpop.permute.xlu0 %1340
    %v1343 = vsel %vm563, %v1341, %v1337
    %s1344 = scalar_lea.vmem %s5, 48
    %1345 = vst.msk [vmem:[%s1344] sm:$0xff] %vm582, %v1343
    %v1346 = vmul.f32 %v1341, %v418
    %v1347 = vadd.f32 %v1346, %v1291
    %v1348 = vld [vmem:[%s142] sm:$0xff]
    %v1349 = vadd.f32 %v1347, %v1348
    %v1350 = vxor.u32 %v1349, 2147483648
    %v1351 = vmul.f32 %v1350, 1.442695
    %v1352 = vpow.pop %v1351
    %v1353 = vadd.f32 %v1352, 1.0
    %v1354 = vrcp.pop %v1353
    %v1355 = vmul.f32 %v1353, %v1354
    %v1356 = vsub.f32 1.0, %v1355
    %v1357 = vmul.f32 %v1354, %v1356
    %v1358 = vadd.f32 %v1354, %v1357
    %vm1359 = vweird.f32 %v1353
    %vm1360 = vweird.f32 %v1354
    %vm1361 = vmor %vm1359, %vm1360
    %v1362 = vsel %vm1361, %v1354, %v1358
    %v1363 = vand.u32 2147483647, %v1353
    %vm1364 = vcmp.eq.f32.partialorder %v1363, 8.507059e+37
    %v1365 = vand.u32 %v1353, 2147483648
    %v1366 = vor.u32 1.1754944e-38, %v1365
    %v1367 = vsel %vm1364, %v1366, %v1362
    %v1368 = vmul.f32 1.0, %v1367
    %v1369 = vmul.f32 %v1368, 2.0
    %v1370 = vsub.f32 %v1369, 1.0
    %v1371 = vmul.f32 %v1368, %v1254
    %1373 = vrot.lane.b32.xlu0 %v1370, 64
    %v1374 = vpop.permute.xlu0 %1373
    %v1376 = vmul.f32 %v1368, %v1374
    %1378 = vrot.lane.b32.xlu0 %v1376, 32
    %v1379 = vpop.permute.xlu0 %1378
    %v1381 = vadd.f32 %v1371, %v1379
    %v1382 = vtanh.pop %v1381
    %1384 = vrot.lane.b32.xlu0 %v1382, 64
    %v1385 = vpop.permute.xlu0 %1384
    %v1387 = vmul.f32 %v1368, %v1385
    %v1388 = vpack.c.bf16 %v1387, %v1387
    %1390 = vrot.lane.b32.xlu0 %v1388, 32
    %v1391 = vpop.permute.xlu0 %1390
    %v1393 = vsel %vm489, %v1391, 0
    %1395 = vmatpush.bf16.msra.mxu0 0
    %1396 = vmatpush.bf16.msra.mxu0 0
    %1397 = vmatpush.bf16.msra.mxu0 0
    %1398 = vmatpush.bf16.msra.mxu0 0
    %1399 = vmatpush.bf16.msra.mxu0 0
    %1400 = vmatpush.bf16.msra.mxu0 0
    %1401 = vmatpush.bf16.msra.mxu0 %v483
    %1402 = vmatpush.bf16.msra.mxu0 %v481
    %1403 = vmatmul.bf16.gmra.mxu0 %v1393
    %v1404 = vpop.f32.mrf.mxu0
    %v1405 = vadd.f32 0.0, %v1404
    %v1406 = vpop.f32.mrf.mxu0
    %1407 = vdwg.mxu0
    %1408 = vmatpush.bf16.msra.mxu0 0
    %1409 = vmatpush.bf16.msra.mxu0 0
    %1410 = vmatpush.bf16.msra.mxu0 0
    %1411 = vmatpush.bf16.msra.mxu0 0
    %1412 = vmatpush.bf16.msra.mxu0 0
    %1413 = vmatpush.bf16.msra.mxu0 0
    %1414 = vmatpush.bf16.msra.mxu0 %v484
    %1415 = vmatpush.bf16.msra.mxu0 %v482
    %1416 = vmatmul.bf16.gmra.mxu0 %v1393
    %v1417 = vpop.f32.mrf.mxu0
    %v1418 = vadd.f32 0.0, %v1417
    %v1419 = vpop.f32.mrf.mxu0
    %1420 = vdwg.mxu0
    %v1421 = vadd.f32 %v1405, %v519
    %v1422 = vadd.f32 %v1405, %v521
    %v1423 = vld [vmem:[%s133] sm:$0xff]
    %v1424 = vmul.f32 %v531, %v1423
    %v1425 = vadd.f32 %v1424, %v533
    %v1426 = vmul.f32 %v1421, %v1425
    %v1427 = vand.u32 2147483647, %v1426
    %v1428 = vsub.f32 0.0, %v1427
    %v1429 = vmul.f32 %v1428, 1.442695
    %v1430 = vpow.pop %v1429
    %v1431 = vadd.f32 %v1430, 1.0
    %v1432 = vrcp.pop %v1431
    %vm1433 = vcmp.ge.f32.partialorder %v1426, 0.0
    %v1434 = vsub.f32 1.0, %v1432
    %v1435 = vsel %vm1433, %v1432, %v1434
    %v1436 = vmax.f32 %v1426, 0.0
    %v1437 = vlog2.pop %v1431
    %v1438 = vmul.f32 %v1437, 0.6931472
    %v1439 = vadd.f32 %v1436, %v1438
    %v1440 = vrcp.pop %v1421
    %v1441 = vmul.f32 %v1440, %v1439
    %v1442 = vsub.f32 1.0, %v1422
    %1444 = vrot.lane.b32.xlu0 %v1441, 1
    %v1445 = vpop.permute.xlu0 %1444
    %v1447 = vmul.f32 %v1442, %v1445
    %1449 = vrot.lane.b32.xlu0 %v1435, 1
    %v1450 = vpop.permute.xlu0 %1449
    %v1452 = vmul.f32 %v1422, %v1450
    %v1453 = vadd.f32 %v1447, %v1452
    %1455 = vset.pattern.permute.xlu0 0
    %1456 = vperm.xlu0 %1455, %v1421
    %v1457 = vpop.permute.xlu0 %1456
    %1460 = vset.pattern.permute.xlu0 1
    %1461 = vperm.xlu0 %1460, %v1422
    %v1462 = vpop.permute.xlu0 %1461
    %v1464 = vsel %vm564, %v1457, %v1462
    %1466 = vset.pattern.permute.xlu0 1
    %1467 = vperm.xlu0 %1466, %v1453
    %v1468 = vpop.permute.xlu0 %1467
    %v1470 = vsel %vm563, %v1468, %v1464
    %s1471 = scalar_lea.vmem %s5, 56
    %1472 = vst.msk [vmem:[%s1471] sm:$0xff] %vm582, %v1470
    %v1473 = vmul.f32 %v1468, %v418
    %v1474 = vadd.f32 %v1473, %v1418
    %v1475 = vld [vmem:[%s153] sm:$0xff]
    %v1476 = vadd.f32 %v1474, %v1475
    %v1477 = vxor.u32 %v1476, 2147483648
    %v1478 = vmul.f32 %v1477, 1.442695
    %v1479 = vpow.pop %v1478
    %v1480 = vadd.f32 %v1479, 1.0
    %v1481 = vrcp.pop %v1480
    %v1482 = vmul.f32 %v1480, %v1481
    %v1483 = vsub.f32 1.0, %v1482
    %v1484 = vmul.f32 %v1481, %v1483
    %v1485 = vadd.f32 %v1481, %v1484
    %vm1486 = vweird.f32 %v1480
    %vm1487 = vweird.f32 %v1481
    %vm1488 = vmor %vm1486, %vm1487
    %v1489 = vsel %vm1488, %v1481, %v1485
    %v1490 = vand.u32 2147483647, %v1480
    %vm1491 = vcmp.eq.f32.partialorder %v1490, 8.507059e+37
    %v1492 = vand.u32 %v1480, 2147483648
    %v1493 = vor.u32 1.1754944e-38, %v1492
    %v1494 = vsel %vm1491, %v1493, %v1489
    %v1495 = vmul.f32 1.0, %v1494
    %v1496 = vmul.f32 %v1495, 2.0
    %v1497 = vsub.f32 %v1496, 1.0
    %v1498 = vmul.f32 %v1495, %v1381
    %1500 = vrot.lane.b32.xlu0 %v1497, 64
    %v1501 = vpop.permute.xlu0 %1500
    %v1503 = vmul.f32 %v1495, %v1501
    %1505 = vrot.lane.b32.xlu0 %v1503, 32
    %v1506 = vpop.permute.xlu0 %1505
    %v1508 = vadd.f32 %v1498, %v1506
    %v1509 = vtanh.pop %v1508
    %1511 = vrot.lane.b32.xlu0 %v1509, 64
    %v1512 = vpop.permute.xlu0 %1511
    %v1514 = vmul.f32 %v1495, %v1512
    %v1515 = vpack.c.bf16 %v1514, %v1514
    %1517 = vrot.lane.b32.xlu0 %v1515, 32
    %v1518 = vpop.permute.xlu0 %1517
    %v1520 = vsel %vm489, %v1518, 0
    %1522 = vmatpush.bf16.msra.mxu0 0
    %1523 = vmatpush.bf16.msra.mxu0 0
    %1524 = vmatpush.bf16.msra.mxu0 0
    %1525 = vmatpush.bf16.msra.mxu0 0
    %1526 = vmatpush.bf16.msra.mxu0 0
    %1527 = vmatpush.bf16.msra.mxu0 0
    %1528 = vmatpush.bf16.msra.mxu0 %v483
    %1529 = vmatpush.bf16.msra.mxu0 %v481
    %1530 = vmatmul.bf16.gmra.mxu0 %v1520
    %v1531 = vpop.f32.mrf.mxu0
    %v1532 = vadd.f32 0.0, %v1531
    %v1533 = vpop.f32.mrf.mxu0
    %1534 = vdwg.mxu0
    %1535 = vmatpush.bf16.msra.mxu0 0
    %1536 = vmatpush.bf16.msra.mxu0 0
    %1537 = vmatpush.bf16.msra.mxu0 0
    %1538 = vmatpush.bf16.msra.mxu0 0
    %1539 = vmatpush.bf16.msra.mxu0 0
    %1540 = vmatpush.bf16.msra.mxu0 0
    %1541 = vmatpush.bf16.msra.mxu0 %v484
    %1542 = vmatpush.bf16.msra.mxu0 %v482
    %1543 = vmatmul.bf16.gmra.mxu0 %v1520
    %v1544 = vpop.f32.mrf.mxu0
    %v1545 = vadd.f32 0.0, %v1544
    %v1546 = vpop.f32.mrf.mxu0
    %1547 = vdwg.mxu0
    %v1548 = vadd.f32 %v1532, %v519
    %v1549 = vadd.f32 %v1532, %v521
    %v1550 = vld [vmem:[%s144] sm:$0xff]
    %v1551 = vmul.f32 %v531, %v1550
    %v1552 = vadd.f32 %v1551, %v533
    %v1553 = vmul.f32 %v1548, %v1552
    %v1554 = vand.u32 2147483647, %v1553
    %v1555 = vsub.f32 0.0, %v1554
    %v1556 = vmul.f32 %v1555, 1.442695
    %v1557 = vpow.pop %v1556
    %v1558 = vadd.f32 %v1557, 1.0
    %v1559 = vrcp.pop %v1558
    %vm1560 = vcmp.ge.f32.partialorder %v1553, 0.0
    %v1561 = vsub.f32 1.0, %v1559
    %v1562 = vsel %vm1560, %v1559, %v1561
    %v1563 = vmax.f32 %v1553, 0.0
    %v1564 = vlog2.pop %v1558
    %v1565 = vmul.f32 %v1564, 0.6931472
    %v1566 = vadd.f32 %v1563, %v1565
    %v1567 = vrcp.pop %v1548
    %v1568 = vmul.f32 %v1567, %v1566
    %v1569 = vsub.f32 1.0, %v1549
    %1571 = vrot.lane.b32.xlu0 %v1568, 1
    %v1572 = vpop.permute.xlu0 %1571
    %v1574 = vmul.f32 %v1569, %v1572
    %1576 = vrot.lane.b32.xlu0 %v1562, 1
    %v1577 = vpop.permute.xlu0 %1576
    %v1579 = vmul.f32 %v1549, %v1577
    %v1580 = vadd.f32 %v1574, %v1579
    %1582 = vset.pattern.permute.xlu0 0
    %1583 = vperm.xlu0 %1582, %v1548
    %v1584 = vpop.permute.xlu0 %1583
    %1587 = vset.pattern.permute.xlu0 1
    %1588 = vperm.xlu0 %1587, %v1549
    %v1589 = vpop.permute.xlu0 %1588
    %v1591 = vsel %vm564, %v1584, %v1589
    %1593 = vset.pattern.permute.xlu0 1
    %1594 = vperm.xlu0 %1593, %v1580
    %v1595 = vpop.permute.xlu0 %1594
    %v1597 = vsel %vm563, %v1595, %v1591
    %s1598 = scalar_lea.vmem %s5, 64
    %1599 = vst.msk [vmem:[%s1598] sm:$0xff] %vm582, %v1597
    %v1600 = vmul.f32 %v1595, %v418
    %v1601 = vadd.f32 %v1600, %v1545
    %v1602 = vld [vmem:[%s164] sm:$0xff]
    %v1603 = vadd.f32 %v1601, %v1602
    %v1604 = vxor.u32 %v1603, 2147483648
    %v1605 = vmul.f32 %v1604, 1.442695
    %v1606 = vpow.pop %v1605
    %v1607 = vadd.f32 %v1606, 1.0
    %v1608 = vrcp.pop %v1607
    %v1609 = vmul.f32 %v1607, %v1608
    %v1610 = vsub.f32 1.0, %v1609
    %v1611 = vmul.f32 %v1608, %v1610
    %v1612 = vadd.f32 %v1608, %v1611
    %vm1613 = vweird.f32 %v1607
    %vm1614 = vweird.f32 %v1608
    %vm1615 = vmor %vm1613, %vm1614
    %v1616 = vsel %vm1615, %v1608, %v1612
    %v1617 = vand.u32 2147483647, %v1607
    %vm1618 = vcmp.eq.f32.partialorder %v1617, 8.507059e+37
    %v1619 = vand.u32 %v1607, 2147483648
    %v1620 = vor.u32 1.1754944e-38, %v1619
    %v1621 = vsel %vm1618, %v1620, %v1616
    %v1622 = vmul.f32 1.0, %v1621
    %v1623 = vmul.f32 %v1622, 2.0
    %v1624 = vsub.f32 %v1623, 1.0
    %v1625 = vmul.f32 %v1622, %v1508
    %1627 = vrot.lane.b32.xlu0 %v1624, 64
    %v1628 = vpop.permute.xlu0 %1627
    %v1630 = vmul.f32 %v1622, %v1628
    %1632 = vrot.lane.b32.xlu0 %v1630, 32
    %v1633 = vpop.permute.xlu0 %1632
    %v1635 = vadd.f32 %v1625, %v1633
    %v1636 = vtanh.pop %v1635
    %1638 = vrot.lane.b32.xlu0 %v1636, 64
    %v1639 = vpop.permute.xlu0 %1638
    %v1641 = vmul.f32 %v1622, %v1639
    %v1642 = vpack.c.bf16 %v1641, %v1641
    %1644 = vrot.lane.b32.xlu0 %v1642, 32
    %v1645 = vpop.permute.xlu0 %1644
    %v1647 = vsel %vm489, %v1645, 0
    %1649 = vmatpush.bf16.msra.mxu0 0
    %1650 = vmatpush.bf16.msra.mxu0 0
    %1651 = vmatpush.bf16.msra.mxu0 0
    %1652 = vmatpush.bf16.msra.mxu0 0
    %1653 = vmatpush.bf16.msra.mxu0 0
    %1654 = vmatpush.bf16.msra.mxu0 0
    %1655 = vmatpush.bf16.msra.mxu0 %v483
    %1656 = vmatpush.bf16.msra.mxu0 %v481
    %1657 = vmatmul.bf16.gmra.mxu0 %v1647
    %v1658 = vpop.f32.mrf.mxu0
    %v1659 = vadd.f32 0.0, %v1658
    %v1660 = vpop.f32.mrf.mxu0
    %1661 = vdwg.mxu0
    %1662 = vmatpush.bf16.msra.mxu0 0
    %1663 = vmatpush.bf16.msra.mxu0 0
    %1664 = vmatpush.bf16.msra.mxu0 0
    %1665 = vmatpush.bf16.msra.mxu0 0
    %1666 = vmatpush.bf16.msra.mxu0 0
    %1667 = vmatpush.bf16.msra.mxu0 0
    %1668 = vmatpush.bf16.msra.mxu0 %v484
    %1669 = vmatpush.bf16.msra.mxu0 %v482
    %1670 = vmatmul.bf16.gmra.mxu0 %v1647
    %v1671 = vpop.f32.mrf.mxu0
    %v1672 = vadd.f32 0.0, %v1671
    %v1673 = vpop.f32.mrf.mxu0
    %1674 = vdwg.mxu0
    %v1675 = vadd.f32 %v1659, %v519
    %v1676 = vadd.f32 %v1659, %v521
    %v1677 = vld [vmem:[%s155] sm:$0xff]
    %v1678 = vmul.f32 %v531, %v1677
    %v1679 = vadd.f32 %v1678, %v533
    %v1680 = vmul.f32 %v1675, %v1679
    %v1681 = vand.u32 2147483647, %v1680
    %v1682 = vsub.f32 0.0, %v1681
    %v1683 = vmul.f32 %v1682, 1.442695
    %v1684 = vpow.pop %v1683
    %v1685 = vadd.f32 %v1684, 1.0
    %v1686 = vrcp.pop %v1685
    %vm1687 = vcmp.ge.f32.partialorder %v1680, 0.0
    %v1688 = vsub.f32 1.0, %v1686
    %v1689 = vsel %vm1687, %v1686, %v1688
    %v1690 = vmax.f32 %v1680, 0.0
    %v1691 = vlog2.pop %v1685
    %v1692 = vmul.f32 %v1691, 0.6931472
    %v1693 = vadd.f32 %v1690, %v1692
    %v1694 = vrcp.pop %v1675
    %v1695 = vmul.f32 %v1694, %v1693
    %v1696 = vsub.f32 1.0, %v1676
    %1698 = vrot.lane.b32.xlu0 %v1695, 1
    %v1699 = vpop.permute.xlu0 %1698
    %v1701 = vmul.f32 %v1696, %v1699
    %1703 = vrot.lane.b32.xlu0 %v1689, 1
    %v1704 = vpop.permute.xlu0 %1703
    %v1706 = vmul.f32 %v1676, %v1704
    %v1707 = vadd.f32 %v1701, %v1706
    %1709 = vset.pattern.permute.xlu0 0
    %1710 = vperm.xlu0 %1709, %v1675
    %v1711 = vpop.permute.xlu0 %1710
    %1714 = vset.pattern.permute.xlu0 1
    %1715 = vperm.xlu0 %1714, %v1676
    %v1716 = vpop.permute.xlu0 %1715
    %v1718 = vsel %vm564, %v1711, %v1716
    %1720 = vset.pattern.permute.xlu0 1
    %1721 = vperm.xlu0 %1720, %v1707
    %v1722 = vpop.permute.xlu0 %1721
    %v1724 = vsel %vm563, %v1722, %v1718
    %s1725 = scalar_lea.vmem %s5, 72
    %1726 = vst.msk [vmem:[%s1725] sm:$0xff] %vm582, %v1724
    %v1727 = vmul.f32 %v1722, %v418
    %v1728 = vadd.f32 %v1727, %v1672
    %v1729 = vld [vmem:[%s175] sm:$0xff]
    %v1730 = vadd.f32 %v1728, %v1729
    %v1731 = vxor.u32 %v1730, 2147483648
    %v1732 = vmul.f32 %v1731, 1.442695
    %v1733 = vpow.pop %v1732
    %v1734 = vadd.f32 %v1733, 1.0
    %v1735 = vrcp.pop %v1734
    %v1736 = vmul.f32 %v1734, %v1735
    %v1737 = vsub.f32 1.0, %v1736
    %v1738 = vmul.f32 %v1735, %v1737
    %v1739 = vadd.f32 %v1735, %v1738
    %vm1740 = vweird.f32 %v1734
    %vm1741 = vweird.f32 %v1735
    %vm1742 = vmor %vm1740, %vm1741
    %v1743 = vsel %vm1742, %v1735, %v1739
    %v1744 = vand.u32 2147483647, %v1734
    %vm1745 = vcmp.eq.f32.partialorder %v1744, 8.507059e+37
    %v1746 = vand.u32 %v1734, 2147483648
    %v1747 = vor.u32 1.1754944e-38, %v1746
    %v1748 = vsel %vm1745, %v1747, %v1743
    %v1749 = vmul.f32 1.0, %v1748
    %v1750 = vmul.f32 %v1749, 2.0
    %v1751 = vsub.f32 %v1750, 1.0
    %v1752 = vmul.f32 %v1749, %v1635
    %1754 = vrot.lane.b32.xlu0 %v1751, 64
    %v1755 = vpop.permute.xlu0 %1754
    %v1757 = vmul.f32 %v1749, %v1755
    %1759 = vrot.lane.b32.xlu0 %v1757, 32
    %v1760 = vpop.permute.xlu0 %1759
    %v1762 = vadd.f32 %v1752, %v1760
    %v1763 = vtanh.pop %v1762
    %1765 = vrot.lane.b32.xlu0 %v1763, 64
    %v1766 = vpop.permute.xlu0 %1765
    %v1768 = vmul.f32 %v1749, %v1766
    %v1769 = vpack.c.bf16 %v1768, %v1768
    %1771 = vrot.lane.b32.xlu0 %v1769, 32
    %v1772 = vpop.permute.xlu0 %1771
    %v1774 = vsel %vm489, %v1772, 0
    %1776 = vmatpush.bf16.msra.mxu0 0
    %1777 = vmatpush.bf16.msra.mxu0 0
    %1778 = vmatpush.bf16.msra.mxu0 0
    %1779 = vmatpush.bf16.msra.mxu0 0
    %1780 = vmatpush.bf16.msra.mxu0 0
    %1781 = vmatpush.bf16.msra.mxu0 0
    %1782 = vmatpush.bf16.msra.mxu0 %v483
    %1783 = vmatpush.bf16.msra.mxu0 %v481
    %1784 = vmatmul.bf16.gmra.mxu0 %v1774
    %v1785 = vpop.f32.mrf.mxu0
    %v1786 = vadd.f32 0.0, %v1785
    %v1787 = vpop.f32.mrf.mxu0
    %1788 = vdwg.mxu0
    %1789 = vmatpush.bf16.msra.mxu0 0
    %1790 = vmatpush.bf16.msra.mxu0 0
    %1791 = vmatpush.bf16.msra.mxu0 0
    %1792 = vmatpush.bf16.msra.mxu0 0
    %1793 = vmatpush.bf16.msra.mxu0 0
    %1794 = vmatpush.bf16.msra.mxu0 0
    %1795 = vmatpush.bf16.msra.mxu0 %v484
    %1796 = vmatpush.bf16.msra.mxu0 %v482
    %1797 = vmatmul.bf16.gmra.mxu0 %v1774
    %v1798 = vpop.f32.mrf.mxu0
    %v1799 = vadd.f32 0.0, %v1798
    %v1800 = vpop.f32.mrf.mxu0
    %1801 = vdwg.mxu0
    %v1802 = vadd.f32 %v1786, %v519
    %v1803 = vadd.f32 %v1786, %v521
    %v1804 = vld [vmem:[%s166] sm:$0xff]
    %v1805 = vmul.f32 %v531, %v1804
    %v1806 = vadd.f32 %v1805, %v533
    %v1807 = vmul.f32 %v1802, %v1806
    %v1808 = vand.u32 2147483647, %v1807
    %v1809 = vsub.f32 0.0, %v1808
    %v1810 = vmul.f32 %v1809, 1.442695
    %v1811 = vpow.pop %v1810
    %v1812 = vadd.f32 %v1811, 1.0
    %v1813 = vrcp.pop %v1812
    %vm1814 = vcmp.ge.f32.partialorder %v1807, 0.0
    %v1815 = vsub.f32 1.0, %v1813
    %v1816 = vsel %vm1814, %v1813, %v1815
    %v1817 = vmax.f32 %v1807, 0.0
    %v1818 = vlog2.pop %v1812
    %v1819 = vmul.f32 %v1818, 0.6931472
    %v1820 = vadd.f32 %v1817, %v1819
    %v1821 = vrcp.pop %v1802
    %v1822 = vmul.f32 %v1821, %v1820
    %v1823 = vsub.f32 1.0, %v1803
    %1825 = vrot.lane.b32.xlu0 %v1822, 1
    %v1826 = vpop.permute.xlu0 %1825
    %v1828 = vmul.f32 %v1823, %v1826
    %1830 = vrot.lane.b32.xlu0 %v1816, 1
    %v1831 = vpop.permute.xlu0 %1830
    %v1833 = vmul.f32 %v1803, %v1831
    %v1834 = vadd.f32 %v1828, %v1833
    %1836 = vset.pattern.permute.xlu0 0
    %1837 = vperm.xlu0 %1836, %v1802
    %v1838 = vpop.permute.xlu0 %1837
    %1841 = vset.pattern.permute.xlu0 1
    %1842 = vperm.xlu0 %1841, %v1803
    %v1843 = vpop.permute.xlu0 %1842
    %v1845 = vsel %vm564, %v1838, %v1843
    %1847 = vset.pattern.permute.xlu0 1
    %1848 = vperm.xlu0 %1847, %v1834
    %v1849 = vpop.permute.xlu0 %1848
    %v1851 = vsel %vm563, %v1849, %v1845
    %s1852 = scalar_lea.vmem %s5, 80
    %1853 = vst.msk [vmem:[%s1852] sm:$0xff] %vm582, %v1851
    %v1854 = vmul.f32 %v1849, %v418
    %v1855 = vadd.f32 %v1854, %v1799
    %v1856 = vld [vmem:[%s186] sm:$0xff]
    %v1857 = vadd.f32 %v1855, %v1856
    %v1858 = vxor.u32 %v1857, 2147483648
    %v1859 = vmul.f32 %v1858, 1.442695
    %v1860 = vpow.pop %v1859
    %v1861 = vadd.f32 %v1860, 1.0
    %v1862 = vrcp.pop %v1861
    %v1863 = vmul.f32 %v1861, %v1862
    %v1864 = vsub.f32 1.0, %v1863
    %v1865 = vmul.f32 %v1862, %v1864
    %v1866 = vadd.f32 %v1862, %v1865
    %vm1867 = vweird.f32 %v1861
    %vm1868 = vweird.f32 %v1862
    %vm1869 = vmor %vm1867, %vm1868
    %v1870 = vsel %vm1869, %v1862, %v1866
    %v1871 = vand.u32 2147483647, %v1861
    %vm1872 = vcmp.eq.f32.partialorder %v1871, 8.507059e+37
    %v1873 = vand.u32 %v1861, 2147483648
    %v1874 = vor.u32 1.1754944e-38, %v1873
    %v1875 = vsel %vm1872, %v1874, %v1870
    %v1876 = vmul.f32 1.0, %v1875
    %v1877 = vmul.f32 %v1876, 2.0
    %v1878 = vsub.f32 %v1877, 1.0
    %v1879 = vmul.f32 %v1876, %v1762
    %1881 = vrot.lane.b32.xlu0 %v1878, 64
    %v1882 = vpop.permute.xlu0 %1881
    %v1884 = vmul.f32 %v1876, %v1882
    %1886 = vrot.lane.b32.xlu0 %v1884, 32
    %v1887 = vpop.permute.xlu0 %1886
    %v1889 = vadd.f32 %v1879, %v1887
    %v1890 = vtanh.pop %v1889
    %1892 = vrot.lane.b32.xlu0 %v1890, 64
    %v1893 = vpop.permute.xlu0 %1892
    %v1895 = vmul.f32 %v1876, %v1893
    %v1896 = vpack.c.bf16 %v1895, %v1895
    %1898 = vrot.lane.b32.xlu0 %v1896, 32
    %v1899 = vpop.permute.xlu0 %1898
    %v1901 = vsel %vm489, %v1899, 0
    %1903 = vmatpush.bf16.msra.mxu0 0
    %1904 = vmatpush.bf16.msra.mxu0 0
    %1905 = vmatpush.bf16.msra.mxu0 0
    %1906 = vmatpush.bf16.msra.mxu0 0
    %1907 = vmatpush.bf16.msra.mxu0 0
    %1908 = vmatpush.bf16.msra.mxu0 0
    %1909 = vmatpush.bf16.msra.mxu0 %v483
    %1910 = vmatpush.bf16.msra.mxu0 %v481
    %1911 = vmatmul.bf16.gmra.mxu0 %v1901
    %v1912 = vpop.f32.mrf.mxu0
    %v1913 = vadd.f32 0.0, %v1912
    %v1914 = vpop.f32.mrf.mxu0
    %1915 = vdwg.mxu0
    %1916 = vmatpush.bf16.msra.mxu0 0
    %1917 = vmatpush.bf16.msra.mxu0 0
    %1918 = vmatpush.bf16.msra.mxu0 0
    %1919 = vmatpush.bf16.msra.mxu0 0
    %1920 = vmatpush.bf16.msra.mxu0 0
    %1921 = vmatpush.bf16.msra.mxu0 0
    %1922 = vmatpush.bf16.msra.mxu0 %v484
    %1923 = vmatpush.bf16.msra.mxu0 %v482
    %1924 = vmatmul.bf16.gmra.mxu0 %v1901
    %v1925 = vpop.f32.mrf.mxu0
    %v1926 = vadd.f32 0.0, %v1925
    %v1927 = vpop.f32.mrf.mxu0
    %1928 = vdwg.mxu0
    %v1929 = vadd.f32 %v1913, %v519
    %v1930 = vadd.f32 %v1913, %v521
    %v1931 = vld [vmem:[%s177] sm:$0xff]
    %v1932 = vmul.f32 %v531, %v1931
    %v1933 = vadd.f32 %v1932, %v533
    %v1934 = vmul.f32 %v1929, %v1933
    %v1935 = vand.u32 2147483647, %v1934
    %v1936 = vsub.f32 0.0, %v1935
    %v1937 = vmul.f32 %v1936, 1.442695
    %v1938 = vpow.pop %v1937
    %v1939 = vadd.f32 %v1938, 1.0
    %v1940 = vrcp.pop %v1939
    %vm1941 = vcmp.ge.f32.partialorder %v1934, 0.0
    %v1942 = vsub.f32 1.0, %v1940
    %v1943 = vsel %vm1941, %v1940, %v1942
    %v1944 = vmax.f32 %v1934, 0.0
    %v1945 = vlog2.pop %v1939
    %v1946 = vmul.f32 %v1945, 0.6931472
    %v1947 = vadd.f32 %v1944, %v1946
    %v1948 = vrcp.pop %v1929
    %v1949 = vmul.f32 %v1948, %v1947
    %v1950 = vsub.f32 1.0, %v1930
    %1952 = vrot.lane.b32.xlu0 %v1949, 1
    %v1953 = vpop.permute.xlu0 %1952
    %v1955 = vmul.f32 %v1950, %v1953
    %1957 = vrot.lane.b32.xlu0 %v1943, 1
    %v1958 = vpop.permute.xlu0 %1957
    %v1960 = vmul.f32 %v1930, %v1958
    %v1961 = vadd.f32 %v1955, %v1960
    %1963 = vset.pattern.permute.xlu0 0
    %1964 = vperm.xlu0 %1963, %v1929
    %v1965 = vpop.permute.xlu0 %1964
    %1968 = vset.pattern.permute.xlu0 1
    %1969 = vperm.xlu0 %1968, %v1930
    %v1970 = vpop.permute.xlu0 %1969
    %v1972 = vsel %vm564, %v1965, %v1970
    %1974 = vset.pattern.permute.xlu0 1
    %1975 = vperm.xlu0 %1974, %v1961
    %v1976 = vpop.permute.xlu0 %1975
    %v1978 = vsel %vm563, %v1976, %v1972
    %s1979 = scalar_lea.vmem %s5, 88
    %1980 = vst.msk [vmem:[%s1979] sm:$0xff] %vm582, %v1978
    %v1981 = vmul.f32 %v1976, %v418
    %v1982 = vadd.f32 %v1981, %v1926
    %v1983 = vld [vmem:[%s197] sm:$0xff]
    %v1984 = vadd.f32 %v1982, %v1983
    %v1985 = vxor.u32 %v1984, 2147483648
    %v1986 = vmul.f32 %v1985, 1.442695
    %v1987 = vpow.pop %v1986
    %v1988 = vadd.f32 %v1987, 1.0
    %v1989 = vrcp.pop %v1988
    %v1990 = vmul.f32 %v1988, %v1989
    %v1991 = vsub.f32 1.0, %v1990
    %v1992 = vmul.f32 %v1989, %v1991
    %v1993 = vadd.f32 %v1989, %v1992
    %vm1994 = vweird.f32 %v1988
    %vm1995 = vweird.f32 %v1989
    %vm1996 = vmor %vm1994, %vm1995
    %v1997 = vsel %vm1996, %v1989, %v1993
    %v1998 = vand.u32 2147483647, %v1988
    %vm1999 = vcmp.eq.f32.partialorder %v1998, 8.507059e+37
    %v2000 = vand.u32 %v1988, 2147483648
    %v2001 = vor.u32 1.1754944e-38, %v2000
    %v2002 = vsel %vm1999, %v2001, %v1997
    %v2003 = vmul.f32 1.0, %v2002
    %v2004 = vmul.f32 %v2003, 2.0
    %v2005 = vsub.f32 %v2004, 1.0
    %v2006 = vmul.f32 %v2003, %v1889
    %2008 = vrot.lane.b32.xlu0 %v2005, 64
    %v2009 = vpop.permute.xlu0 %2008
    %v2011 = vmul.f32 %v2003, %v2009
    %2013 = vrot.lane.b32.xlu0 %v2011, 32
    %v2014 = vpop.permute.xlu0 %2013
    %v2016 = vadd.f32 %v2006, %v2014
    %v2017 = vtanh.pop %v2016
    %2019 = vrot.lane.b32.xlu0 %v2017, 64
    %v2020 = vpop.permute.xlu0 %2019
    %v2022 = vmul.f32 %v2003, %v2020
    %v2023 = vpack.c.bf16 %v2022, %v2022
    %2025 = vrot.lane.b32.xlu0 %v2023, 32
    %v2026 = vpop.permute.xlu0 %2025
    %v2028 = vsel %vm489, %v2026, 0
    %2030 = vmatpush.bf16.msra.mxu0 0
    %2031 = vmatpush.bf16.msra.mxu0 0
    %2032 = vmatpush.bf16.msra.mxu0 0
    %2033 = vmatpush.bf16.msra.mxu0 0
    %2034 = vmatpush.bf16.msra.mxu0 0
    %2035 = vmatpush.bf16.msra.mxu0 0
    %2036 = vmatpush.bf16.msra.mxu0 %v483
    %2037 = vmatpush.bf16.msra.mxu0 %v481
    %2038 = vmatmul.bf16.gmra.mxu0 %v2028
    %v2039 = vpop.f32.mrf.mxu0
    %v2040 = vadd.f32 0.0, %v2039
    %v2041 = vpop.f32.mrf.mxu0
    %2042 = vdwg.mxu0
    %2043 = vmatpush.bf16.msra.mxu0 0
    %2044 = vmatpush.bf16.msra.mxu0 0
    %2045 = vmatpush.bf16.msra.mxu0 0
    %2046 = vmatpush.bf16.msra.mxu0 0
    %2047 = vmatpush.bf16.msra.mxu0 0
    %2048 = vmatpush.bf16.msra.mxu0 0
    %2049 = vmatpush.bf16.msra.mxu0 %v484
    %2050 = vmatpush.bf16.msra.mxu0 %v482
    %2051 = vmatmul.bf16.gmra.mxu0 %v2028
    %v2052 = vpop.f32.mrf.mxu0
    %v2053 = vadd.f32 0.0, %v2052
    %v2054 = vpop.f32.mrf.mxu0
    %2055 = vdwg.mxu0
    %v2056 = vadd.f32 %v2040, %v519
    %v2057 = vadd.f32 %v2040, %v521
    %v2058 = vld [vmem:[%s188] sm:$0xff]
    %v2059 = vmul.f32 %v531, %v2058
    %v2060 = vadd.f32 %v2059, %v533
    %v2061 = vmul.f32 %v2056, %v2060
    %v2062 = vand.u32 2147483647, %v2061
    %v2063 = vsub.f32 0.0, %v2062
    %v2064 = vmul.f32 %v2063, 1.442695
    %v2065 = vpow.pop %v2064
    %v2066 = vadd.f32 %v2065, 1.0
    %v2067 = vrcp.pop %v2066
    %vm2068 = vcmp.ge.f32.partialorder %v2061, 0.0
    %v2069 = vsub.f32 1.0, %v2067
    %v2070 = vsel %vm2068, %v2067, %v2069
    %v2071 = vmax.f32 %v2061, 0.0
    %v2072 = vlog2.pop %v2066
    %v2073 = vmul.f32 %v2072, 0.6931472
    %v2074 = vadd.f32 %v2071, %v2073
    %v2075 = vrcp.pop %v2056
    %v2076 = vmul.f32 %v2075, %v2074
    %v2077 = vsub.f32 1.0, %v2057
    %2079 = vrot.lane.b32.xlu0 %v2076, 1
    %v2080 = vpop.permute.xlu0 %2079
    %v2082 = vmul.f32 %v2077, %v2080
    %2084 = vrot.lane.b32.xlu0 %v2070, 1
    %v2085 = vpop.permute.xlu0 %2084
    %v2087 = vmul.f32 %v2057, %v2085
    %v2088 = vadd.f32 %v2082, %v2087
    %2090 = vset.pattern.permute.xlu0 0
    %2091 = vperm.xlu0 %2090, %v2056
    %v2092 = vpop.permute.xlu0 %2091
    %2095 = vset.pattern.permute.xlu0 1
    %2096 = vperm.xlu0 %2095, %v2057
    %v2097 = vpop.permute.xlu0 %2096
    %v2099 = vsel %vm564, %v2092, %v2097
    %2101 = vset.pattern.permute.xlu0 1
    %2102 = vperm.xlu0 %2101, %v2088
    %v2103 = vpop.permute.xlu0 %2102
    %v2105 = vsel %vm563, %v2103, %v2099
    %s2106 = scalar_lea.vmem %s5, 96
    %2107 = vst.msk [vmem:[%s2106] sm:$0xff] %vm582, %v2105
    %v2108 = vmul.f32 %v2103, %v418
    %v2109 = vadd.f32 %v2108, %v2053
    %v2110 = vld [vmem:[%s208] sm:$0xff]
    %v2111 = vadd.f32 %v2109, %v2110
    %v2112 = vxor.u32 %v2111, 2147483648
    %v2113 = vmul.f32 %v2112, 1.442695
    %v2114 = vpow.pop %v2113
    %v2115 = vadd.f32 %v2114, 1.0
    %v2116 = vrcp.pop %v2115
    %v2117 = vmul.f32 %v2115, %v2116
    %v2118 = vsub.f32 1.0, %v2117
    %v2119 = vmul.f32 %v2116, %v2118
    %v2120 = vadd.f32 %v2116, %v2119
    %vm2121 = vweird.f32 %v2115
    %vm2122 = vweird.f32 %v2116
    %vm2123 = vmor %vm2121, %vm2122
    %v2124 = vsel %vm2123, %v2116, %v2120
    %v2125 = vand.u32 2147483647, %v2115
    %vm2126 = vcmp.eq.f32.partialorder %v2125, 8.507059e+37
    %v2127 = vand.u32 %v2115, 2147483648
    %v2128 = vor.u32 1.1754944e-38, %v2127
    %v2129 = vsel %vm2126, %v2128, %v2124
    %v2130 = vmul.f32 1.0, %v2129
    %v2131 = vmul.f32 %v2130, 2.0
    %v2132 = vsub.f32 %v2131, 1.0
    %v2133 = vmul.f32 %v2130, %v2016
    %2135 = vrot.lane.b32.xlu0 %v2132, 64
    %v2136 = vpop.permute.xlu0 %2135
    %v2138 = vmul.f32 %v2130, %v2136
    %2140 = vrot.lane.b32.xlu0 %v2138, 32
    %v2141 = vpop.permute.xlu0 %2140
    %v2143 = vadd.f32 %v2133, %v2141
    %v2144 = vtanh.pop %v2143
    %2146 = vrot.lane.b32.xlu0 %v2144, 64
    %v2147 = vpop.permute.xlu0 %2146
    %v2149 = vmul.f32 %v2130, %v2147
    %v2150 = vpack.c.bf16 %v2149, %v2149
    %2152 = vrot.lane.b32.xlu0 %v2150, 32
    %v2153 = vpop.permute.xlu0 %2152
    %v2155 = vsel %vm489, %v2153, 0
    %2157 = vmatpush.bf16.msra.mxu0 0
    %2158 = vmatpush.bf16.msra.mxu0 0
    %2159 = vmatpush.bf16.msra.mxu0 0
    %2160 = vmatpush.bf16.msra.mxu0 0
    %2161 = vmatpush.bf16.msra.mxu0 0
    %2162 = vmatpush.bf16.msra.mxu0 0
    %2163 = vmatpush.bf16.msra.mxu0 %v483
    %2164 = vmatpush.bf16.msra.mxu0 %v481
    %2165 = vmatmul.bf16.gmra.mxu0 %v2155
    %v2166 = vpop.f32.mrf.mxu0
    %v2167 = vadd.f32 0.0, %v2166
    %v2168 = vpop.f32.mrf.mxu0
    %2169 = vdwg.mxu0
    %2170 = vmatpush.bf16.msra.mxu0 0
    %2171 = vmatpush.bf16.msra.mxu0 0
    %2172 = vmatpush.bf16.msra.mxu0 0
    %2173 = vmatpush.bf16.msra.mxu0 0
    %2174 = vmatpush.bf16.msra.mxu0 0
    %2175 = vmatpush.bf16.msra.mxu0 0
    %2176 = vmatpush.bf16.msra.mxu0 %v484
    %2177 = vmatpush.bf16.msra.mxu0 %v482
    %2178 = vmatmul.bf16.gmra.mxu0 %v2155
    %v2179 = vpop.f32.mrf.mxu0
    %v2180 = vadd.f32 0.0, %v2179
    %v2181 = vpop.f32.mrf.mxu0
    %2182 = vdwg.mxu0
    %v2183 = vadd.f32 %v2167, %v519
    %v2184 = vadd.f32 %v2167, %v521
    %v2185 = vld [vmem:[%s199] sm:$0xff]
    %v2186 = vmul.f32 %v531, %v2185
    %v2187 = vadd.f32 %v2186, %v533
    %v2188 = vmul.f32 %v2183, %v2187
    %v2189 = vand.u32 2147483647, %v2188
    %v2190 = vsub.f32 0.0, %v2189
    %v2191 = vmul.f32 %v2190, 1.442695
    %v2192 = vpow.pop %v2191
    %v2193 = vadd.f32 %v2192, 1.0
    %v2194 = vrcp.pop %v2193
    %vm2195 = vcmp.ge.f32.partialorder %v2188, 0.0
    %v2196 = vsub.f32 1.0, %v2194
    %v2197 = vsel %vm2195, %v2194, %v2196
    %v2198 = vmax.f32 %v2188, 0.0
    %v2199 = vlog2.pop %v2193
    %v2200 = vmul.f32 %v2199, 0.6931472
    %v2201 = vadd.f32 %v2198, %v2200
    %v2202 = vrcp.pop %v2183
    %v2203 = vmul.f32 %v2202, %v2201
    %v2204 = vsub.f32 1.0, %v2184
    %2206 = vrot.lane.b32.xlu0 %v2203, 1
    %v2207 = vpop.permute.xlu0 %2206
    %v2209 = vmul.f32 %v2204, %v2207
    %2211 = vrot.lane.b32.xlu0 %v2197, 1
    %v2212 = vpop.permute.xlu0 %2211
    %v2214 = vmul.f32 %v2184, %v2212
    %v2215 = vadd.f32 %v2209, %v2214
    %2217 = vset.pattern.permute.xlu0 0
    %2218 = vperm.xlu0 %2217, %v2183
    %v2219 = vpop.permute.xlu0 %2218
    %2222 = vset.pattern.permute.xlu0 1
    %2223 = vperm.xlu0 %2222, %v2184
    %v2224 = vpop.permute.xlu0 %2223
    %v2226 = vsel %vm564, %v2219, %v2224
    %2228 = vset.pattern.permute.xlu0 1
    %2229 = vperm.xlu0 %2228, %v2215
    %v2230 = vpop.permute.xlu0 %2229
    %v2232 = vsel %vm563, %v2230, %v2226
    %s2233 = scalar_lea.vmem %s5, 104
    %2234 = vst.msk [vmem:[%s2233] sm:$0xff] %vm582, %v2232
    %v2235 = vmul.f32 %v2230, %v418
    %v2236 = vadd.f32 %v2235, %v2180
    %v2237 = vld [vmem:[%s219] sm:$0xff]
    %v2238 = vadd.f32 %v2236, %v2237
    %v2239 = vxor.u32 %v2238, 2147483648
    %v2240 = vmul.f32 %v2239, 1.442695
    %v2241 = vpow.pop %v2240
    %v2242 = vadd.f32 %v2241, 1.0
    %v2243 = vrcp.pop %v2242
    %v2244 = vmul.f32 %v2242, %v2243
    %v2245 = vsub.f32 1.0, %v2244
    %v2246 = vmul.f32 %v2243, %v2245
    %v2247 = vadd.f32 %v2243, %v2246
    %vm2248 = vweird.f32 %v2242
    %vm2249 = vweird.f32 %v2243
    %vm2250 = vmor %vm2248, %vm2249
    %v2251 = vsel %vm2250, %v2243, %v2247
    %v2252 = vand.u32 2147483647, %v2242
    %vm2253 = vcmp.eq.f32.partialorder %v2252, 8.507059e+37
    %v2254 = vand.u32 %v2242, 2147483648
    %v2255 = vor.u32 1.1754944e-38, %v2254
    %v2256 = vsel %vm2253, %v2255, %v2251
    %v2257 = vmul.f32 1.0, %v2256
    %v2258 = vmul.f32 %v2257, 2.0
    %v2259 = vsub.f32 %v2258, 1.0
    %v2260 = vmul.f32 %v2257, %v2143
    %2262 = vrot.lane.b32.xlu0 %v2259, 64
    %v2263 = vpop.permute.xlu0 %2262
    %v2265 = vmul.f32 %v2257, %v2263
    %2267 = vrot.lane.b32.xlu0 %v2265, 32
    %v2268 = vpop.permute.xlu0 %2267
    %v2270 = vadd.f32 %v2260, %v2268
    %v2271 = vtanh.pop %v2270
    %2273 = vrot.lane.b32.xlu0 %v2271, 64
    %v2274 = vpop.permute.xlu0 %2273
    %v2276 = vmul.f32 %v2257, %v2274
    %v2277 = vpack.c.bf16 %v2276, %v2276
    %2279 = vrot.lane.b32.xlu0 %v2277, 32
    %v2280 = vpop.permute.xlu0 %2279
    %v2282 = vsel %vm489, %v2280, 0
    %2284 = vmatpush.bf16.msra.mxu0 0
    %2285 = vmatpush.bf16.msra.mxu0 0
    %2286 = vmatpush.bf16.msra.mxu0 0
    %2287 = vmatpush.bf16.msra.mxu0 0
    %2288 = vmatpush.bf16.msra.mxu0 0
    %2289 = vmatpush.bf16.msra.mxu0 0
    %2290 = vmatpush.bf16.msra.mxu0 %v483
    %2291 = vmatpush.bf16.msra.mxu0 %v481
    %2292 = vmatmul.bf16.gmra.mxu0 %v2282
    %v2293 = vpop.f32.mrf.mxu0
    %v2294 = vadd.f32 0.0, %v2293
    %v2295 = vpop.f32.mrf.mxu0
    %2296 = vdwg.mxu0
    %2297 = vmatpush.bf16.msra.mxu0 0
    %2298 = vmatpush.bf16.msra.mxu0 0
    %2299 = vmatpush.bf16.msra.mxu0 0
    %2300 = vmatpush.bf16.msra.mxu0 0
    %2301 = vmatpush.bf16.msra.mxu0 0
    %2302 = vmatpush.bf16.msra.mxu0 0
    %2303 = vmatpush.bf16.msra.mxu0 %v484
    %2304 = vmatpush.bf16.msra.mxu0 %v482
    %2305 = vmatmul.bf16.gmra.mxu0 %v2282
    %v2306 = vpop.f32.mrf.mxu0
    %v2307 = vadd.f32 0.0, %v2306
    %v2308 = vpop.f32.mrf.mxu0
    %2309 = vdwg.mxu0
    %v2310 = vadd.f32 %v2294, %v519
    %v2311 = vadd.f32 %v2294, %v521
    %v2312 = vld [vmem:[%s210] sm:$0xff]
    %v2313 = vmul.f32 %v531, %v2312
    %v2314 = vadd.f32 %v2313, %v533
    %v2315 = vmul.f32 %v2310, %v2314
    %v2316 = vand.u32 2147483647, %v2315
    %v2317 = vsub.f32 0.0, %v2316
    %v2318 = vmul.f32 %v2317, 1.442695
    %v2319 = vpow.pop %v2318
    %v2320 = vadd.f32 %v2319, 1.0
    %v2321 = vrcp.pop %v2320
    %vm2322 = vcmp.ge.f32.partialorder %v2315, 0.0
    %v2323 = vsub.f32 1.0, %v2321
    %v2324 = vsel %vm2322, %v2321, %v2323
    %v2325 = vmax.f32 %v2315, 0.0
    %v2326 = vlog2.pop %v2320
    %v2327 = vmul.f32 %v2326, 0.6931472
    %v2328 = vadd.f32 %v2325, %v2327
    %v2329 = vrcp.pop %v2310
    %v2330 = vmul.f32 %v2329, %v2328
    %v2331 = vsub.f32 1.0, %v2311
    %2333 = vrot.lane.b32.xlu0 %v2330, 1
    %v2334 = vpop.permute.xlu0 %2333
    %v2336 = vmul.f32 %v2331, %v2334
    %2338 = vrot.lane.b32.xlu0 %v2324, 1
    %v2339 = vpop.permute.xlu0 %2338
    %v2341 = vmul.f32 %v2311, %v2339
    %v2342 = vadd.f32 %v2336, %v2341
    %2344 = vset.pattern.permute.xlu0 0
    %2345 = vperm.xlu0 %2344, %v2310
    %v2346 = vpop.permute.xlu0 %2345
    %2349 = vset.pattern.permute.xlu0 1
    %2350 = vperm.xlu0 %2349, %v2311
    %v2351 = vpop.permute.xlu0 %2350
    %v2353 = vsel %vm564, %v2346, %v2351
    %2355 = vset.pattern.permute.xlu0 1
    %2356 = vperm.xlu0 %2355, %v2342
    %v2357 = vpop.permute.xlu0 %2356
    %v2359 = vsel %vm563, %v2357, %v2353
    %s2360 = scalar_lea.vmem %s5, 112
    %2361 = vst.msk [vmem:[%s2360] sm:$0xff] %vm582, %v2359
    %v2362 = vmul.f32 %v2357, %v418
    %v2363 = vadd.f32 %v2362, %v2307
    %v2364 = vld [vmem:[%s230] sm:$0xff]
    %v2365 = vadd.f32 %v2363, %v2364
    %v2366 = vxor.u32 %v2365, 2147483648
    %v2367 = vmul.f32 %v2366, 1.442695
    %v2368 = vpow.pop %v2367
    %v2369 = vadd.f32 %v2368, 1.0
    %v2370 = vrcp.pop %v2369
    %v2371 = vmul.f32 %v2369, %v2370
    %v2372 = vsub.f32 1.0, %v2371
    %v2373 = vmul.f32 %v2370, %v2372
    %v2374 = vadd.f32 %v2370, %v2373
    %vm2375 = vweird.f32 %v2369
    %vm2376 = vweird.f32 %v2370
    %vm2377 = vmor %vm2375, %vm2376
    %v2378 = vsel %vm2377, %v2370, %v2374
    %v2379 = vand.u32 2147483647, %v2369
    %vm2380 = vcmp.eq.f32.partialorder %v2379, 8.507059e+37
    %v2381 = vand.u32 %v2369, 2147483648
    %v2382 = vor.u32 1.1754944e-38, %v2381
    %v2383 = vsel %vm2380, %v2382, %v2378
    %v2384 = vmul.f32 1.0, %v2383
    %v2385 = vmul.f32 %v2384, 2.0
    %v2386 = vsub.f32 %v2385, 1.0
    %v2387 = vmul.f32 %v2384, %v2270
    %2389 = vrot.lane.b32.xlu0 %v2386, 64
    %v2390 = vpop.permute.xlu0 %2389
    %v2392 = vmul.f32 %v2384, %v2390
    %2394 = vrot.lane.b32.xlu0 %v2392, 32
    %v2395 = vpop.permute.xlu0 %2394
    %v2397 = vadd.f32 %v2387, %v2395
    %v2398 = vtanh.pop %v2397
    %2400 = vrot.lane.b32.xlu0 %v2398, 64
    %v2401 = vpop.permute.xlu0 %2400
    %v2403 = vmul.f32 %v2384, %v2401
    %v2404 = vpack.c.bf16 %v2403, %v2403
    %2406 = vrot.lane.b32.xlu0 %v2404, 32
    %v2407 = vpop.permute.xlu0 %2406
    %v2409 = vsel %vm489, %v2407, 0
    %2411 = vmatpush.bf16.msra.mxu0 0
    %2412 = vmatpush.bf16.msra.mxu0 0
    %2413 = vmatpush.bf16.msra.mxu0 0
    %2414 = vmatpush.bf16.msra.mxu0 0
    %2415 = vmatpush.bf16.msra.mxu0 0
    %2416 = vmatpush.bf16.msra.mxu0 0
    %2417 = vmatpush.bf16.msra.mxu0 %v483
    %2418 = vmatpush.bf16.msra.mxu0 %v481
    %2419 = vmatmul.bf16.gmra.mxu0 %v2409
    %v2420 = vpop.f32.mrf.mxu0
    %v2421 = vadd.f32 0.0, %v2420
    %v2422 = vpop.f32.mrf.mxu0
    %2423 = vdwg.mxu0
    %2424 = vmatpush.bf16.msra.mxu0 0
    %2425 = vmatpush.bf16.msra.mxu0 0
    %2426 = vmatpush.bf16.msra.mxu0 0
    %2427 = vmatpush.bf16.msra.mxu0 0
    %2428 = vmatpush.bf16.msra.mxu0 0
    %2429 = vmatpush.bf16.msra.mxu0 0
    %2430 = vmatpush.bf16.msra.mxu0 %v484
    %2431 = vmatpush.bf16.msra.mxu0 %v482
    %2432 = vmatmul.bf16.gmra.mxu0 %v2409
    %v2433 = vpop.f32.mrf.mxu0
    %v2434 = vadd.f32 0.0, %v2433
    %v2435 = vpop.f32.mrf.mxu0
    %2436 = vdwg.mxu0
    %v2437 = vadd.f32 %v2421, %v519
    %v2438 = vadd.f32 %v2421, %v521
    %v2439 = vld [vmem:[%s221] sm:$0xff]
    %v2440 = vmul.f32 %v531, %v2439
    %v2441 = vadd.f32 %v2440, %v533
    %v2442 = vmul.f32 %v2437, %v2441
    %v2443 = vand.u32 2147483647, %v2442
    %v2444 = vsub.f32 0.0, %v2443
    %v2445 = vmul.f32 %v2444, 1.442695
    %v2446 = vpow.pop %v2445
    %v2447 = vadd.f32 %v2446, 1.0
    %v2448 = vrcp.pop %v2447
    %vm2449 = vcmp.ge.f32.partialorder %v2442, 0.0
    %v2450 = vsub.f32 1.0, %v2448
    %v2451 = vsel %vm2449, %v2448, %v2450
    %v2452 = vmax.f32 %v2442, 0.0
    %v2453 = vlog2.pop %v2447
    %v2454 = vmul.f32 %v2453, 0.6931472
    %v2455 = vadd.f32 %v2452, %v2454
    %v2456 = vrcp.pop %v2437
    %v2457 = vmul.f32 %v2456, %v2455
    %v2458 = vsub.f32 1.0, %v2438
    %2460 = vrot.lane.b32.xlu0 %v2457, 1
    %v2461 = vpop.permute.xlu0 %2460
    %v2463 = vmul.f32 %v2458, %v2461
    %2465 = vrot.lane.b32.xlu0 %v2451, 1
    %v2466 = vpop.permute.xlu0 %2465
    %v2468 = vmul.f32 %v2438, %v2466
    %v2469 = vadd.f32 %v2463, %v2468
    %2471 = vset.pattern.permute.xlu0 0
    %2472 = vperm.xlu0 %2471, %v2437
    %v2473 = vpop.permute.xlu0 %2472
    %2476 = vset.pattern.permute.xlu0 1
    %2477 = vperm.xlu0 %2476, %v2438
    %v2478 = vpop.permute.xlu0 %2477
    %v2480 = vsel %vm564, %v2473, %v2478
    %2482 = vset.pattern.permute.xlu0 1
    %2483 = vperm.xlu0 %2482, %v2469
    %v2484 = vpop.permute.xlu0 %2483
    %v2486 = vsel %vm563, %v2484, %v2480
    %s2487 = scalar_lea.vmem %s5, 120
    %2488 = vst.msk [vmem:[%s2487] sm:$0xff] %vm582, %v2486
    %v2489 = vmul.f32 %v2484, %v418
    %v2490 = vadd.f32 %v2489, %v2434
    %v2491 = vld [vmem:[%s241] sm:$0xff]
    %v2492 = vadd.f32 %v2490, %v2491
    %v2493 = vxor.u32 %v2492, 2147483648
    %v2494 = vmul.f32 %v2493, 1.442695
    %v2495 = vpow.pop %v2494
    %v2496 = vadd.f32 %v2495, 1.0
    %v2497 = vrcp.pop %v2496
    %v2498 = vmul.f32 %v2496, %v2497
    %v2499 = vsub.f32 1.0, %v2498
    %v2500 = vmul.f32 %v2497, %v2499
    %v2501 = vadd.f32 %v2497, %v2500
    %vm2502 = vweird.f32 %v2496
    %vm2503 = vweird.f32 %v2497
    %vm2504 = vmor %vm2502, %vm2503
    %v2505 = vsel %vm2504, %v2497, %v2501
    %v2506 = vand.u32 2147483647, %v2496
    %vm2507 = vcmp.eq.f32.partialorder %v2506, 8.507059e+37
    %v2508 = vand.u32 %v2496, 2147483648
    %v2509 = vor.u32 1.1754944e-38, %v2508
    %v2510 = vsel %vm2507, %v2509, %v2505
    %v2511 = vmul.f32 1.0, %v2510
    %v2512 = vmul.f32 %v2511, 2.0
    %v2513 = vsub.f32 %v2512, 1.0
    %v2514 = vmul.f32 %v2511, %v2397
    %2516 = vrot.lane.b32.xlu0 %v2513, 64
    %v2517 = vpop.permute.xlu0 %2516
    %v2519 = vmul.f32 %v2511, %v2517
    %2521 = vrot.lane.b32.xlu0 %v2519, 32
    %v2522 = vpop.permute.xlu0 %2521
    %v2524 = vadd.f32 %v2514, %v2522
    %v2525 = vtanh.pop %v2524
    %2527 = vrot.lane.b32.xlu0 %v2525, 64
    %v2528 = vpop.permute.xlu0 %2527
    %v2530 = vmul.f32 %v2511, %v2528
    %v2531 = vpack.c.bf16 %v2530, %v2530
    %2533 = vrot.lane.b32.xlu0 %v2531, 32
    %v2534 = vpop.permute.xlu0 %2533
    %v2536 = vsel %vm489, %v2534, 0
    %2538 = vmatpush.bf16.msra.mxu0 0
    %2539 = vmatpush.bf16.msra.mxu0 0
    %2540 = vmatpush.bf16.msra.mxu0 0
    %2541 = vmatpush.bf16.msra.mxu0 0
    %2542 = vmatpush.bf16.msra.mxu0 0
    %2543 = vmatpush.bf16.msra.mxu0 0
    %2544 = vmatpush.bf16.msra.mxu0 %v483
    %2545 = vmatpush.bf16.msra.mxu0 %v481
    %2546 = vmatmul.bf16.gmra.mxu0 %v2536
    %v2547 = vpop.f32.mrf.mxu0
    %v2548 = vadd.f32 0.0, %v2547
    %v2549 = vpop.f32.mrf.mxu0
    %2550 = vdwg.mxu0
    %2551 = vmatpush.bf16.msra.mxu0 0
    %2552 = vmatpush.bf16.msra.mxu0 0
    %2553 = vmatpush.bf16.msra.mxu0 0
    %2554 = vmatpush.bf16.msra.mxu0 0
    %2555 = vmatpush.bf16.msra.mxu0 0
    %2556 = vmatpush.bf16.msra.mxu0 0
    %2557 = vmatpush.bf16.msra.mxu0 %v484
    %2558 = vmatpush.bf16.msra.mxu0 %v482
    %2559 = vmatmul.bf16.gmra.mxu0 %v2536
    %v2560 = vpop.f32.mrf.mxu0
    %v2561 = vadd.f32 0.0, %v2560
    %v2562 = vpop.f32.mrf.mxu0
    %2563 = vdwg.mxu0
    %v2564 = vadd.f32 %v2548, %v519
    %v2565 = vadd.f32 %v2548, %v521
    %v2566 = vld [vmem:[%s232] sm:$0xff]
    %v2567 = vmul.f32 %v531, %v2566
    %v2568 = vadd.f32 %v2567, %v533
    %v2569 = vmul.f32 %v2564, %v2568
    %v2570 = vand.u32 2147483647, %v2569
    %v2571 = vsub.f32 0.0, %v2570
    %v2572 = vmul.f32 %v2571, 1.442695
    %v2573 = vpow.pop %v2572
    %v2574 = vadd.f32 %v2573, 1.0
    %v2575 = vrcp.pop %v2574
    %vm2576 = vcmp.ge.f32.partialorder %v2569, 0.0
    %v2577 = vsub.f32 1.0, %v2575
    %v2578 = vsel %vm2576, %v2575, %v2577
    %v2579 = vmax.f32 %v2569, 0.0
    %v2580 = vlog2.pop %v2574
    %v2581 = vmul.f32 %v2580, 0.6931472
    %v2582 = vadd.f32 %v2579, %v2581
    %v2583 = vrcp.pop %v2564
    %v2584 = vmul.f32 %v2583, %v2582
    %v2585 = vsub.f32 1.0, %v2565
    %2587 = vrot.lane.b32.xlu0 %v2584, 1
    %v2588 = vpop.permute.xlu0 %2587
    %v2590 = vmul.f32 %v2585, %v2588
    %2592 = vrot.lane.b32.xlu0 %v2578, 1
    %v2593 = vpop.permute.xlu0 %2592
    %v2595 = vmul.f32 %v2565, %v2593
    %v2596 = vadd.f32 %v2590, %v2595
    %2598 = vset.pattern.permute.xlu0 0
    %2599 = vperm.xlu0 %2598, %v2564
    %v2600 = vpop.permute.xlu0 %2599
    %2603 = vset.pattern.permute.xlu0 1
    %2604 = vperm.xlu0 %2603, %v2565
    %v2605 = vpop.permute.xlu0 %2604
    %v2607 = vsel %vm564, %v2600, %v2605
    %2609 = vset.pattern.permute.xlu0 1
    %2610 = vperm.xlu0 %2609, %v2596
    %v2611 = vpop.permute.xlu0 %2610
    %v2613 = vsel %vm563, %v2611, %v2607
    %s2614 = scalar_lea.vmem %s5, 128
    %2615 = vst.msk [vmem:[%s2614] sm:$0xff] %vm582, %v2613
    %v2616 = vmul.f32 %v2611, %v418
    %v2617 = vadd.f32 %v2616, %v2561
    %v2618 = vld [vmem:[%s252] sm:$0xff]
    %v2619 = vadd.f32 %v2617, %v2618
    %v2620 = vxor.u32 %v2619, 2147483648
    %v2621 = vmul.f32 %v2620, 1.442695
    %v2622 = vpow.pop %v2621
    %v2623 = vadd.f32 %v2622, 1.0
    %v2624 = vrcp.pop %v2623
    %v2625 = vmul.f32 %v2623, %v2624
    %v2626 = vsub.f32 1.0, %v2625
    %v2627 = vmul.f32 %v2624, %v2626
    %v2628 = vadd.f32 %v2624, %v2627
    %vm2629 = vweird.f32 %v2623
    %vm2630 = vweird.f32 %v2624
    %vm2631 = vmor %vm2629, %vm2630
    %v2632 = vsel %vm2631, %v2624, %v2628
    %v2633 = vand.u32 2147483647, %v2623
    %vm2634 = vcmp.eq.f32.partialorder %v2633, 8.507059e+37
    %v2635 = vand.u32 %v2623, 2147483648
    %v2636 = vor.u32 1.1754944e-38, %v2635
    %v2637 = vsel %vm2634, %v2636, %v2632
    %v2638 = vmul.f32 1.0, %v2637
    %v2639 = vmul.f32 %v2638, 2.0
    %v2640 = vsub.f32 %v2639, 1.0
    %v2641 = vmul.f32 %v2638, %v2524
    %2643 = vrot.lane.b32.xlu0 %v2640, 64
    %v2644 = vpop.permute.xlu0 %2643
    %v2646 = vmul.f32 %v2638, %v2644
    %2648 = vrot.lane.b32.xlu0 %v2646, 32
    %v2649 = vpop.permute.xlu0 %2648
    %v2651 = vadd.f32 %v2641, %v2649
    %v2652 = vtanh.pop %v2651
    %2654 = vrot.lane.b32.xlu0 %v2652, 64
    %v2655 = vpop.permute.xlu0 %2654
    %v2657 = vmul.f32 %v2638, %v2655
    %v2658 = vpack.c.bf16 %v2657, %v2657
    %2660 = vrot.lane.b32.xlu0 %v2658, 32
    %v2661 = vpop.permute.xlu0 %2660
    %v2663 = vsel %vm489, %v2661, 0
    %2665 = vmatpush.bf16.msra.mxu0 0
    %2666 = vmatpush.bf16.msra.mxu0 0
    %2667 = vmatpush.bf16.msra.mxu0 0
    %2668 = vmatpush.bf16.msra.mxu0 0
    %2669 = vmatpush.bf16.msra.mxu0 0
    %2670 = vmatpush.bf16.msra.mxu0 0
    %2671 = vmatpush.bf16.msra.mxu0 %v483
    %2672 = vmatpush.bf16.msra.mxu0 %v481
    %2673 = vmatmul.bf16.gmra.mxu0 %v2663
    %v2674 = vpop.f32.mrf.mxu0
    %v2675 = vadd.f32 0.0, %v2674
    %v2676 = vpop.f32.mrf.mxu0
    %2677 = vdwg.mxu0
    %2678 = vmatpush.bf16.msra.mxu0 0
    %2679 = vmatpush.bf16.msra.mxu0 0
    %2680 = vmatpush.bf16.msra.mxu0 0
    %2681 = vmatpush.bf16.msra.mxu0 0
    %2682 = vmatpush.bf16.msra.mxu0 0
    %2683 = vmatpush.bf16.msra.mxu0 0
    %2684 = vmatpush.bf16.msra.mxu0 %v484
    %2685 = vmatpush.bf16.msra.mxu0 %v482
    %2686 = vmatmul.bf16.gmra.mxu0 %v2663
    %v2687 = vpop.f32.mrf.mxu0
    %v2688 = vadd.f32 0.0, %v2687
    %v2689 = vpop.f32.mrf.mxu0
    %2690 = vdwg.mxu0
    %v2691 = vadd.f32 %v2675, %v519
    %v2692 = vadd.f32 %v2675, %v521
    %v2693 = vld [vmem:[%s243] sm:$0xff]
    %v2694 = vmul.f32 %v531, %v2693
    %v2695 = vadd.f32 %v2694, %v533
    %v2696 = vmul.f32 %v2691, %v2695
    %v2697 = vand.u32 2147483647, %v2696
    %v2698 = vsub.f32 0.0, %v2697
    %v2699 = vmul.f32 %v2698, 1.442695
    %v2700 = vpow.pop %v2699
    %v2701 = vadd.f32 %v2700, 1.0
    %v2702 = vrcp.pop %v2701
    %vm2703 = vcmp.ge.f32.partialorder %v2696, 0.0
    %v2704 = vsub.f32 1.0, %v2702
    %v2705 = vsel %vm2703, %v2702, %v2704
    %v2706 = vmax.f32 %v2696, 0.0
    %v2707 = vlog2.pop %v2701
    %v2708 = vmul.f32 %v2707, 0.6931472
    %v2709 = vadd.f32 %v2706, %v2708
    %v2710 = vrcp.pop %v2691
    %v2711 = vmul.f32 %v2710, %v2709
    %v2712 = vsub.f32 1.0, %v2692
    %2714 = vrot.lane.b32.xlu0 %v2711, 1
    %v2715 = vpop.permute.xlu0 %2714
    %v2717 = vmul.f32 %v2712, %v2715
    %2719 = vrot.lane.b32.xlu0 %v2705, 1
    %v2720 = vpop.permute.xlu0 %2719
    %v2722 = vmul.f32 %v2692, %v2720
    %v2723 = vadd.f32 %v2717, %v2722
    %2725 = vset.pattern.permute.xlu0 0
    %2726 = vperm.xlu0 %2725, %v2691
    %v2727 = vpop.permute.xlu0 %2726
    %2730 = vset.pattern.permute.xlu0 1
    %2731 = vperm.xlu0 %2730, %v2692
    %v2732 = vpop.permute.xlu0 %2731
    %v2734 = vsel %vm564, %v2727, %v2732
    %2736 = vset.pattern.permute.xlu0 1
    %2737 = vperm.xlu0 %2736, %v2723
    %v2738 = vpop.permute.xlu0 %2737
    %v2740 = vsel %vm563, %v2738, %v2734
    %s2741 = scalar_lea.vmem %s5, 136
    %2742 = vst.msk [vmem:[%s2741] sm:$0xff] %vm582, %v2740
    %v2743 = vmul.f32 %v2738, %v418
    %v2744 = vadd.f32 %v2743, %v2688
    %v2745 = vld [vmem:[%s263] sm:$0xff]
    %v2746 = vadd.f32 %v2744, %v2745
    %v2747 = vxor.u32 %v2746, 2147483648
    %v2748 = vmul.f32 %v2747, 1.442695
    %v2749 = vpow.pop %v2748
    %v2750 = vadd.f32 %v2749, 1.0
    %v2751 = vrcp.pop %v2750
    %v2752 = vmul.f32 %v2750, %v2751
    %v2753 = vsub.f32 1.0, %v2752
    %v2754 = vmul.f32 %v2751, %v2753
    %v2755 = vadd.f32 %v2751, %v2754
    %vm2756 = vweird.f32 %v2750
    %vm2757 = vweird.f32 %v2751
    %vm2758 = vmor %vm2756, %vm2757
    %v2759 = vsel %vm2758, %v2751, %v2755
    %v2760 = vand.u32 2147483647, %v2750
    %vm2761 = vcmp.eq.f32.partialorder %v2760, 8.507059e+37
    %v2762 = vand.u32 %v2750, 2147483648
    %v2763 = vor.u32 1.1754944e-38, %v2762
    %v2764 = vsel %vm2761, %v2763, %v2759
    %v2765 = vmul.f32 1.0, %v2764
    %v2766 = vmul.f32 %v2765, 2.0
    %v2767 = vsub.f32 %v2766, 1.0
    %v2768 = vmul.f32 %v2765, %v2651
    %2770 = vrot.lane.b32.xlu0 %v2767, 64
    %v2771 = vpop.permute.xlu0 %2770
    %v2773 = vmul.f32 %v2765, %v2771
    %2775 = vrot.lane.b32.xlu0 %v2773, 32
    %v2776 = vpop.permute.xlu0 %2775
    %v2778 = vadd.f32 %v2768, %v2776
    %v2779 = vtanh.pop %v2778
    %2781 = vrot.lane.b32.xlu0 %v2779, 64
    %v2782 = vpop.permute.xlu0 %2781
    %v2784 = vmul.f32 %v2765, %v2782
    %v2785 = vpack.c.bf16 %v2784, %v2784
    %2787 = vrot.lane.b32.xlu0 %v2785, 32
    %v2788 = vpop.permute.xlu0 %2787
    %v2790 = vsel %vm489, %v2788, 0
    %2792 = vmatpush.bf16.msra.mxu0 0
    %2793 = vmatpush.bf16.msra.mxu0 0
    %2794 = vmatpush.bf16.msra.mxu0 0
    %2795 = vmatpush.bf16.msra.mxu0 0
    %2796 = vmatpush.bf16.msra.mxu0 0
    %2797 = vmatpush.bf16.msra.mxu0 0
    %2798 = vmatpush.bf16.msra.mxu0 %v483
    %2799 = vmatpush.bf16.msra.mxu0 %v481
    %2800 = vmatmul.bf16.gmra.mxu0 %v2790
    %v2801 = vpop.f32.mrf.mxu0
    %v2802 = vadd.f32 0.0, %v2801
    %v2803 = vpop.f32.mrf.mxu0
    %2804 = vdwg.mxu0
    %2805 = vmatpush.bf16.msra.mxu0 0
    %2806 = vmatpush.bf16.msra.mxu0 0
    %2807 = vmatpush.bf16.msra.mxu0 0
    %2808 = vmatpush.bf16.msra.mxu0 0
    %2809 = vmatpush.bf16.msra.mxu0 0
    %2810 = vmatpush.bf16.msra.mxu0 0
    %2811 = vmatpush.bf16.msra.mxu0 %v484
    %2812 = vmatpush.bf16.msra.mxu0 %v482
    %2813 = vmatmul.bf16.gmra.mxu0 %v2790
    %v2814 = vpop.f32.mrf.mxu0
    %v2815 = vadd.f32 0.0, %v2814
    %v2816 = vpop.f32.mrf.mxu0
    %2817 = vdwg.mxu0
    %v2818 = vadd.f32 %v2802, %v519
    %v2819 = vadd.f32 %v2802, %v521
    %v2820 = vld [vmem:[%s254] sm:$0xff]
    %v2821 = vmul.f32 %v531, %v2820
    %v2822 = vadd.f32 %v2821, %v533
    %v2823 = vmul.f32 %v2818, %v2822
    %v2824 = vand.u32 2147483647, %v2823
    %v2825 = vsub.f32 0.0, %v2824
    %v2826 = vmul.f32 %v2825, 1.442695
    %v2827 = vpow.pop %v2826
    %v2828 = vadd.f32 %v2827, 1.0
    %v2829 = vrcp.pop %v2828
    %vm2830 = vcmp.ge.f32.partialorder %v2823, 0.0
    %v2831 = vsub.f32 1.0, %v2829
    %v2832 = vsel %vm2830, %v2829, %v2831
    %v2833 = vmax.f32 %v2823, 0.0
    %v2834 = vlog2.pop %v2828
    %v2835 = vmul.f32 %v2834, 0.6931472
    %v2836 = vadd.f32 %v2833, %v2835
    %v2837 = vrcp.pop %v2818
    %v2838 = vmul.f32 %v2837, %v2836
    %v2839 = vsub.f32 1.0, %v2819
    %2841 = vrot.lane.b32.xlu0 %v2838, 1
    %v2842 = vpop.permute.xlu0 %2841
    %v2844 = vmul.f32 %v2839, %v2842
    %2846 = vrot.lane.b32.xlu0 %v2832, 1
    %v2847 = vpop.permute.xlu0 %2846
    %v2849 = vmul.f32 %v2819, %v2847
    %v2850 = vadd.f32 %v2844, %v2849
    %2852 = vset.pattern.permute.xlu0 0
    %2853 = vperm.xlu0 %2852, %v2818
    %v2854 = vpop.permute.xlu0 %2853
    %2857 = vset.pattern.permute.xlu0 1
    %2858 = vperm.xlu0 %2857, %v2819
    %v2859 = vpop.permute.xlu0 %2858
    %v2861 = vsel %vm564, %v2854, %v2859
    %2863 = vset.pattern.permute.xlu0 1
    %2864 = vperm.xlu0 %2863, %v2850
    %v2865 = vpop.permute.xlu0 %2864
    %v2867 = vsel %vm563, %v2865, %v2861
    %s2868 = scalar_lea.vmem %s5, 144
    %2869 = vst.msk [vmem:[%s2868] sm:$0xff] %vm582, %v2867
    %v2870 = vmul.f32 %v2865, %v418
    %v2871 = vadd.f32 %v2870, %v2815
    %v2872 = vld [vmem:[%s274] sm:$0xff]
    %v2873 = vadd.f32 %v2871, %v2872
    %v2874 = vxor.u32 %v2873, 2147483648
    %v2875 = vmul.f32 %v2874, 1.442695
    %v2876 = vpow.pop %v2875
    %v2877 = vadd.f32 %v2876, 1.0
    %v2878 = vrcp.pop %v2877
    %v2879 = vmul.f32 %v2877, %v2878
    %v2880 = vsub.f32 1.0, %v2879
    %v2881 = vmul.f32 %v2878, %v2880
    %v2882 = vadd.f32 %v2878, %v2881
    %vm2883 = vweird.f32 %v2877
    %vm2884 = vweird.f32 %v2878
    %vm2885 = vmor %vm2883, %vm2884
    %v2886 = vsel %vm2885, %v2878, %v2882
    %v2887 = vand.u32 2147483647, %v2877
    %vm2888 = vcmp.eq.f32.partialorder %v2887, 8.507059e+37
    %v2889 = vand.u32 %v2877, 2147483648
    %v2890 = vor.u32 1.1754944e-38, %v2889
    %v2891 = vsel %vm2888, %v2890, %v2886
    %v2892 = vmul.f32 1.0, %v2891
    %v2893 = vmul.f32 %v2892, 2.0
    %v2894 = vsub.f32 %v2893, 1.0
    %v2895 = vmul.f32 %v2892, %v2778
    %2897 = vrot.lane.b32.xlu0 %v2894, 64
    %v2898 = vpop.permute.xlu0 %2897
    %v2900 = vmul.f32 %v2892, %v2898
    %2902 = vrot.lane.b32.xlu0 %v2900, 32
    %v2903 = vpop.permute.xlu0 %2902
    %v2905 = vadd.f32 %v2895, %v2903
    %v2906 = vtanh.pop %v2905
    %2908 = vrot.lane.b32.xlu0 %v2906, 64
    %v2909 = vpop.permute.xlu0 %2908
    %v2911 = vmul.f32 %v2892, %v2909
    %v2912 = vpack.c.bf16 %v2911, %v2911
    %2914 = vrot.lane.b32.xlu0 %v2912, 32
    %v2915 = vpop.permute.xlu0 %2914
    %v2917 = vsel %vm489, %v2915, 0
    %2919 = vmatpush.bf16.msra.mxu0 0
    %2920 = vmatpush.bf16.msra.mxu0 0
    %2921 = vmatpush.bf16.msra.mxu0 0
    %2922 = vmatpush.bf16.msra.mxu0 0
    %2923 = vmatpush.bf16.msra.mxu0 0
    %2924 = vmatpush.bf16.msra.mxu0 0
    %2925 = vmatpush.bf16.msra.mxu0 %v483
    %2926 = vmatpush.bf16.msra.mxu0 %v481
    %2927 = vmatmul.bf16.gmra.mxu0 %v2917
    %v2928 = vpop.f32.mrf.mxu0
    %v2929 = vadd.f32 0.0, %v2928
    %v2930 = vpop.f32.mrf.mxu0
    %2931 = vdwg.mxu0
    %2932 = vmatpush.bf16.msra.mxu0 0
    %2933 = vmatpush.bf16.msra.mxu0 0
    %2934 = vmatpush.bf16.msra.mxu0 0
    %2935 = vmatpush.bf16.msra.mxu0 0
    %2936 = vmatpush.bf16.msra.mxu0 0
    %2937 = vmatpush.bf16.msra.mxu0 0
    %2938 = vmatpush.bf16.msra.mxu0 %v484
    %2939 = vmatpush.bf16.msra.mxu0 %v482
    %2940 = vmatmul.bf16.gmra.mxu0 %v2917
    %v2941 = vpop.f32.mrf.mxu0
    %v2942 = vadd.f32 0.0, %v2941
    %v2943 = vpop.f32.mrf.mxu0
    %2944 = vdwg.mxu0
    %v2945 = vadd.f32 %v2929, %v519
    %v2946 = vadd.f32 %v2929, %v521
    %v2947 = vld [vmem:[%s265] sm:$0xff]
    %v2948 = vmul.f32 %v531, %v2947
    %v2949 = vadd.f32 %v2948, %v533
    %v2950 = vmul.f32 %v2945, %v2949
    %v2951 = vand.u32 2147483647, %v2950
    %v2952 = vsub.f32 0.0, %v2951
    %v2953 = vmul.f32 %v2952, 1.442695
    %v2954 = vpow.pop %v2953
    %v2955 = vadd.f32 %v2954, 1.0
    %v2956 = vrcp.pop %v2955
    %vm2957 = vcmp.ge.f32.partialorder %v2950, 0.0
    %v2958 = vsub.f32 1.0, %v2956
    %v2959 = vsel %vm2957, %v2956, %v2958
    %v2960 = vmax.f32 %v2950, 0.0
    %v2961 = vlog2.pop %v2955
    %v2962 = vmul.f32 %v2961, 0.6931472
    %v2963 = vadd.f32 %v2960, %v2962
    %v2964 = vrcp.pop %v2945
    %v2965 = vmul.f32 %v2964, %v2963
    %v2966 = vsub.f32 1.0, %v2946
    %2968 = vrot.lane.b32.xlu0 %v2965, 1
    %v2969 = vpop.permute.xlu0 %2968
    %v2971 = vmul.f32 %v2966, %v2969
    %2973 = vrot.lane.b32.xlu0 %v2959, 1
    %v2974 = vpop.permute.xlu0 %2973
    %v2976 = vmul.f32 %v2946, %v2974
    %v2977 = vadd.f32 %v2971, %v2976
    %2979 = vset.pattern.permute.xlu0 0
    %2980 = vperm.xlu0 %2979, %v2945
    %v2981 = vpop.permute.xlu0 %2980
    %2984 = vset.pattern.permute.xlu0 1
    %2985 = vperm.xlu0 %2984, %v2946
    %v2986 = vpop.permute.xlu0 %2985
    %v2988 = vsel %vm564, %v2981, %v2986
    %2990 = vset.pattern.permute.xlu0 1
    %2991 = vperm.xlu0 %2990, %v2977
    %v2992 = vpop.permute.xlu0 %2991
    %v2994 = vsel %vm563, %v2992, %v2988
    %s2995 = scalar_lea.vmem %s5, 152
    %2996 = vst.msk [vmem:[%s2995] sm:$0xff] %vm582, %v2994
    %v2997 = vmul.f32 %v2992, %v418
    %v2998 = vadd.f32 %v2997, %v2942
    %v2999 = vld [vmem:[%s285] sm:$0xff]
    %v3000 = vadd.f32 %v2998, %v2999
    %v3001 = vxor.u32 %v3000, 2147483648
    %v3002 = vmul.f32 %v3001, 1.442695
    %v3003 = vpow.pop %v3002
    %v3004 = vadd.f32 %v3003, 1.0
    %v3005 = vrcp.pop %v3004
    %v3006 = vmul.f32 %v3004, %v3005
    %v3007 = vsub.f32 1.0, %v3006
    %v3008 = vmul.f32 %v3005, %v3007
    %v3009 = vadd.f32 %v3005, %v3008
    %vm3010 = vweird.f32 %v3004
    %vm3011 = vweird.f32 %v3005
    %vm3012 = vmor %vm3010, %vm3011
    %v3013 = vsel %vm3012, %v3005, %v3009
    %v3014 = vand.u32 2147483647, %v3004
    %vm3015 = vcmp.eq.f32.partialorder %v3014, 8.507059e+37
    %v3016 = vand.u32 %v3004, 2147483648
    %v3017 = vor.u32 1.1754944e-38, %v3016
    %v3018 = vsel %vm3015, %v3017, %v3013
    %v3019 = vmul.f32 1.0, %v3018
    %v3020 = vmul.f32 %v3019, 2.0
    %v3021 = vsub.f32 %v3020, 1.0
    %v3022 = vmul.f32 %v3019, %v2905
    %3024 = vrot.lane.b32.xlu0 %v3021, 64
    %v3025 = vpop.permute.xlu0 %3024
    %v3027 = vmul.f32 %v3019, %v3025
    %3029 = vrot.lane.b32.xlu0 %v3027, 32
    %v3030 = vpop.permute.xlu0 %3029
    %v3032 = vadd.f32 %v3022, %v3030
    %v3033 = vtanh.pop %v3032
    %3035 = vrot.lane.b32.xlu0 %v3033, 64
    %v3036 = vpop.permute.xlu0 %3035
    %v3038 = vmul.f32 %v3019, %v3036
    %v3039 = vpack.c.bf16 %v3038, %v3038
    %3041 = vrot.lane.b32.xlu0 %v3039, 32
    %v3042 = vpop.permute.xlu0 %3041
    %v3044 = vsel %vm489, %v3042, 0
    %3046 = vmatpush.bf16.msra.mxu0 0
    %3047 = vmatpush.bf16.msra.mxu0 0
    %3048 = vmatpush.bf16.msra.mxu0 0
    %3049 = vmatpush.bf16.msra.mxu0 0
    %3050 = vmatpush.bf16.msra.mxu0 0
    %3051 = vmatpush.bf16.msra.mxu0 0
    %3052 = vmatpush.bf16.msra.mxu0 %v483
    %3053 = vmatpush.bf16.msra.mxu0 %v481
    %3054 = vmatmul.bf16.gmra.mxu0 %v3044
    %v3055 = vpop.f32.mrf.mxu0
    %v3056 = vadd.f32 0.0, %v3055
    %v3057 = vpop.f32.mrf.mxu0
    %3058 = vdwg.mxu0
    %3059 = vmatpush.bf16.msra.mxu0 0
    %3060 = vmatpush.bf16.msra.mxu0 0
    %3061 = vmatpush.bf16.msra.mxu0 0
    %3062 = vmatpush.bf16.msra.mxu0 0
    %3063 = vmatpush.bf16.msra.mxu0 0
    %3064 = vmatpush.bf16.msra.mxu0 0
    %3065 = vmatpush.bf16.msra.mxu0 %v484
    %3066 = vmatpush.bf16.msra.mxu0 %v482
    %3067 = vmatmul.bf16.gmra.mxu0 %v3044
    %v3068 = vpop.f32.mrf.mxu0
    %v3069 = vadd.f32 0.0, %v3068
    %v3070 = vpop.f32.mrf.mxu0
    %3071 = vdwg.mxu0
    %v3072 = vadd.f32 %v3056, %v519
    %v3073 = vadd.f32 %v3056, %v521
    %v3074 = vld [vmem:[%s276] sm:$0xff]
    %v3075 = vmul.f32 %v531, %v3074
    %v3076 = vadd.f32 %v3075, %v533
    %v3077 = vmul.f32 %v3072, %v3076
    %v3078 = vand.u32 2147483647, %v3077
    %v3079 = vsub.f32 0.0, %v3078
    %v3080 = vmul.f32 %v3079, 1.442695
    %v3081 = vpow.pop %v3080
    %v3082 = vadd.f32 %v3081, 1.0
    %v3083 = vrcp.pop %v3082
    %vm3084 = vcmp.ge.f32.partialorder %v3077, 0.0
    %v3085 = vsub.f32 1.0, %v3083
    %v3086 = vsel %vm3084, %v3083, %v3085
    %v3087 = vmax.f32 %v3077, 0.0
    %v3088 = vlog2.pop %v3082
    %v3089 = vmul.f32 %v3088, 0.6931472
    %v3090 = vadd.f32 %v3087, %v3089
    %v3091 = vrcp.pop %v3072
    %v3092 = vmul.f32 %v3091, %v3090
    %v3093 = vsub.f32 1.0, %v3073
    %3095 = vrot.lane.b32.xlu0 %v3092, 1
    %v3096 = vpop.permute.xlu0 %3095
    %v3098 = vmul.f32 %v3093, %v3096
    %3100 = vrot.lane.b32.xlu0 %v3086, 1
    %v3101 = vpop.permute.xlu0 %3100
    %v3103 = vmul.f32 %v3073, %v3101
    %v3104 = vadd.f32 %v3098, %v3103
    %3106 = vset.pattern.permute.xlu0 0
    %3107 = vperm.xlu0 %3106, %v3072
    %v3108 = vpop.permute.xlu0 %3107
    %3111 = vset.pattern.permute.xlu0 1
    %3112 = vperm.xlu0 %3111, %v3073
    %v3113 = vpop.permute.xlu0 %3112
    %v3115 = vsel %vm564, %v3108, %v3113
    %3117 = vset.pattern.permute.xlu0 1
    %3118 = vperm.xlu0 %3117, %v3104
    %v3119 = vpop.permute.xlu0 %3118
    %v3121 = vsel %vm563, %v3119, %v3115
    %s3122 = scalar_lea.vmem %s5, 160
    %3123 = vst.msk [vmem:[%s3122] sm:$0xff] %vm582, %v3121
    %v3124 = vmul.f32 %v3119, %v418
    %v3125 = vadd.f32 %v3124, %v3069
    %v3126 = vld [vmem:[%s296] sm:$0xff]
    %v3127 = vadd.f32 %v3125, %v3126
    %v3128 = vxor.u32 %v3127, 2147483648
    %v3129 = vmul.f32 %v3128, 1.442695
    %v3130 = vpow.pop %v3129
    %v3131 = vadd.f32 %v3130, 1.0
    %v3132 = vrcp.pop %v3131
    %v3133 = vmul.f32 %v3131, %v3132
    %v3134 = vsub.f32 1.0, %v3133
    %v3135 = vmul.f32 %v3132, %v3134
    %v3136 = vadd.f32 %v3132, %v3135
    %vm3137 = vweird.f32 %v3131
    %vm3138 = vweird.f32 %v3132
    %vm3139 = vmor %vm3137, %vm3138
    %v3140 = vsel %vm3139, %v3132, %v3136
    %v3141 = vand.u32 2147483647, %v3131
    %vm3142 = vcmp.eq.f32.partialorder %v3141, 8.507059e+37
    %v3143 = vand.u32 %v3131, 2147483648
    %v3144 = vor.u32 1.1754944e-38, %v3143
    %v3145 = vsel %vm3142, %v3144, %v3140
    %v3146 = vmul.f32 1.0, %v3145
    %v3147 = vmul.f32 %v3146, 2.0
    %v3148 = vsub.f32 %v3147, 1.0
    %v3149 = vmul.f32 %v3146, %v3032
    %3151 = vrot.lane.b32.xlu0 %v3148, 64
    %v3152 = vpop.permute.xlu0 %3151
    %v3154 = vmul.f32 %v3146, %v3152
    %3156 = vrot.lane.b32.xlu0 %v3154, 32
    %v3157 = vpop.permute.xlu0 %3156
    %v3159 = vadd.f32 %v3149, %v3157
    %v3160 = vtanh.pop %v3159
    %3162 = vrot.lane.b32.xlu0 %v3160, 64
    %v3163 = vpop.permute.xlu0 %3162
    %v3165 = vmul.f32 %v3146, %v3163
    %v3166 = vpack.c.bf16 %v3165, %v3165
    %3168 = vrot.lane.b32.xlu0 %v3166, 32
    %v3169 = vpop.permute.xlu0 %3168
    %v3171 = vsel %vm489, %v3169, 0
    %3173 = vmatpush.bf16.msra.mxu0 0
    %3174 = vmatpush.bf16.msra.mxu0 0
    %3175 = vmatpush.bf16.msra.mxu0 0
    %3176 = vmatpush.bf16.msra.mxu0 0
    %3177 = vmatpush.bf16.msra.mxu0 0
    %3178 = vmatpush.bf16.msra.mxu0 0
    %3179 = vmatpush.bf16.msra.mxu0 %v483
    %3180 = vmatpush.bf16.msra.mxu0 %v481
    %3181 = vmatmul.bf16.gmra.mxu0 %v3171
    %v3182 = vpop.f32.mrf.mxu0
    %v3183 = vadd.f32 0.0, %v3182
    %v3184 = vpop.f32.mrf.mxu0
    %3185 = vdwg.mxu0
    %3186 = vmatpush.bf16.msra.mxu0 0
    %3187 = vmatpush.bf16.msra.mxu0 0
    %3188 = vmatpush.bf16.msra.mxu0 0
    %3189 = vmatpush.bf16.msra.mxu0 0
    %3190 = vmatpush.bf16.msra.mxu0 0
    %3191 = vmatpush.bf16.msra.mxu0 0
    %3192 = vmatpush.bf16.msra.mxu0 %v484
    %3193 = vmatpush.bf16.msra.mxu0 %v482
    %3194 = vmatmul.bf16.gmra.mxu0 %v3171
    %v3195 = vpop.f32.mrf.mxu0
    %v3196 = vadd.f32 0.0, %v3195
    %v3197 = vpop.f32.mrf.mxu0
    %3198 = vdwg.mxu0
    %v3199 = vadd.f32 %v3183, %v519
    %v3200 = vadd.f32 %v3183, %v521
    %v3201 = vld [vmem:[%s287] sm:$0xff]
    %v3202 = vmul.f32 %v531, %v3201
    %v3203 = vadd.f32 %v3202, %v533
    %v3204 = vmul.f32 %v3199, %v3203
    %v3205 = vand.u32 2147483647, %v3204
    %v3206 = vsub.f32 0.0, %v3205
    %v3207 = vmul.f32 %v3206, 1.442695
    %v3208 = vpow.pop %v3207
    %v3209 = vadd.f32 %v3208, 1.0
    %v3210 = vrcp.pop %v3209
    %vm3211 = vcmp.ge.f32.partialorder %v3204, 0.0
    %v3212 = vsub.f32 1.0, %v3210
    %v3213 = vsel %vm3211, %v3210, %v3212
    %v3214 = vmax.f32 %v3204, 0.0
    %v3215 = vlog2.pop %v3209
    %v3216 = vmul.f32 %v3215, 0.6931472
    %v3217 = vadd.f32 %v3214, %v3216
    %v3218 = vrcp.pop %v3199
    %v3219 = vmul.f32 %v3218, %v3217
    %v3220 = vsub.f32 1.0, %v3200
    %3222 = vrot.lane.b32.xlu0 %v3219, 1
    %v3223 = vpop.permute.xlu0 %3222
    %v3225 = vmul.f32 %v3220, %v3223
    %3227 = vrot.lane.b32.xlu0 %v3213, 1
    %v3228 = vpop.permute.xlu0 %3227
    %v3230 = vmul.f32 %v3200, %v3228
    %v3231 = vadd.f32 %v3225, %v3230
    %3233 = vset.pattern.permute.xlu0 0
    %3234 = vperm.xlu0 %3233, %v3199
    %v3235 = vpop.permute.xlu0 %3234
    %3238 = vset.pattern.permute.xlu0 1
    %3239 = vperm.xlu0 %3238, %v3200
    %v3240 = vpop.permute.xlu0 %3239
    %v3242 = vsel %vm564, %v3235, %v3240
    %3244 = vset.pattern.permute.xlu0 1
    %3245 = vperm.xlu0 %3244, %v3231
    %v3246 = vpop.permute.xlu0 %3245
    %v3248 = vsel %vm563, %v3246, %v3242
    %s3249 = scalar_lea.vmem %s5, 168
    %3250 = vst.msk [vmem:[%s3249] sm:$0xff] %vm582, %v3248
    %v3251 = vmul.f32 %v3246, %v418
    %v3252 = vadd.f32 %v3251, %v3196
    %v3253 = vld [vmem:[%s307] sm:$0xff]
    %v3254 = vadd.f32 %v3252, %v3253
    %v3255 = vxor.u32 %v3254, 2147483648
    %v3256 = vmul.f32 %v3255, 1.442695
    %v3257 = vpow.pop %v3256
    %v3258 = vadd.f32 %v3257, 1.0
    %v3259 = vrcp.pop %v3258
    %v3260 = vmul.f32 %v3258, %v3259
    %v3261 = vsub.f32 1.0, %v3260
    %v3262 = vmul.f32 %v3259, %v3261
    %v3263 = vadd.f32 %v3259, %v3262
    %vm3264 = vweird.f32 %v3258
    %vm3265 = vweird.f32 %v3259
    %vm3266 = vmor %vm3264, %vm3265
    %v3267 = vsel %vm3266, %v3259, %v3263
    %v3268 = vand.u32 2147483647, %v3258
    %vm3269 = vcmp.eq.f32.partialorder %v3268, 8.507059e+37
    %v3270 = vand.u32 %v3258, 2147483648
    %v3271 = vor.u32 1.1754944e-38, %v3270
    %v3272 = vsel %vm3269, %v3271, %v3267
    %v3273 = vmul.f32 1.0, %v3272
    %v3274 = vmul.f32 %v3273, 2.0
    %v3275 = vsub.f32 %v3274, 1.0
    %v3276 = vmul.f32 %v3273, %v3159
    %3278 = vrot.lane.b32.xlu0 %v3275, 64
    %v3279 = vpop.permute.xlu0 %3278
    %v3281 = vmul.f32 %v3273, %v3279
    %3283 = vrot.lane.b32.xlu0 %v3281, 32
    %v3284 = vpop.permute.xlu0 %3283
    %v3286 = vadd.f32 %v3276, %v3284
    %v3287 = vtanh.pop %v3286
    %3289 = vrot.lane.b32.xlu0 %v3287, 64
    %v3290 = vpop.permute.xlu0 %3289
    %v3292 = vmul.f32 %v3273, %v3290
    %v3293 = vpack.c.bf16 %v3292, %v3292
    %3295 = vrot.lane.b32.xlu0 %v3293, 32
    %v3296 = vpop.permute.xlu0 %3295
    %v3298 = vsel %vm489, %v3296, 0
    %3300 = vmatpush.bf16.msra.mxu0 0
    %3301 = vmatpush.bf16.msra.mxu0 0
    %3302 = vmatpush.bf16.msra.mxu0 0
    %3303 = vmatpush.bf16.msra.mxu0 0
    %3304 = vmatpush.bf16.msra.mxu0 0
    %3305 = vmatpush.bf16.msra.mxu0 0
    %3306 = vmatpush.bf16.msra.mxu0 %v483
    %3307 = vmatpush.bf16.msra.mxu0 %v481
    %3308 = vmatmul.bf16.gmra.mxu0 %v3298
    %v3309 = vpop.f32.mrf.mxu0
    %v3310 = vadd.f32 0.0, %v3309
    %v3311 = vpop.f32.mrf.mxu0
    %3312 = vdwg.mxu0
    %3313 = vmatpush.bf16.msra.mxu0 0
    %3314 = vmatpush.bf16.msra.mxu0 0
    %3315 = vmatpush.bf16.msra.mxu0 0
    %3316 = vmatpush.bf16.msra.mxu0 0
    %3317 = vmatpush.bf16.msra.mxu0 0
    %3318 = vmatpush.bf16.msra.mxu0 0
    %3319 = vmatpush.bf16.msra.mxu0 %v484
    %3320 = vmatpush.bf16.msra.mxu0 %v482
    %3321 = vmatmul.bf16.gmra.mxu0 %v3298
    %v3322 = vpop.f32.mrf.mxu0
    %v3323 = vadd.f32 0.0, %v3322
    %v3324 = vpop.f32.mrf.mxu0
    %3325 = vdwg.mxu0
    %v3326 = vadd.f32 %v3310, %v519
    %v3327 = vadd.f32 %v3310, %v521
    %v3328 = vld [vmem:[%s298] sm:$0xff]
    %v3329 = vmul.f32 %v531, %v3328
    %v3330 = vadd.f32 %v3329, %v533
    %v3331 = vmul.f32 %v3326, %v3330
    %v3332 = vand.u32 2147483647, %v3331
    %v3333 = vsub.f32 0.0, %v3332
    %v3334 = vmul.f32 %v3333, 1.442695
    %v3335 = vpow.pop %v3334
    %v3336 = vadd.f32 %v3335, 1.0
    %v3337 = vrcp.pop %v3336
    %vm3338 = vcmp.ge.f32.partialorder %v3331, 0.0
    %v3339 = vsub.f32 1.0, %v3337
    %v3340 = vsel %vm3338, %v3337, %v3339
    %v3341 = vmax.f32 %v3331, 0.0
    %v3342 = vlog2.pop %v3336
    %v3343 = vmul.f32 %v3342, 0.6931472
    %v3344 = vadd.f32 %v3341, %v3343
    %v3345 = vrcp.pop %v3326
    %v3346 = vmul.f32 %v3345, %v3344
    %v3347 = vsub.f32 1.0, %v3327
    %3349 = vrot.lane.b32.xlu0 %v3346, 1
    %v3350 = vpop.permute.xlu0 %3349
    %v3352 = vmul.f32 %v3347, %v3350
    %3354 = vrot.lane.b32.xlu0 %v3340, 1
    %v3355 = vpop.permute.xlu0 %3354
    %v3357 = vmul.f32 %v3327, %v3355
    %v3358 = vadd.f32 %v3352, %v3357
    %3360 = vset.pattern.permute.xlu0 0
    %3361 = vperm.xlu0 %3360, %v3326
    %v3362 = vpop.permute.xlu0 %3361
    %3365 = vset.pattern.permute.xlu0 1
    %3366 = vperm.xlu0 %3365, %v3327
    %v3367 = vpop.permute.xlu0 %3366
    %v3369 = vsel %vm564, %v3362, %v3367
    %3371 = vset.pattern.permute.xlu0 1
    %3372 = vperm.xlu0 %3371, %v3358
    %v3373 = vpop.permute.xlu0 %3372
    %v3375 = vsel %vm563, %v3373, %v3369
    %s3376 = scalar_lea.vmem %s5, 176
    %3377 = vst.msk [vmem:[%s3376] sm:$0xff] %vm582, %v3375
    %v3378 = vmul.f32 %v3373, %v418
    %v3379 = vadd.f32 %v3378, %v3323
    %v3380 = vld [vmem:[%s318] sm:$0xff]
    %v3381 = vadd.f32 %v3379, %v3380
    %v3382 = vxor.u32 %v3381, 2147483648
    %v3383 = vmul.f32 %v3382, 1.442695
    %v3384 = vpow.pop %v3383
    %v3385 = vadd.f32 %v3384, 1.0
    %v3386 = vrcp.pop %v3385
    %v3387 = vmul.f32 %v3385, %v3386
    %v3388 = vsub.f32 1.0, %v3387
    %v3389 = vmul.f32 %v3386, %v3388
    %v3390 = vadd.f32 %v3386, %v3389
    %vm3391 = vweird.f32 %v3385
    %vm3392 = vweird.f32 %v3386
    %vm3393 = vmor %vm3391, %vm3392
    %v3394 = vsel %vm3393, %v3386, %v3390
    %v3395 = vand.u32 2147483647, %v3385
    %vm3396 = vcmp.eq.f32.partialorder %v3395, 8.507059e+37
    %v3397 = vand.u32 %v3385, 2147483648
    %v3398 = vor.u32 1.1754944e-38, %v3397
    %v3399 = vsel %vm3396, %v3398, %v3394
    %v3400 = vmul.f32 1.0, %v3399
    %v3401 = vmul.f32 %v3400, 2.0
    %v3402 = vsub.f32 %v3401, 1.0
    %v3403 = vmul.f32 %v3400, %v3286
    %3405 = vrot.lane.b32.xlu0 %v3402, 64
    %v3406 = vpop.permute.xlu0 %3405
    %v3408 = vmul.f32 %v3400, %v3406
    %3410 = vrot.lane.b32.xlu0 %v3408, 32
    %v3411 = vpop.permute.xlu0 %3410
    %v3413 = vadd.f32 %v3403, %v3411
    %v3414 = vtanh.pop %v3413
    %3416 = vrot.lane.b32.xlu0 %v3414, 64
    %v3417 = vpop.permute.xlu0 %3416
    %v3419 = vmul.f32 %v3400, %v3417
    %v3420 = vpack.c.bf16 %v3419, %v3419
    %3422 = vrot.lane.b32.xlu0 %v3420, 32
    %v3423 = vpop.permute.xlu0 %3422
    %v3425 = vsel %vm489, %v3423, 0
    %3427 = vmatpush.bf16.msra.mxu0 0
    %3428 = vmatpush.bf16.msra.mxu0 0
    %3429 = vmatpush.bf16.msra.mxu0 0
    %3430 = vmatpush.bf16.msra.mxu0 0
    %3431 = vmatpush.bf16.msra.mxu0 0
    %3432 = vmatpush.bf16.msra.mxu0 0
    %3433 = vmatpush.bf16.msra.mxu0 %v483
    %3434 = vmatpush.bf16.msra.mxu0 %v481
    %3435 = vmatmul.bf16.gmra.mxu0 %v3425
    %v3436 = vpop.f32.mrf.mxu0
    %v3437 = vadd.f32 0.0, %v3436
    %v3438 = vpop.f32.mrf.mxu0
    %3439 = vdwg.mxu0
    %3440 = vmatpush.bf16.msra.mxu0 0
    %3441 = vmatpush.bf16.msra.mxu0 0
    %3442 = vmatpush.bf16.msra.mxu0 0
    %3443 = vmatpush.bf16.msra.mxu0 0
    %3444 = vmatpush.bf16.msra.mxu0 0
    %3445 = vmatpush.bf16.msra.mxu0 0
    %3446 = vmatpush.bf16.msra.mxu0 %v484
    %3447 = vmatpush.bf16.msra.mxu0 %v482
    %3448 = vmatmul.bf16.gmra.mxu0 %v3425
    %v3449 = vpop.f32.mrf.mxu0
    %v3450 = vadd.f32 0.0, %v3449
    %v3451 = vpop.f32.mrf.mxu0
    %3452 = vdwg.mxu0
    %v3453 = vadd.f32 %v3437, %v519
    %v3454 = vadd.f32 %v3437, %v521
    %v3455 = vld [vmem:[%s309] sm:$0xff]
    %v3456 = vmul.f32 %v531, %v3455
    %v3457 = vadd.f32 %v3456, %v533
    %v3458 = vmul.f32 %v3453, %v3457
    %v3459 = vand.u32 2147483647, %v3458
    %v3460 = vsub.f32 0.0, %v3459
    %v3461 = vmul.f32 %v3460, 1.442695
    %v3462 = vpow.pop %v3461
    %v3463 = vadd.f32 %v3462, 1.0
    %v3464 = vrcp.pop %v3463
    %vm3465 = vcmp.ge.f32.partialorder %v3458, 0.0
    %v3466 = vsub.f32 1.0, %v3464
    %v3467 = vsel %vm3465, %v3464, %v3466
    %v3468 = vmax.f32 %v3458, 0.0
    %v3469 = vlog2.pop %v3463
    %v3470 = vmul.f32 %v3469, 0.6931472
    %v3471 = vadd.f32 %v3468, %v3470
    %v3472 = vrcp.pop %v3453
    %v3473 = vmul.f32 %v3472, %v3471
    %v3474 = vsub.f32 1.0, %v3454
    %3476 = vrot.lane.b32.xlu0 %v3473, 1
    %v3477 = vpop.permute.xlu0 %3476
    %v3479 = vmul.f32 %v3474, %v3477
    %3481 = vrot.lane.b32.xlu0 %v3467, 1
    %v3482 = vpop.permute.xlu0 %3481
    %v3484 = vmul.f32 %v3454, %v3482
    %v3485 = vadd.f32 %v3479, %v3484
    %3487 = vset.pattern.permute.xlu0 0
    %3488 = vperm.xlu0 %3487, %v3453
    %v3489 = vpop.permute.xlu0 %3488
    %3492 = vset.pattern.permute.xlu0 1
    %3493 = vperm.xlu0 %3492, %v3454
    %v3494 = vpop.permute.xlu0 %3493
    %v3496 = vsel %vm564, %v3489, %v3494
    %3498 = vset.pattern.permute.xlu0 1
    %3499 = vperm.xlu0 %3498, %v3485
    %v3500 = vpop.permute.xlu0 %3499
    %v3502 = vsel %vm563, %v3500, %v3496
    %s3503 = scalar_lea.vmem %s5, 184
    %3504 = vst.msk [vmem:[%s3503] sm:$0xff] %vm582, %v3502
    %v3505 = vmul.f32 %v3500, %v418
    %v3506 = vadd.f32 %v3505, %v3450
    %v3507 = vld [vmem:[%s329] sm:$0xff]
    %v3508 = vadd.f32 %v3506, %v3507
    %v3509 = vxor.u32 %v3508, 2147483648
    %v3510 = vmul.f32 %v3509, 1.442695
    %v3511 = vpow.pop %v3510
    %v3512 = vadd.f32 %v3511, 1.0
    %v3513 = vrcp.pop %v3512
    %v3514 = vmul.f32 %v3512, %v3513
    %v3515 = vsub.f32 1.0, %v3514
    %v3516 = vmul.f32 %v3513, %v3515
    %v3517 = vadd.f32 %v3513, %v3516
    %vm3518 = vweird.f32 %v3512
    %vm3519 = vweird.f32 %v3513
    %vm3520 = vmor %vm3518, %vm3519
    %v3521 = vsel %vm3520, %v3513, %v3517
    %v3522 = vand.u32 2147483647, %v3512
    %vm3523 = vcmp.eq.f32.partialorder %v3522, 8.507059e+37
    %v3524 = vand.u32 %v3512, 2147483648
    %v3525 = vor.u32 1.1754944e-38, %v3524
    %v3526 = vsel %vm3523, %v3525, %v3521
    %v3527 = vmul.f32 1.0, %v3526
    %v3528 = vmul.f32 %v3527, 2.0
    %v3529 = vsub.f32 %v3528, 1.0
    %v3530 = vmul.f32 %v3527, %v3413
    %3532 = vrot.lane.b32.xlu0 %v3529, 64
    %v3533 = vpop.permute.xlu0 %3532
    %v3535 = vmul.f32 %v3527, %v3533
    %3537 = vrot.lane.b32.xlu0 %v3535, 32
    %v3538 = vpop.permute.xlu0 %3537
    %v3540 = vadd.f32 %v3530, %v3538
    %v3541 = vtanh.pop %v3540
    %3543 = vrot.lane.b32.xlu0 %v3541, 64
    %v3544 = vpop.permute.xlu0 %3543
    %v3546 = vmul.f32 %v3527, %v3544
    %v3547 = vpack.c.bf16 %v3546, %v3546
    %3549 = vrot.lane.b32.xlu0 %v3547, 32
    %v3550 = vpop.permute.xlu0 %3549
    %v3552 = vsel %vm489, %v3550, 0
    %3554 = vmatpush.bf16.msra.mxu0 0
    %3555 = vmatpush.bf16.msra.mxu0 0
    %3556 = vmatpush.bf16.msra.mxu0 0
    %3557 = vmatpush.bf16.msra.mxu0 0
    %3558 = vmatpush.bf16.msra.mxu0 0
    %3559 = vmatpush.bf16.msra.mxu0 0
    %3560 = vmatpush.bf16.msra.mxu0 %v483
    %3561 = vmatpush.bf16.msra.mxu0 %v481
    %3562 = vmatmul.bf16.gmra.mxu0 %v3552
    %v3563 = vpop.f32.mrf.mxu0
    %v3564 = vadd.f32 0.0, %v3563
    %v3565 = vpop.f32.mrf.mxu0
    %3566 = vdwg.mxu0
    %3567 = vmatpush.bf16.msra.mxu0 0
    %3568 = vmatpush.bf16.msra.mxu0 0
    %3569 = vmatpush.bf16.msra.mxu0 0
    %3570 = vmatpush.bf16.msra.mxu0 0
    %3571 = vmatpush.bf16.msra.mxu0 0
    %3572 = vmatpush.bf16.msra.mxu0 0
    %3573 = vmatpush.bf16.msra.mxu0 %v484
    %3574 = vmatpush.bf16.msra.mxu0 %v482
    %3575 = vmatmul.bf16.gmra.mxu0 %v3552
    %v3576 = vpop.f32.mrf.mxu0
    %v3577 = vadd.f32 0.0, %v3576
    %v3578 = vpop.f32.mrf.mxu0
    %3579 = vdwg.mxu0
    %v3580 = vadd.f32 %v3564, %v519
    %v3581 = vadd.f32 %v3564, %v521
    %v3582 = vld [vmem:[%s320] sm:$0xff]
    %v3583 = vmul.f32 %v531, %v3582
    %v3584 = vadd.f32 %v3583, %v533
    %v3585 = vmul.f32 %v3580, %v3584
    %v3586 = vand.u32 2147483647, %v3585
    %v3587 = vsub.f32 0.0, %v3586
    %v3588 = vmul.f32 %v3587, 1.442695
    %v3589 = vpow.pop %v3588
    %v3590 = vadd.f32 %v3589, 1.0
    %v3591 = vrcp.pop %v3590
    %vm3592 = vcmp.ge.f32.partialorder %v3585, 0.0
    %v3593 = vsub.f32 1.0, %v3591
    %v3594 = vsel %vm3592, %v3591, %v3593
    %v3595 = vmax.f32 %v3585, 0.0
    %v3596 = vlog2.pop %v3590
    %v3597 = vmul.f32 %v3596, 0.6931472
    %v3598 = vadd.f32 %v3595, %v3597
    %v3599 = vrcp.pop %v3580
    %v3600 = vmul.f32 %v3599, %v3598
    %v3601 = vsub.f32 1.0, %v3581
    %3603 = vrot.lane.b32.xlu0 %v3600, 1
    %v3604 = vpop.permute.xlu0 %3603
    %v3606 = vmul.f32 %v3601, %v3604
    %3608 = vrot.lane.b32.xlu0 %v3594, 1
    %v3609 = vpop.permute.xlu0 %3608
    %v3611 = vmul.f32 %v3581, %v3609
    %v3612 = vadd.f32 %v3606, %v3611
    %3614 = vset.pattern.permute.xlu0 0
    %3615 = vperm.xlu0 %3614, %v3580
    %v3616 = vpop.permute.xlu0 %3615
    %3619 = vset.pattern.permute.xlu0 1
    %3620 = vperm.xlu0 %3619, %v3581
    %v3621 = vpop.permute.xlu0 %3620
    %v3623 = vsel %vm564, %v3616, %v3621
    %3625 = vset.pattern.permute.xlu0 1
    %3626 = vperm.xlu0 %3625, %v3612
    %v3627 = vpop.permute.xlu0 %3626
    %v3629 = vsel %vm563, %v3627, %v3623
    %s3630 = scalar_lea.vmem %s5, 192
    %3631 = vst.msk [vmem:[%s3630] sm:$0xff] %vm582, %v3629
    %v3632 = vmul.f32 %v3627, %v418
    %v3633 = vadd.f32 %v3632, %v3577
    %v3634 = vld [vmem:[%s340] sm:$0xff]
    %v3635 = vadd.f32 %v3633, %v3634
    %v3636 = vxor.u32 %v3635, 2147483648
    %v3637 = vmul.f32 %v3636, 1.442695
    %v3638 = vpow.pop %v3637
    %v3639 = vadd.f32 %v3638, 1.0
    %v3640 = vrcp.pop %v3639
    %v3641 = vmul.f32 %v3639, %v3640
    %v3642 = vsub.f32 1.0, %v3641
    %v3643 = vmul.f32 %v3640, %v3642
    %v3644 = vadd.f32 %v3640, %v3643
    %vm3645 = vweird.f32 %v3639
    %vm3646 = vweird.f32 %v3640
    %vm3647 = vmor %vm3645, %vm3646
    %v3648 = vsel %vm3647, %v3640, %v3644
    %v3649 = vand.u32 2147483647, %v3639
    %vm3650 = vcmp.eq.f32.partialorder %v3649, 8.507059e+37
    %v3651 = vand.u32 %v3639, 2147483648
    %v3652 = vor.u32 1.1754944e-38, %v3651
    %v3653 = vsel %vm3650, %v3652, %v3648
    %v3654 = vmul.f32 1.0, %v3653
    %v3655 = vmul.f32 %v3654, 2.0
    %v3656 = vsub.f32 %v3655, 1.0
    %v3657 = vmul.f32 %v3654, %v3540
    %3659 = vrot.lane.b32.xlu0 %v3656, 64
    %v3660 = vpop.permute.xlu0 %3659
    %v3662 = vmul.f32 %v3654, %v3660
    %3664 = vrot.lane.b32.xlu0 %v3662, 32
    %v3665 = vpop.permute.xlu0 %3664
    %v3667 = vadd.f32 %v3657, %v3665
    %v3668 = vtanh.pop %v3667
    %3670 = vrot.lane.b32.xlu0 %v3668, 64
    %v3671 = vpop.permute.xlu0 %3670
    %v3673 = vmul.f32 %v3654, %v3671
    %v3674 = vpack.c.bf16 %v3673, %v3673
    %3676 = vrot.lane.b32.xlu0 %v3674, 32
    %v3677 = vpop.permute.xlu0 %3676
    %v3679 = vsel %vm489, %v3677, 0
    %3681 = vmatpush.bf16.msra.mxu0 0
    %3682 = vmatpush.bf16.msra.mxu0 0
    %3683 = vmatpush.bf16.msra.mxu0 0
    %3684 = vmatpush.bf16.msra.mxu0 0
    %3685 = vmatpush.bf16.msra.mxu0 0
    %3686 = vmatpush.bf16.msra.mxu0 0
    %3687 = vmatpush.bf16.msra.mxu0 %v483
    %3688 = vmatpush.bf16.msra.mxu0 %v481
    %3689 = vmatmul.bf16.gmra.mxu0 %v3679
    %v3690 = vpop.f32.mrf.mxu0
    %v3691 = vadd.f32 0.0, %v3690
    %v3692 = vpop.f32.mrf.mxu0
    %3693 = vdwg.mxu0
    %3694 = vmatpush.bf16.msra.mxu0 0
    %3695 = vmatpush.bf16.msra.mxu0 0
    %3696 = vmatpush.bf16.msra.mxu0 0
    %3697 = vmatpush.bf16.msra.mxu0 0
    %3698 = vmatpush.bf16.msra.mxu0 0
    %3699 = vmatpush.bf16.msra.mxu0 0
    %3700 = vmatpush.bf16.msra.mxu0 %v484
    %3701 = vmatpush.bf16.msra.mxu0 %v482
    %3702 = vmatmul.bf16.gmra.mxu0 %v3679
    %v3703 = vpop.f32.mrf.mxu0
    %v3704 = vadd.f32 0.0, %v3703
    %v3705 = vpop.f32.mrf.mxu0
    %3706 = vdwg.mxu0
    %v3707 = vadd.f32 %v3691, %v519
    %v3708 = vadd.f32 %v3691, %v521
    %v3709 = vld [vmem:[%s331] sm:$0xff]
    %v3710 = vmul.f32 %v531, %v3709
    %v3711 = vadd.f32 %v3710, %v533
    %v3712 = vmul.f32 %v3707, %v3711
    %v3713 = vand.u32 2147483647, %v3712
    %v3714 = vsub.f32 0.0, %v3713
    %v3715 = vmul.f32 %v3714, 1.442695
    %v3716 = vpow.pop %v3715
    %v3717 = vadd.f32 %v3716, 1.0
    %v3718 = vrcp.pop %v3717
    %vm3719 = vcmp.ge.f32.partialorder %v3712, 0.0
    %v3720 = vsub.f32 1.0, %v3718
    %v3721 = vsel %vm3719, %v3718, %v3720
    %v3722 = vmax.f32 %v3712, 0.0
    %v3723 = vlog2.pop %v3717
    %v3724 = vmul.f32 %v3723, 0.6931472
    %v3725 = vadd.f32 %v3722, %v3724
    %v3726 = vrcp.pop %v3707
    %v3727 = vmul.f32 %v3726, %v3725
    %v3728 = vsub.f32 1.0, %v3708
    %3730 = vrot.lane.b32.xlu0 %v3727, 1
    %v3731 = vpop.permute.xlu0 %3730
    %v3733 = vmul.f32 %v3728, %v3731
    %3735 = vrot.lane.b32.xlu0 %v3721, 1
    %v3736 = vpop.permute.xlu0 %3735
    %v3738 = vmul.f32 %v3708, %v3736
    %v3739 = vadd.f32 %v3733, %v3738
    %3741 = vset.pattern.permute.xlu0 0
    %3742 = vperm.xlu0 %3741, %v3707
    %v3743 = vpop.permute.xlu0 %3742
    %3746 = vset.pattern.permute.xlu0 1
    %3747 = vperm.xlu0 %3746, %v3708
    %v3748 = vpop.permute.xlu0 %3747
    %v3750 = vsel %vm564, %v3743, %v3748
    %3752 = vset.pattern.permute.xlu0 1
    %3753 = vperm.xlu0 %3752, %v3739
    %v3754 = vpop.permute.xlu0 %3753
    %v3756 = vsel %vm563, %v3754, %v3750
    %s3757 = scalar_lea.vmem %s5, 200
    %3758 = vst.msk [vmem:[%s3757] sm:$0xff] %vm582, %v3756
    %v3759 = vmul.f32 %v3754, %v418
    %v3760 = vadd.f32 %v3759, %v3704
    %v3761 = vld [vmem:[%s351] sm:$0xff]
    %v3762 = vadd.f32 %v3760, %v3761
    %v3763 = vxor.u32 %v3762, 2147483648
    %v3764 = vmul.f32 %v3763, 1.442695
    %v3765 = vpow.pop %v3764
    %v3766 = vadd.f32 %v3765, 1.0
    %v3767 = vrcp.pop %v3766
    %v3768 = vmul.f32 %v3766, %v3767
    %v3769 = vsub.f32 1.0, %v3768
    %v3770 = vmul.f32 %v3767, %v3769
    %v3771 = vadd.f32 %v3767, %v3770
    %vm3772 = vweird.f32 %v3766
    %vm3773 = vweird.f32 %v3767
    %vm3774 = vmor %vm3772, %vm3773
    %v3775 = vsel %vm3774, %v3767, %v3771
    %v3776 = vand.u32 2147483647, %v3766
    %vm3777 = vcmp.eq.f32.partialorder %v3776, 8.507059e+37
    %v3778 = vand.u32 %v3766, 2147483648
    %v3779 = vor.u32 1.1754944e-38, %v3778
    %v3780 = vsel %vm3777, %v3779, %v3775
    %v3781 = vmul.f32 1.0, %v3780
    %v3782 = vmul.f32 %v3781, 2.0
    %v3783 = vsub.f32 %v3782, 1.0
    %v3784 = vmul.f32 %v3781, %v3667
    %3786 = vrot.lane.b32.xlu0 %v3783, 64
    %v3787 = vpop.permute.xlu0 %3786
    %v3789 = vmul.f32 %v3781, %v3787
    %3791 = vrot.lane.b32.xlu0 %v3789, 32
    %v3792 = vpop.permute.xlu0 %3791
    %v3794 = vadd.f32 %v3784, %v3792
    %v3795 = vtanh.pop %v3794
    %3797 = vrot.lane.b32.xlu0 %v3795, 64
    %v3798 = vpop.permute.xlu0 %3797
    %v3800 = vmul.f32 %v3781, %v3798
    %v3801 = vpack.c.bf16 %v3800, %v3800
    %3803 = vrot.lane.b32.xlu0 %v3801, 32
    %v3804 = vpop.permute.xlu0 %3803
    %v3806 = vsel %vm489, %v3804, 0
    %3808 = vmatpush.bf16.msra.mxu0 0
    %3809 = vmatpush.bf16.msra.mxu0 0
    %3810 = vmatpush.bf16.msra.mxu0 0
    %3811 = vmatpush.bf16.msra.mxu0 0
    %3812 = vmatpush.bf16.msra.mxu0 0
    %3813 = vmatpush.bf16.msra.mxu0 0
    %3814 = vmatpush.bf16.msra.mxu0 %v483
    %3815 = vmatpush.bf16.msra.mxu0 %v481
    %3816 = vmatmul.bf16.gmra.mxu0 %v3806
    %v3817 = vpop.f32.mrf.mxu0
    %v3818 = vadd.f32 0.0, %v3817
    %v3819 = vpop.f32.mrf.mxu0
    %3820 = vdwg.mxu0
    %3821 = vmatpush.bf16.msra.mxu0 0
    %3822 = vmatpush.bf16.msra.mxu0 0
    %3823 = vmatpush.bf16.msra.mxu0 0
    %3824 = vmatpush.bf16.msra.mxu0 0
    %3825 = vmatpush.bf16.msra.mxu0 0
    %3826 = vmatpush.bf16.msra.mxu0 0
    %3827 = vmatpush.bf16.msra.mxu0 %v484
    %3828 = vmatpush.bf16.msra.mxu0 %v482
    %3829 = vmatmul.bf16.gmra.mxu0 %v3806
    %v3830 = vpop.f32.mrf.mxu0
    %v3831 = vadd.f32 0.0, %v3830
    %v3832 = vpop.f32.mrf.mxu0
    %3833 = vdwg.mxu0
    %v3834 = vadd.f32 %v3818, %v519
    %v3835 = vadd.f32 %v3818, %v521
    %v3836 = vld [vmem:[%s342] sm:$0xff]
    %v3837 = vmul.f32 %v531, %v3836
    %v3838 = vadd.f32 %v3837, %v533
    %v3839 = vmul.f32 %v3834, %v3838
    %v3840 = vand.u32 2147483647, %v3839
    %v3841 = vsub.f32 0.0, %v3840
    %v3842 = vmul.f32 %v3841, 1.442695
    %v3843 = vpow.pop %v3842
    %v3844 = vadd.f32 %v3843, 1.0
    %v3845 = vrcp.pop %v3844
    %vm3846 = vcmp.ge.f32.partialorder %v3839, 0.0
    %v3847 = vsub.f32 1.0, %v3845
    %v3848 = vsel %vm3846, %v3845, %v3847
    %v3849 = vmax.f32 %v3839, 0.0
    %v3850 = vlog2.pop %v3844
    %v3851 = vmul.f32 %v3850, 0.6931472
    %v3852 = vadd.f32 %v3849, %v3851
    %v3853 = vrcp.pop %v3834
    %v3854 = vmul.f32 %v3853, %v3852
    %v3855 = vsub.f32 1.0, %v3835
    %3857 = vrot.lane.b32.xlu0 %v3854, 1
    %v3858 = vpop.permute.xlu0 %3857
    %v3860 = vmul.f32 %v3855, %v3858
    %3862 = vrot.lane.b32.xlu0 %v3848, 1
    %v3863 = vpop.permute.xlu0 %3862
    %v3865 = vmul.f32 %v3835, %v3863
    %v3866 = vadd.f32 %v3860, %v3865
    %3868 = vset.pattern.permute.xlu0 0
    %3869 = vperm.xlu0 %3868, %v3834
    %v3870 = vpop.permute.xlu0 %3869
    %3873 = vset.pattern.permute.xlu0 1
    %3874 = vperm.xlu0 %3873, %v3835
    %v3875 = vpop.permute.xlu0 %3874
    %v3877 = vsel %vm564, %v3870, %v3875
    %3879 = vset.pattern.permute.xlu0 1
    %3880 = vperm.xlu0 %3879, %v3866
    %v3881 = vpop.permute.xlu0 %3880
    %v3883 = vsel %vm563, %v3881, %v3877
    %s3884 = scalar_lea.vmem %s5, 208
    %3885 = vst.msk [vmem:[%s3884] sm:$0xff] %vm582, %v3883
    %v3886 = vmul.f32 %v3881, %v418
    %v3887 = vadd.f32 %v3886, %v3831
    %v3888 = vld [vmem:[%s362] sm:$0xff]
    %v3889 = vadd.f32 %v3887, %v3888
    %v3890 = vxor.u32 %v3889, 2147483648
    %v3891 = vmul.f32 %v3890, 1.442695
    %v3892 = vpow.pop %v3891
    %v3893 = vadd.f32 %v3892, 1.0
    %v3894 = vrcp.pop %v3893
    %v3895 = vmul.f32 %v3893, %v3894
    %v3896 = vsub.f32 1.0, %v3895
    %v3897 = vmul.f32 %v3894, %v3896
    %v3898 = vadd.f32 %v3894, %v3897
    %vm3899 = vweird.f32 %v3893
    %vm3900 = vweird.f32 %v3894
    %vm3901 = vmor %vm3899, %vm3900
    %v3902 = vsel %vm3901, %v3894, %v3898
    %v3903 = vand.u32 2147483647, %v3893
    %vm3904 = vcmp.eq.f32.partialorder %v3903, 8.507059e+37
    %v3905 = vand.u32 %v3893, 2147483648
    %v3906 = vor.u32 1.1754944e-38, %v3905
    %v3907 = vsel %vm3904, %v3906, %v3902
    %v3908 = vmul.f32 1.0, %v3907
    %v3909 = vmul.f32 %v3908, 2.0
    %v3910 = vsub.f32 %v3909, 1.0
    %v3911 = vmul.f32 %v3908, %v3794
    %3913 = vrot.lane.b32.xlu0 %v3910, 64
    %v3914 = vpop.permute.xlu0 %3913
    %v3916 = vmul.f32 %v3908, %v3914
    %3918 = vrot.lane.b32.xlu0 %v3916, 32
    %v3919 = vpop.permute.xlu0 %3918
    %v3921 = vadd.f32 %v3911, %v3919
    %v3922 = vtanh.pop %v3921
    %3924 = vrot.lane.b32.xlu0 %v3922, 64
    %v3925 = vpop.permute.xlu0 %3924
    %v3927 = vmul.f32 %v3908, %v3925
    %v3928 = vpack.c.bf16 %v3927, %v3927
    %3930 = vrot.lane.b32.xlu0 %v3928, 32
    %v3931 = vpop.permute.xlu0 %3930
    %v3933 = vsel %vm489, %v3931, 0
    %3935 = vmatpush.bf16.msra.mxu0 0
    %3936 = vmatpush.bf16.msra.mxu0 0
    %3937 = vmatpush.bf16.msra.mxu0 0
    %3938 = vmatpush.bf16.msra.mxu0 0
    %3939 = vmatpush.bf16.msra.mxu0 0
    %3940 = vmatpush.bf16.msra.mxu0 0
    %3941 = vmatpush.bf16.msra.mxu0 %v483
    %3942 = vmatpush.bf16.msra.mxu0 %v481
    %3943 = vmatmul.bf16.gmra.mxu0 %v3933
    %v3944 = vpop.f32.mrf.mxu0
    %v3945 = vadd.f32 0.0, %v3944
    %v3946 = vpop.f32.mrf.mxu0
    %3947 = vdwg.mxu0
    %3948 = vmatpush.bf16.msra.mxu0 0
    %3949 = vmatpush.bf16.msra.mxu0 0
    %3950 = vmatpush.bf16.msra.mxu0 0
    %3951 = vmatpush.bf16.msra.mxu0 0
    %3952 = vmatpush.bf16.msra.mxu0 0
    %3953 = vmatpush.bf16.msra.mxu0 0
    %3954 = vmatpush.bf16.msra.mxu0 %v484
    %3955 = vmatpush.bf16.msra.mxu0 %v482
    %3956 = vmatmul.bf16.gmra.mxu0 %v3933
    %v3957 = vpop.f32.mrf.mxu0
    %v3958 = vadd.f32 0.0, %v3957
    %v3959 = vpop.f32.mrf.mxu0
    %3960 = vdwg.mxu0
    %v3961 = vadd.f32 %v3945, %v519
    %v3962 = vadd.f32 %v3945, %v521
    %v3963 = vld [vmem:[%s353] sm:$0xff]
    %v3964 = vmul.f32 %v531, %v3963
    %v3965 = vadd.f32 %v3964, %v533
    %v3966 = vmul.f32 %v3961, %v3965
    %v3967 = vand.u32 2147483647, %v3966
    %v3968 = vsub.f32 0.0, %v3967
    %v3969 = vmul.f32 %v3968, 1.442695
    %v3970 = vpow.pop %v3969
    %v3971 = vadd.f32 %v3970, 1.0
    %v3972 = vrcp.pop %v3971
    %vm3973 = vcmp.ge.f32.partialorder %v3966, 0.0
    %v3974 = vsub.f32 1.0, %v3972
    %v3975 = vsel %vm3973, %v3972, %v3974
    %v3976 = vmax.f32 %v3966, 0.0
    %v3977 = vlog2.pop %v3971
    %v3978 = vmul.f32 %v3977, 0.6931472
    %v3979 = vadd.f32 %v3976, %v3978
    %v3980 = vrcp.pop %v3961
    %v3981 = vmul.f32 %v3980, %v3979
    %v3982 = vsub.f32 1.0, %v3962
    %3984 = vrot.lane.b32.xlu0 %v3981, 1
    %v3985 = vpop.permute.xlu0 %3984
    %v3987 = vmul.f32 %v3982, %v3985
    %3989 = vrot.lane.b32.xlu0 %v3975, 1
    %v3990 = vpop.permute.xlu0 %3989
    %v3992 = vmul.f32 %v3962, %v3990
    %v3993 = vadd.f32 %v3987, %v3992
    %3995 = vset.pattern.permute.xlu0 0
    %3996 = vperm.xlu0 %3995, %v3961
    %v3997 = vpop.permute.xlu0 %3996
    %4000 = vset.pattern.permute.xlu0 1
    %4001 = vperm.xlu0 %4000, %v3962
    %v4002 = vpop.permute.xlu0 %4001
    %v4004 = vsel %vm564, %v3997, %v4002
    %4006 = vset.pattern.permute.xlu0 1
    %4007 = vperm.xlu0 %4006, %v3993
    %v4008 = vpop.permute.xlu0 %4007
    %v4010 = vsel %vm563, %v4008, %v4004
    %s4011 = scalar_lea.vmem %s5, 216
    %4012 = vst.msk [vmem:[%s4011] sm:$0xff] %vm582, %v4010
    %v4013 = vmul.f32 %v4008, %v418
    %v4014 = vadd.f32 %v4013, %v3958
    %v4015 = vld [vmem:[%s373] sm:$0xff]
    %v4016 = vadd.f32 %v4014, %v4015
    %v4017 = vxor.u32 %v4016, 2147483648
    %v4018 = vmul.f32 %v4017, 1.442695
    %v4019 = vpow.pop %v4018
    %v4020 = vadd.f32 %v4019, 1.0
    %v4021 = vrcp.pop %v4020
    %v4022 = vmul.f32 %v4020, %v4021
    %v4023 = vsub.f32 1.0, %v4022
    %v4024 = vmul.f32 %v4021, %v4023
    %v4025 = vadd.f32 %v4021, %v4024
    %vm4026 = vweird.f32 %v4020
    %vm4027 = vweird.f32 %v4021
    %vm4028 = vmor %vm4026, %vm4027
    %v4029 = vsel %vm4028, %v4021, %v4025
    %v4030 = vand.u32 2147483647, %v4020
    %vm4031 = vcmp.eq.f32.partialorder %v4030, 8.507059e+37
    %v4032 = vand.u32 %v4020, 2147483648
    %v4033 = vor.u32 1.1754944e-38, %v4032
    %v4034 = vsel %vm4031, %v4033, %v4029
    %v4035 = vmul.f32 1.0, %v4034
    %v4036 = vmul.f32 %v4035, 2.0
    %v4037 = vsub.f32 %v4036, 1.0
    %v4038 = vmul.f32 %v4035, %v3921
    %4040 = vrot.lane.b32.xlu0 %v4037, 64
    %v4041 = vpop.permute.xlu0 %4040
    %v4043 = vmul.f32 %v4035, %v4041
    %4045 = vrot.lane.b32.xlu0 %v4043, 32
    %v4046 = vpop.permute.xlu0 %4045
    %v4048 = vadd.f32 %v4038, %v4046
    %v4049 = vtanh.pop %v4048
    %4051 = vrot.lane.b32.xlu0 %v4049, 64
    %v4052 = vpop.permute.xlu0 %4051
    %v4054 = vmul.f32 %v4035, %v4052
    %v4055 = vpack.c.bf16 %v4054, %v4054
    %4057 = vrot.lane.b32.xlu0 %v4055, 32
    %v4058 = vpop.permute.xlu0 %4057
    %v4060 = vsel %vm489, %v4058, 0
    %4062 = vmatpush.bf16.msra.mxu0 0
    %4063 = vmatpush.bf16.msra.mxu0 0
    %4064 = vmatpush.bf16.msra.mxu0 0
    %4065 = vmatpush.bf16.msra.mxu0 0
    %4066 = vmatpush.bf16.msra.mxu0 0
    %4067 = vmatpush.bf16.msra.mxu0 0
    %4068 = vmatpush.bf16.msra.mxu0 %v483
    %4069 = vmatpush.bf16.msra.mxu0 %v481
    %4070 = vmatmul.bf16.gmra.mxu0 %v4060
    %v4071 = vpop.f32.mrf.mxu0
    %v4072 = vadd.f32 0.0, %v4071
    %v4073 = vpop.f32.mrf.mxu0
    %4074 = vdwg.mxu0
    %4075 = vmatpush.bf16.msra.mxu0 0
    %4076 = vmatpush.bf16.msra.mxu0 0
    %4077 = vmatpush.bf16.msra.mxu0 0
    %4078 = vmatpush.bf16.msra.mxu0 0
    %4079 = vmatpush.bf16.msra.mxu0 0
    %4080 = vmatpush.bf16.msra.mxu0 0
    %4081 = vmatpush.bf16.msra.mxu0 %v484
    %4082 = vmatpush.bf16.msra.mxu0 %v482
    %4083 = vmatmul.bf16.gmra.mxu0 %v4060
    %v4084 = vpop.f32.mrf.mxu0
    %v4085 = vadd.f32 0.0, %v4084
    %v4086 = vpop.f32.mrf.mxu0
    %4087 = vdwg.mxu0
    %v4088 = vadd.f32 %v4072, %v519
    %v4089 = vadd.f32 %v4072, %v521
    %v4090 = vld [vmem:[%s364] sm:$0xff]
    %v4091 = vmul.f32 %v531, %v4090
    %v4092 = vadd.f32 %v4091, %v533
    %v4093 = vmul.f32 %v4088, %v4092
    %v4094 = vand.u32 2147483647, %v4093
    %v4095 = vsub.f32 0.0, %v4094
    %v4096 = vmul.f32 %v4095, 1.442695
    %v4097 = vpow.pop %v4096
    %v4098 = vadd.f32 %v4097, 1.0
    %v4099 = vrcp.pop %v4098
    %vm4100 = vcmp.ge.f32.partialorder %v4093, 0.0
    %v4101 = vsub.f32 1.0, %v4099
    %v4102 = vsel %vm4100, %v4099, %v4101
    %v4103 = vmax.f32 %v4093, 0.0
    %v4104 = vlog2.pop %v4098
    %v4105 = vmul.f32 %v4104, 0.6931472
    %v4106 = vadd.f32 %v4103, %v4105
    %v4107 = vrcp.pop %v4088
    %v4108 = vmul.f32 %v4107, %v4106
    %v4109 = vsub.f32 1.0, %v4089
    %4111 = vrot.lane.b32.xlu0 %v4108, 1
    %v4112 = vpop.permute.xlu0 %4111
    %v4114 = vmul.f32 %v4109, %v4112
    %4116 = vrot.lane.b32.xlu0 %v4102, 1
    %v4117 = vpop.permute.xlu0 %4116
    %v4119 = vmul.f32 %v4089, %v4117
    %v4120 = vadd.f32 %v4114, %v4119
    %4122 = vset.pattern.permute.xlu0 0
    %4123 = vperm.xlu0 %4122, %v4088
    %v4124 = vpop.permute.xlu0 %4123
    %4127 = vset.pattern.permute.xlu0 1
    %4128 = vperm.xlu0 %4127, %v4089
    %v4129 = vpop.permute.xlu0 %4128
    %v4131 = vsel %vm564, %v4124, %v4129
    %4133 = vset.pattern.permute.xlu0 1
    %4134 = vperm.xlu0 %4133, %v4120
    %v4135 = vpop.permute.xlu0 %4134
    %v4137 = vsel %vm563, %v4135, %v4131
    %s4138 = scalar_lea.vmem %s5, 224
    %4139 = vst.msk [vmem:[%s4138] sm:$0xff] %vm582, %v4137
    %v4140 = vmul.f32 %v4135, %v418
    %v4141 = vadd.f32 %v4140, %v4085
    %v4142 = vld [vmem:[%s384] sm:$0xff]
    %v4143 = vadd.f32 %v4141, %v4142
    %v4144 = vxor.u32 %v4143, 2147483648
    %v4145 = vmul.f32 %v4144, 1.442695
    %v4146 = vpow.pop %v4145
    %v4147 = vadd.f32 %v4146, 1.0
    %v4148 = vrcp.pop %v4147
    %v4149 = vmul.f32 %v4147, %v4148
    %v4150 = vsub.f32 1.0, %v4149
    %v4151 = vmul.f32 %v4148, %v4150
    %v4152 = vadd.f32 %v4148, %v4151
    %vm4153 = vweird.f32 %v4147
    %vm4154 = vweird.f32 %v4148
    %vm4155 = vmor %vm4153, %vm4154
    %v4156 = vsel %vm4155, %v4148, %v4152
    %v4157 = vand.u32 2147483647, %v4147
    %vm4158 = vcmp.eq.f32.partialorder %v4157, 8.507059e+37
    %v4159 = vand.u32 %v4147, 2147483648
    %v4160 = vor.u32 1.1754944e-38, %v4159
    %v4161 = vsel %vm4158, %v4160, %v4156
    %v4162 = vmul.f32 1.0, %v4161
    %v4163 = vmul.f32 %v4162, 2.0
    %v4164 = vsub.f32 %v4163, 1.0
    %v4165 = vmul.f32 %v4162, %v4048
    %4167 = vrot.lane.b32.xlu0 %v4164, 64
    %v4168 = vpop.permute.xlu0 %4167
    %v4170 = vmul.f32 %v4162, %v4168
    %4172 = vrot.lane.b32.xlu0 %v4170, 32
    %v4173 = vpop.permute.xlu0 %4172
    %v4175 = vadd.f32 %v4165, %v4173
    %v4176 = vtanh.pop %v4175
    %4178 = vrot.lane.b32.xlu0 %v4176, 64
    %v4179 = vpop.permute.xlu0 %4178
    %v4181 = vmul.f32 %v4162, %v4179
    %v4182 = vpack.c.bf16 %v4181, %v4181
    %4184 = vrot.lane.b32.xlu0 %v4182, 32
    %v4185 = vpop.permute.xlu0 %4184
    %v4187 = vsel %vm489, %v4185, 0
    %4189 = vmatpush.bf16.msra.mxu0 0
    %4190 = vmatpush.bf16.msra.mxu0 0
    %4191 = vmatpush.bf16.msra.mxu0 0
    %4192 = vmatpush.bf16.msra.mxu0 0
    %4193 = vmatpush.bf16.msra.mxu0 0
    %4194 = vmatpush.bf16.msra.mxu0 0
    %4195 = vmatpush.bf16.msra.mxu0 %v483
    %4196 = vmatpush.bf16.msra.mxu0 %v481
    %4197 = vmatmul.bf16.gmra.mxu0 %v4187
    %v4198 = vpop.f32.mrf.mxu0
    %v4199 = vadd.f32 0.0, %v4198
    %v4200 = vpop.f32.mrf.mxu0
    %4201 = vdwg.mxu0
    %4202 = vmatpush.bf16.msra.mxu0 0
    %4203 = vmatpush.bf16.msra.mxu0 0
    %4204 = vmatpush.bf16.msra.mxu0 0
    %4205 = vmatpush.bf16.msra.mxu0 0
    %4206 = vmatpush.bf16.msra.mxu0 0
    %4207 = vmatpush.bf16.msra.mxu0 0
    %4208 = vmatpush.bf16.msra.mxu0 %v484
    %4209 = vmatpush.bf16.msra.mxu0 %v482
    %4210 = vmatmul.bf16.gmra.mxu0 %v4187
    %v4211 = vpop.f32.mrf.mxu0
    %v4212 = vadd.f32 0.0, %v4211
    %v4213 = vpop.f32.mrf.mxu0
    %4214 = vdwg.mxu0
    %v4215 = vadd.f32 %v4199, %v519
    %v4216 = vadd.f32 %v4199, %v521
    %v4217 = vld [vmem:[%s375] sm:$0xff]
    %v4218 = vmul.f32 %v531, %v4217
    %v4219 = vadd.f32 %v4218, %v533
    %v4220 = vmul.f32 %v4215, %v4219
    %v4221 = vand.u32 2147483647, %v4220
    %v4222 = vsub.f32 0.0, %v4221
    %v4223 = vmul.f32 %v4222, 1.442695
    %v4224 = vpow.pop %v4223
    %v4225 = vadd.f32 %v4224, 1.0
    %v4226 = vrcp.pop %v4225
    %vm4227 = vcmp.ge.f32.partialorder %v4220, 0.0
    %v4228 = vsub.f32 1.0, %v4226
    %v4229 = vsel %vm4227, %v4226, %v4228
    %v4230 = vmax.f32 %v4220, 0.0
    %v4231 = vlog2.pop %v4225
    %v4232 = vmul.f32 %v4231, 0.6931472
    %v4233 = vadd.f32 %v4230, %v4232
    %v4234 = vrcp.pop %v4215
    %v4235 = vmul.f32 %v4234, %v4233
    %v4236 = vsub.f32 1.0, %v4216
    %4238 = vrot.lane.b32.xlu0 %v4235, 1
    %v4239 = vpop.permute.xlu0 %4238
    %v4241 = vmul.f32 %v4236, %v4239
    %4243 = vrot.lane.b32.xlu0 %v4229, 1
    %v4244 = vpop.permute.xlu0 %4243
    %v4246 = vmul.f32 %v4216, %v4244
    %v4247 = vadd.f32 %v4241, %v4246
    %4249 = vset.pattern.permute.xlu0 0
    %4250 = vperm.xlu0 %4249, %v4215
    %v4251 = vpop.permute.xlu0 %4250
    %4254 = vset.pattern.permute.xlu0 1
    %4255 = vperm.xlu0 %4254, %v4216
    %v4256 = vpop.permute.xlu0 %4255
    %v4258 = vsel %vm564, %v4251, %v4256
    %4260 = vset.pattern.permute.xlu0 1
    %4261 = vperm.xlu0 %4260, %v4247
    %v4262 = vpop.permute.xlu0 %4261
    %v4264 = vsel %vm563, %v4262, %v4258
    %s4265 = scalar_lea.vmem %s5, 232
    %4266 = vst.msk [vmem:[%s4265] sm:$0xff] %vm582, %v4264
    %v4267 = vmul.f32 %v4262, %v418
    %v4268 = vadd.f32 %v4267, %v4212
    %v4269 = vld [vmem:[%s395] sm:$0xff]
    %v4270 = vadd.f32 %v4268, %v4269
    %v4271 = vxor.u32 %v4270, 2147483648
    %v4272 = vmul.f32 %v4271, 1.442695
    %v4273 = vpow.pop %v4272
    %v4274 = vadd.f32 %v4273, 1.0
    %v4275 = vrcp.pop %v4274
    %v4276 = vmul.f32 %v4274, %v4275
    %v4277 = vsub.f32 1.0, %v4276
    %v4278 = vmul.f32 %v4275, %v4277
    %v4279 = vadd.f32 %v4275, %v4278
    %vm4280 = vweird.f32 %v4274
    %vm4281 = vweird.f32 %v4275
    %vm4282 = vmor %vm4280, %vm4281
    %v4283 = vsel %vm4282, %v4275, %v4279
    %v4284 = vand.u32 2147483647, %v4274
    %vm4285 = vcmp.eq.f32.partialorder %v4284, 8.507059e+37
    %v4286 = vand.u32 %v4274, 2147483648
    %v4287 = vor.u32 1.1754944e-38, %v4286
    %v4288 = vsel %vm4285, %v4287, %v4283
    %v4289 = vmul.f32 1.0, %v4288
    %v4290 = vmul.f32 %v4289, 2.0
    %v4291 = vsub.f32 %v4290, 1.0
    %v4292 = vmul.f32 %v4289, %v4175
    %4294 = vrot.lane.b32.xlu0 %v4291, 64
    %v4295 = vpop.permute.xlu0 %4294
    %v4297 = vmul.f32 %v4289, %v4295
    %4299 = vrot.lane.b32.xlu0 %v4297, 32
    %v4300 = vpop.permute.xlu0 %4299
    %v4302 = vadd.f32 %v4292, %v4300
    %v4303 = vtanh.pop %v4302
    %4305 = vrot.lane.b32.xlu0 %v4303, 64
    %v4306 = vpop.permute.xlu0 %4305
    %v4308 = vmul.f32 %v4289, %v4306
    %v4309 = vpack.c.bf16 %v4308, %v4308
    %4311 = vrot.lane.b32.xlu0 %v4309, 32
    %v4312 = vpop.permute.xlu0 %4311
    %v4314 = vsel %vm489, %v4312, 0
    %4316 = vmatpush.bf16.msra.mxu0 0
    %4317 = vmatpush.bf16.msra.mxu0 0
    %4318 = vmatpush.bf16.msra.mxu0 0
    %4319 = vmatpush.bf16.msra.mxu0 0
    %4320 = vmatpush.bf16.msra.mxu0 0
    %4321 = vmatpush.bf16.msra.mxu0 0
    %4322 = vmatpush.bf16.msra.mxu0 %v483
    %4323 = vmatpush.bf16.msra.mxu0 %v481
    %4324 = vmatmul.bf16.gmra.mxu0 %v4314
    %v4325 = vpop.f32.mrf.mxu0
    %v4326 = vadd.f32 0.0, %v4325
    %v4327 = vpop.f32.mrf.mxu0
    %4328 = vdwg.mxu0
    %4329 = vmatpush.bf16.msra.mxu0 0
    %4330 = vmatpush.bf16.msra.mxu0 0
    %4331 = vmatpush.bf16.msra.mxu0 0
    %4332 = vmatpush.bf16.msra.mxu0 0
    %4333 = vmatpush.bf16.msra.mxu0 0
    %4334 = vmatpush.bf16.msra.mxu0 0
    %4335 = vmatpush.bf16.msra.mxu0 %v484
    %4336 = vmatpush.bf16.msra.mxu0 %v482
    %4337 = vmatmul.bf16.gmra.mxu0 %v4314
    %v4338 = vpop.f32.mrf.mxu0
    %v4339 = vadd.f32 0.0, %v4338
    %v4340 = vpop.f32.mrf.mxu0
    %4341 = vdwg.mxu0
    %v4342 = vadd.f32 %v4326, %v519
    %v4343 = vadd.f32 %v4326, %v521
    %v4344 = vld [vmem:[%s386] sm:$0xff]
    %v4345 = vmul.f32 %v531, %v4344
    %v4346 = vadd.f32 %v4345, %v533
    %v4347 = vmul.f32 %v4342, %v4346
    %v4348 = vand.u32 2147483647, %v4347
    %v4349 = vsub.f32 0.0, %v4348
    %v4350 = vmul.f32 %v4349, 1.442695
    %v4351 = vpow.pop %v4350
    %v4352 = vadd.f32 %v4351, 1.0
    %v4353 = vrcp.pop %v4352
    %vm4354 = vcmp.ge.f32.partialorder %v4347, 0.0
    %v4355 = vsub.f32 1.0, %v4353
    %v4356 = vsel %vm4354, %v4353, %v4355
    %v4357 = vmax.f32 %v4347, 0.0
    %v4358 = vlog2.pop %v4352
    %v4359 = vmul.f32 %v4358, 0.6931472
    %v4360 = vadd.f32 %v4357, %v4359
    %v4361 = vrcp.pop %v4342
    %v4362 = vmul.f32 %v4361, %v4360
    %v4363 = vsub.f32 1.0, %v4343
    %4365 = vrot.lane.b32.xlu0 %v4362, 1
    %v4366 = vpop.permute.xlu0 %4365
    %v4368 = vmul.f32 %v4363, %v4366
    %4370 = vrot.lane.b32.xlu0 %v4356, 1
    %v4371 = vpop.permute.xlu0 %4370
    %v4373 = vmul.f32 %v4343, %v4371
    %v4374 = vadd.f32 %v4368, %v4373
    %4376 = vset.pattern.permute.xlu0 0
    %4377 = vperm.xlu0 %4376, %v4342
    %v4378 = vpop.permute.xlu0 %4377
    %4381 = vset.pattern.permute.xlu0 1
    %4382 = vperm.xlu0 %4381, %v4343
    %v4383 = vpop.permute.xlu0 %4382
    %v4385 = vsel %vm564, %v4378, %v4383
    %4387 = vset.pattern.permute.xlu0 1
    %4388 = vperm.xlu0 %4387, %v4374
    %v4389 = vpop.permute.xlu0 %4388
    %v4391 = vsel %vm563, %v4389, %v4385
    %s4392 = scalar_lea.vmem %s5, 240
    %4393 = vst.msk [vmem:[%s4392] sm:$0xff] %vm582, %v4391
    %v4394 = vmul.f32 %v4389, %v418
    %v4395 = vadd.f32 %v4394, %v4339
    %v4396 = vld [vmem:[%s406] sm:$0xff]
    %v4397 = vadd.f32 %v4395, %v4396
    %v4398 = vxor.u32 %v4397, 2147483648
    %v4399 = vmul.f32 %v4398, 1.442695
    %v4400 = vpow.pop %v4399
    %v4401 = vadd.f32 %v4400, 1.0
    %v4402 = vrcp.pop %v4401
    %v4403 = vmul.f32 %v4401, %v4402
    %v4404 = vsub.f32 1.0, %v4403
    %v4405 = vmul.f32 %v4402, %v4404
    %v4406 = vadd.f32 %v4402, %v4405
    %vm4407 = vweird.f32 %v4401
    %vm4408 = vweird.f32 %v4402
    %vm4409 = vmor %vm4407, %vm4408
    %v4410 = vsel %vm4409, %v4402, %v4406
    %v4411 = vand.u32 2147483647, %v4401
    %vm4412 = vcmp.eq.f32.partialorder %v4411, 8.507059e+37
    %v4413 = vand.u32 %v4401, 2147483648
    %v4414 = vor.u32 1.1754944e-38, %v4413
    %v4415 = vsel %vm4412, %v4414, %v4410
    %v4416 = vmul.f32 1.0, %v4415
    %v4417 = vmul.f32 %v4416, 2.0
    %v4418 = vsub.f32 %v4417, 1.0
    %v4419 = vmul.f32 %v4416, %v4302
    %4421 = vrot.lane.b32.xlu0 %v4418, 64
    %v4422 = vpop.permute.xlu0 %4421
    %v4424 = vmul.f32 %v4416, %v4422
    %4426 = vrot.lane.b32.xlu0 %v4424, 32
    %v4427 = vpop.permute.xlu0 %4426
    %v4429 = vadd.f32 %v4419, %v4427
    %v4430 = vtanh.pop %v4429
    %4432 = vrot.lane.b32.xlu0 %v4430, 64
    %v4433 = vpop.permute.xlu0 %4432
    %v4435 = vmul.f32 %v4416, %v4433
    %v4436 = vpack.c.bf16 %v4435, %v4435
    %4438 = vrot.lane.b32.xlu0 %v4436, 32
    %v4439 = vpop.permute.xlu0 %4438
    %v4441 = vsel %vm489, %v4439, 0
    %4443 = vmatpush.bf16.msra.mxu0 0
    %4444 = vmatpush.bf16.msra.mxu0 0
    %4445 = vmatpush.bf16.msra.mxu0 0
    %4446 = vmatpush.bf16.msra.mxu0 0
    %4447 = vmatpush.bf16.msra.mxu0 0
    %4448 = vmatpush.bf16.msra.mxu0 0
    %4449 = vmatpush.bf16.msra.mxu0 %v483
    %4450 = vmatpush.bf16.msra.mxu0 %v481
    %4451 = vmatmul.bf16.gmra.mxu0 %v4441
    %v4452 = vpop.f32.mrf.mxu0
    %v4453 = vadd.f32 0.0, %v4452
    %v4454 = vpop.f32.mrf.mxu0
    %4455 = vdwg.mxu0
    %4456 = vmatpush.bf16.msra.mxu0 0
    %4457 = vmatpush.bf16.msra.mxu0 0
    %4458 = vmatpush.bf16.msra.mxu0 0
    %4459 = vmatpush.bf16.msra.mxu0 0
    %4460 = vmatpush.bf16.msra.mxu0 0
    %4461 = vmatpush.bf16.msra.mxu0 0
    %4462 = vmatpush.bf16.msra.mxu0 %v484
    %4463 = vmatpush.bf16.msra.mxu0 %v482
    %4464 = vmatmul.bf16.gmra.mxu0 %v4441
    %v4465 = vpop.f32.mrf.mxu0
    %v4466 = vadd.f32 0.0, %v4465
    %v4467 = vpop.f32.mrf.mxu0
    %4468 = vdwg.mxu0
    %v4469 = vadd.f32 %v4453, %v519
    %v4470 = vadd.f32 %v4453, %v521
    %v4471 = vld [vmem:[%s397] sm:$0xff]
    %v4472 = vmul.f32 %v531, %v4471
    %v4473 = vadd.f32 %v4472, %v533
    %v4474 = vmul.f32 %v4469, %v4473
    %v4475 = vand.u32 2147483647, %v4474
    %v4476 = vsub.f32 0.0, %v4475
    %v4477 = vmul.f32 %v4476, 1.442695
    %v4478 = vpow.pop %v4477
    %v4479 = vadd.f32 %v4478, 1.0
    %v4480 = vrcp.pop %v4479
    %vm4481 = vcmp.ge.f32.partialorder %v4474, 0.0
    %v4482 = vsub.f32 1.0, %v4480
    %v4483 = vsel %vm4481, %v4480, %v4482
    %v4484 = vmax.f32 %v4474, 0.0
    %v4485 = vlog2.pop %v4479
    %v4486 = vmul.f32 %v4485, 0.6931472
    %v4487 = vadd.f32 %v4484, %v4486
    %v4488 = vrcp.pop %v4469
    %v4489 = vmul.f32 %v4488, %v4487
    %v4490 = vsub.f32 1.0, %v4470
    %4492 = vrot.lane.b32.xlu0 %v4489, 1
    %v4493 = vpop.permute.xlu0 %4492
    %v4495 = vmul.f32 %v4490, %v4493
    %4497 = vrot.lane.b32.xlu0 %v4483, 1
    %v4498 = vpop.permute.xlu0 %4497
    %v4500 = vmul.f32 %v4470, %v4498
    %v4501 = vadd.f32 %v4495, %v4500
    %4503 = vset.pattern.permute.xlu0 0
    %4504 = vperm.xlu0 %4503, %v4469
    %v4505 = vpop.permute.xlu0 %4504
    %4508 = vset.pattern.permute.xlu0 1
    %4509 = vperm.xlu0 %4508, %v4470
    %v4510 = vpop.permute.xlu0 %4509
    %v4512 = vsel %vm564, %v4505, %v4510
    %4514 = vset.pattern.permute.xlu0 1
    %4515 = vperm.xlu0 %4514, %v4501
    %v4516 = vpop.permute.xlu0 %4515
    %v4518 = vsel %vm563, %v4516, %v4512
    %s4519 = scalar_lea.vmem %s5, 248
    %4520 = vst.msk [vmem:[%s4519] sm:$0xff] %vm582, %v4518
    %4521 = vst [vmem:[#allocation2] sm:$0xff] %v4466
    %4523 = vrot.lane.b32.xlu0 %v4429, 96
    %v4524 = vpop.permute.xlu0 %4523
    %4526 = vst.msk [vmem:[#allocation3] sm:$0xff] %vm489, %v4524
    %4527 = vrot.lane.b32.xlu0 %v4501, 127
    %v4528 = vpop.permute.xlu0 %4527
    %vm4530 = vcmask 7168
    %4531 = vst.msk [vmem:[#allocation4] sm:$0xff] %vm4530, %v4528
    // Predicated region
    $region30: #{tpu_custom_call.1} parent=1 // pred_check
      _
    $region31: #{tpu_custom_call.1} parent=1 // pred_check_branch
      %4533 = sbr.rel (0) target = $region33
    $region32: #{tpu_custom_call.1} parent=1 // pred_region
      _
    $region33: #{tpu_custom_call.1} parent=1 // pred_fallthru
      _
    // Predicated region
    $region34: #{tpu_custom_call.1} parent=1 // pred_check
      _
    $region35: #{tpu_custom_call.1} parent=1 // pred_check_branch
      %4535 = sbr.rel (0) target = $region37
    $region36: #{tpu_custom_call.1} parent=1 // pred_region
      _
    $region37: #{tpu_custom_call.1} parent=1 // pred_fallthru
      _
    %4536 = vsyncpa [#allocation7], 1

</llo_original>
